<compile_context>
chip_gen: v7x
topology: tpu7x:2x2x1
jax: 0.10.0
libtpu: 0.0.40
codegen_flags: <defaults>
</compile_context>

<pallas_src>
import functools

import jax
import jax.numpy as jnp
from jax import lax
from jax.experimental import pallas as pl
from jax.experimental.pallas import tpu as pltpu

# Keep XLA reference matmuls in true f32 so the f32 kernel-vs-reference check
# is meaningful at tight tolerances on TPU.
jax.config.update("jax_default_matmul_precision", "highest")


def _pick_tile(n, cap):
    """Largest tile <= cap that divides n, keeping the lane axis 128-aligned."""
    if n <= cap:
        return n
    for t in range(cap - cap % 128, 0, -128):
        if n % t == 0:
            return t
    # TODO(synk): add a padding/masking path for oddly sized N/M instead of
    # falling back to the full axis (can blow VMEM on v7x for huge inputs).
    return n


def _auto_config(tn_cap, tm_cap):
    """Generation-aware tile caps / scoped-VMEM limit."""
    try:
        vmem_cap = int(pltpu.get_tpu_info().vmem_capacity_bytes)
    except Exception:  # non-TPU backend or API drift -> conservative fallback
        vmem_cap = 64 * 1024 * 1024
    if vmem_cap >= 128 * 1024 * 1024:            # v5e / v6e: 128 MiB VMEM
        tn_cap = 512 if tn_cap is None else tn_cap
        tm_cap = 1024 if tm_cap is None else tm_cap   # bigger key tiles
        vmem_limit = 96 * 1024 * 1024
    else:                                        # v7x (64 MiB) or unknown
        tn_cap = 512 if tn_cap is None else tn_cap
        tm_cap = 512 if tm_cap is None else tm_cap
        vmem_limit = 40 * 1024 * 1024
    return tn_cap, tm_cap, vmem_limit


# ------------------------------ fused kernel --------------------------------
def fused_nonlocal_kernel(k_ref, phi_ref, g_ref, vres_ref,
                          tw_ref, tb_ref, ww_ref, wb_ref,
                          o_ref,
                          theta_sc, m_sc, l_sc, acc_sc,
                          *, approx_recip, mxu_precision):
    # grid = (batch b, query tile i, key tile j); j is innermost / "arbitrary".
    j = pl.program_id(2)

    @pl.when(j == 0)
    def _init():
        # theta projection for this query tile (depends only on (b, i)).
        th = jnp.dot(tw_ref[...], k_ref[0],
                     preferred_element_type=jnp.float32,
                     precision=mxu_precision) + tb_ref[...]          # (Ci, TN)
        theta_sc[...] = th.astype(theta_sc.dtype)
        m_sc[...] = jnp.full(m_sc.shape, -jnp.inf, jnp.float32)
        l_sc[...] = jnp.zeros(l_sc.shape, jnp.float32)
        acc_sc[...] = jnp.zeros(acc_sc.shape, jnp.float32)

    # Pre-projected phi / g tiles for this key tile (Ci channels only).
    phi = phi_ref[0]                                                 # (Ci, TM)
    g = g_ref[0]                                                     # (Ci, TM)

    # Logits with keys on sublanes, queries on lanes; contraction over the
    # (tiny) channel axis via dot_general -> no large relayouts.
    s = lax.dot_general(phi, theta_sc[...], (((0,), (0,)), ((), ())),
                        preferred_element_type=jnp.float32,
                        precision=mxu_precision)                     # (TM, TN)

    # Online softmax over the key (sublane) axis; statistics in f32.
    m_prev = m_sc[...]
    m_new = jnp.maximum(m_prev, jnp.max(s, axis=0, keepdims=True))   # (1, TN)
    alpha = jnp.exp(m_prev - m_new)
    # TODO(synk): on v6e/v7x the EUP supports bf16 exp (~2x throughput on the
    # saturating slot); kept f32 here for v5e portability and accuracy.
    p = jnp.exp(s - m_new)                                           # (TM, TN)
    l_sc[...] = alpha * l_sc[...] + jnp.sum(p, axis=0, keepdims=True)
    acc_sc[...] = alpha * acc_sc[...] + jnp.dot(
        g, p.astype(g.dtype),
        preferred_element_type=jnp.float32, precision=mxu_precision)  # (Ci, TN)
    m_sc[...] = m_new

    @pl.when(j == pl.num_programs(2) - 1)
    def _finalize():
        # Deferred softmax normalization (once per output tile), then the
        # BN-folded W conv and the residual add.
        if approx_recip:
            y = acc_sc[...] * pl.reciprocal(l_sc[...], approx=True)  # (Ci, TN)
        else:
            y = acc_sc[...] / l_sc[...]
        z = (jnp.dot(ww_ref[...], y, preferred_element_type=jnp.float32,
                     precision=lax.Precision.HIGHEST)
             + wb_ref[...] + vres_ref[0])                            # (C, TN)
        o_ref[0] = z.astype(o_ref.dtype)


# -------------------------------- glue --------------------------------------
def avg_pool_122(x):
    """AvgPool3d(kernel=(1,2,2), stride=(1,2,2)) for NCDHW (H, W must be even)."""
    B, C, T, H, W = x.shape
    return x.reshape(B, C, T, H // 2, 2, W // 2, 2).mean(axis=(4, 6))


def my_nonlocal_forward(q, k, v, params, eps=1e-5,
                        tn_cap=None, tm_cap=None, use_bf16=False):
    """Pallas implementation of MY_NonLocalBlockND.forward (dimension=3)."""
    B, C, T, H, W = q.shape
    Ci = params["theta_w"].shape[0]
    N = T * H * W

    tn_cap, tm_cap, vmem_limit = _auto_config(tn_cap, tm_cap)

    # AvgPool3d((1,2,2)) commutes with the 1x1 convs (linear + constant bias),
    # so pool first, then pre-project phi/g in XLA.  The kernel's j-varying
    # key-side streams then carry Ci channels instead of C.
    qp = avg_pool_122(q).reshape(B, C, -1)        # (B, C, M)
    vp = avg_pool_122(v).reshape(B, C, -1)        # (B, C, M)
    M = qp.shape[-1]
    phi = jnp.einsum("oc,bcm->bom", params["phi_w"], qp) \
        + params["phi_b"][None, :, None]          # (B, Ci, M)
    g = jnp.einsum("oc,bcm->bom", params["g_w"], vp) \
        + params["g_b"][None, :, None]            # (B, Ci, M)

    k_flat = k.reshape(B, C, N)
    v_flat = v.reshape(B, C, N)                   # residual (kept f32)

    # Fold eval-mode BatchNorm3d into the final 1x1 conv.
    scale = params["bn_gamma"] * lax.rsqrt(params["bn_var"] + eps)        # (C,)
    w_eff = params["W_w"] * scale[:, None]                                # (C, Ci)
    b_eff = (params["W_b"] - params["bn_mean"]) * scale + params["bn_beta"]  # (C,)

    # bf16 MXU operands (f32 accumulation) for the production path.
    stream_dtype = jnp.bfloat16 if use_bf16 else q.dtype
    k_in = k_flat.astype(stream_dtype)
    phi_in = phi.astype(stream_dtype)
    g_in = g.astype(stream_dtype)
    tw = params["theta_w"].astype(stream_dtype)
    mxu_precision = lax.Precision.DEFAULT if use_bf16 else lax.Precision.HIGHEST

    TN = _pick_tile(N, tn_cap)
    TM = _pick_tile(M, tm_cap)
    grid = (B, N // TN, M // TM)

    kernel = functools.partial(fused_nonlocal_kernel,
                               approx_recip=bool(use_bf16),
                               mxu_precision=mxu_precision)

    out = pl.pallas_call(
        kernel,
        out_shape=jax.ShapeDtypeStruct((B, C, N), q.dtype),
        grid=grid,
        in_specs=[
            pl.BlockSpec((1, C, TN), lambda b, i, j: (b, 0, i)),     # k (theta in)
            pl.BlockSpec((1, Ci, TM), lambda b, i, j: (b, 0, j)),    # phi (pre-projected)
            pl.BlockSpec((1, Ci, TM), lambda b, i, j: (b, 0, j)),    # g (pre-projected)
            pl.BlockSpec((1, C, TN), lambda b, i, j: (b, 0, i)),     # residual v
            pl.BlockSpec((Ci, C), lambda b, i, j: (0, 0)),           # theta_w
            pl.BlockSpec((Ci, 1), lambda b, i, j: (0, 0)),           # theta_b
            pl.BlockSpec((C, Ci), lambda b, i, j: (0, 0)),           # W (BN folded)
            pl.BlockSpec((C, 1), lambda b, i, j: (0, 0)),            # b (BN folded)
        ],
        out_specs=pl.BlockSpec((1, C, TN), lambda b, i, j: (b, 0, i)),
        scratch_shapes=[
            pltpu.VMEM((Ci, TN), stream_dtype),  # theta tile (compute dtype)
            pltpu.VMEM((1, TN), jnp.float32),    # running max
            pltpu.VMEM((1, TN), jnp.float32),    # running sum
            pltpu.VMEM((Ci, TN), jnp.float32),   # output accumulator
        ],
        compiler_params=pltpu.CompilerParams(
            dimension_semantics=("parallel", "parallel", "arbitrary"),
            vmem_limit_bytes=vmem_limit),
    )(k_in, phi_in, g_in, v_flat,
      tw, params["theta_b"][:, None],
      w_eff, b_eff[:, None])
    return out.reshape(B, C, T, H, W)


# --------------------------- pure-JAX reference ------------------------------
def reference_forward(q, k, v, params, eps=1e-5):
    """Direct transcription of the PyTorch forward (conv -> pool order)."""
    B, C, T, H, W = q.shape
    Ci = params["theta_w"].shape[0]
    N = T * H * W

    def conv(x, w, b):   # x: (B, Cin, N)
        return jnp.einsum("oc,bcn->bon", w, x) + b[None, :, None]

    g_x = avg_pool_122(conv(v.reshape(B, C, N), params["g_w"], params["g_b"])
                       .reshape(B, Ci, T, H, W)).reshape(B, Ci, -1)      # (B,Ci,M)
    theta_x = conv(k.reshape(B, C, N), params["theta_w"], params["theta_b"])
    phi_x = avg_pool_122(conv(q.reshape(B, C, N), params["phi_w"], params["phi_b"])
                         .reshape(B, Ci, T, H, W)).reshape(B, Ci, -1)    # (B,Ci,M)
    f = jnp.einsum("bcn,bcm->bnm", theta_x, phi_x)
    f_div_C = jax.nn.softmax(f, axis=-1)
    y = jnp.einsum("bnm,bcm->bcn", f_div_C, g_x)                         # (B,Ci,N)
    W_y = jnp.einsum("oc,bcn->bon", params["W_w"], y) + params["W_b"][None, :, None]
    scale = params["bn_gamma"] / jnp.sqrt(params["bn_var"] + eps)
    W_y = (W_y - params["bn_mean"][None, :, None]) * scale[None, :, None] \
        + params["bn_beta"][None, :, None]
    z = W_y + v.reshape(B, C, N)
    return z.reshape(B, C, T, H, W)


# --------------------------------- main --------------------------------------
if __name__ == "__main__":
    # in_channels=8 -> inter_channels=4; N = 4*16*16 = 1024, M = 4*8*8 = 256.
    B, C, T, H, W = 2, 8, 4, 16, 16
    Ci = max(C // 2, 1)

    key = jax.random.PRNGKey(0)
    keys = jax.random.split(key, 12)

    def init_conv(rw, rb, cout, cin):
        bound = 1.0 / (cin ** 0.5)
        w = jax.random.uniform(rw, (cout, cin), jnp.float32, -bound, bound)
        b = jax.random.uniform(rb, (cout,), jnp.float32, -bound, bound)
        return w, b

    g_w, g_b = init_conv(keys[0], keys[1], Ci, C)
    theta_w, theta_b = init_conv(keys[2], keys[3], Ci, C)
    phi_w, phi_b = init_conv(keys[4], keys[5], Ci, C)
    W_w, W_b = init_conv(keys[6], keys[7], C, Ci)

    q = jax.random.normal(keys[8], (B, C, T, H, W), jnp.float32)
    k = jax.random.normal(keys[9], (B, C, T, H, W), jnp.float32)
    v = jax.random.normal(keys[10], (B, C, T, H, W), jnp.float32)

    base = dict(g_w=g_w, g_b=g_b, theta_w=theta_w, theta_b=theta_b,
                phi_w=phi_w, phi_b=phi_b, W_w=W_w, W_b=W_b)

    # (1) PyTorch-default BN init (gamma=beta=0 -> W branch contributes 0).
    params0 = dict(base,
                   bn_gamma=jnp.zeros((C,), jnp.float32),
                   bn_beta=jnp.zeros((C,), jnp.float32),
                   bn_mean=jnp.zeros((C,), jnp.float32),
                   bn_var=jnp.ones((C,), jnp.float32))
    # (2) Non-trivial BN stats so the attention + W path is actually exercised.
    params1 = dict(base,
                   bn_gamma=(jax.random.normal(keys[11], (C,), jnp.float32) * 0.5 + 1.0),
                   bn_beta=jnp.linspace(-0.2, 0.3, C).astype(jnp.float32),
                   bn_mean=jnp.linspace(-0.1, 0.1, C).astype(jnp.float32),
                   bn_var=jnp.linspace(0.5, 1.5, C).astype(jnp.float32))

    # f32 parity path, generation-default tiles (single key tile here).
    z = my_nonlocal_forward(q, k, v, params0)
    jax.block_until_ready(z)
    z_ref = reference_forward(q, k, v, params0)
    assert z.shape == (B, C, T, H, W)
    assert jnp.allclose(z, z_ref, atol=1e-4, rtol=1e-4), \
        f"f32 mismatch (params0): {float(jnp.max(jnp.abs(z - z_ref)))}"

    # f32 parity path, tm_cap=128 forces multiple key tiles -> exercises the
    # online softmax (not a production setting; defaults keep TM >= 512).
    z = my_nonlocal_forward(q, k, v, params1, tm_cap=128)
    jax.block_until_ready(z)
    z_ref = reference_forward(q, k, v, params1)
    assert jnp.allclose(z, z_ref, atol=1e-4, rtol=1e-4), \
        f"f32 mismatch (params1, multi-tile): {float(jnp.max(jnp.abs(z - z_ref)))}"

    # bf16 MXU-operand production path (f32 accumulation), looser tolerance.
    z_bf16 = my_nonlocal_forward(q, k, v, params1, use_bf16=True)
    jax.block_until_ready(z_bf16)
    assert jnp.allclose(z_bf16, z_ref, atol=6e-2, rtol=6e-2), \
        f"bf16 mismatch: {float(jnp.max(jnp.abs(z_bf16 - z_ref)))}"

    print("KERNEL_OK")
</pallas_src>

<mosaic_0001>
module attributes {stable_mosaic.version = 11 : i64} {
  func.func @fused_nonlocal_kernel(%arg0: i32, %arg1: i32, %arg2: i32, %arg3: memref<1x8x512xf32, #tpu.memory_space<vmem>>, %arg4: memref<1x4x256xf32, #tpu.memory_space<vmem>>, %arg5: memref<1x4x256xf32, #tpu.memory_space<vmem>>, %arg6: memref<1x8x512xf32, #tpu.memory_space<vmem>>, %arg7: memref<4x8xf32, #tpu.memory_space<vmem>>, %arg8: memref<4x1xf32, #tpu.memory_space<vmem>>, %arg9: memref<8x4xf32, #tpu.memory_space<vmem>>, %arg10: memref<8x1xf32, #tpu.memory_space<vmem>>, %arg11: memref<1x8x512xf32, #tpu.memory_space<vmem>>, %arg12: memref<4x512xf32, #tpu.memory_space<vmem>>, %arg13: memref<1x512xf32, #tpu.memory_space<vmem>>, %arg14: memref<1x512xf32, #tpu.memory_space<vmem>>, %arg15: memref<4x512xf32, #tpu.memory_space<vmem>>) attributes {dimension_semantics = [#tpu.dimension_semantics<parallel>, #tpu.dimension_semantics<parallel>, #tpu.dimension_semantics<arbitrary>], iteration_bounds = array<i64: 2, 2, 1>, scalar_prefetch = 0 : i64, scratch_operands = 4 : i64, tpu.core_type = #tpu.core_type<tc>, window_params = [{transform_indices = @transform_0, window_bounds = array<i64: 1, 8, 512>}, {transform_indices = @transform_1, window_bounds = array<i64: 1, 4, 256>}, {transform_indices = @transform_2, window_bounds = array<i64: 1, 4, 256>}, {transform_indices = @transform_3, window_bounds = array<i64: 1, 8, 512>}, {pipeline_mode = #tpu.pipeline_mode<synchronous>, transform_indices = @transform_4, window_bounds = array<i64: 4, 8>}, {pipeline_mode = #tpu.pipeline_mode<synchronous>, transform_indices = @transform_5, window_bounds = array<i64: 4, 1>}, {pipeline_mode = #tpu.pipeline_mode<synchronous>, transform_indices = @transform_6, window_bounds = array<i64: 8, 4>}, {pipeline_mode = #tpu.pipeline_mode<synchronous>, transform_indices = @transform_7, window_bounds = array<i64: 8, 1>}, {transform_indices = @transform_8, window_bounds = array<i64: 1, 8, 512>}]} {
    %c0_i32 = arith.constant 0 : i32
    %0 = arith.cmpi eq, %arg2, %c0_i32 : i32
    %1 = arith.extui %0 : i1 to i32
    %c0_i32_0 = arith.constant 0 : i32
    %2 = arith.cmpi ne, %1, %c0_i32_0 : i32
    scf.if %2 {
      %c0_25 = arith.constant 0 : index
      %c0_26 = arith.constant 0 : index
      %34 = vector.load %arg7[%c0_25, %c0_26] : memref<4x8xf32, #tpu.memory_space<vmem>>, vector<4x8xf32>
      %c0_27 = arith.constant 0 : index
      %c0_28 = arith.constant 0 : index
      %c0_29 = arith.constant 0 : index
      %35 = vector.load %arg3[%c0_27, %c0_28, %c0_29] : memref<1x8x512xf32, #tpu.memory_space<vmem>>, vector<1x8x512xf32>
      %36 = vector.shape_cast %35 : vector<1x8x512xf32> to vector<8x512xf32>
      %cst_30 = arith.constant dense<0.000000e+00> : vector<4x512xf32>
      %37 = tpu.matmul %34, %36, %cst_30 {dimension_numbers = #tpu.dot_dimension_numbers<[1], [0], [0], [1], [0, 0, 1, 1], [], []>, precision = #tpu.contract_precision<fp32>} : vector<4x8xf32>, vector<8x512xf32>, vector<4x512xf32> -> vector<4x512xf32>
      %c0_31 = arith.constant 0 : index
      %c0_32 = arith.constant 0 : index
      %38 = vector.load %arg8[%c0_31, %c0_32] : memref<4x1xf32, #tpu.memory_space<vmem>>, vector<4x1xf32>
      %39 = vector.broadcast %38 : vector<4x1xf32> to vector<4x512xf32>
      %40 = arith.addf %37, %39 : vector<4x512xf32>
      %c0_33 = arith.constant 0 : index
      %c0_34 = arith.constant 0 : index
      %41 = vector.load %arg12[%c0_33, %c0_34] : memref<4x512xf32, #tpu.memory_space<vmem>>, vector<4x512xf32>
      tpu.vector_store %arg12[%c0_33, %c0_34], %40 {strides = array<i32>} : memref<4x512xf32, #tpu.memory_space<vmem>>, vector<4x512xf32>,
      %cst_35 = arith.constant 0xFF800000 : f32
      %42 = vector.broadcast %cst_35 : f32 to vector<1x512xf32>
      %c0_36 = arith.constant 0 : index
      %c0_37 = arith.constant 0 : index
      %43 = vector.load %arg13[%c0_36, %c0_37] : memref<1x512xf32, #tpu.memory_space<vmem>>, vector<1x512xf32>
      tpu.vector_store %arg13[%c0_36, %c0_37], %42 {strides = array<i32>} : memref<1x512xf32, #tpu.memory_space<vmem>>, vector<1x512xf32>,
      %cst_38 = arith.constant 0.000000e+00 : f32
      %44 = vector.broadcast %cst_38 : f32 to vector<1x512xf32>
      %c0_39 = arith.constant 0 : index
      %c0_40 = arith.constant 0 : index
      %45 = vector.load %arg14[%c0_39, %c0_40] : memref<1x512xf32, #tpu.memory_space<vmem>>, vector<1x512xf32>
      tpu.vector_store %arg14[%c0_39, %c0_40], %44 {strides = array<i32>} : memref<1x512xf32, #tpu.memory_space<vmem>>, vector<1x512xf32>,
      %cst_41 = arith.constant 0.000000e+00 : f32
      %46 = vector.broadcast %cst_41 : f32 to vector<4x512xf32>
      %c0_42 = arith.constant 0 : index
      %c0_43 = arith.constant 0 : index
      %47 = vector.load %arg15[%c0_42, %c0_43] : memref<4x512xf32, #tpu.memory_space<vmem>>, vector<4x512xf32>
      tpu.vector_store %arg15[%c0_42, %c0_43], %46 {strides = array<i32>} : memref<4x512xf32, #tpu.memory_space<vmem>>, vector<4x512xf32>,
    } else {
    }
    %c0 = arith.constant 0 : index
    %c0_1 = arith.constant 0 : index
    %c0_2 = arith.constant 0 : index
    %3 = vector.load %arg4[%c0, %c0_1, %c0_2] : memref<1x4x256xf32, #tpu.memory_space<vmem>>, vector<1x4x256xf32>
    %4 = vector.shape_cast %3 : vector<1x4x256xf32> to vector<4x256xf32>
    %c0_3 = arith.constant 0 : index
    %c0_4 = arith.constant 0 : index
    %c0_5 = arith.constant 0 : index
    %5 = vector.load %arg5[%c0_3, %c0_4, %c0_5] : memref<1x4x256xf32, #tpu.memory_space<vmem>>, vector<1x4x256xf32>
    %6 = vector.shape_cast %5 : vector<1x4x256xf32> to vector<4x256xf32>
    %c0_6 = arith.constant 0 : index
    %c0_7 = arith.constant 0 : index
    %7 = vector.load %arg12[%c0_6, %c0_7] : memref<4x512xf32, #tpu.memory_space<vmem>>, vector<4x512xf32>
    %cst = arith.constant dense<0.000000e+00> : vector<256x512xf32>
    %8 = tpu.matmul %4, %7, %cst {dimension_numbers = #tpu.dot_dimension_numbers<[0], [0], [1], [1], [0, 1, 1, 1], [], []>, precision = #tpu.contract_precision<fp32>} : vector<4x256xf32>, vector<4x512xf32>, vector<256x512xf32> -> vector<256x512xf32>
    %c0_8 = arith.constant 0 : index
    %c0_9 = arith.constant 0 : index
    %9 = vector.load %arg13[%c0_8, %c0_9] : memref<1x512xf32, #tpu.memory_space<vmem>>, vector<1x512xf32>
    %cst_10 = arith.constant dense<0xFF800000> : vector<512xf32>
    %10 = vector.multi_reduction <maximumf>, %8, %cst_10 [0] : vector<256x512xf32> to vector<512xf32>
    %11 = vector.shape_cast %10 : vector<512xf32> to vector<1x512xf32>
    %12 = arith.maximumf %9, %11 : vector<1x512xf32>
    %13 = arith.subf %9, %12 : vector<1x512xf32>
    %14 = math.exp %13 : vector<1x512xf32>
    %15 = vector.broadcast %12 : vector<1x512xf32> to vector<256x512xf32>
    %16 = arith.subf %8, %15 : vector<256x512xf32>
    %17 = math.exp %16 : vector<256x512xf32>
    %c0_11 = arith.constant 0 : index
    %c0_12 = arith.constant 0 : index
    %18 = vector.load %arg14[%c0_11, %c0_12] : memref<1x512xf32, #tpu.memory_space<vmem>>, vector<1x512xf32>
    %19 = arith.mulf %14, %18 : vector<1x512xf32>
    %cst_13 = arith.constant dense<0.000000e+00> : vector<512xf32>
    %20 = vector.multi_reduction <add>, %17, %cst_13 [0] : vector<256x512xf32> to vector<512xf32>
    %21 = vector.shape_cast %20 : vector<512xf32> to vector<1x512xf32>
    %22 = arith.addf %19, %21 : vector<1x512xf32>
    %c0_14 = arith.constant 0 : index
    %c0_15 = arith.constant 0 : index
    %23 = vector.load %arg14[%c0_14, %c0_15] : memref<1x512xf32, #tpu.memory_space<vmem>>, vector<1x512xf32>
    tpu.vector_store %arg14[%c0_14, %c0_15], %22 {strides = array<i32>} : memref<1x512xf32, #tpu.memory_space<vmem>>, vector<1x512xf32>,
    %c0_16 = arith.constant 0 : index
    %c0_17 = arith.constant 0 : index
    %24 = vector.load %arg15[%c0_16, %c0_17] : memref<4x512xf32, #tpu.memory_space<vmem>>, vector<4x512xf32>
    %25 = vector.broadcast %14 : vector<1x512xf32> to vector<4x512xf32>
    %26 = arith.mulf %25, %24 : vector<4x512xf32>
    %cst_18 = arith.constant dense<0.000000e+00> : vector<4x512xf32>
    %27 = tpu.matmul %6, %17, %cst_18 {dimension_numbers = #tpu.dot_dimension_numbers<[1], [0], [0], [1], [0, 0, 1, 1], [], []>, precision = #tpu.contract_precision<fp32>} : vector<4x256xf32>, vector<256x512xf32>, vector<4x512xf32> -> vector<4x512xf32>
    %28 = arith.addf %26, %27 : vector<4x512xf32>
    %c0_19 = arith.constant 0 : index
    %c0_20 = arith.constant 0 : index
    %29 = vector.load %arg15[%c0_19, %c0_20] : memref<4x512xf32, #tpu.memory_space<vmem>>, vector<4x512xf32>
    tpu.vector_store %arg15[%c0_19, %c0_20], %28 {strides = array<i32>} : memref<4x512xf32, #tpu.memory_space<vmem>>, vector<4x512xf32>,
    %c0_21 = arith.constant 0 : index
    %c0_22 = arith.constant 0 : index
    %30 = vector.load %arg13[%c0_21, %c0_22] : memref<1x512xf32, #tpu.memory_space<vmem>>, vector<1x512xf32>
    tpu.vector_store %arg13[%c0_21, %c0_22], %12 {strides = array<i32>} : memref<1x512xf32, #tpu.memory_space<vmem>>, vector<1x512xf32>,
    %c0_i32_23 = arith.constant 0 : i32
    %31 = arith.cmpi eq, %arg2, %c0_i32_23 : i32
    %32 = arith.extui %31 : i1 to i32
    %c0_i32_24 = arith.constant 0 : i32
    %33 = arith.cmpi ne, %32, %c0_i32_24 : i32
    scf.if %33 {
      %c0_25 = arith.constant 0 : index
      %c0_26 = arith.constant 0 : index
      %34 = vector.load %arg15[%c0_25, %c0_26] : memref<4x512xf32, #tpu.memory_space<vmem>>, vector<4x512xf32>
      %c0_27 = arith.constant 0 : index
      %c0_28 = arith.constant 0 : index
      %35 = vector.load %arg14[%c0_27, %c0_28] : memref<1x512xf32, #tpu.memory_space<vmem>>, vector<1x512xf32>
      %36 = vector.broadcast %35 : vector<1x512xf32> to vector<4x512xf32>
      %37 = arith.divf %34, %36 : vector<4x512xf32>
      %c0_29 = arith.constant 0 : index
      %c0_30 = arith.constant 0 : index
      %38 = vector.load %arg9[%c0_29, %c0_30] : memref<8x4xf32, #tpu.memory_space<vmem>>, vector<8x4xf32>
      %cst_31 = arith.constant dense<0.000000e+00> : vector<8x512xf32>
      %39 = tpu.matmul %38, %37, %cst_31 {dimension_numbers = #tpu.dot_dimension_numbers<[1], [0], [0], [1], [0, 0, 1, 1], [], []>, precision = #tpu.contract_precision<fp32>} : vector<8x4xf32>, vector<4x512xf32>, vector<8x512xf32> -> vector<8x512xf32>
      %c0_32 = arith.constant 0 : index
      %c0_33 = arith.constant 0 : index
      %40 = vector.load %arg10[%c0_32, %c0_33] : memref<8x1xf32, #tpu.memory_space<vmem>>, vector<8x1xf32>
      %41 = vector.broadcast %40 : vector<8x1xf32> to vector<8x512xf32>
      %42 = arith.addf %39, %41 : vector<8x512xf32>
      %c0_34 = arith.constant 0 : index
      %c0_35 = arith.constant 0 : index
      %c0_36 = arith.constant 0 : index
      %43 = vector.load %arg6[%c0_34, %c0_35, %c0_36] : memref<1x8x512xf32, #tpu.memory_space<vmem>>, vector<1x8x512xf32>
      %44 = vector.shape_cast %43 : vector<1x8x512xf32> to vector<8x512xf32>
      %45 = arith.addf %42, %44 : vector<8x512xf32>
      %c0_37 = arith.constant 0 : index
      %c0_38 = arith.constant 0 : index
      %c0_39 = arith.constant 0 : index
      %46 = vector.load %arg11[%c0_37, %c0_38, %c0_39] : memref<1x8x512xf32, #tpu.memory_space<vmem>>, vector<1x8x512xf32>
      %47 = vector.shape_cast %46 : vector<1x8x512xf32> to vector<8x512xf32>
      %48 = vector.shape_cast %45 : vector<8x512xf32> to vector<1x8x512xf32>
      tpu.vector_store %arg11[%c0_37, %c0_38, %c0_39], %48 {strides = array<i32>} : memref<1x8x512xf32, #tpu.memory_space<vmem>>, vector<1x8x512xf32>,
    } else {
    }
    return
  }
  func.func @transform_0(%arg0: i32, %arg1: i32, %arg2: i32) -> (i32, i32, i32) {
    %c0_i32 = arith.constant 0 : i32
    %c0_i32_0 = arith.constant 0 : i32
    return %arg0, %c0_i32, %arg1 : i32, i32, i32
  }
  func.func @transform_1(%arg0: i32, %arg1: i32, %arg2: i32) -> (i32, i32, i32) {
    %c0_i32 = arith.constant 0 : i32
    %c0_i32_0 = arith.constant 0 : i32
    return %arg0, %c0_i32, %arg2 : i32, i32, i32
  }
  func.func @transform_2(%arg0: i32, %arg1: i32, %arg2: i32) -> (i32, i32, i32) {
    %c0_i32 = arith.constant 0 : i32
    %c0_i32_0 = arith.constant 0 : i32
    return %arg0, %c0_i32, %arg2 : i32, i32, i32
  }
  func.func @transform_3(%arg0: i32, %arg1: i32, %arg2: i32) -> (i32, i32, i32) {
    %c0_i32 = arith.constant 0 : i32
    %c0_i32_0 = arith.constant 0 : i32
    return %arg0, %c0_i32, %arg1 : i32, i32, i32
  }
  func.func @transform_4(%arg0: i32, %arg1: i32, %arg2: i32) -> (i32, i32) {
    %c0_i32 = arith.constant 0 : i32
    %c0_i32_0 = arith.constant 0 : i32
    %c0_i32_1 = arith.constant 0 : i32
    return %c0_i32, %c0_i32_0 : i32, i32
  }
  func.func @transform_5(%arg0: i32, %arg1: i32, %arg2: i32) -> (i32, i32) {
    %c0_i32 = arith.constant 0 : i32
    %c0_i32_0 = arith.constant 0 : i32
    %c0_i32_1 = arith.constant 0 : i32
    return %c0_i32, %c0_i32_0 : i32, i32
  }
  func.func @transform_6(%arg0: i32, %arg1: i32, %arg2: i32) -> (i32, i32) {
    %c0_i32 = arith.constant 0 : i32
    %c0_i32_0 = arith.constant 0 : i32
    %c0_i32_1 = arith.constant 0 : i32
    return %c0_i32, %c0_i32_0 : i32, i32
  }
  func.func @transform_7(%arg0: i32, %arg1: i32, %arg2: i32) -> (i32, i32) {
    %c0_i32 = arith.constant 0 : i32
    %c0_i32_0 = arith.constant 0 : i32
    %c0_i32_1 = arith.constant 0 : i32
    return %c0_i32, %c0_i32_0 : i32, i32
  }
  func.func @transform_8(%arg0: i32, %arg1: i32, %arg2: i32) -> (i32, i32, i32) {
    %c0_i32 = arith.constant 0 : i32
    %c0_i32_0 = arith.constant 0 : i32
    return %arg0, %c0_i32, %arg1 : i32, i32, i32
  }
}

</mosaic_0001>

<llo_original>
// kernel: tpu_custom_call.1
$region0: #{tpu_custom_call.1}
  #allocation0 [shape = 'u32[]', space=smem, size = 0x4, offset = 0x4, fixed_abs, tag = 'smem constant byte address 0x4 - core index']
  #allocation1 [shape = 'u32[144,128]{1,0:T(1,128)}', space=vmem, size = 0x12000, scoped, tag = 'internal scratch']
  #allocation2 [shape = 'f32[4,512]{1,0:T(4,128)}', space=vmem, size = 0x2000, scoped, tag = 'scratch operand']
  #allocation3 [shape = 'f32[1,512]{1,0:T(1,128)}', space=vmem, size = 0x800, scoped, tag = 'scratch operand']
  #allocation4 [shape = 'f32[1,512]{1,0:T(1,128)}', space=vmem, size = 0x800, scoped, tag = 'scratch operand']
  #allocation5 [shape = 'f32[4,512]{1,0:T(4,128)}', space=vmem, size = 0x2000, scoped, tag = 'scratch operand']
  %s0 = inlined_call_operand.hbm [shape: f32[2,8,1024], index: 0, kind: input, shape index: {}]
  %s1 = inlined_call_operand.vmem [shape: f32[2,4,256], index: 1, kind: input, shape index: {}]
  %s2 = inlined_call_operand.vmem [shape: f32[2,4,256], index: 2, kind: input, shape index: {}]
  %s3 = inlined_call_operand.hbm [shape: f32[2,8,1024], index: 3, kind: input, shape index: {}]
  %s4 = inlined_call_operand.vmem [shape: f32[4,8], index: 4, kind: input, shape index: {}]
  %s5 = inlined_call_operand.vmem [shape: f32[4,1], index: 5, kind: input, shape index: {}]
  %s6 = inlined_call_operand.vmem [shape: f32[8,4], index: 6, kind: input, shape index: {}]
  %s7 = inlined_call_operand.vmem [shape: f32[8,1], index: 7, kind: input, shape index: {}]
  %s8 = inlined_call_operand.hbm [shape: f32[2,8,1024], index: 8, kind: output, shape index: {}]
  %s9 = sld [smem:[#allocation0]]
  $region81: #{tpu_custom_call.1} parent=0
    _
  %s11 = ssub.s32 1, %s9
  %s12 = scalar_select 0, %s11, %s9
  $region1: #{tpu_custom_call.1} parent=0
    #allocation6 [shape = 'u8[32768]{0}', space=vmem, size = 0x8000, scoped, tag = 'input window, operand 0']
    #allocation7 [shape = 's32[2]{0}', space=sflag, size = 0x8, scoped, tag = 'scoped memory for tpu_custom_call.1']
    #allocation8 [shape = 's32[2]{0}', space=sflag, size = 0x8, scoped, tag = 'scoped memory for tpu_custom_call.1']
    #allocation9 [shape = 'u8[32768]{0}', space=vmem, size = 0x8000, scoped, tag = 'input window, operand 3']
    #allocation10 [shape = 's32[2]{0}', space=sflag, size = 0x8, scoped, tag = 'scoped memory for tpu_custom_call.1']
    #allocation11 [shape = 'u8[32768]{0}', space=vmem, size = 0x8000, scoped, tag = 'output window, operand 0']
    %13 = vsyncpa [#allocation7], 0
    %s14 = scalar_lea.sflag [#allocation7], 1
    %15 = vsyncpa %s14, 0
    %16 = vsyncpa [#allocation10], 0
    %s17 = scalar_lea.sflag [#allocation10], 1
    %18 = vsyncpa %s17, 0
    %19 = vsyncpa [#allocation8], 0
    %s20 = scalar_lea.sflag [#allocation8], 1
    %21 = vsyncpa %s20, 0
    loop: start=0, step=1, limit=6
    $region2: #{tpu_custom_call.1} parent=1 // loop_pre_header
      _
    $region3: #{tpu_custom_call.1} parent=1 // loop_header
      %s23 = sphi 0, %s27
      %p24 = scmp.ge.s32.totalorder %s23, 6
      %s30 = sphi 0, %s49
      %s31 = sphi 0, %s45
      %s32 = sphi 0, %s41
      %s33 = sphi 0, %s30
      %s34 = sphi 0, %s31
      %s35 = sphi 0, %s32
      %s36 = sphi 0, %s33
      %s37 = sphi 0, %s34
      %s38 = sphi 0, %s35
      %s54 = sphi 0, %s56
      %s57 = sphi 0, %s54
      %s58 = sphi 0, %s57
      %s74 = sphi 0, %s58
      %s82 = sphi 0, %s84
      %s85 = sphi 0, %s82
      %s86 = sphi 0, %s85
      %s102 = sphi 0, %s86
      %s110 = sphi 0, %s112
      %s113 = sphi 0, %s110
      %s114 = sphi 0, %s113
      %s130 = sphi 0, %s114
      %s138 = sphi 0, %s140
      %s141 = sphi 0, %s138
      %s142 = sphi 0, %s141
      %s158 = sphi 0, %s142
      %s162 = sphi 0, %s162
      %s164 = sphi 0, %s162
      %s165 = sphi 0, %s164
      %s179 = sphi 0, %s165
      %s183 = sphi 0, %s183
      %s185 = sphi 0, %s183
      %s186 = sphi 0, %s185
      %s200 = sphi 0, %s186
      %s204 = sphi 0, %s204
      %s206 = sphi 0, %s204
      %s207 = sphi 0, %s206
      %s221 = sphi 0, %s207
      %s225 = sphi 0, %s225
      %s227 = sphi 0, %s225
      %s228 = sphi 0, %s227
      %s242 = sphi 0, %s228
      %s250 = sphi 0, %s252
      %s253 = sphi 0, %s250
      %s254 = sphi 0, %s253
      %s270 = sphi 0, %s254
    $region4: #{tpu_custom_call.1} parent=1 // loop_header_branch
      %26 = sbr.rel (%p24) target = $region8
    $region5: #{tpu_custom_call.1} parent=1 // loop_body
      %s28 = ssub.s32 %s23, 1
      %s29 = ssub.s32 %s23, 2
      %s39 = sadd.s32 1, %s32
      %p40 = scmp.ge.s32.totalorder %s39, 1
      %s41 = scalar_select %p40, 0, %s39
      %s42 = sadd.s32 1, %s31
      %s43 = scalar_select %p40, %s42, %s31
      %p44 = scmp.ge.s32.totalorder %s43, 2
      %s45 = scalar_select %p44, 0, %s43
      %s46 = sadd.s32 1, %s30
      %s47 = scalar_select %p44, %s46, %s30
      %p48 = scmp.ge.s32.totalorder %s47, 2
      %s49 = scalar_select %p48, 0, %s47
      %s50 = ssub.s32 %s30, %s49
      %s51 = ssub.s32 %s31, %s45
      %s52 = sor.u32 %s50, %s51
      %p53 = scmp.eq.s32.totalorder %s52, 0
      %s55 = sadd.s32 %s54, 1
      %s56 = scalar_select %p53, %s54, %s55
      %p59 = pneg %p53
      %p60 = scmp.eq.s32.totalorder %s23, 3
      %p61 = por %p59, %p60
      %p62 = scmp.ne.s32.totalorder %s54, %s57
      %p63 = scmp.eq.s32.totalorder %s23, 0
      %p64 = por %p62, %p63
      %p65 = scmp.ne.s32.totalorder %s54, %s57
      %p66 = scmp.eq.s32.totalorder %s28, 3
      %p67 = por %p65, %p66
      %p68 = scmp.ne.s32.totalorder %s57, %s58
      %p69 = scmp.eq.s32.totalorder %s28, 0
      %p70 = por %p68, %p69
      %p71 = scmp.ne.s32.totalorder %s57, %s58
      %p72 = scmp.eq.s32.totalorder %s29, 3
      %p73 = por %p71, %p72
      %p75 = scmp.ne.s32.totalorder %s58, %s74
      %p76 = scmp.eq.s32.totalorder %s29, 0
      %p77 = por %p75, %p76
      %s78 = ssub.s32 %s30, %s49
      %s79 = ssub.s32 %s32, %s41
      %s80 = sor.u32 %s78, %s79
      %p81 = scmp.eq.s32.totalorder %s80, 0
      %s83 = sadd.s32 %s82, 1
      %s84 = scalar_select %p81, %s82, %s83
      %p87 = pneg %p81
      %p88 = scmp.eq.s32.totalorder %s23, 3
      %p89 = por %p87, %p88
      %p90 = scmp.ne.s32.totalorder %s82, %s85
      %p91 = scmp.eq.s32.totalorder %s23, 0
      %p92 = por %p90, %p91
      %p93 = scmp.ne.s32.totalorder %s82, %s85
      %p94 = scmp.eq.s32.totalorder %s28, 3
      %p95 = por %p93, %p94
      %p96 = scmp.ne.s32.totalorder %s85, %s86
      %p97 = scmp.eq.s32.totalorder %s28, 0
      %p98 = por %p96, %p97
      %p99 = scmp.ne.s32.totalorder %s85, %s86
      %p100 = scmp.eq.s32.totalorder %s29, 3
      %p101 = por %p99, %p100
      %p103 = scmp.ne.s32.totalorder %s86, %s102
      %p104 = scmp.eq.s32.totalorder %s29, 0
      %p105 = por %p103, %p104
      %s106 = ssub.s32 %s30, %s49
      %s107 = ssub.s32 %s32, %s41
      %s108 = sor.u32 %s106, %s107
      %p109 = scmp.eq.s32.totalorder %s108, 0
      %s111 = sadd.s32 %s110, 1
      %s112 = scalar_select %p109, %s110, %s111
      %p115 = pneg %p109
      %p116 = scmp.eq.s32.totalorder %s23, 3
      %p117 = por %p115, %p116
      %p118 = scmp.ne.s32.totalorder %s110, %s113
      %p119 = scmp.eq.s32.totalorder %s23, 0
      %p120 = por %p118, %p119
      %p121 = scmp.ne.s32.totalorder %s110, %s113
      %p122 = scmp.eq.s32.totalorder %s28, 3
      %p123 = por %p121, %p122
      %p124 = scmp.ne.s32.totalorder %s113, %s114
      %p125 = scmp.eq.s32.totalorder %s28, 0
      %p126 = por %p124, %p125
      %p127 = scmp.ne.s32.totalorder %s113, %s114
      %p128 = scmp.eq.s32.totalorder %s29, 3
      %p129 = por %p127, %p128
      %p131 = scmp.ne.s32.totalorder %s114, %s130
      %p132 = scmp.eq.s32.totalorder %s29, 0
      %p133 = por %p131, %p132
      %s134 = ssub.s32 %s30, %s49
      %s135 = ssub.s32 %s31, %s45
      %s136 = sor.u32 %s134, %s135
      %p137 = scmp.eq.s32.totalorder %s136, 0
      %s139 = sadd.s32 %s138, 1
      %s140 = scalar_select %p137, %s138, %s139
      %p143 = pneg %p137
      %p144 = scmp.eq.s32.totalorder %s23, 3
      %p145 = por %p143, %p144
      %p146 = scmp.ne.s32.totalorder %s138, %s141
      %p147 = scmp.eq.s32.totalorder %s23, 0
      %p148 = por %p146, %p147
      %p149 = scmp.ne.s32.totalorder %s138, %s141
      %p150 = scmp.eq.s32.totalorder %s28, 3
      %p151 = por %p149, %p150
      %p152 = scmp.ne.s32.totalorder %s141, %s142
      %p153 = scmp.eq.s32.totalorder %s28, 0
      %p154 = por %p152, %p153
      %p155 = scmp.ne.s32.totalorder %s141, %s142
      %p156 = scmp.eq.s32.totalorder %s29, 3
      %p157 = por %p155, %p156
      %p159 = scmp.ne.s32.totalorder %s142, %s158
      %p160 = scmp.eq.s32.totalorder %s29, 0
      %p161 = por %p159, %p160
      %s163 = sadd.s32 %s162, 1
      %p166 = scmp.eq.s32.totalorder %s23, 3
      %p167 = scmp.ne.s32.totalorder %s162, %s164
      %p168 = scmp.eq.s32.totalorder %s23, 0
      %p169 = por %p167, %p168
      %p170 = scmp.ne.s32.totalorder %s162, %s164
      %p171 = scmp.eq.s32.totalorder %s28, 3
      %p172 = por %p170, %p171
      %p173 = scmp.ne.s32.totalorder %s164, %s165
      %p174 = scmp.eq.s32.totalorder %s28, 0
      %p175 = por %p173, %p174
      %p176 = scmp.ne.s32.totalorder %s164, %s165
      %p177 = scmp.eq.s32.totalorder %s29, 3
      %p178 = por %p176, %p177
      %p180 = scmp.ne.s32.totalorder %s165, %s179
      %p181 = scmp.eq.s32.totalorder %s29, 0
      %p182 = por %p180, %p181
      %s184 = sadd.s32 %s183, 1
      %p187 = scmp.eq.s32.totalorder %s23, 3
      %p188 = scmp.ne.s32.totalorder %s183, %s185
      %p189 = scmp.eq.s32.totalorder %s23, 0
      %p190 = por %p188, %p189
      %p191 = scmp.ne.s32.totalorder %s183, %s185
      %p192 = scmp.eq.s32.totalorder %s28, 3
      %p193 = por %p191, %p192
      %p194 = scmp.ne.s32.totalorder %s185, %s186
      %p195 = scmp.eq.s32.totalorder %s28, 0
      %p196 = por %p194, %p195
      %p197 = scmp.ne.s32.totalorder %s185, %s186
      %p198 = scmp.eq.s32.totalorder %s29, 3
      %p199 = por %p197, %p198
      %p201 = scmp.ne.s32.totalorder %s186, %s200
      %p202 = scmp.eq.s32.totalorder %s29, 0
      %p203 = por %p201, %p202
      %s205 = sadd.s32 %s204, 1
      %p208 = scmp.eq.s32.totalorder %s23, 3
      %p209 = scmp.ne.s32.totalorder %s204, %s206
      %p210 = scmp.eq.s32.totalorder %s23, 0
      %p211 = por %p209, %p210
      %p212 = scmp.ne.s32.totalorder %s204, %s206
      %p213 = scmp.eq.s32.totalorder %s28, 3
      %p214 = por %p212, %p213
      %p215 = scmp.ne.s32.totalorder %s206, %s207
      %p216 = scmp.eq.s32.totalorder %s28, 0
      %p217 = por %p215, %p216
      %p218 = scmp.ne.s32.totalorder %s206, %s207
      %p219 = scmp.eq.s32.totalorder %s29, 3
      %p220 = por %p218, %p219
      %p222 = scmp.ne.s32.totalorder %s207, %s221
      %p223 = scmp.eq.s32.totalorder %s29, 0
      %p224 = por %p222, %p223
      %s226 = sadd.s32 %s225, 1
      %p229 = scmp.eq.s32.totalorder %s23, 3
      %p230 = scmp.ne.s32.totalorder %s225, %s227
      %p231 = scmp.eq.s32.totalorder %s23, 0
      %p232 = por %p230, %p231
      %p233 = scmp.ne.s32.totalorder %s225, %s227
      %p234 = scmp.eq.s32.totalorder %s28, 3
      %p235 = por %p233, %p234
      %p236 = scmp.ne.s32.totalorder %s227, %s228
      %p237 = scmp.eq.s32.totalorder %s28, 0
      %p238 = por %p236, %p237
      %p239 = scmp.ne.s32.totalorder %s227, %s228
      %p240 = scmp.eq.s32.totalorder %s29, 3
      %p241 = por %p239, %p240
      %p243 = scmp.ne.s32.totalorder %s228, %s242
      %p244 = scmp.eq.s32.totalorder %s29, 0
      %p245 = por %p243, %p244
      %s246 = ssub.s32 %s30, %s49
      %s247 = ssub.s32 %s31, %s45
      %s248 = sor.u32 %s246, %s247
      %p249 = scmp.eq.s32.totalorder %s248, 0
      %s251 = sadd.s32 %s250, 1
      %s252 = scalar_select %p249, %s250, %s251
      %p255 = pneg %p249
      %p256 = scmp.eq.s32.totalorder %s23, 3
      %p257 = por %p255, %p256
      %p258 = scmp.ne.s32.totalorder %s250, %s253
      %p259 = scmp.eq.s32.totalorder %s23, 0
      %p260 = por %p258, %p259
      %p261 = scmp.ne.s32.totalorder %s250, %s253
      %p262 = scmp.eq.s32.totalorder %s28, 3
      %p263 = por %p261, %p262
      %p264 = scmp.ne.s32.totalorder %s253, %s254
      %p265 = scmp.eq.s32.totalorder %s28, 0
      %p266 = por %p264, %p265
      %p267 = scmp.ne.s32.totalorder %s253, %s254
      %p268 = scmp.eq.s32.totalorder %s29, 3
      %p269 = por %p267, %p268
      %p271 = scmp.ne.s32.totalorder %s254, %s270
      %p272 = scmp.eq.s32.totalorder %s29, 0
      %p273 = por %p271, %p272
      %p274 = scmp.le.s32.totalorder 1, %s23
      %p275 = scmp.lt.s32.totalorder %s23, 5
      %p276 = pnand %p274, %p275
      %p277 = pneg %p276
      // Predicated region
      $region9: #{tpu_custom_call.1} parent=5 // pred_check
        _
      $region10: #{tpu_custom_call.1} parent=5 // pred_check_branch
        %279 = sbr.rel (%p276) target = $region12
      $region11: #{tpu_custom_call.1} parent=5 // pred_region
        %s280 = ssub.s32 %s23, 1
        // Predicated region
        $region13: #{tpu_custom_call.1} parent=11 // pred_check
          %p281 = pneg %p175
        $region14: #{tpu_custom_call.1} parent=11 // pred_check_branch
          %283 = sbr.rel (%p281) target = $region16
        $region15: #{tpu_custom_call.1} parent=11 // pred_region
          _
        $region16: #{tpu_custom_call.1} parent=11 // pred_fallthru
          _
        // Predicated region
        $region17: #{tpu_custom_call.1} parent=11 // pred_check
          %p284 = pneg %p196
        $region18: #{tpu_custom_call.1} parent=11 // pred_check_branch
          %286 = sbr.rel (%p284) target = $region20
        $region19: #{tpu_custom_call.1} parent=11 // pred_region
          _
        $region20: #{tpu_custom_call.1} parent=11 // pred_fallthru
          _
        // Predicated region
        $region21: #{tpu_custom_call.1} parent=11 // pred_check
          %p287 = pneg %p217
        $region22: #{tpu_custom_call.1} parent=11 // pred_check_branch
          %289 = sbr.rel (%p287) target = $region24
        $region23: #{tpu_custom_call.1} parent=11 // pred_region
          _
        $region24: #{tpu_custom_call.1} parent=11 // pred_fallthru
          _
        // Predicated region
        $region25: #{tpu_custom_call.1} parent=11 // pred_check
          %p290 = pneg %p238
        $region26: #{tpu_custom_call.1} parent=11 // pred_check_branch
          %292 = sbr.rel (%p290) target = $region28
        $region27: #{tpu_custom_call.1} parent=11 // pred_region
          _
        $region28: #{tpu_custom_call.1} parent=11 // pred_fallthru
          _
      $region12: #{tpu_custom_call.1} parent=5 // pred_fallthru
        _
      %p293 = scmp.lt.s32.totalorder %s23, 4
      // Predicated region
      $region29: #{tpu_custom_call.1} parent=5 // pred_check
        %p294 = pneg %p293
      $region30: #{tpu_custom_call.1} parent=5 // pred_check_branch
        %296 = sbr.rel (%p294) target = $region32
      $region31: #{tpu_custom_call.1} parent=5 // pred_region
        // Predicated region
        $region33: #{tpu_custom_call.1} parent=31 // pred_check
          %p297 = pneg %p64
        $region34: #{tpu_custom_call.1} parent=31 // pred_check_branch
          %299 = sbr.rel (%p297) target = $region36
        $region35: #{tpu_custom_call.1} parent=31 // pred_region
          %s300 = sand.u32 %s54, 1
          %s301 = scalar_lea.sflag [#allocation7], %s300
          %s302 = sand.u32 %s54, 1
          %s303 = smul.addr %s302, 32
          %s304 = scalar_lea.vmem [#allocation6], %s303
          %s305 = smul.u32 4, %s31
          %s307 = ssub.s32 512, 512
          %308 = vsyncadd %s301, %s307
          %s309 = smul.addr %s30, 8
          %s310 = sadd.s32 %s305, %s309
          %s311 = smul.addr %s310, 128
          %s312 = scalar_lea.hbm %s0, %s311
          %s314 = sshll.u32 %s304, 4
          %s315 = int_to_ptr.vmem [resolvable:$true] %s314
          %317 = dma.hbm_to_vmem [thread:$0]  %s312, 512, %s315, %s301
        $region36: #{tpu_custom_call.1} parent=31 // pred_fallthru
          _
        // Predicated region
        $region37: #{tpu_custom_call.1} parent=31 // pred_check
          %p318 = pneg %p92
        $region38: #{tpu_custom_call.1} parent=31 // pred_check_branch
          %320 = sbr.rel (%p318) target = $region40
        $region39: #{tpu_custom_call.1} parent=31 // pred_region
          %s321 = smul.u32 2, %s32
          %p322 = scmp.lt.s32.totalorder %s30, 1
          %s323 = scalar_select %p322, %s30, 1
          %p324 = scmp.lt.s32.totalorder %s321, 1
          %s325 = scalar_select %p324, %s321, 1
          %s326 = smul.addr %s323, 2
          %s327 = sadd.s32 %s325, %s326
          %s328 = smul.addr %s327, 4
          %s329 = scalar_lea.vmem %s1, %s328
          %s330 = smul.u32 2, %s32
        $region40: #{tpu_custom_call.1} parent=31 // pred_fallthru
          _
        // Predicated region
        $region41: #{tpu_custom_call.1} parent=31 // pred_check
          %p331 = pneg %p120
        $region42: #{tpu_custom_call.1} parent=31 // pred_check_branch
          %333 = sbr.rel (%p331) target = $region44
        $region43: #{tpu_custom_call.1} parent=31 // pred_region
          %s334 = smul.u32 2, %s32
          %p335 = scmp.lt.s32.totalorder %s30, 1
          %s336 = scalar_select %p335, %s30, 1
          %p337 = scmp.lt.s32.totalorder %s334, 1
          %s338 = scalar_select %p337, %s334, 1
          %s339 = smul.addr %s336, 2
          %s340 = sadd.s32 %s338, %s339
          %s341 = smul.addr %s340, 4
          %s342 = scalar_lea.vmem %s2, %s341
          %s343 = smul.u32 2, %s32
        $region44: #{tpu_custom_call.1} parent=31 // pred_fallthru
          _
        // Predicated region
        $region45: #{tpu_custom_call.1} parent=31 // pred_check
          %p344 = pneg %p148
        $region46: #{tpu_custom_call.1} parent=31 // pred_check_branch
          %346 = sbr.rel (%p344) target = $region48
        $region47: #{tpu_custom_call.1} parent=31 // pred_region
          %s347 = sand.u32 %s138, 1
          %s348 = scalar_lea.sflag [#allocation10], %s347
          %s349 = sand.u32 %s138, 1
          %s350 = smul.addr %s349, 32
          %s351 = scalar_lea.vmem [#allocation9], %s350
          %s352 = smul.u32 4, %s31
          %s354 = ssub.s32 512, 512
          %355 = vsyncadd %s348, %s354
          %s356 = smul.addr %s30, 8
          %s357 = sadd.s32 %s352, %s356
          %s358 = smul.addr %s357, 128
          %s359 = scalar_lea.hbm %s3, %s358
          %s361 = sshll.u32 %s351, 4
          %s362 = int_to_ptr.vmem [resolvable:$true] %s361
          %364 = dma.hbm_to_vmem [thread:$0]  %s359, 512, %s362, %s348
        $region48: #{tpu_custom_call.1} parent=31 // pred_fallthru
          _
      $region32: #{tpu_custom_call.1} parent=5 // pred_fallthru
        _
      %p365 = scmp.le.s32.totalorder 1, %s23
      %p366 = scmp.lt.s32.totalorder %s23, 5
      %p367 = pnand %p365, %p366
      %p368 = pneg %p367
      // Predicated region
      $region49: #{tpu_custom_call.1} parent=5 // pred_check
        _
      $region50: #{tpu_custom_call.1} parent=5 // pred_check_branch
        %370 = sbr.rel (%p367) target = $region52
      $region51: #{tpu_custom_call.1} parent=5 // pred_region
        %s371 = ssub.s32 %s23, 1
        %s372 = sand.u32 %s57, 1
        %s373 = scalar_lea.sflag [#allocation7], %s372
        %s374 = sand.u32 %s57, 1
        %s375 = smul.addr %s374, 32
        %s376 = scalar_lea.vmem [#allocation6], %s375
        // Predicated region
        $region53: #{tpu_custom_call.1} parent=51 // pred_check
          %p377 = pneg %p70
        $region54: #{tpu_custom_call.1} parent=51 // pred_check_branch
          %379 = sbr.rel (%p377) target = $region56
        $region55: #{tpu_custom_call.1} parent=51 // pred_region
          %380 = dma.done %s373, 512
        $region56: #{tpu_custom_call.1} parent=51 // pred_fallthru
          _
        %s381 = sand.u32 %s141, 1
        %s382 = scalar_lea.sflag [#allocation10], %s381
        %s383 = sand.u32 %s141, 1
        %s384 = smul.addr %s383, 32
        %s385 = scalar_lea.vmem [#allocation9], %s384
        // Predicated region
        $region57: #{tpu_custom_call.1} parent=51 // pred_check
          %p386 = pneg %p154
        $region58: #{tpu_custom_call.1} parent=51 // pred_check_branch
          %388 = sbr.rel (%p386) target = $region60
        $region59: #{tpu_custom_call.1} parent=51 // pred_region
          %389 = dma.done %s382, 512
        $region60: #{tpu_custom_call.1} parent=51 // pred_fallthru
          _
        %s390 = sand.u32 %s57, 1
        %s391 = scalar_lea.sflag [#allocation7], %s390
        %s392 = sand.u32 %s57, 1
        %s393 = smul.addr %s392, 32
        %s394 = scalar_lea.vmem [#allocation6], %s393
        %p395 = pneg %p70
        %p396 = pneg %p67
        %s397 = smul.u32 2, %s35
        %p398 = scmp.lt.s32.totalorder %s33, 1
        %s399 = scalar_select %p398, %s33, 1
        %p400 = scmp.lt.s32.totalorder %s397, 1
        %s401 = scalar_select %p400, %s397, 1
        %s402 = smul.addr %s399, 2
        %s403 = sadd.s32 %s401, %s402
        %s404 = smul.addr %s403, 4
        %s405 = scalar_lea.vmem %s1, %s404
        %p406 = pneg %p98
        %p407 = pneg %p95
        %s408 = smul.u32 2, %s35
        %p409 = scmp.lt.s32.totalorder %s33, 1
        %s410 = scalar_select %p409, %s33, 1
        %p411 = scmp.lt.s32.totalorder %s408, 1
        %s412 = scalar_select %p411, %s408, 1
        %s413 = smul.addr %s410, 2
        %s414 = sadd.s32 %s412, %s413
        %s415 = smul.addr %s414, 4
        %s416 = scalar_lea.vmem %s2, %s415
        %p417 = pneg %p126
        %p418 = pneg %p123
        %s419 = sand.u32 %s141, 1
        %s420 = scalar_lea.sflag [#allocation10], %s419
        %s421 = sand.u32 %s141, 1
        %s422 = smul.addr %s421, 32
        %s423 = scalar_lea.vmem [#allocation9], %s422
        %p424 = pneg %p154
        %p425 = pneg %p151
        %p426 = pneg %p175
        %p427 = pneg %p172
        %p428 = pneg %p196
        %p429 = pneg %p193
        %p430 = pneg %p217
        %p431 = pneg %p214
        %p432 = pneg %p238
        %p433 = pneg %p235
        %p434 = pneg %p266
        %p435 = pneg %p263
        %s436 = sand.u32 %s253, 1
        %s437 = scalar_lea.sflag [#allocation8], %s436
        %s438 = sand.u32 %s253, 1
        %s439 = smul.addr %s438, 32
        %s440 = scalar_lea.vmem [#allocation11], %s439
        %s441 = smul.u32 4, %s34
        %s442 = smul.u32 2, %s35
        %p443 = scmp.lt.s32.totalorder %s33, 1
        %s444 = scalar_select %p443, %s33, 1
        %p445 = scmp.lt.s32.totalorder %s442, 1
        %s446 = scalar_select %p445, %s442, 1
        %s447 = smul.addr %s444, 2
        %s448 = sadd.s32 %s446, %s447
        %s449 = smul.addr %s448, 4
        %s450 = scalar_lea.vmem %s1, %s449
        %s451 = smul.u32 2, %s35
        %s452 = smul.u32 2, %s35
        %p453 = scmp.lt.s32.totalorder %s33, 1
        %s454 = scalar_select %p453, %s33, 1
        %p455 = scmp.lt.s32.totalorder %s452, 1
        %s456 = scalar_select %p455, %s452, 1
        %s457 = smul.addr %s454, 2
        %s458 = sadd.s32 %s456, %s457
        %s459 = smul.addr %s458, 4
        %s460 = scalar_lea.vmem %s2, %s459
        %s461 = smul.u32 2, %s35
        %s462 = smul.u32 4, %s34
        %s463 = smul.u32 4, %s34
        %p464 = scmp.eq.s32.totalorder %s35, 0
        // Predicated region
        $region61: #{tpu_custom_call.1} parent=51 // pred_check
          %p465 = pneg %p464
        $region62: #{tpu_custom_call.1} parent=51 // pred_check_branch
          %467 = sbr.rel (%p465) target = $region64
        $region63: #{tpu_custom_call.1} parent=51 // pred_region
          %v468 = vld [vmem:[%s4] sm:$0xf]
          %v469 = vld [vmem:[%s376] sm:$0xff]
          %v470 = vld [vmem:[%s376 + $0x8] sm:$0xff]
          %v471 = vld [vmem:[%s376 + $0x10] sm:$0xff]
          %v472 = vld [vmem:[%s376 + $0x18] sm:$0xff]
          %v473 = vld [vmem:[%s5] sm:$0xf]
          %475 = vset.pattern.permute.xlu0 0
          %476 = vperm.xlu0 %475, %v473
          %v477 = vpop.permute.xlu0 %476
          %vm479 = vcmask 64512
          %v481 = vsel %vm479, %v468, 0
          %v483 = vand.u32 %v470, 4294901760
          %484 = vmatprep.subr.mxu0 %v483
          %v485 = vand.u32 %v469, 4294901760
          %486 = vmatpush1.msra.mxu0 %v485
          %487 = vmatprep.subr.mxu0 0.0
          %488 = vmatpush1.msra.mxu0 0.0
          %489 = vmatprep.subr.mxu0 0.0
          %490 = vmatpush1.msra.mxu0 0.0
          %491 = vmatprep.subr.mxu0 0.0
          %492 = vmatpush1.msra.mxu0 0.0
          %493 = vmatprep.subr.mxu0 0.0
          %494 = vmatpush1.msra.mxu0 0.0
          %495 = vmatprep.subr.mxu0 0.0
          %496 = vmatpush1.msra.mxu0 0.0
          %497 = vmatprep.subr.mxu0 0.0
          %498 = vmatpush1.msra.mxu0 0.0
          %499 = vmatprep.subr.mxu0 0.0
          %500 = vmatpush1.msra.mxu0 0.0
          %501 = vmatprep.subr.mxu0 0.0
          %502 = vmatpush1.msra.mxu0 0.0
          %503 = vmatprep.subr.mxu0 0.0
          %504 = vmatpush1.msra.mxu0 0.0
          %505 = vmatprep.subr.mxu0 0.0
          %506 = vmatpush1.msra.mxu0 0.0
          %507 = vmatprep.subr.mxu0 0.0
          %508 = vmatpush1.msra.mxu0 0.0
          %509 = vmatprep.subr.mxu0 0.0
          %510 = vmatpush1.msra.mxu0 0.0
          %511 = vmatprep.subr.mxu0 0.0
          %512 = vmatpush1.msra.mxu0 0.0
          %513 = vmatprep.subr.mxu0 0.0
          %514 = vmatpush1.msra.mxu0 0.0
          %515 = vmatprep.subr.mxu0 0.0
          %516 = vmatpush1.msra.mxu0 0.0
          %517 = vmatprep.subr.mxu0 0.0
          %518 = vmatpush1.msra.mxu0 0.0
          %519 = vmatprep.subr.mxu0 0.0
          %520 = vmatpush1.msra.mxu0 0.0
          %521 = vmatprep.subr.mxu0 0.0
          %522 = vmatpush1.msra.mxu0 0.0
          %523 = vmatprep.subr.mxu0 0.0
          %524 = vmatpush1.msra.mxu0 0.0
          %525 = vmatprep.subr.mxu0 0.0
          %526 = vmatpush1.msra.mxu0 0.0
          %527 = vmatprep.subr.mxu0 0.0
          %528 = vmatpush1.msra.mxu0 0.0
          %529 = vmatprep.subr.mxu0 0.0
          %530 = vmatpush1.msra.mxu0 0.0
          %531 = vmatprep.subr.mxu0 0.0
          %532 = vmatpush1.msra.mxu0 0.0
          %533 = vmatprep.subr.mxu0 0.0
          %534 = vmatpush1.msra.mxu0 0.0
          %535 = vmatprep.subr.mxu0 0.0
          %536 = vmatpush1.msra.mxu0 0.0
          %537 = vmatprep.subr.mxu0 0.0
          %538 = vmatpush1.msra.mxu0 0.0
          %539 = vmatprep.subr.mxu0 0.0
          %540 = vmatpush1.msra.mxu0 0.0
          %541 = vmatprep.subr.mxu0 0.0
          %542 = vmatpush1.msra.mxu0 0.0
          %543 = vmatprep.subr.mxu0 0.0
          %544 = vmatpush1.msra.mxu0 0.0
          %545 = vmatprep.subr.mxu0 0.0
          %546 = vmatpush1.msra.mxu0 0.0
          %547 = vmatprep.subr.mxu0 0.0
          %548 = vmatpush1.msra.mxu0 0.0
          %549 = vmatprep.mubr.f32.mxu0 0.0
          %v550 = vand.u32 %v481, 4294901760
          %v551 = vsub.f32 %v481, %v550
          %v552 = vand.u32 %v551, 4294901760
          %v553 = vsub.f32 %v551, %v552
          %v554 = vand.u32 %v553, 4294901760
          %555 = vmatmul.mubr.f32.gmra.mrb[0].mxu0 %v554
          %v556 = vpop.f32.mrb[0].mxu0
          %v557 = vadd.f32 %v477, %v556
          %v558 = vpop.f32.mrb[0].mxu0
          %v559 = vadd.f32 %v477, %v558
          %560 = vdwg.mxu0
          %v561 = vand.u32 %v470, 4294901760
          %v562 = vsub.f32 %v470, %v561
          %v563 = vand.u32 %v562, 4294901760
          %v564 = vsub.f32 %v562, %v563
          %v565 = vand.u32 %v564, 4294901760
          %566 = vmatprep.subr.mxu0 %v565
          %v567 = vand.u32 %v469, 4294901760
          %v568 = vsub.f32 %v469, %v567
          %v569 = vand.u32 %v568, 4294901760
          %v570 = vsub.f32 %v568, %v569
          %v571 = vand.u32 %v570, 4294901760
          %572 = vmatpush1.msra.mxu0 %v571
          %573 = vmatprep.subr.mxu0 0.0
          %574 = vmatpush1.msra.mxu0 0.0
          %575 = vmatprep.subr.mxu0 0.0
          %576 = vmatpush1.msra.mxu0 0.0
          %577 = vmatprep.subr.mxu0 0.0
          %578 = vmatpush1.msra.mxu0 0.0
          %579 = vmatprep.subr.mxu0 0.0
          %580 = vmatpush1.msra.mxu0 0.0
          %581 = vmatprep.subr.mxu0 0.0
          %582 = vmatpush1.msra.mxu0 0.0
          %583 = vmatprep.subr.mxu0 0.0
          %584 = vmatpush1.msra.mxu0 0.0
          %585 = vmatprep.subr.mxu0 0.0
          %586 = vmatpush1.msra.mxu0 0.0
          %587 = vmatprep.subr.mxu0 0.0
          %588 = vmatpush1.msra.mxu0 0.0
          %589 = vmatprep.subr.mxu0 0.0
          %590 = vmatpush1.msra.mxu0 0.0
          %591 = vmatprep.subr.mxu0 0.0
          %592 = vmatpush1.msra.mxu0 0.0
          %593 = vmatprep.subr.mxu0 0.0
          %594 = vmatpush1.msra.mxu0 0.0
          %595 = vmatprep.subr.mxu0 0.0
          %596 = vmatpush1.msra.mxu0 0.0
          %597 = vmatprep.subr.mxu0 0.0
          %598 = vmatpush1.msra.mxu0 0.0
          %599 = vmatprep.subr.mxu0 0.0
          %600 = vmatpush1.msra.mxu0 0.0
          %601 = vmatprep.subr.mxu0 0.0
          %602 = vmatpush1.msra.mxu0 0.0
          %603 = vmatprep.subr.mxu0 0.0
          %604 = vmatpush1.msra.mxu0 0.0
          %605 = vmatprep.subr.mxu0 0.0
          %606 = vmatpush1.msra.mxu0 0.0
          %607 = vmatprep.subr.mxu0 0.0
          %608 = vmatpush1.msra.mxu0 0.0
          %609 = vmatprep.subr.mxu0 0.0
          %610 = vmatpush1.msra.mxu0 0.0
          %611 = vmatprep.subr.mxu0 0.0
          %612 = vmatpush1.msra.mxu0 0.0
          %613 = vmatprep.subr.mxu0 0.0
          %614 = vmatpush1.msra.mxu0 0.0
          %615 = vmatprep.subr.mxu0 0.0
          %616 = vmatpush1.msra.mxu0 0.0
          %617 = vmatprep.subr.mxu0 0.0
          %618 = vmatpush1.msra.mxu0 0.0
          %619 = vmatprep.subr.mxu0 0.0
          %620 = vmatpush1.msra.mxu0 0.0
          %621 = vmatprep.subr.mxu0 0.0
          %622 = vmatpush1.msra.mxu0 0.0
          %623 = vmatprep.subr.mxu0 0.0
          %624 = vmatpush1.msra.mxu0 0.0
          %625 = vmatprep.subr.mxu0 0.0
          %626 = vmatpush1.msra.mxu0 0.0
          %627 = vmatprep.subr.mxu0 0.0
          %628 = vmatpush1.msra.mxu0 0.0
          %629 = vmatprep.subr.mxu0 0.0
          %630 = vmatpush1.msra.mxu0 0.0
          %631 = vmatprep.subr.mxu0 0.0
          %632 = vmatpush1.msra.mxu0 0.0
          %633 = vmatprep.subr.mxu0 0.0
          %634 = vmatpush1.msra.mxu0 0.0
          %635 = vmatprep.mubr.f32.mxu0 0.0
          %v636 = vand.u32 %v481, 4294901760
          %637 = vmatmul.mubr.f32.gmra.mrb[0].mxu0 %v636
          %v638 = vpop.f32.mrb[0].mxu0
          %v639 = vadd.f32 %v557, %v638
          %v640 = vpop.f32.mrb[0].mxu0
          %v641 = vadd.f32 %v559, %v640
          %642 = vdwg.mxu0
          %v643 = vand.u32 %v470, 4294901760
          %v644 = vsub.f32 %v470, %v643
          %645 = vmatprep.subr.mxu0 %v644
          %v646 = vand.u32 %v469, 4294901760
          %v647 = vsub.f32 %v469, %v646
          %648 = vmatpush1.msra.mxu0 %v647
          %649 = vmatprep.subr.mxu0 0.0
          %650 = vmatpush1.msra.mxu0 0.0
          %651 = vmatprep.subr.mxu0 0.0
          %652 = vmatpush1.msra.mxu0 0.0
          %653 = vmatprep.subr.mxu0 0.0
          %654 = vmatpush1.msra.mxu0 0.0
          %655 = vmatprep.subr.mxu0 0.0
          %656 = vmatpush1.msra.mxu0 0.0
          %657 = vmatprep.subr.mxu0 0.0
          %658 = vmatpush1.msra.mxu0 0.0
          %659 = vmatprep.subr.mxu0 0.0
          %660 = vmatpush1.msra.mxu0 0.0
          %661 = vmatprep.subr.mxu0 0.0
          %662 = vmatpush1.msra.mxu0 0.0
          %663 = vmatprep.subr.mxu0 0.0
          %664 = vmatpush1.msra.mxu0 0.0
          %665 = vmatprep.subr.mxu0 0.0
          %666 = vmatpush1.msra.mxu0 0.0
          %667 = vmatprep.subr.mxu0 0.0
          %668 = vmatpush1.msra.mxu0 0.0
          %669 = vmatprep.subr.mxu0 0.0
          %670 = vmatpush1.msra.mxu0 0.0
          %671 = vmatprep.subr.mxu0 0.0
          %672 = vmatpush1.msra.mxu0 0.0
          %673 = vmatprep.subr.mxu0 0.0
          %674 = vmatpush1.msra.mxu0 0.0
          %675 = vmatprep.subr.mxu0 0.0
          %676 = vmatpush1.msra.mxu0 0.0
          %677 = vmatprep.subr.mxu0 0.0
          %678 = vmatpush1.msra.mxu0 0.0
          %679 = vmatprep.subr.mxu0 0.0
          %680 = vmatpush1.msra.mxu0 0.0
          %681 = vmatprep.subr.mxu0 0.0
          %682 = vmatpush1.msra.mxu0 0.0
          %683 = vmatprep.subr.mxu0 0.0
          %684 = vmatpush1.msra.mxu0 0.0
          %685 = vmatprep.subr.mxu0 0.0
          %686 = vmatpush1.msra.mxu0 0.0
          %687 = vmatprep.subr.mxu0 0.0
          %688 = vmatpush1.msra.mxu0 0.0
          %689 = vmatprep.subr.mxu0 0.0
          %690 = vmatpush1.msra.mxu0 0.0
          %691 = vmatprep.subr.mxu0 0.0
          %692 = vmatpush1.msra.mxu0 0.0
          %693 = vmatprep.subr.mxu0 0.0
          %694 = vmatpush1.msra.mxu0 0.0
          %695 = vmatprep.subr.mxu0 0.0
          %696 = vmatpush1.msra.mxu0 0.0
          %697 = vmatprep.subr.mxu0 0.0
          %698 = vmatpush1.msra.mxu0 0.0
          %699 = vmatprep.subr.mxu0 0.0
          %700 = vmatpush1.msra.mxu0 0.0
          %701 = vmatprep.subr.mxu0 0.0
          %702 = vmatpush1.msra.mxu0 0.0
          %703 = vmatprep.subr.mxu0 0.0
          %704 = vmatpush1.msra.mxu0 0.0
          %705 = vmatprep.subr.mxu0 0.0
          %706 = vmatpush1.msra.mxu0 0.0
          %707 = vmatprep.subr.mxu0 0.0
          %708 = vmatpush1.msra.mxu0 0.0
          %709 = vmatprep.subr.mxu0 0.0
          %710 = vmatpush1.msra.mxu0 0.0
          %711 = vmatprep.mubr.f32.mxu0 0.0
          %v712 = vand.u32 %v481, 4294901760
          %v713 = vsub.f32 %v481, %v712
          %714 = vmatmul.mubr.f32.gmra.mrb[0].mxu0 %v713
          %v715 = vpop.f32.mrb[0].mxu0
          %v716 = vadd.f32 %v639, %v715
          %v717 = vpop.f32.mrb[0].mxu0
          %v718 = vadd.f32 %v641, %v717
          %719 = vdwg.mxu0
          %v720 = vand.u32 %v470, 4294901760
          %721 = vmatprep.subr.mxu0 %v720
          %v722 = vand.u32 %v469, 4294901760
          %723 = vmatpush1.msra.mxu0 %v722
          %724 = vmatprep.subr.mxu0 0.0
          %725 = vmatpush1.msra.mxu0 0.0
          %726 = vmatprep.subr.mxu0 0.0
          %727 = vmatpush1.msra.mxu0 0.0
          %728 = vmatprep.subr.mxu0 0.0
          %729 = vmatpush1.msra.mxu0 0.0
          %730 = vmatprep.subr.mxu0 0.0
          %731 = vmatpush1.msra.mxu0 0.0
          %732 = vmatprep.subr.mxu0 0.0
          %733 = vmatpush1.msra.mxu0 0.0
          %734 = vmatprep.subr.mxu0 0.0
          %735 = vmatpush1.msra.mxu0 0.0
          %736 = vmatprep.subr.mxu0 0.0
          %737 = vmatpush1.msra.mxu0 0.0
          %738 = vmatprep.subr.mxu0 0.0
          %739 = vmatpush1.msra.mxu0 0.0
          %740 = vmatprep.subr.mxu0 0.0
          %741 = vmatpush1.msra.mxu0 0.0
          %742 = vmatprep.subr.mxu0 0.0
          %743 = vmatpush1.msra.mxu0 0.0
          %744 = vmatprep.subr.mxu0 0.0
          %745 = vmatpush1.msra.mxu0 0.0
          %746 = vmatprep.subr.mxu0 0.0
          %747 = vmatpush1.msra.mxu0 0.0
          %748 = vmatprep.subr.mxu0 0.0
          %749 = vmatpush1.msra.mxu0 0.0
          %750 = vmatprep.subr.mxu0 0.0
          %751 = vmatpush1.msra.mxu0 0.0
          %752 = vmatprep.subr.mxu0 0.0
          %753 = vmatpush1.msra.mxu0 0.0
          %754 = vmatprep.subr.mxu0 0.0
          %755 = vmatpush1.msra.mxu0 0.0
          %756 = vmatprep.subr.mxu0 0.0
          %757 = vmatpush1.msra.mxu0 0.0
          %758 = vmatprep.subr.mxu0 0.0
          %759 = vmatpush1.msra.mxu0 0.0
          %760 = vmatprep.subr.mxu0 0.0
          %761 = vmatpush1.msra.mxu0 0.0
          %762 = vmatprep.subr.mxu0 0.0
          %763 = vmatpush1.msra.mxu0 0.0
          %764 = vmatprep.subr.mxu0 0.0
          %765 = vmatpush1.msra.mxu0 0.0
          %766 = vmatprep.subr.mxu0 0.0
          %767 = vmatpush1.msra.mxu0 0.0
          %768 = vmatprep.subr.mxu0 0.0
          %769 = vmatpush1.msra.mxu0 0.0
          %770 = vmatprep.subr.mxu0 0.0
          %771 = vmatpush1.msra.mxu0 0.0
          %772 = vmatprep.subr.mxu0 0.0
          %773 = vmatpush1.msra.mxu0 0.0
          %774 = vmatprep.subr.mxu0 0.0
          %775 = vmatpush1.msra.mxu0 0.0
          %776 = vmatprep.subr.mxu0 0.0
          %777 = vmatpush1.msra.mxu0 0.0
          %778 = vmatprep.subr.mxu0 0.0
          %779 = vmatpush1.msra.mxu0 0.0
          %780 = vmatprep.subr.mxu0 0.0
          %781 = vmatpush1.msra.mxu0 0.0
          %782 = vmatprep.subr.mxu0 0.0
          %783 = vmatpush1.msra.mxu0 0.0
          %784 = vmatprep.subr.mxu0 0.0
          %785 = vmatpush1.msra.mxu0 0.0
          %786 = vmatprep.mubr.f32.mxu0 0.0
          %v787 = vand.u32 %v481, 4294901760
          %v788 = vsub.f32 %v481, %v787
          %v789 = vand.u32 %v788, 4294901760
          %790 = vmatmul.mubr.f32.gmra.mrb[0].mxu0 %v789
          %v791 = vpop.f32.mrb[0].mxu0
          %v792 = vadd.f32 %v716, %v791
          %v793 = vpop.f32.mrb[0].mxu0
          %v794 = vadd.f32 %v718, %v793
          %795 = vdwg.mxu0
          %v796 = vand.u32 %v470, 4294901760
          %v797 = vsub.f32 %v470, %v796
          %v798 = vand.u32 %v797, 4294901760
          %799 = vmatprep.subr.mxu0 %v798
          %v800 = vand.u32 %v469, 4294901760
          %v801 = vsub.f32 %v469, %v800
          %v802 = vand.u32 %v801, 4294901760
          %803 = vmatpush1.msra.mxu0 %v802
          %804 = vmatprep.subr.mxu0 0.0
          %805 = vmatpush1.msra.mxu0 0.0
          %806 = vmatprep.subr.mxu0 0.0
          %807 = vmatpush1.msra.mxu0 0.0
          %808 = vmatprep.subr.mxu0 0.0
          %809 = vmatpush1.msra.mxu0 0.0
          %810 = vmatprep.subr.mxu0 0.0
          %811 = vmatpush1.msra.mxu0 0.0
          %812 = vmatprep.subr.mxu0 0.0
          %813 = vmatpush1.msra.mxu0 0.0
          %814 = vmatprep.subr.mxu0 0.0
          %815 = vmatpush1.msra.mxu0 0.0
          %816 = vmatprep.subr.mxu0 0.0
          %817 = vmatpush1.msra.mxu0 0.0
          %818 = vmatprep.subr.mxu0 0.0
          %819 = vmatpush1.msra.mxu0 0.0
          %820 = vmatprep.subr.mxu0 0.0
          %821 = vmatpush1.msra.mxu0 0.0
          %822 = vmatprep.subr.mxu0 0.0
          %823 = vmatpush1.msra.mxu0 0.0
          %824 = vmatprep.subr.mxu0 0.0
          %825 = vmatpush1.msra.mxu0 0.0
          %826 = vmatprep.subr.mxu0 0.0
          %827 = vmatpush1.msra.mxu0 0.0
          %828 = vmatprep.subr.mxu0 0.0
          %829 = vmatpush1.msra.mxu0 0.0
          %830 = vmatprep.subr.mxu0 0.0
          %831 = vmatpush1.msra.mxu0 0.0
          %832 = vmatprep.subr.mxu0 0.0
          %833 = vmatpush1.msra.mxu0 0.0
          %834 = vmatprep.subr.mxu0 0.0
          %835 = vmatpush1.msra.mxu0 0.0
          %836 = vmatprep.subr.mxu0 0.0
          %837 = vmatpush1.msra.mxu0 0.0
          %838 = vmatprep.subr.mxu0 0.0
          %839 = vmatpush1.msra.mxu0 0.0
          %840 = vmatprep.subr.mxu0 0.0
          %841 = vmatpush1.msra.mxu0 0.0
          %842 = vmatprep.subr.mxu0 0.0
          %843 = vmatpush1.msra.mxu0 0.0
          %844 = vmatprep.subr.mxu0 0.0
          %845 = vmatpush1.msra.mxu0 0.0
          %846 = vmatprep.subr.mxu0 0.0
          %847 = vmatpush1.msra.mxu0 0.0
          %848 = vmatprep.subr.mxu0 0.0
          %849 = vmatpush1.msra.mxu0 0.0
          %850 = vmatprep.subr.mxu0 0.0
          %851 = vmatpush1.msra.mxu0 0.0
          %852 = vmatprep.subr.mxu0 0.0
          %853 = vmatpush1.msra.mxu0 0.0
          %854 = vmatprep.subr.mxu0 0.0
          %855 = vmatpush1.msra.mxu0 0.0
          %856 = vmatprep.subr.mxu0 0.0
          %857 = vmatpush1.msra.mxu0 0.0
          %858 = vmatprep.subr.mxu0 0.0
          %859 = vmatpush1.msra.mxu0 0.0
          %860 = vmatprep.subr.mxu0 0.0
          %861 = vmatpush1.msra.mxu0 0.0
          %862 = vmatprep.subr.mxu0 0.0
          %863 = vmatpush1.msra.mxu0 0.0
          %864 = vmatprep.subr.mxu0 0.0
          %865 = vmatpush1.msra.mxu0 0.0
          %866 = vmatprep.mubr.f32.mxu0 0.0
          %v867 = vand.u32 %v481, 4294901760
          %868 = vmatmul.mubr.f32.gmra.mrb[0].mxu0 %v867
          %v869 = vpop.f32.mrb[0].mxu0
          %v870 = vadd.f32 %v792, %v869
          %v871 = vpop.f32.mrb[0].mxu0
          %v872 = vadd.f32 %v794, %v871
          %873 = vdwg.mxu0
          %v874 = vand.u32 %v470, 4294901760
          %875 = vmatprep.subr.mxu0 %v874
          %v876 = vand.u32 %v469, 4294901760
          %877 = vmatpush1.msra.mxu0 %v876
          %878 = vmatprep.subr.mxu0 0.0
          %879 = vmatpush1.msra.mxu0 0.0
          %880 = vmatprep.subr.mxu0 0.0
          %881 = vmatpush1.msra.mxu0 0.0
          %882 = vmatprep.subr.mxu0 0.0
          %883 = vmatpush1.msra.mxu0 0.0
          %884 = vmatprep.subr.mxu0 0.0
          %885 = vmatpush1.msra.mxu0 0.0
          %886 = vmatprep.subr.mxu0 0.0
          %887 = vmatpush1.msra.mxu0 0.0
          %888 = vmatprep.subr.mxu0 0.0
          %889 = vmatpush1.msra.mxu0 0.0
          %890 = vmatprep.subr.mxu0 0.0
          %891 = vmatpush1.msra.mxu0 0.0
          %892 = vmatprep.subr.mxu0 0.0
          %893 = vmatpush1.msra.mxu0 0.0
          %894 = vmatprep.subr.mxu0 0.0
          %895 = vmatpush1.msra.mxu0 0.0
          %896 = vmatprep.subr.mxu0 0.0
          %897 = vmatpush1.msra.mxu0 0.0
          %898 = vmatprep.subr.mxu0 0.0
          %899 = vmatpush1.msra.mxu0 0.0
          %900 = vmatprep.subr.mxu0 0.0
          %901 = vmatpush1.msra.mxu0 0.0
          %902 = vmatprep.subr.mxu0 0.0
          %903 = vmatpush1.msra.mxu0 0.0
          %904 = vmatprep.subr.mxu0 0.0
          %905 = vmatpush1.msra.mxu0 0.0
          %906 = vmatprep.subr.mxu0 0.0
          %907 = vmatpush1.msra.mxu0 0.0
          %908 = vmatprep.subr.mxu0 0.0
          %909 = vmatpush1.msra.mxu0 0.0
          %910 = vmatprep.subr.mxu0 0.0
          %911 = vmatpush1.msra.mxu0 0.0
          %912 = vmatprep.subr.mxu0 0.0
          %913 = vmatpush1.msra.mxu0 0.0
          %914 = vmatprep.subr.mxu0 0.0
          %915 = vmatpush1.msra.mxu0 0.0
          %916 = vmatprep.subr.mxu0 0.0
          %917 = vmatpush1.msra.mxu0 0.0
          %918 = vmatprep.subr.mxu0 0.0
          %919 = vmatpush1.msra.mxu0 0.0
          %920 = vmatprep.subr.mxu0 0.0
          %921 = vmatpush1.msra.mxu0 0.0
          %922 = vmatprep.subr.mxu0 0.0
          %923 = vmatpush1.msra.mxu0 0.0
          %924 = vmatprep.subr.mxu0 0.0
          %925 = vmatpush1.msra.mxu0 0.0
          %926 = vmatprep.subr.mxu0 0.0
          %927 = vmatpush1.msra.mxu0 0.0
          %928 = vmatprep.subr.mxu0 0.0
          %929 = vmatpush1.msra.mxu0 0.0
          %930 = vmatprep.subr.mxu0 0.0
          %931 = vmatpush1.msra.mxu0 0.0
          %932 = vmatprep.subr.mxu0 0.0
          %933 = vmatpush1.msra.mxu0 0.0
          %934 = vmatprep.subr.mxu0 0.0
          %935 = vmatpush1.msra.mxu0 0.0
          %936 = vmatprep.subr.mxu0 0.0
          %937 = vmatpush1.msra.mxu0 0.0
          %938 = vmatprep.subr.mxu0 0.0
          %939 = vmatpush1.msra.mxu0 0.0
          %940 = vmatprep.mubr.f32.mxu0 0.0
          %v941 = vand.u32 %v481, 4294901760
          %942 = vmatmul.mubr.f32.gmra.mrb[0].mxu0 %v941
          %v943 = vpop.f32.mrb[0].mxu0
          %v944 = vadd.f32 %v870, %v943
          %v945 = vpop.f32.mrb[0].mxu0
          %v946 = vadd.f32 %v872, %v945
          %947 = vdwg.mxu0
          %v948 = vand.u32 %v472, 4294901760
          %949 = vmatprep.subr.mxu0 %v948
          %v950 = vand.u32 %v471, 4294901760
          %951 = vmatpush1.msra.mxu0 %v950
          %952 = vmatprep.subr.mxu0 0.0
          %953 = vmatpush1.msra.mxu0 0.0
          %954 = vmatprep.subr.mxu0 0.0
          %955 = vmatpush1.msra.mxu0 0.0
          %956 = vmatprep.subr.mxu0 0.0
          %957 = vmatpush1.msra.mxu0 0.0
          %958 = vmatprep.subr.mxu0 0.0
          %959 = vmatpush1.msra.mxu0 0.0
          %960 = vmatprep.subr.mxu0 0.0
          %961 = vmatpush1.msra.mxu0 0.0
          %962 = vmatprep.subr.mxu0 0.0
          %963 = vmatpush1.msra.mxu0 0.0
          %964 = vmatprep.subr.mxu0 0.0
          %965 = vmatpush1.msra.mxu0 0.0
          %966 = vmatprep.subr.mxu0 0.0
          %967 = vmatpush1.msra.mxu0 0.0
          %968 = vmatprep.subr.mxu0 0.0
          %969 = vmatpush1.msra.mxu0 0.0
          %970 = vmatprep.subr.mxu0 0.0
          %971 = vmatpush1.msra.mxu0 0.0
          %972 = vmatprep.subr.mxu0 0.0
          %973 = vmatpush1.msra.mxu0 0.0
          %974 = vmatprep.subr.mxu0 0.0
          %975 = vmatpush1.msra.mxu0 0.0
          %976 = vmatprep.subr.mxu0 0.0
          %977 = vmatpush1.msra.mxu0 0.0
          %978 = vmatprep.subr.mxu0 0.0
          %979 = vmatpush1.msra.mxu0 0.0
          %980 = vmatprep.subr.mxu0 0.0
          %981 = vmatpush1.msra.mxu0 0.0
          %982 = vmatprep.subr.mxu0 0.0
          %983 = vmatpush1.msra.mxu0 0.0
          %984 = vmatprep.subr.mxu0 0.0
          %985 = vmatpush1.msra.mxu0 0.0
          %986 = vmatprep.subr.mxu0 0.0
          %987 = vmatpush1.msra.mxu0 0.0
          %988 = vmatprep.subr.mxu0 0.0
          %989 = vmatpush1.msra.mxu0 0.0
          %990 = vmatprep.subr.mxu0 0.0
          %991 = vmatpush1.msra.mxu0 0.0
          %992 = vmatprep.subr.mxu0 0.0
          %993 = vmatpush1.msra.mxu0 0.0
          %994 = vmatprep.subr.mxu0 0.0
          %995 = vmatpush1.msra.mxu0 0.0
          %996 = vmatprep.subr.mxu0 0.0
          %997 = vmatpush1.msra.mxu0 0.0
          %998 = vmatprep.subr.mxu0 0.0
          %999 = vmatpush1.msra.mxu0 0.0
          %1000 = vmatprep.subr.mxu0 0.0
          %1001 = vmatpush1.msra.mxu0 0.0
          %1002 = vmatprep.subr.mxu0 0.0
          %1003 = vmatpush1.msra.mxu0 0.0
          %1004 = vmatprep.subr.mxu0 0.0
          %1005 = vmatpush1.msra.mxu0 0.0
          %1006 = vmatprep.subr.mxu0 0.0
          %1007 = vmatpush1.msra.mxu0 0.0
          %1008 = vmatprep.subr.mxu0 0.0
          %1009 = vmatpush1.msra.mxu0 0.0
          %1010 = vmatprep.subr.mxu0 0.0
          %1011 = vmatpush1.msra.mxu0 0.0
          %1012 = vmatprep.subr.mxu0 0.0
          %1013 = vmatpush1.msra.mxu0 0.0
          %1014 = vmatprep.mubr.f32.mxu0 0.0
          %v1015 = vand.u32 %v481, 4294901760
          %v1016 = vsub.f32 %v481, %v1015
          %v1017 = vand.u32 %v1016, 4294901760
          %v1018 = vsub.f32 %v1016, %v1017
          %v1019 = vand.u32 %v1018, 4294901760
          %1020 = vmatmul.mubr.f32.gmra.mrb[0].mxu0 %v1019
          %v1021 = vpop.f32.mrb[0].mxu0
          %v1022 = vadd.f32 %v477, %v1021
          %v1023 = vpop.f32.mrb[0].mxu0
          %v1024 = vadd.f32 %v477, %v1023
          %1025 = vdwg.mxu0
          %v1026 = vand.u32 %v472, 4294901760
          %v1027 = vsub.f32 %v472, %v1026
          %v1028 = vand.u32 %v1027, 4294901760
          %v1029 = vsub.f32 %v1027, %v1028
          %v1030 = vand.u32 %v1029, 4294901760
          %1031 = vmatprep.subr.mxu0 %v1030
          %v1032 = vand.u32 %v471, 4294901760
          %v1033 = vsub.f32 %v471, %v1032
          %v1034 = vand.u32 %v1033, 4294901760
          %v1035 = vsub.f32 %v1033, %v1034
          %v1036 = vand.u32 %v1035, 4294901760
          %1037 = vmatpush1.msra.mxu0 %v1036
          %1038 = vmatprep.subr.mxu0 0.0
          %1039 = vmatpush1.msra.mxu0 0.0
          %1040 = vmatprep.subr.mxu0 0.0
          %1041 = vmatpush1.msra.mxu0 0.0
          %1042 = vmatprep.subr.mxu0 0.0
          %1043 = vmatpush1.msra.mxu0 0.0
          %1044 = vmatprep.subr.mxu0 0.0
          %1045 = vmatpush1.msra.mxu0 0.0
          %1046 = vmatprep.subr.mxu0 0.0
          %1047 = vmatpush1.msra.mxu0 0.0
          %1048 = vmatprep.subr.mxu0 0.0
          %1049 = vmatpush1.msra.mxu0 0.0
          %1050 = vmatprep.subr.mxu0 0.0
          %1051 = vmatpush1.msra.mxu0 0.0
          %1052 = vmatprep.subr.mxu0 0.0
          %1053 = vmatpush1.msra.mxu0 0.0
          %1054 = vmatprep.subr.mxu0 0.0
          %1055 = vmatpush1.msra.mxu0 0.0
          %1056 = vmatprep.subr.mxu0 0.0
          %1057 = vmatpush1.msra.mxu0 0.0
          %1058 = vmatprep.subr.mxu0 0.0
          %1059 = vmatpush1.msra.mxu0 0.0
          %1060 = vmatprep.subr.mxu0 0.0
          %1061 = vmatpush1.msra.mxu0 0.0
          %1062 = vmatprep.subr.mxu0 0.0
          %1063 = vmatpush1.msra.mxu0 0.0
          %1064 = vmatprep.subr.mxu0 0.0
          %1065 = vmatpush1.msra.mxu0 0.0
          %1066 = vmatprep.subr.mxu0 0.0
          %1067 = vmatpush1.msra.mxu0 0.0
          %1068 = vmatprep.subr.mxu0 0.0
          %1069 = vmatpush1.msra.mxu0 0.0
          %1070 = vmatprep.subr.mxu0 0.0
          %1071 = vmatpush1.msra.mxu0 0.0
          %1072 = vmatprep.subr.mxu0 0.0
          %1073 = vmatpush1.msra.mxu0 0.0
          %1074 = vmatprep.subr.mxu0 0.0
          %1075 = vmatpush1.msra.mxu0 0.0
          %1076 = vmatprep.subr.mxu0 0.0
          %1077 = vmatpush1.msra.mxu0 0.0
          %1078 = vmatprep.subr.mxu0 0.0
          %1079 = vmatpush1.msra.mxu0 0.0
          %1080 = vmatprep.subr.mxu0 0.0
          %1081 = vmatpush1.msra.mxu0 0.0
          %1082 = vmatprep.subr.mxu0 0.0
          %1083 = vmatpush1.msra.mxu0 0.0
          %1084 = vmatprep.subr.mxu0 0.0
          %1085 = vmatpush1.msra.mxu0 0.0
          %1086 = vmatprep.subr.mxu0 0.0
          %1087 = vmatpush1.msra.mxu0 0.0
          %1088 = vmatprep.subr.mxu0 0.0
          %1089 = vmatpush1.msra.mxu0 0.0
          %1090 = vmatprep.subr.mxu0 0.0
          %1091 = vmatpush1.msra.mxu0 0.0
          %1092 = vmatprep.subr.mxu0 0.0
          %1093 = vmatpush1.msra.mxu0 0.0
          %1094 = vmatprep.subr.mxu0 0.0
          %1095 = vmatpush1.msra.mxu0 0.0
          %1096 = vmatprep.subr.mxu0 0.0
          %1097 = vmatpush1.msra.mxu0 0.0
          %1098 = vmatprep.subr.mxu0 0.0
          %1099 = vmatpush1.msra.mxu0 0.0
          %1100 = vmatprep.mubr.f32.mxu0 0.0
          %v1101 = vand.u32 %v481, 4294901760
          %1102 = vmatmul.mubr.f32.gmra.mrb[0].mxu0 %v1101
          %v1103 = vpop.f32.mrb[0].mxu0
          %v1104 = vadd.f32 %v1022, %v1103
          %v1105 = vpop.f32.mrb[0].mxu0
          %v1106 = vadd.f32 %v1024, %v1105
          %1107 = vdwg.mxu0
          %v1108 = vand.u32 %v472, 4294901760
          %v1109 = vsub.f32 %v472, %v1108
          %1110 = vmatprep.subr.mxu0 %v1109
          %v1111 = vand.u32 %v471, 4294901760
          %v1112 = vsub.f32 %v471, %v1111
          %1113 = vmatpush1.msra.mxu0 %v1112
          %1114 = vmatprep.subr.mxu0 0.0
          %1115 = vmatpush1.msra.mxu0 0.0
          %1116 = vmatprep.subr.mxu0 0.0
          %1117 = vmatpush1.msra.mxu0 0.0
          %1118 = vmatprep.subr.mxu0 0.0
          %1119 = vmatpush1.msra.mxu0 0.0
          %1120 = vmatprep.subr.mxu0 0.0
          %1121 = vmatpush1.msra.mxu0 0.0
          %1122 = vmatprep.subr.mxu0 0.0
          %1123 = vmatpush1.msra.mxu0 0.0
          %1124 = vmatprep.subr.mxu0 0.0
          %1125 = vmatpush1.msra.mxu0 0.0
          %1126 = vmatprep.subr.mxu0 0.0
          %1127 = vmatpush1.msra.mxu0 0.0
          %1128 = vmatprep.subr.mxu0 0.0
          %1129 = vmatpush1.msra.mxu0 0.0
          %1130 = vmatprep.subr.mxu0 0.0
          %1131 = vmatpush1.msra.mxu0 0.0
          %1132 = vmatprep.subr.mxu0 0.0
          %1133 = vmatpush1.msra.mxu0 0.0
          %1134 = vmatprep.subr.mxu0 0.0
          %1135 = vmatpush1.msra.mxu0 0.0
          %1136 = vmatprep.subr.mxu0 0.0
          %1137 = vmatpush1.msra.mxu0 0.0
          %1138 = vmatprep.subr.mxu0 0.0
          %1139 = vmatpush1.msra.mxu0 0.0
          %1140 = vmatprep.subr.mxu0 0.0
          %1141 = vmatpush1.msra.mxu0 0.0
          %1142 = vmatprep.subr.mxu0 0.0
          %1143 = vmatpush1.msra.mxu0 0.0
          %1144 = vmatprep.subr.mxu0 0.0
          %1145 = vmatpush1.msra.mxu0 0.0
          %1146 = vmatprep.subr.mxu0 0.0
          %1147 = vmatpush1.msra.mxu0 0.0
          %1148 = vmatprep.subr.mxu0 0.0
          %1149 = vmatpush1.msra.mxu0 0.0
          %1150 = vmatprep.subr.mxu0 0.0
          %1151 = vmatpush1.msra.mxu0 0.0
          %1152 = vmatprep.subr.mxu0 0.0
          %1153 = vmatpush1.msra.mxu0 0.0
          %1154 = vmatprep.subr.mxu0 0.0
          %1155 = vmatpush1.msra.mxu0 0.0
          %1156 = vmatprep.subr.mxu0 0.0
          %1157 = vmatpush1.msra.mxu0 0.0
          %1158 = vmatprep.subr.mxu0 0.0
          %1159 = vmatpush1.msra.mxu0 0.0
          %1160 = vmatprep.subr.mxu0 0.0
          %1161 = vmatpush1.msra.mxu0 0.0
          %1162 = vmatprep.subr.mxu0 0.0
          %1163 = vmatpush1.msra.mxu0 0.0
          %1164 = vmatprep.subr.mxu0 0.0
          %1165 = vmatpush1.msra.mxu0 0.0
          %1166 = vmatprep.subr.mxu0 0.0
          %1167 = vmatpush1.msra.mxu0 0.0
          %1168 = vmatprep.subr.mxu0 0.0
          %1169 = vmatpush1.msra.mxu0 0.0
          %1170 = vmatprep.subr.mxu0 0.0
          %1171 = vmatpush1.msra.mxu0 0.0
          %1172 = vmatprep.subr.mxu0 0.0
          %1173 = vmatpush1.msra.mxu0 0.0
          %1174 = vmatprep.subr.mxu0 0.0
          %1175 = vmatpush1.msra.mxu0 0.0
          %1176 = vmatprep.mubr.f32.mxu0 0.0
          %v1177 = vand.u32 %v481, 4294901760
          %v1178 = vsub.f32 %v481, %v1177
          %1179 = vmatmul.mubr.f32.gmra.mrb[0].mxu0 %v1178
          %v1180 = vpop.f32.mrb[0].mxu0
          %v1181 = vadd.f32 %v1104, %v1180
          %v1182 = vpop.f32.mrb[0].mxu0
          %v1183 = vadd.f32 %v1106, %v1182
          %1184 = vdwg.mxu0
          %v1185 = vand.u32 %v472, 4294901760
          %1186 = vmatprep.subr.mxu0 %v1185
          %v1187 = vand.u32 %v471, 4294901760
          %1188 = vmatpush1.msra.mxu0 %v1187
          %1189 = vmatprep.subr.mxu0 0.0
          %1190 = vmatpush1.msra.mxu0 0.0
          %1191 = vmatprep.subr.mxu0 0.0
          %1192 = vmatpush1.msra.mxu0 0.0
          %1193 = vmatprep.subr.mxu0 0.0
          %1194 = vmatpush1.msra.mxu0 0.0
          %1195 = vmatprep.subr.mxu0 0.0
          %1196 = vmatpush1.msra.mxu0 0.0
          %1197 = vmatprep.subr.mxu0 0.0
          %1198 = vmatpush1.msra.mxu0 0.0
          %1199 = vmatprep.subr.mxu0 0.0
          %1200 = vmatpush1.msra.mxu0 0.0
          %1201 = vmatprep.subr.mxu0 0.0
          %1202 = vmatpush1.msra.mxu0 0.0
          %1203 = vmatprep.subr.mxu0 0.0
          %1204 = vmatpush1.msra.mxu0 0.0
          %1205 = vmatprep.subr.mxu0 0.0
          %1206 = vmatpush1.msra.mxu0 0.0
          %1207 = vmatprep.subr.mxu0 0.0
          %1208 = vmatpush1.msra.mxu0 0.0
          %1209 = vmatprep.subr.mxu0 0.0
          %1210 = vmatpush1.msra.mxu0 0.0
          %1211 = vmatprep.subr.mxu0 0.0
          %1212 = vmatpush1.msra.mxu0 0.0
          %1213 = vmatprep.subr.mxu0 0.0
          %1214 = vmatpush1.msra.mxu0 0.0
          %1215 = vmatprep.subr.mxu0 0.0
          %1216 = vmatpush1.msra.mxu0 0.0
          %1217 = vmatprep.subr.mxu0 0.0
          %1218 = vmatpush1.msra.mxu0 0.0
          %1219 = vmatprep.subr.mxu0 0.0
          %1220 = vmatpush1.msra.mxu0 0.0
          %1221 = vmatprep.subr.mxu0 0.0
          %1222 = vmatpush1.msra.mxu0 0.0
          %1223 = vmatprep.subr.mxu0 0.0
          %1224 = vmatpush1.msra.mxu0 0.0
          %1225 = vmatprep.subr.mxu0 0.0
          %1226 = vmatpush1.msra.mxu0 0.0
          %1227 = vmatprep.subr.mxu0 0.0
          %1228 = vmatpush1.msra.mxu0 0.0
          %1229 = vmatprep.subr.mxu0 0.0
          %1230 = vmatpush1.msra.mxu0 0.0
          %1231 = vmatprep.subr.mxu0 0.0
          %1232 = vmatpush1.msra.mxu0 0.0
          %1233 = vmatprep.subr.mxu0 0.0
          %1234 = vmatpush1.msra.mxu0 0.0
          %1235 = vmatprep.subr.mxu0 0.0
          %1236 = vmatpush1.msra.mxu0 0.0
          %1237 = vmatprep.subr.mxu0 0.0
          %1238 = vmatpush1.msra.mxu0 0.0
          %1239 = vmatprep.subr.mxu0 0.0
          %1240 = vmatpush1.msra.mxu0 0.0
          %1241 = vmatprep.subr.mxu0 0.0
          %1242 = vmatpush1.msra.mxu0 0.0
          %1243 = vmatprep.subr.mxu0 0.0
          %1244 = vmatpush1.msra.mxu0 0.0
          %1245 = vmatprep.subr.mxu0 0.0
          %1246 = vmatpush1.msra.mxu0 0.0
          %1247 = vmatprep.subr.mxu0 0.0
          %1248 = vmatpush1.msra.mxu0 0.0
          %1249 = vmatprep.subr.mxu0 0.0
          %1250 = vmatpush1.msra.mxu0 0.0
          %1251 = vmatprep.mubr.f32.mxu0 0.0
          %v1252 = vand.u32 %v481, 4294901760
          %v1253 = vsub.f32 %v481, %v1252
          %v1254 = vand.u32 %v1253, 4294901760
          %1255 = vmatmul.mubr.f32.gmra.mrb[0].mxu0 %v1254
          %v1256 = vpop.f32.mrb[0].mxu0
          %v1257 = vadd.f32 %v1181, %v1256
          %v1258 = vpop.f32.mrb[0].mxu0
          %v1259 = vadd.f32 %v1183, %v1258
          %1260 = vdwg.mxu0
          %v1261 = vand.u32 %v472, 4294901760
          %v1262 = vsub.f32 %v472, %v1261
          %v1263 = vand.u32 %v1262, 4294901760
          %1264 = vmatprep.subr.mxu0 %v1263
          %v1265 = vand.u32 %v471, 4294901760
          %v1266 = vsub.f32 %v471, %v1265
          %v1267 = vand.u32 %v1266, 4294901760
          %1268 = vmatpush1.msra.mxu0 %v1267
          %1269 = vmatprep.subr.mxu0 0.0
          %1270 = vmatpush1.msra.mxu0 0.0
          %1271 = vmatprep.subr.mxu0 0.0
          %1272 = vmatpush1.msra.mxu0 0.0
          %1273 = vmatprep.subr.mxu0 0.0
          %1274 = vmatpush1.msra.mxu0 0.0
          %1275 = vmatprep.subr.mxu0 0.0
          %1276 = vmatpush1.msra.mxu0 0.0
          %1277 = vmatprep.subr.mxu0 0.0
          %1278 = vmatpush1.msra.mxu0 0.0
          %1279 = vmatprep.subr.mxu0 0.0
          %1280 = vmatpush1.msra.mxu0 0.0
          %1281 = vmatprep.subr.mxu0 0.0
          %1282 = vmatpush1.msra.mxu0 0.0
          %1283 = vmatprep.subr.mxu0 0.0
          %1284 = vmatpush1.msra.mxu0 0.0
          %1285 = vmatprep.subr.mxu0 0.0
          %1286 = vmatpush1.msra.mxu0 0.0
          %1287 = vmatprep.subr.mxu0 0.0
          %1288 = vmatpush1.msra.mxu0 0.0
          %1289 = vmatprep.subr.mxu0 0.0
          %1290 = vmatpush1.msra.mxu0 0.0
          %1291 = vmatprep.subr.mxu0 0.0
          %1292 = vmatpush1.msra.mxu0 0.0
          %1293 = vmatprep.subr.mxu0 0.0
          %1294 = vmatpush1.msra.mxu0 0.0
          %1295 = vmatprep.subr.mxu0 0.0
          %1296 = vmatpush1.msra.mxu0 0.0
          %1297 = vmatprep.subr.mxu0 0.0
          %1298 = vmatpush1.msra.mxu0 0.0
          %1299 = vmatprep.subr.mxu0 0.0
          %1300 = vmatpush1.msra.mxu0 0.0
          %1301 = vmatprep.subr.mxu0 0.0
          %1302 = vmatpush1.msra.mxu0 0.0
          %1303 = vmatprep.subr.mxu0 0.0
          %1304 = vmatpush1.msra.mxu0 0.0
          %1305 = vmatprep.subr.mxu0 0.0
          %1306 = vmatpush1.msra.mxu0 0.0
          %1307 = vmatprep.subr.mxu0 0.0
          %1308 = vmatpush1.msra.mxu0 0.0
          %1309 = vmatprep.subr.mxu0 0.0
          %1310 = vmatpush1.msra.mxu0 0.0
          %1311 = vmatprep.subr.mxu0 0.0
          %1312 = vmatpush1.msra.mxu0 0.0
          %1313 = vmatprep.subr.mxu0 0.0
          %1314 = vmatpush1.msra.mxu0 0.0
          %1315 = vmatprep.subr.mxu0 0.0
          %1316 = vmatpush1.msra.mxu0 0.0
          %1317 = vmatprep.subr.mxu0 0.0
          %1318 = vmatpush1.msra.mxu0 0.0
          %1319 = vmatprep.subr.mxu0 0.0
          %1320 = vmatpush1.msra.mxu0 0.0
          %1321 = vmatprep.subr.mxu0 0.0
          %1322 = vmatpush1.msra.mxu0 0.0
          %1323 = vmatprep.subr.mxu0 0.0
          %1324 = vmatpush1.msra.mxu0 0.0
          %1325 = vmatprep.subr.mxu0 0.0
          %1326 = vmatpush1.msra.mxu0 0.0
          %1327 = vmatprep.subr.mxu0 0.0
          %1328 = vmatpush1.msra.mxu0 0.0
          %1329 = vmatprep.subr.mxu0 0.0
          %1330 = vmatpush1.msra.mxu0 0.0
          %1331 = vmatprep.mubr.f32.mxu0 0.0
          %v1332 = vand.u32 %v481, 4294901760
          %1333 = vmatmul.mubr.f32.gmra.mrb[0].mxu0 %v1332
          %v1334 = vpop.f32.mrb[0].mxu0
          %v1335 = vadd.f32 %v1257, %v1334
          %v1336 = vpop.f32.mrb[0].mxu0
          %v1337 = vadd.f32 %v1259, %v1336
          %1338 = vdwg.mxu0
          %v1339 = vand.u32 %v472, 4294901760
          %1340 = vmatprep.subr.mxu0 %v1339
          %v1341 = vand.u32 %v471, 4294901760
          %1342 = vmatpush1.msra.mxu0 %v1341
          %1343 = vmatprep.subr.mxu0 0.0
          %1344 = vmatpush1.msra.mxu0 0.0
          %1345 = vmatprep.subr.mxu0 0.0
          %1346 = vmatpush1.msra.mxu0 0.0
          %1347 = vmatprep.subr.mxu0 0.0
          %1348 = vmatpush1.msra.mxu0 0.0
          %1349 = vmatprep.subr.mxu0 0.0
          %1350 = vmatpush1.msra.mxu0 0.0
          %1351 = vmatprep.subr.mxu0 0.0
          %1352 = vmatpush1.msra.mxu0 0.0
          %1353 = vmatprep.subr.mxu0 0.0
          %1354 = vmatpush1.msra.mxu0 0.0
          %1355 = vmatprep.subr.mxu0 0.0
          %1356 = vmatpush1.msra.mxu0 0.0
          %1357 = vmatprep.subr.mxu0 0.0
          %1358 = vmatpush1.msra.mxu0 0.0
          %1359 = vmatprep.subr.mxu0 0.0
          %1360 = vmatpush1.msra.mxu0 0.0
          %1361 = vmatprep.subr.mxu0 0.0
          %1362 = vmatpush1.msra.mxu0 0.0
          %1363 = vmatprep.subr.mxu0 0.0
          %1364 = vmatpush1.msra.mxu0 0.0
          %1365 = vmatprep.subr.mxu0 0.0
          %1366 = vmatpush1.msra.mxu0 0.0
          %1367 = vmatprep.subr.mxu0 0.0
          %1368 = vmatpush1.msra.mxu0 0.0
          %1369 = vmatprep.subr.mxu0 0.0
          %1370 = vmatpush1.msra.mxu0 0.0
          %1371 = vmatprep.subr.mxu0 0.0
          %1372 = vmatpush1.msra.mxu0 0.0
          %1373 = vmatprep.subr.mxu0 0.0
          %1374 = vmatpush1.msra.mxu0 0.0
          %1375 = vmatprep.subr.mxu0 0.0
          %1376 = vmatpush1.msra.mxu0 0.0
          %1377 = vmatprep.subr.mxu0 0.0
          %1378 = vmatpush1.msra.mxu0 0.0
          %1379 = vmatprep.subr.mxu0 0.0
          %1380 = vmatpush1.msra.mxu0 0.0
          %1381 = vmatprep.subr.mxu0 0.0
          %1382 = vmatpush1.msra.mxu0 0.0
          %1383 = vmatprep.subr.mxu0 0.0
          %1384 = vmatpush1.msra.mxu0 0.0
          %1385 = vmatprep.subr.mxu0 0.0
          %1386 = vmatpush1.msra.mxu0 0.0
          %1387 = vmatprep.subr.mxu0 0.0
          %1388 = vmatpush1.msra.mxu0 0.0
          %1389 = vmatprep.subr.mxu0 0.0
          %1390 = vmatpush1.msra.mxu0 0.0
          %1391 = vmatprep.subr.mxu0 0.0
          %1392 = vmatpush1.msra.mxu0 0.0
          %1393 = vmatprep.subr.mxu0 0.0
          %1394 = vmatpush1.msra.mxu0 0.0
          %1395 = vmatprep.subr.mxu0 0.0
          %1396 = vmatpush1.msra.mxu0 0.0
          %1397 = vmatprep.subr.mxu0 0.0
          %1398 = vmatpush1.msra.mxu0 0.0
          %1399 = vmatprep.subr.mxu0 0.0
          %1400 = vmatpush1.msra.mxu0 0.0
          %1401 = vmatprep.subr.mxu0 0.0
          %1402 = vmatpush1.msra.mxu0 0.0
          %1403 = vmatprep.subr.mxu0 0.0
          %1404 = vmatpush1.msra.mxu0 0.0
          %1405 = vmatprep.mubr.f32.mxu0 0.0
          %v1406 = vand.u32 %v481, 4294901760
          %1407 = vmatmul.mubr.f32.gmra.mrb[0].mxu0 %v1406
          %v1408 = vpop.f32.mrb[0].mxu0
          %v1409 = vadd.f32 %v1335, %v1408
          %v1410 = vpop.f32.mrb[0].mxu0
          %v1411 = vadd.f32 %v1337, %v1410
          %1412 = vdwg.mxu0
          %v1417 = vcombine.low %v944, %v946
          %v1418 = vcombine.low %v1409, %v1411
          %1421 = vst [vmem:[#allocation2] sm:$0xff] %v1417
          %1422 = vst [vmem:[#allocation2 + $0x8] sm:$0xff] %v1418
          %v1423 = vlaneseq
          %vm1424 = vcmp.ge.s32.totalorder %v1423, 0
          %vm1425 = vcmp.lt.s32.totalorder %v1423, 512
          %vm1426 = vmand %vm1424, %vm1425
          %1427 = vst.msk [vmem:[#allocation3] sm:$0xf] %vm1426, -inf
          %1428 = vst.msk [vmem:[#allocation4] sm:$0xf] %vm1426, 0.0
          %1429 = vst [vmem:[#allocation5] sm:$0xff] 0.0
          %1430 = vst [vmem:[#allocation5 + $0x8] sm:$0xff] 0.0
        $region64: #{tpu_custom_call.1} parent=51 // pred_fallthru
          _
        %v1431 = vld [vmem:[%s450] sm:$0xff]
        %v1432 = vld [vmem:[%s460] sm:$0xff]
        %v1433 = vld [vmem:[#allocation2] sm:$0xff]
        %v1434 = vld [vmem:[#allocation2 + $0x8] sm:$0xff]
        %v1436 = vcombine.high %v1431, %v1431
        %1438 = vxpose.xlu0.b32.start [1/16] %v1431, 128
        %1439 = vxpose.xlu0.b32.cont [2/16] 0.0, 128
        %1440 = vxpose.xlu0.b32.cont [3/16] 0.0, 128
        %1441 = vxpose.xlu0.b32.cont [4/16] 0.0, 128
        %1442 = vxpose.xlu0.b32.cont [5/16] 0.0, 128
        %1443 = vxpose.xlu0.b32.cont [6/16] 0.0, 128
        %1444 = vxpose.xlu0.b32.cont [7/16] 0.0, 128
        %1445 = vxpose.xlu0.b32.cont [8/16] 0.0, 128
        %1446 = vxpose.xlu0.b32.cont [9/16] 0.0, 128
        %1447 = vxpose.xlu0.b32.cont [10/16] 0.0, 128
        %1448 = vxpose.xlu0.b32.cont [11/16] 0.0, 128
        %1449 = vxpose.xlu0.b32.cont [12/16] 0.0, 128
        %1450 = vxpose.xlu0.b32.cont [13/16] 0.0, 128
        %1451 = vxpose.xlu0.b32.cont [14/16] 0.0, 128
        %1452 = vxpose.xlu0.b32.cont [15/16] 0.0, 128
        %1453 = vxpose.xlu0.b32.end [16/16] 0.0, 128
        %v1454 = vpop.trf.xlu0
        %v1455 = vpop.trf.xlu0
        %v1456 = vpop.trf.xlu0
        %v1457 = vpop.trf.xlu0
        %v1458 = vpop.trf.xlu0
        %v1459 = vpop.trf.xlu0
        %v1460 = vpop.trf.xlu0
        %v1461 = vpop.trf.xlu0
        %v1462 = vpop.trf.xlu0
        %v1463 = vpop.trf.xlu0
        %v1464 = vpop.trf.xlu0
        %v1465 = vpop.trf.xlu0
        %v1466 = vpop.trf.xlu0
        %v1467 = vpop.trf.xlu0
        %v1468 = vpop.trf.xlu0
        %v1469 = vpop.trf.xlu0
        %1470 = vxpose.xlu0.b32.start [1/16] %v1436, 128
        %1471 = vxpose.xlu0.b32.cont [2/16] 0.0, 128
        %1472 = vxpose.xlu0.b32.cont [3/16] 0.0, 128
        %1473 = vxpose.xlu0.b32.cont [4/16] 0.0, 128
        %1474 = vxpose.xlu0.b32.cont [5/16] 0.0, 128
        %1475 = vxpose.xlu0.b32.cont [6/16] 0.0, 128
        %1476 = vxpose.xlu0.b32.cont [7/16] 0.0, 128
        %1477 = vxpose.xlu0.b32.cont [8/16] 0.0, 128
        %1478 = vxpose.xlu0.b32.cont [9/16] 0.0, 128
        %1479 = vxpose.xlu0.b32.cont [10/16] 0.0, 128
        %1480 = vxpose.xlu0.b32.cont [11/16] 0.0, 128
        %1481 = vxpose.xlu0.b32.cont [12/16] 0.0, 128
        %1482 = vxpose.xlu0.b32.cont [13/16] 0.0, 128
        %1483 = vxpose.xlu0.b32.cont [14/16] 0.0, 128
        %1484 = vxpose.xlu0.b32.cont [15/16] 0.0, 128
        %1485 = vxpose.xlu0.b32.end [16/16] 0.0, 128
        %v1486 = vpop.trf.xlu0
        %v1487 = vpop.trf.xlu0
        %v1488 = vpop.trf.xlu0
        %v1489 = vpop.trf.xlu0
        %v1490 = vpop.trf.xlu0
        %v1491 = vpop.trf.xlu0
        %v1492 = vpop.trf.xlu0
        %v1493 = vpop.trf.xlu0
        %v1494 = vpop.trf.xlu0
        %v1495 = vpop.trf.xlu0
        %v1496 = vpop.trf.xlu0
        %v1497 = vpop.trf.xlu0
        %v1498 = vpop.trf.xlu0
        %v1499 = vpop.trf.xlu0
        %v1500 = vpop.trf.xlu0
        %v1501 = vpop.trf.xlu0
        %v1504 = vcombine.high %v1433, %v1433
        %v1505 = vcombine.high %v1434, %v1434
        %vm1506 = vcmask 31744
        %v1508 = vsel %vm1506, %v1454, 0
        %v1511 = vsel %vm1506, %v1455, 0
        %v1514 = vsel %vm1506, %v1456, 0
        %v1517 = vsel %vm1506, %v1457, 0
        %v1520 = vsel %vm1506, %v1458, 0
        %v1523 = vsel %vm1506, %v1459, 0
        %v1526 = vsel %vm1506, %v1460, 0
        %v1529 = vsel %vm1506, %v1461, 0
        %v1532 = vsel %vm1506, %v1462, 0
        %v1535 = vsel %vm1506, %v1463, 0
        %v1538 = vsel %vm1506, %v1464, 0
        %v1541 = vsel %vm1506, %v1465, 0
        %v1544 = vsel %vm1506, %v1466, 0
        %v1547 = vsel %vm1506, %v1467, 0
        %v1550 = vsel %vm1506, %v1468, 0
        %v1553 = vsel %vm1506, %v1469, 0
        %v1556 = vsel %vm1506, %v1486, 0
        %v1559 = vsel %vm1506, %v1487, 0
        %v1562 = vsel %vm1506, %v1488, 0
        %v1565 = vsel %vm1506, %v1489, 0
        %v1568 = vsel %vm1506, %v1490, 0
        %v1571 = vsel %vm1506, %v1491, 0
        %v1574 = vsel %vm1506, %v1492, 0
        %v1577 = vsel %vm1506, %v1493, 0
        %v1580 = vsel %vm1506, %v1494, 0
        %v1583 = vsel %vm1506, %v1495, 0
        %v1586 = vsel %vm1506, %v1496, 0
        %v1589 = vsel %vm1506, %v1497, 0
        %v1592 = vsel %vm1506, %v1498, 0
        %v1595 = vsel %vm1506, %v1499, 0
        %v1598 = vsel %vm1506, %v1500, 0
        %v1601 = vsel %vm1506, %v1501, 0
        %vm1603 = vcmask 1043456
        %v1604 = vsel %vm1603, %v1433, 0
        %v1606 = vsel %vm1603, %v1504, 0
        %v1608 = vsel %vm1603, %v1434, 0
        %v1610 = vsel %vm1603, %v1505, 0
        %v1612 = vand.u32 %v1606, 4294901760
        %1613 = vmatprep.subr.mxu0 %v1612
        %v1614 = vand.u32 %v1604, 4294901760
        %1615 = vmatpush1.msra.mxu0 %v1614
        %1616 = vmatprep.subr.mxu0 0.0
        %1617 = vmatpush1.msra.mxu0 0.0
        %1618 = vmatprep.subr.mxu0 0.0
        %1619 = vmatpush1.msra.mxu0 0.0
        %1620 = vmatprep.subr.mxu0 0.0
        %1621 = vmatpush1.msra.mxu0 0.0
        %1622 = vmatprep.subr.mxu0 0.0
        %1623 = vmatpush1.msra.mxu0 0.0
        %1624 = vmatprep.subr.mxu0 0.0
        %1625 = vmatpush1.msra.mxu0 0.0
        %1626 = vmatprep.subr.mxu0 0.0
        %1627 = vmatpush1.msra.mxu0 0.0
        %1628 = vmatprep.subr.mxu0 0.0
        %1629 = vmatpush1.msra.mxu0 0.0
        %1630 = vmatprep.subr.mxu0 0.0
        %1631 = vmatpush1.msra.mxu0 0.0
        %1632 = vmatprep.subr.mxu0 0.0
        %1633 = vmatpush1.msra.mxu0 0.0
        %1634 = vmatprep.subr.mxu0 0.0
        %1635 = vmatpush1.msra.mxu0 0.0
        %1636 = vmatprep.subr.mxu0 0.0
        %1637 = vmatpush1.msra.mxu0 0.0
        %1638 = vmatprep.subr.mxu0 0.0
        %1639 = vmatpush1.msra.mxu0 0.0
        %1640 = vmatprep.subr.mxu0 0.0
        %1641 = vmatpush1.msra.mxu0 0.0
        %1642 = vmatprep.subr.mxu0 0.0
        %1643 = vmatpush1.msra.mxu0 0.0
        %1644 = vmatprep.subr.mxu0 0.0
        %1645 = vmatpush1.msra.mxu0 0.0
        %1646 = vmatprep.subr.mxu0 0.0
        %1647 = vmatpush1.msra.mxu0 0.0
        %1648 = vmatprep.subr.mxu0 0.0
        %1649 = vmatpush1.msra.mxu0 0.0
        %1650 = vmatprep.subr.mxu0 0.0
        %1651 = vmatpush1.msra.mxu0 0.0
        %1652 = vmatprep.subr.mxu0 0.0
        %1653 = vmatpush1.msra.mxu0 0.0
        %1654 = vmatprep.subr.mxu0 0.0
        %1655 = vmatpush1.msra.mxu0 0.0
        %1656 = vmatprep.subr.mxu0 0.0
        %1657 = vmatpush1.msra.mxu0 0.0
        %1658 = vmatprep.subr.mxu0 0.0
        %1659 = vmatpush1.msra.mxu0 0.0
        %1660 = vmatprep.subr.mxu0 0.0
        %1661 = vmatpush1.msra.mxu0 0.0
        %1662 = vmatprep.subr.mxu0 0.0
        %1663 = vmatpush1.msra.mxu0 0.0
        %1664 = vmatprep.subr.mxu0 0.0
        %1665 = vmatpush1.msra.mxu0 0.0
        %1666 = vmatprep.subr.mxu0 0.0
        %1667 = vmatpush1.msra.mxu0 0.0
        %1668 = vmatprep.subr.mxu0 0.0
        %1669 = vmatpush1.msra.mxu0 0.0
        %1670 = vmatprep.subr.mxu0 0.0
        %1671 = vmatpush1.msra.mxu0 0.0
        %1672 = vmatprep.subr.mxu0 0.0
        %1673 = vmatpush1.msra.mxu0 0.0
        %1674 = vmatprep.subr.mxu0 0.0
        %1675 = vmatpush1.msra.mxu0 0.0
        %1676 = vmatprep.subr.mxu0 0.0
        %1677 = vmatpush1.msra.mxu0 0.0
        %1678 = vmatprep.mubr.f32.mxu0 0.0
        %v1679 = vand.u32 %v1508, 4294901760
        %v1680 = vsub.f32 %v1508, %v1679
        %v1681 = vand.u32 %v1680, 4294901760
        %v1682 = vsub.f32 %v1680, %v1681
        %v1683 = vand.u32 %v1682, 4294901760
        %1684 = vmatmul.mubr.f32.gmra.mrb[0].mxu0 %v1683
        %v1685 = vpop.f32.mrb[0].mxu0
        %v1686 = vadd.f32 0.0, %v1685
        %v1687 = vpop.f32.mrb[0].mxu0
        %v1688 = vadd.f32 0.0, %v1687
        %1689 = vmatprep.mubr.f32.mxu0 0.0
        %v1690 = vand.u32 %v1511, 4294901760
        %v1691 = vsub.f32 %v1511, %v1690
        %v1692 = vand.u32 %v1691, 4294901760
        %v1693 = vsub.f32 %v1691, %v1692
        %v1694 = vand.u32 %v1693, 4294901760
        %1695 = vmatmul.mubr.f32.gmra.mrb[0].mxu0 %v1694
        %v1696 = vpop.f32.mrb[0].mxu0
        %v1697 = vadd.f32 0.0, %v1696
        %v1698 = vpop.f32.mrb[0].mxu0
        %v1699 = vadd.f32 0.0, %v1698
        %1700 = vmatprep.mubr.f32.mxu0 0.0
        %v1701 = vand.u32 %v1514, 4294901760
        %v1702 = vsub.f32 %v1514, %v1701
        %v1703 = vand.u32 %v1702, 4294901760
        %v1704 = vsub.f32 %v1702, %v1703
        %v1705 = vand.u32 %v1704, 4294901760
        %1706 = vmatmul.mubr.f32.gmra.mrb[0].mxu0 %v1705
        %v1707 = vpop.f32.mrb[0].mxu0
        %v1708 = vadd.f32 0.0, %v1707
        %v1709 = vpop.f32.mrb[0].mxu0
        %v1710 = vadd.f32 0.0, %v1709
        %1711 = vmatprep.mubr.f32.mxu0 0.0
        %v1712 = vand.u32 %v1517, 4294901760
        %v1713 = vsub.f32 %v1517, %v1712
        %v1714 = vand.u32 %v1713, 4294901760
        %v1715 = vsub.f32 %v1713, %v1714
        %v1716 = vand.u32 %v1715, 4294901760
        %1717 = vmatmul.mubr.f32.gmra.mrb[0].mxu0 %v1716
        %v1718 = vpop.f32.mrb[0].mxu0
        %v1719 = vadd.f32 0.0, %v1718
        %v1720 = vpop.f32.mrb[0].mxu0
        %v1721 = vadd.f32 0.0, %v1720
        %1722 = vmatprep.mubr.f32.mxu0 0.0
        %v1723 = vand.u32 %v1520, 4294901760
        %v1724 = vsub.f32 %v1520, %v1723
        %v1725 = vand.u32 %v1724, 4294901760
        %v1726 = vsub.f32 %v1724, %v1725
        %v1727 = vand.u32 %v1726, 4294901760
        %1728 = vmatmul.mubr.f32.gmra.mrb[0].mxu0 %v1727
        %v1729 = vpop.f32.mrb[0].mxu0
        %v1730 = vadd.f32 0.0, %v1729
        %v1731 = vpop.f32.mrb[0].mxu0
        %v1732 = vadd.f32 0.0, %v1731
        %1733 = vmatprep.mubr.f32.mxu0 0.0
        %v1734 = vand.u32 %v1523, 4294901760
        %v1735 = vsub.f32 %v1523, %v1734
        %v1736 = vand.u32 %v1735, 4294901760
        %v1737 = vsub.f32 %v1735, %v1736
        %v1738 = vand.u32 %v1737, 4294901760
        %1739 = vmatmul.mubr.f32.gmra.mrb[0].mxu0 %v1738
        %v1740 = vpop.f32.mrb[0].mxu0
        %v1741 = vadd.f32 0.0, %v1740
        %v1742 = vpop.f32.mrb[0].mxu0
        %v1743 = vadd.f32 0.0, %v1742
        %1744 = vmatprep.mubr.f32.mxu0 0.0
        %v1745 = vand.u32 %v1526, 4294901760
        %v1746 = vsub.f32 %v1526, %v1745
        %v1747 = vand.u32 %v1746, 4294901760
        %v1748 = vsub.f32 %v1746, %v1747
        %v1749 = vand.u32 %v1748, 4294901760
        %1750 = vmatmul.mubr.f32.gmra.mrb[0].mxu0 %v1749
        %v1751 = vpop.f32.mrb[0].mxu0
        %v1752 = vadd.f32 0.0, %v1751
        %v1753 = vpop.f32.mrb[0].mxu0
        %v1754 = vadd.f32 0.0, %v1753
        %1755 = vmatprep.mubr.f32.mxu0 0.0
        %v1756 = vand.u32 %v1529, 4294901760
        %v1757 = vsub.f32 %v1529, %v1756
        %v1758 = vand.u32 %v1757, 4294901760
        %v1759 = vsub.f32 %v1757, %v1758
        %v1760 = vand.u32 %v1759, 4294901760
        %1761 = vmatmul.mubr.f32.gmra.mrb[0].mxu0 %v1760
        %v1762 = vpop.f32.mrb[0].mxu0
        %v1763 = vadd.f32 0.0, %v1762
        %v1764 = vpop.f32.mrb[0].mxu0
        %v1765 = vadd.f32 0.0, %v1764
        %1766 = vmatprep.mubr.f32.mxu0 0.0
        %v1767 = vand.u32 %v1532, 4294901760
        %v1768 = vsub.f32 %v1532, %v1767
        %v1769 = vand.u32 %v1768, 4294901760
        %v1770 = vsub.f32 %v1768, %v1769
        %v1771 = vand.u32 %v1770, 4294901760
        %1772 = vmatmul.mubr.f32.gmra.mrb[0].mxu0 %v1771
        %v1773 = vpop.f32.mrb[0].mxu0
        %v1774 = vadd.f32 0.0, %v1773
        %v1775 = vpop.f32.mrb[0].mxu0
        %v1776 = vadd.f32 0.0, %v1775
        %1777 = vmatprep.mubr.f32.mxu0 0.0
        %v1778 = vand.u32 %v1535, 4294901760
        %v1779 = vsub.f32 %v1535, %v1778
        %v1780 = vand.u32 %v1779, 4294901760
        %v1781 = vsub.f32 %v1779, %v1780
        %v1782 = vand.u32 %v1781, 4294901760
        %1783 = vmatmul.mubr.f32.gmra.mrb[0].mxu0 %v1782
        %v1784 = vpop.f32.mrb[0].mxu0
        %v1785 = vadd.f32 0.0, %v1784
        %v1786 = vpop.f32.mrb[0].mxu0
        %v1787 = vadd.f32 0.0, %v1786
        %1788 = vmatprep.mubr.f32.mxu0 0.0
        %v1789 = vand.u32 %v1538, 4294901760
        %v1790 = vsub.f32 %v1538, %v1789
        %v1791 = vand.u32 %v1790, 4294901760
        %v1792 = vsub.f32 %v1790, %v1791
        %v1793 = vand.u32 %v1792, 4294901760
        %1794 = vmatmul.mubr.f32.gmra.mrb[0].mxu0 %v1793
        %v1795 = vpop.f32.mrb[0].mxu0
        %v1796 = vadd.f32 0.0, %v1795
        %v1797 = vpop.f32.mrb[0].mxu0
        %v1798 = vadd.f32 0.0, %v1797
        %1799 = vmatprep.mubr.f32.mxu0 0.0
        %v1800 = vand.u32 %v1541, 4294901760
        %v1801 = vsub.f32 %v1541, %v1800
        %v1802 = vand.u32 %v1801, 4294901760
        %v1803 = vsub.f32 %v1801, %v1802
        %v1804 = vand.u32 %v1803, 4294901760
        %1805 = vmatmul.mubr.f32.gmra.mrb[0].mxu0 %v1804
        %v1806 = vpop.f32.mrb[0].mxu0
        %v1807 = vadd.f32 0.0, %v1806
        %v1808 = vpop.f32.mrb[0].mxu0
        %v1809 = vadd.f32 0.0, %v1808
        %1810 = vmatprep.mubr.f32.mxu0 0.0
        %v1811 = vand.u32 %v1544, 4294901760
        %v1812 = vsub.f32 %v1544, %v1811
        %v1813 = vand.u32 %v1812, 4294901760
        %v1814 = vsub.f32 %v1812, %v1813
        %v1815 = vand.u32 %v1814, 4294901760
        %1816 = vmatmul.mubr.f32.gmra.mrb[0].mxu0 %v1815
        %v1817 = vpop.f32.mrb[0].mxu0
        %v1818 = vadd.f32 0.0, %v1817
        %v1819 = vpop.f32.mrb[0].mxu0
        %v1820 = vadd.f32 0.0, %v1819
        %1821 = vmatprep.mubr.f32.mxu0 0.0
        %v1822 = vand.u32 %v1547, 4294901760
        %v1823 = vsub.f32 %v1547, %v1822
        %v1824 = vand.u32 %v1823, 4294901760
        %v1825 = vsub.f32 %v1823, %v1824
        %v1826 = vand.u32 %v1825, 4294901760
        %1827 = vmatmul.mubr.f32.gmra.mrb[0].mxu0 %v1826
        %v1828 = vpop.f32.mrb[0].mxu0
        %v1829 = vadd.f32 0.0, %v1828
        %v1830 = vpop.f32.mrb[0].mxu0
        %v1831 = vadd.f32 0.0, %v1830
        %1832 = vmatprep.mubr.f32.mxu0 0.0
        %v1833 = vand.u32 %v1550, 4294901760
        %v1834 = vsub.f32 %v1550, %v1833
        %v1835 = vand.u32 %v1834, 4294901760
        %v1836 = vsub.f32 %v1834, %v1835
        %v1837 = vand.u32 %v1836, 4294901760
        %1838 = vmatmul.mubr.f32.gmra.mrb[0].mxu0 %v1837
        %v1839 = vpop.f32.mrb[0].mxu0
        %v1840 = vadd.f32 0.0, %v1839
        %v1841 = vpop.f32.mrb[0].mxu0
        %v1842 = vadd.f32 0.0, %v1841
        %1843 = vmatprep.mubr.f32.mxu0 0.0
        %v1844 = vand.u32 %v1553, 4294901760
        %v1845 = vsub.f32 %v1553, %v1844
        %v1846 = vand.u32 %v1845, 4294901760
        %v1847 = vsub.f32 %v1845, %v1846
        %v1848 = vand.u32 %v1847, 4294901760
        %1849 = vmatmul.mubr.f32.gmra.mrb[0].mxu0 %v1848
        %v1850 = vpop.f32.mrb[0].mxu0
        %v1851 = vadd.f32 0.0, %v1850
        %v1852 = vpop.f32.mrb[0].mxu0
        %v1853 = vadd.f32 0.0, %v1852
        %1854 = vmatprep.mubr.f32.mxu0 0.0
        %v1855 = vand.u32 %v1556, 4294901760
        %v1856 = vsub.f32 %v1556, %v1855
        %v1857 = vand.u32 %v1856, 4294901760
        %v1858 = vsub.f32 %v1856, %v1857
        %v1859 = vand.u32 %v1858, 4294901760
        %1860 = vmatmul.mubr.f32.gmra.mrb[0].mxu0 %v1859
        %v1861 = vpop.f32.mrb[0].mxu0
        %v1862 = vadd.f32 0.0, %v1861
        %v1863 = vpop.f32.mrb[0].mxu0
        %v1864 = vadd.f32 0.0, %v1863
        %1865 = vmatprep.mubr.f32.mxu0 0.0
        %v1866 = vand.u32 %v1559, 4294901760
        %v1867 = vsub.f32 %v1559, %v1866
        %v1868 = vand.u32 %v1867, 4294901760
        %v1869 = vsub.f32 %v1867, %v1868
        %v1870 = vand.u32 %v1869, 4294901760
        %1871 = vmatmul.mubr.f32.gmra.mrb[0].mxu0 %v1870
        %v1872 = vpop.f32.mrb[0].mxu0
        %v1873 = vadd.f32 0.0, %v1872
        %v1874 = vpop.f32.mrb[0].mxu0
        %v1875 = vadd.f32 0.0, %v1874
        %1876 = vmatprep.mubr.f32.mxu0 0.0
        %v1877 = vand.u32 %v1562, 4294901760
        %v1878 = vsub.f32 %v1562, %v1877
        %v1879 = vand.u32 %v1878, 4294901760
        %v1880 = vsub.f32 %v1878, %v1879
        %v1881 = vand.u32 %v1880, 4294901760
        %1882 = vmatmul.mubr.f32.gmra.mrb[0].mxu0 %v1881
        %v1883 = vpop.f32.mrb[0].mxu0
        %v1884 = vadd.f32 0.0, %v1883
        %v1885 = vpop.f32.mrb[0].mxu0
        %v1886 = vadd.f32 0.0, %v1885
        %1887 = vmatprep.mubr.f32.mxu0 0.0
        %v1888 = vand.u32 %v1565, 4294901760
        %v1889 = vsub.f32 %v1565, %v1888
        %v1890 = vand.u32 %v1889, 4294901760
        %v1891 = vsub.f32 %v1889, %v1890
        %v1892 = vand.u32 %v1891, 4294901760
        %1893 = vmatmul.mubr.f32.gmra.mrb[0].mxu0 %v1892
        %v1894 = vpop.f32.mrb[0].mxu0
        %v1895 = vadd.f32 0.0, %v1894
        %v1896 = vpop.f32.mrb[0].mxu0
        %v1897 = vadd.f32 0.0, %v1896
        %1898 = vmatprep.mubr.f32.mxu0 0.0
        %v1899 = vand.u32 %v1568, 4294901760
        %v1900 = vsub.f32 %v1568, %v1899
        %v1901 = vand.u32 %v1900, 4294901760
        %v1902 = vsub.f32 %v1900, %v1901
        %v1903 = vand.u32 %v1902, 4294901760
        %1904 = vmatmul.mubr.f32.gmra.mrb[0].mxu0 %v1903
        %v1905 = vpop.f32.mrb[0].mxu0
        %v1906 = vadd.f32 0.0, %v1905
        %v1907 = vpop.f32.mrb[0].mxu0
        %v1908 = vadd.f32 0.0, %v1907
        %1909 = vmatprep.mubr.f32.mxu0 0.0
        %v1910 = vand.u32 %v1571, 4294901760
        %v1911 = vsub.f32 %v1571, %v1910
        %v1912 = vand.u32 %v1911, 4294901760
        %v1913 = vsub.f32 %v1911, %v1912
        %v1914 = vand.u32 %v1913, 4294901760
        %1915 = vmatmul.mubr.f32.gmra.mrb[0].mxu0 %v1914
        %v1916 = vpop.f32.mrb[0].mxu0
        %v1917 = vadd.f32 0.0, %v1916
        %v1918 = vpop.f32.mrb[0].mxu0
        %v1919 = vadd.f32 0.0, %v1918
        %1920 = vmatprep.mubr.f32.mxu0 0.0
        %v1921 = vand.u32 %v1574, 4294901760
        %v1922 = vsub.f32 %v1574, %v1921
        %v1923 = vand.u32 %v1922, 4294901760
        %v1924 = vsub.f32 %v1922, %v1923
        %v1925 = vand.u32 %v1924, 4294901760
        %1926 = vmatmul.mubr.f32.gmra.mrb[0].mxu0 %v1925
        %v1927 = vpop.f32.mrb[0].mxu0
        %v1928 = vadd.f32 0.0, %v1927
        %v1929 = vpop.f32.mrb[0].mxu0
        %v1930 = vadd.f32 0.0, %v1929
        %1931 = vmatprep.mubr.f32.mxu0 0.0
        %v1932 = vand.u32 %v1577, 4294901760
        %v1933 = vsub.f32 %v1577, %v1932
        %v1934 = vand.u32 %v1933, 4294901760
        %v1935 = vsub.f32 %v1933, %v1934
        %v1936 = vand.u32 %v1935, 4294901760
        %1937 = vmatmul.mubr.f32.gmra.mrb[0].mxu0 %v1936
        %v1938 = vpop.f32.mrb[0].mxu0
        %v1939 = vadd.f32 0.0, %v1938
        %v1940 = vpop.f32.mrb[0].mxu0
        %v1941 = vadd.f32 0.0, %v1940
        %1942 = vmatprep.mubr.f32.mxu0 0.0
        %v1943 = vand.u32 %v1580, 4294901760
        %v1944 = vsub.f32 %v1580, %v1943
        %v1945 = vand.u32 %v1944, 4294901760
        %v1946 = vsub.f32 %v1944, %v1945
        %v1947 = vand.u32 %v1946, 4294901760
        %1948 = vmatmul.mubr.f32.gmra.mrb[0].mxu0 %v1947
        %v1949 = vpop.f32.mrb[0].mxu0
        %v1950 = vadd.f32 0.0, %v1949
        %v1951 = vpop.f32.mrb[0].mxu0
        %v1952 = vadd.f32 0.0, %v1951
        %1953 = vmatprep.mubr.f32.mxu0 0.0
        %v1954 = vand.u32 %v1583, 4294901760
        %v1955 = vsub.f32 %v1583, %v1954
        %v1956 = vand.u32 %v1955, 4294901760
        %v1957 = vsub.f32 %v1955, %v1956
        %v1958 = vand.u32 %v1957, 4294901760
        %1959 = vmatmul.mubr.f32.gmra.mrb[0].mxu0 %v1958
        %v1960 = vpop.f32.mrb[0].mxu0
        %v1961 = vadd.f32 0.0, %v1960
        %v1962 = vpop.f32.mrb[0].mxu0
        %v1963 = vadd.f32 0.0, %v1962
        %1964 = vmatprep.mubr.f32.mxu0 0.0
        %v1965 = vand.u32 %v1586, 4294901760
        %v1966 = vsub.f32 %v1586, %v1965
        %v1967 = vand.u32 %v1966, 4294901760
        %v1968 = vsub.f32 %v1966, %v1967
        %v1969 = vand.u32 %v1968, 4294901760
        %1970 = vmatmul.mubr.f32.gmra.mrb[0].mxu0 %v1969
        %v1971 = vpop.f32.mrb[0].mxu0
        %v1972 = vadd.f32 0.0, %v1971
        %v1973 = vpop.f32.mrb[0].mxu0
        %v1974 = vadd.f32 0.0, %v1973
        %1975 = vmatprep.mubr.f32.mxu0 0.0
        %v1976 = vand.u32 %v1589, 4294901760
        %v1977 = vsub.f32 %v1589, %v1976
        %v1978 = vand.u32 %v1977, 4294901760
        %v1979 = vsub.f32 %v1977, %v1978
        %v1980 = vand.u32 %v1979, 4294901760
        %1981 = vmatmul.mubr.f32.gmra.mrb[0].mxu0 %v1980
        %v1982 = vpop.f32.mrb[0].mxu0
        %v1983 = vadd.f32 0.0, %v1982
        %v1984 = vpop.f32.mrb[0].mxu0
        %v1985 = vadd.f32 0.0, %v1984
        %1986 = vmatprep.mubr.f32.mxu0 0.0
        %v1987 = vand.u32 %v1592, 4294901760
        %v1988 = vsub.f32 %v1592, %v1987
        %v1989 = vand.u32 %v1988, 4294901760
        %v1990 = vsub.f32 %v1988, %v1989
        %v1991 = vand.u32 %v1990, 4294901760
        %1992 = vmatmul.mubr.f32.gmra.mrb[0].mxu0 %v1991
        %v1993 = vpop.f32.mrb[0].mxu0
        %v1994 = vadd.f32 0.0, %v1993
        %v1995 = vpop.f32.mrb[0].mxu0
        %v1996 = vadd.f32 0.0, %v1995
        %1997 = vmatprep.mubr.f32.mxu0 0.0
        %v1998 = vand.u32 %v1595, 4294901760
        %v1999 = vsub.f32 %v1595, %v1998
        %v2000 = vand.u32 %v1999, 4294901760
        %v2001 = vsub.f32 %v1999, %v2000
        %v2002 = vand.u32 %v2001, 4294901760
        %2003 = vmatmul.mubr.f32.gmra.mrb[0].mxu0 %v2002
        %v2004 = vpop.f32.mrb[0].mxu0
        %v2005 = vadd.f32 0.0, %v2004
        %v2006 = vpop.f32.mrb[0].mxu0
        %v2007 = vadd.f32 0.0, %v2006
        %2008 = vmatprep.mubr.f32.mxu0 0.0
        %v2009 = vand.u32 %v1598, 4294901760
        %v2010 = vsub.f32 %v1598, %v2009
        %v2011 = vand.u32 %v2010, 4294901760
        %v2012 = vsub.f32 %v2010, %v2011
        %v2013 = vand.u32 %v2012, 4294901760
        %2014 = vmatmul.mubr.f32.gmra.mrb[0].mxu0 %v2013
        %v2015 = vpop.f32.mrb[0].mxu0
        %v2016 = vadd.f32 0.0, %v2015
        %v2017 = vpop.f32.mrb[0].mxu0
        %v2018 = vadd.f32 0.0, %v2017
        %2019 = vmatprep.mubr.f32.mxu0 0.0
        %v2020 = vand.u32 %v1601, 4294901760
        %v2021 = vsub.f32 %v1601, %v2020
        %v2022 = vand.u32 %v2021, 4294901760
        %v2023 = vsub.f32 %v2021, %v2022
        %v2024 = vand.u32 %v2023, 4294901760
        %2025 = vmatmul.mubr.f32.gmra.mrb[0].mxu0 %v2024
        %v2026 = vpop.f32.mrb[0].mxu0
        %v2027 = vadd.f32 0.0, %v2026
        %v2028 = vpop.f32.mrb[0].mxu0
        %v2029 = vadd.f32 0.0, %v2028
        %2030 = vdwg.mxu0
        %v2031 = vand.u32 %v1606, 4294901760
        %v2032 = vsub.f32 %v1606, %v2031
        %v2033 = vand.u32 %v2032, 4294901760
        %v2034 = vsub.f32 %v2032, %v2033
        %v2035 = vand.u32 %v2034, 4294901760
        %2036 = vmatprep.subr.mxu0 %v2035
        %v2037 = vand.u32 %v1604, 4294901760
        %v2038 = vsub.f32 %v1604, %v2037
        %v2039 = vand.u32 %v2038, 4294901760
        %v2040 = vsub.f32 %v2038, %v2039
        %v2041 = vand.u32 %v2040, 4294901760
        %2042 = vmatpush1.msra.mxu0 %v2041
        %2043 = vmatprep.subr.mxu0 0.0
        %2044 = vmatpush1.msra.mxu0 0.0
        %2045 = vmatprep.subr.mxu0 0.0
        %2046 = vmatpush1.msra.mxu0 0.0
        %2047 = vmatprep.subr.mxu0 0.0
        %2048 = vmatpush1.msra.mxu0 0.0
        %2049 = vmatprep.subr.mxu0 0.0
        %2050 = vmatpush1.msra.mxu0 0.0
        %2051 = vmatprep.subr.mxu0 0.0
        %2052 = vmatpush1.msra.mxu0 0.0
        %2053 = vmatprep.subr.mxu0 0.0
        %2054 = vmatpush1.msra.mxu0 0.0
        %2055 = vmatprep.subr.mxu0 0.0
        %2056 = vmatpush1.msra.mxu0 0.0
        %2057 = vmatprep.subr.mxu0 0.0
        %2058 = vmatpush1.msra.mxu0 0.0
        %2059 = vmatprep.subr.mxu0 0.0
        %2060 = vmatpush1.msra.mxu0 0.0
        %2061 = vmatprep.subr.mxu0 0.0
        %2062 = vmatpush1.msra.mxu0 0.0
        %2063 = vmatprep.subr.mxu0 0.0
        %2064 = vmatpush1.msra.mxu0 0.0
        %2065 = vmatprep.subr.mxu0 0.0
        %2066 = vmatpush1.msra.mxu0 0.0
        %2067 = vmatprep.subr.mxu0 0.0
        %2068 = vmatpush1.msra.mxu0 0.0
        %2069 = vmatprep.subr.mxu0 0.0
        %2070 = vmatpush1.msra.mxu0 0.0
        %2071 = vmatprep.subr.mxu0 0.0
        %2072 = vmatpush1.msra.mxu0 0.0
        %2073 = vmatprep.subr.mxu0 0.0
        %2074 = vmatpush1.msra.mxu0 0.0
        %2075 = vmatprep.subr.mxu0 0.0
        %2076 = vmatpush1.msra.mxu0 0.0
        %2077 = vmatprep.subr.mxu0 0.0
        %2078 = vmatpush1.msra.mxu0 0.0
        %2079 = vmatprep.subr.mxu0 0.0
        %2080 = vmatpush1.msra.mxu0 0.0
        %2081 = vmatprep.subr.mxu0 0.0
        %2082 = vmatpush1.msra.mxu0 0.0
        %2083 = vmatprep.subr.mxu0 0.0
        %2084 = vmatpush1.msra.mxu0 0.0
        %2085 = vmatprep.subr.mxu0 0.0
        %2086 = vmatpush1.msra.mxu0 0.0
        %2087 = vmatprep.subr.mxu0 0.0
        %2088 = vmatpush1.msra.mxu0 0.0
        %2089 = vmatprep.subr.mxu0 0.0
        %2090 = vmatpush1.msra.mxu0 0.0
        %2091 = vmatprep.subr.mxu0 0.0
        %2092 = vmatpush1.msra.mxu0 0.0
        %2093 = vmatprep.subr.mxu0 0.0
        %2094 = vmatpush1.msra.mxu0 0.0
        %2095 = vmatprep.subr.mxu0 0.0
        %2096 = vmatpush1.msra.mxu0 0.0
        %2097 = vmatprep.subr.mxu0 0.0
        %2098 = vmatpush1.msra.mxu0 0.0
        %2099 = vmatprep.subr.mxu0 0.0
        %2100 = vmatpush1.msra.mxu0 0.0
        %2101 = vmatprep.subr.mxu0 0.0
        %2102 = vmatpush1.msra.mxu0 0.0
        %2103 = vmatprep.subr.mxu0 0.0
        %2104 = vmatpush1.msra.mxu0 0.0
        %2105 = vmatprep.mubr.f32.mxu0 0.0
        %v2106 = vand.u32 %v1508, 4294901760
        %2107 = vmatmul.mubr.f32.gmra.mrb[0].mxu0 %v2106
        %v2108 = vpop.f32.mrb[0].mxu0
        %v2109 = vadd.f32 %v1686, %v2108
        %v2110 = vpop.f32.mrb[0].mxu0
        %v2111 = vadd.f32 %v1688, %v2110
        %2112 = vmatprep.mubr.f32.mxu0 0.0
        %v2113 = vand.u32 %v1511, 4294901760
        %2114 = vmatmul.mubr.f32.gmra.mrb[0].mxu0 %v2113
        %v2115 = vpop.f32.mrb[0].mxu0
        %v2116 = vadd.f32 %v1697, %v2115
        %v2117 = vpop.f32.mrb[0].mxu0
        %v2118 = vadd.f32 %v1699, %v2117
        %2119 = vmatprep.mubr.f32.mxu0 0.0
        %v2120 = vand.u32 %v1514, 4294901760
        %2121 = vmatmul.mubr.f32.gmra.mrb[0].mxu0 %v2120
        %v2122 = vpop.f32.mrb[0].mxu0
        %v2123 = vadd.f32 %v1708, %v2122
        %v2124 = vpop.f32.mrb[0].mxu0
        %v2125 = vadd.f32 %v1710, %v2124
        %2126 = vmatprep.mubr.f32.mxu0 0.0
        %v2127 = vand.u32 %v1517, 4294901760
        %2128 = vmatmul.mubr.f32.gmra.mrb[0].mxu0 %v2127
        %v2129 = vpop.f32.mrb[0].mxu0
        %v2130 = vadd.f32 %v1719, %v2129
        %v2131 = vpop.f32.mrb[0].mxu0
        %v2132 = vadd.f32 %v1721, %v2131
        %2133 = vmatprep.mubr.f32.mxu0 0.0
        %v2134 = vand.u32 %v1520, 4294901760
        %2135 = vmatmul.mubr.f32.gmra.mrb[0].mxu0 %v2134
        %v2136 = vpop.f32.mrb[0].mxu0
        %v2137 = vadd.f32 %v1730, %v2136
        %v2138 = vpop.f32.mrb[0].mxu0
        %v2139 = vadd.f32 %v1732, %v2138
        %2140 = vmatprep.mubr.f32.mxu0 0.0
        %v2141 = vand.u32 %v1523, 4294901760
        %2142 = vmatmul.mubr.f32.gmra.mrb[0].mxu0 %v2141
        %v2143 = vpop.f32.mrb[0].mxu0
        %v2144 = vadd.f32 %v1741, %v2143
        %v2145 = vpop.f32.mrb[0].mxu0
        %v2146 = vadd.f32 %v1743, %v2145
        %2147 = vmatprep.mubr.f32.mxu0 0.0
        %v2148 = vand.u32 %v1526, 4294901760
        %2149 = vmatmul.mubr.f32.gmra.mrb[0].mxu0 %v2148
        %v2150 = vpop.f32.mrb[0].mxu0
        %v2151 = vadd.f32 %v1752, %v2150
        %v2152 = vpop.f32.mrb[0].mxu0
        %v2153 = vadd.f32 %v1754, %v2152
        %2154 = vmatprep.mubr.f32.mxu0 0.0
        %v2155 = vand.u32 %v1529, 4294901760
        %2156 = vmatmul.mubr.f32.gmra.mrb[0].mxu0 %v2155
        %v2157 = vpop.f32.mrb[0].mxu0
        %v2158 = vadd.f32 %v1763, %v2157
        %v2159 = vpop.f32.mrb[0].mxu0
        %v2160 = vadd.f32 %v1765, %v2159
        %2161 = vmatprep.mubr.f32.mxu0 0.0
        %v2162 = vand.u32 %v1532, 4294901760
        %2163 = vmatmul.mubr.f32.gmra.mrb[0].mxu0 %v2162
        %v2164 = vpop.f32.mrb[0].mxu0
        %v2165 = vadd.f32 %v1774, %v2164
        %v2166 = vpop.f32.mrb[0].mxu0
        %v2167 = vadd.f32 %v1776, %v2166
        %2168 = vmatprep.mubr.f32.mxu0 0.0
        %v2169 = vand.u32 %v1535, 4294901760
        %2170 = vmatmul.mubr.f32.gmra.mrb[0].mxu0 %v2169
        %v2171 = vpop.f32.mrb[0].mxu0
        %v2172 = vadd.f32 %v1785, %v2171
        %v2173 = vpop.f32.mrb[0].mxu0
        %v2174 = vadd.f32 %v1787, %v2173
        %2175 = vmatprep.mubr.f32.mxu0 0.0
        %v2176 = vand.u32 %v1538, 4294901760
        %2177 = vmatmul.mubr.f32.gmra.mrb[0].mxu0 %v2176
        %v2178 = vpop.f32.mrb[0].mxu0
        %v2179 = vadd.f32 %v1796, %v2178
        %v2180 = vpop.f32.mrb[0].mxu0
        %v2181 = vadd.f32 %v1798, %v2180
        %2182 = vmatprep.mubr.f32.mxu0 0.0
        %v2183 = vand.u32 %v1541, 4294901760
        %2184 = vmatmul.mubr.f32.gmra.mrb[0].mxu0 %v2183
        %v2185 = vpop.f32.mrb[0].mxu0
        %v2186 = vadd.f32 %v1807, %v2185
        %v2187 = vpop.f32.mrb[0].mxu0
        %v2188 = vadd.f32 %v1809, %v2187
        %2189 = vmatprep.mubr.f32.mxu0 0.0
        %v2190 = vand.u32 %v1544, 4294901760
        %2191 = vmatmul.mubr.f32.gmra.mrb[0].mxu0 %v2190
        %v2192 = vpop.f32.mrb[0].mxu0
        %v2193 = vadd.f32 %v1818, %v2192
        %v2194 = vpop.f32.mrb[0].mxu0
        %v2195 = vadd.f32 %v1820, %v2194
        %2196 = vmatprep.mubr.f32.mxu0 0.0
        %v2197 = vand.u32 %v1547, 4294901760
        %2198 = vmatmul.mubr.f32.gmra.mrb[0].mxu0 %v2197
        %v2199 = vpop.f32.mrb[0].mxu0
        %v2200 = vadd.f32 %v1829, %v2199
        %v2201 = vpop.f32.mrb[0].mxu0
        %v2202 = vadd.f32 %v1831, %v2201
        %2203 = vmatprep.mubr.f32.mxu0 0.0
        %v2204 = vand.u32 %v1550, 4294901760
        %2205 = vmatmul.mubr.f32.gmra.mrb[0].mxu0 %v2204
        %v2206 = vpop.f32.mrb[0].mxu0
        %v2207 = vadd.f32 %v1840, %v2206
        %v2208 = vpop.f32.mrb[0].mxu0
        %v2209 = vadd.f32 %v1842, %v2208
        %2210 = vmatprep.mubr.f32.mxu0 0.0
        %v2211 = vand.u32 %v1553, 4294901760
        %2212 = vmatmul.mubr.f32.gmra.mrb[0].mxu0 %v2211
        %v2213 = vpop.f32.mrb[0].mxu0
        %v2214 = vadd.f32 %v1851, %v2213
        %v2215 = vpop.f32.mrb[0].mxu0
        %v2216 = vadd.f32 %v1853, %v2215
        %2217 = vmatprep.mubr.f32.mxu0 0.0
        %v2218 = vand.u32 %v1556, 4294901760
        %2219 = vmatmul.mubr.f32.gmra.mrb[0].mxu0 %v2218
        %v2220 = vpop.f32.mrb[0].mxu0
        %v2221 = vadd.f32 %v1862, %v2220
        %v2222 = vpop.f32.mrb[0].mxu0
        %v2223 = vadd.f32 %v1864, %v2222
        %2224 = vmatprep.mubr.f32.mxu0 0.0
        %v2225 = vand.u32 %v1559, 4294901760
        %2226 = vmatmul.mubr.f32.gmra.mrb[0].mxu0 %v2225
        %v2227 = vpop.f32.mrb[0].mxu0
        %v2228 = vadd.f32 %v1873, %v2227
        %v2229 = vpop.f32.mrb[0].mxu0
        %v2230 = vadd.f32 %v1875, %v2229
        %2231 = vmatprep.mubr.f32.mxu0 0.0
        %v2232 = vand.u32 %v1562, 4294901760
        %2233 = vmatmul.mubr.f32.gmra.mrb[0].mxu0 %v2232
        %v2234 = vpop.f32.mrb[0].mxu0
        %v2235 = vadd.f32 %v1884, %v2234
        %v2236 = vpop.f32.mrb[0].mxu0
        %v2237 = vadd.f32 %v1886, %v2236
        %2238 = vmatprep.mubr.f32.mxu0 0.0
        %v2239 = vand.u32 %v1565, 4294901760
        %2240 = vmatmul.mubr.f32.gmra.mrb[0].mxu0 %v2239
        %v2241 = vpop.f32.mrb[0].mxu0
        %v2242 = vadd.f32 %v1895, %v2241
        %v2243 = vpop.f32.mrb[0].mxu0
        %v2244 = vadd.f32 %v1897, %v2243
        %2245 = vmatprep.mubr.f32.mxu0 0.0
        %v2246 = vand.u32 %v1568, 4294901760
        %2247 = vmatmul.mubr.f32.gmra.mrb[0].mxu0 %v2246
        %v2248 = vpop.f32.mrb[0].mxu0
        %v2249 = vadd.f32 %v1906, %v2248
        %v2250 = vpop.f32.mrb[0].mxu0
        %v2251 = vadd.f32 %v1908, %v2250
        %2252 = vmatprep.mubr.f32.mxu0 0.0
        %v2253 = vand.u32 %v1571, 4294901760
        %2254 = vmatmul.mubr.f32.gmra.mrb[0].mxu0 %v2253
        %v2255 = vpop.f32.mrb[0].mxu0
        %v2256 = vadd.f32 %v1917, %v2255
        %v2257 = vpop.f32.mrb[0].mxu0
        %v2258 = vadd.f32 %v1919, %v2257
        %2259 = vmatprep.mubr.f32.mxu0 0.0
        %v2260 = vand.u32 %v1574, 4294901760
        %2261 = vmatmul.mubr.f32.gmra.mrb[0].mxu0 %v2260
        %v2262 = vpop.f32.mrb[0].mxu0
        %v2263 = vadd.f32 %v1928, %v2262
        %v2264 = vpop.f32.mrb[0].mxu0
        %v2265 = vadd.f32 %v1930, %v2264
        %2266 = vmatprep.mubr.f32.mxu0 0.0
        %v2267 = vand.u32 %v1577, 4294901760
        %2268 = vmatmul.mubr.f32.gmra.mrb[0].mxu0 %v2267
        %v2269 = vpop.f32.mrb[0].mxu0
        %v2270 = vadd.f32 %v1939, %v2269
        %v2271 = vpop.f32.mrb[0].mxu0
        %v2272 = vadd.f32 %v1941, %v2271
        %2273 = vmatprep.mubr.f32.mxu0 0.0
        %v2274 = vand.u32 %v1580, 4294901760
        %2275 = vmatmul.mubr.f32.gmra.mrb[0].mxu0 %v2274
        %v2276 = vpop.f32.mrb[0].mxu0
        %v2277 = vadd.f32 %v1950, %v2276
        %v2278 = vpop.f32.mrb[0].mxu0
        %v2279 = vadd.f32 %v1952, %v2278
        %2280 = vmatprep.mubr.f32.mxu0 0.0
        %v2281 = vand.u32 %v1583, 4294901760
        %2282 = vmatmul.mubr.f32.gmra.mrb[0].mxu0 %v2281
        %v2283 = vpop.f32.mrb[0].mxu0
        %v2284 = vadd.f32 %v1961, %v2283
        %v2285 = vpop.f32.mrb[0].mxu0
        %v2286 = vadd.f32 %v1963, %v2285
        %2287 = vmatprep.mubr.f32.mxu0 0.0
        %v2288 = vand.u32 %v1586, 4294901760
        %2289 = vmatmul.mubr.f32.gmra.mrb[0].mxu0 %v2288
        %v2290 = vpop.f32.mrb[0].mxu0
        %v2291 = vadd.f32 %v1972, %v2290
        %v2292 = vpop.f32.mrb[0].mxu0
        %v2293 = vadd.f32 %v1974, %v2292
        %2294 = vmatprep.mubr.f32.mxu0 0.0
        %v2295 = vand.u32 %v1589, 4294901760
        %2296 = vmatmul.mubr.f32.gmra.mrb[0].mxu0 %v2295
        %v2297 = vpop.f32.mrb[0].mxu0
        %v2298 = vadd.f32 %v1983, %v2297
        %v2299 = vpop.f32.mrb[0].mxu0
        %v2300 = vadd.f32 %v1985, %v2299
        %2301 = vmatprep.mubr.f32.mxu0 0.0
        %v2302 = vand.u32 %v1592, 4294901760
        %2303 = vmatmul.mubr.f32.gmra.mrb[0].mxu0 %v2302
        %v2304 = vpop.f32.mrb[0].mxu0
        %v2305 = vadd.f32 %v1994, %v2304
        %v2306 = vpop.f32.mrb[0].mxu0
        %v2307 = vadd.f32 %v1996, %v2306
        %2308 = vmatprep.mubr.f32.mxu0 0.0
        %v2309 = vand.u32 %v1595, 4294901760
        %2310 = vmatmul.mubr.f32.gmra.mrb[0].mxu0 %v2309
        %v2311 = vpop.f32.mrb[0].mxu0
        %v2312 = vadd.f32 %v2005, %v2311
        %v2313 = vpop.f32.mrb[0].mxu0
        %v2314 = vadd.f32 %v2007, %v2313
        %2315 = vmatprep.mubr.f32.mxu0 0.0
        %v2316 = vand.u32 %v1598, 4294901760
        %2317 = vmatmul.mubr.f32.gmra.mrb[0].mxu0 %v2316
        %v2318 = vpop.f32.mrb[0].mxu0
        %v2319 = vadd.f32 %v2016, %v2318
        %v2320 = vpop.f32.mrb[0].mxu0
        %v2321 = vadd.f32 %v2018, %v2320
        %2322 = vmatprep.mubr.f32.mxu0 0.0
        %v2323 = vand.u32 %v1601, 4294901760
        %2324 = vmatmul.mubr.f32.gmra.mrb[0].mxu0 %v2323
        %v2325 = vpop.f32.mrb[0].mxu0
        %v2326 = vadd.f32 %v2027, %v2325
        %v2327 = vpop.f32.mrb[0].mxu0
        %v2328 = vadd.f32 %v2029, %v2327
        %2329 = vdwg.mxu0
        %v2330 = vand.u32 %v1606, 4294901760
        %v2331 = vsub.f32 %v1606, %v2330
        %2332 = vmatprep.subr.mxu0 %v2331
        %v2333 = vand.u32 %v1604, 4294901760
        %v2334 = vsub.f32 %v1604, %v2333
        %2335 = vmatpush1.msra.mxu0 %v2334
        %2336 = vmatprep.subr.mxu0 0.0
        %2337 = vmatpush1.msra.mxu0 0.0
        %2338 = vmatprep.subr.mxu0 0.0
        %2339 = vmatpush1.msra.mxu0 0.0
        %2340 = vmatprep.subr.mxu0 0.0
        %2341 = vmatpush1.msra.mxu0 0.0
        %2342 = vmatprep.subr.mxu0 0.0
        %2343 = vmatpush1.msra.mxu0 0.0
        %2344 = vmatprep.subr.mxu0 0.0
        %2345 = vmatpush1.msra.mxu0 0.0
        %2346 = vmatprep.subr.mxu0 0.0
        %2347 = vmatpush1.msra.mxu0 0.0
        %2348 = vmatprep.subr.mxu0 0.0
        %2349 = vmatpush1.msra.mxu0 0.0
        %2350 = vmatprep.subr.mxu0 0.0
        %2351 = vmatpush1.msra.mxu0 0.0
        %2352 = vmatprep.subr.mxu0 0.0
        %2353 = vmatpush1.msra.mxu0 0.0
        %2354 = vmatprep.subr.mxu0 0.0
        %2355 = vmatpush1.msra.mxu0 0.0
        %2356 = vmatprep.subr.mxu0 0.0
        %2357 = vmatpush1.msra.mxu0 0.0
        %2358 = vmatprep.subr.mxu0 0.0
        %2359 = vmatpush1.msra.mxu0 0.0
        %2360 = vmatprep.subr.mxu0 0.0
        %2361 = vmatpush1.msra.mxu0 0.0
        %2362 = vmatprep.subr.mxu0 0.0
        %2363 = vmatpush1.msra.mxu0 0.0
        %2364 = vmatprep.subr.mxu0 0.0
        %2365 = vmatpush1.msra.mxu0 0.0
        %2366 = vmatprep.subr.mxu0 0.0
        %2367 = vmatpush1.msra.mxu0 0.0
        %2368 = vmatprep.subr.mxu0 0.0
        %2369 = vmatpush1.msra.mxu0 0.0
        %2370 = vmatprep.subr.mxu0 0.0
        %2371 = vmatpush1.msra.mxu0 0.0
        %2372 = vmatprep.subr.mxu0 0.0
        %2373 = vmatpush1.msra.mxu0 0.0
        %2374 = vmatprep.subr.mxu0 0.0
        %2375 = vmatpush1.msra.mxu0 0.0
        %2376 = vmatprep.subr.mxu0 0.0
        %2377 = vmatpush1.msra.mxu0 0.0
        %2378 = vmatprep.subr.mxu0 0.0
        %2379 = vmatpush1.msra.mxu0 0.0
        %2380 = vmatprep.subr.mxu0 0.0
        %2381 = vmatpush1.msra.mxu0 0.0
        %2382 = vmatprep.subr.mxu0 0.0
        %2383 = vmatpush1.msra.mxu0 0.0
        %2384 = vmatprep.subr.mxu0 0.0
        %2385 = vmatpush1.msra.mxu0 0.0
        %2386 = vmatprep.subr.mxu0 0.0
        %2387 = vmatpush1.msra.mxu0 0.0
        %2388 = vmatprep.subr.mxu0 0.0
        %2389 = vmatpush1.msra.mxu0 0.0
        %2390 = vmatprep.subr.mxu0 0.0
        %2391 = vmatpush1.msra.mxu0 0.0
        %2392 = vmatprep.subr.mxu0 0.0
        %2393 = vmatpush1.msra.mxu0 0.0
        %2394 = vmatprep.subr.mxu0 0.0
        %2395 = vmatpush1.msra.mxu0 0.0
        %2396 = vmatprep.subr.mxu0 0.0
        %2397 = vmatpush1.msra.mxu0 0.0
        %2398 = vmatprep.mubr.f32.mxu0 0.0
        %v2399 = vand.u32 %v1508, 4294901760
        %v2400 = vsub.f32 %v1508, %v2399
        %2401 = vmatmul.mubr.f32.gmra.mrb[0].mxu0 %v2400
        %v2402 = vpop.f32.mrb[0].mxu0
        %v2403 = vadd.f32 %v2109, %v2402
        %v2404 = vpop.f32.mrb[0].mxu0
        %v2405 = vadd.f32 %v2111, %v2404
        %2406 = vmatprep.mubr.f32.mxu0 0.0
        %v2407 = vand.u32 %v1511, 4294901760
        %v2408 = vsub.f32 %v1511, %v2407
        %2409 = vmatmul.mubr.f32.gmra.mrb[0].mxu0 %v2408
        %v2410 = vpop.f32.mrb[0].mxu0
        %v2411 = vadd.f32 %v2116, %v2410
        %v2412 = vpop.f32.mrb[0].mxu0
        %v2413 = vadd.f32 %v2118, %v2412
        %2414 = vmatprep.mubr.f32.mxu0 0.0
        %v2415 = vand.u32 %v1514, 4294901760
        %v2416 = vsub.f32 %v1514, %v2415
        %2417 = vmatmul.mubr.f32.gmra.mrb[0].mxu0 %v2416
        %v2418 = vpop.f32.mrb[0].mxu0
        %v2419 = vadd.f32 %v2123, %v2418
        %v2420 = vpop.f32.mrb[0].mxu0
        %v2421 = vadd.f32 %v2125, %v2420
        %2422 = vmatprep.mubr.f32.mxu0 0.0
        %v2423 = vand.u32 %v1517, 4294901760
        %v2424 = vsub.f32 %v1517, %v2423
        %2425 = vmatmul.mubr.f32.gmra.mrb[0].mxu0 %v2424
        %v2426 = vpop.f32.mrb[0].mxu0
        %v2427 = vadd.f32 %v2130, %v2426
        %v2428 = vpop.f32.mrb[0].mxu0
        %v2429 = vadd.f32 %v2132, %v2428
        %2430 = vmatprep.mubr.f32.mxu0 0.0
        %v2431 = vand.u32 %v1520, 4294901760
        %v2432 = vsub.f32 %v1520, %v2431
        %2433 = vmatmul.mubr.f32.gmra.mrb[0].mxu0 %v2432
        %v2434 = vpop.f32.mrb[0].mxu0
        %v2435 = vadd.f32 %v2137, %v2434
        %v2436 = vpop.f32.mrb[0].mxu0
        %v2437 = vadd.f32 %v2139, %v2436
        %2438 = vmatprep.mubr.f32.mxu0 0.0
        %v2439 = vand.u32 %v1523, 4294901760
        %v2440 = vsub.f32 %v1523, %v2439
        %2441 = vmatmul.mubr.f32.gmra.mrb[0].mxu0 %v2440
        %v2442 = vpop.f32.mrb[0].mxu0
        %v2443 = vadd.f32 %v2144, %v2442
        %v2444 = vpop.f32.mrb[0].mxu0
        %v2445 = vadd.f32 %v2146, %v2444
        %2446 = vmatprep.mubr.f32.mxu0 0.0
        %v2447 = vand.u32 %v1526, 4294901760
        %v2448 = vsub.f32 %v1526, %v2447
        %2449 = vmatmul.mubr.f32.gmra.mrb[0].mxu0 %v2448
        %v2450 = vpop.f32.mrb[0].mxu0
        %v2451 = vadd.f32 %v2151, %v2450
        %v2452 = vpop.f32.mrb[0].mxu0
        %v2453 = vadd.f32 %v2153, %v2452
        %2454 = vmatprep.mubr.f32.mxu0 0.0
        %v2455 = vand.u32 %v1529, 4294901760
        %v2456 = vsub.f32 %v1529, %v2455
        %2457 = vmatmul.mubr.f32.gmra.mrb[0].mxu0 %v2456
        %v2458 = vpop.f32.mrb[0].mxu0
        %v2459 = vadd.f32 %v2158, %v2458
        %v2460 = vpop.f32.mrb[0].mxu0
        %v2461 = vadd.f32 %v2160, %v2460
        %2462 = vmatprep.mubr.f32.mxu0 0.0
        %v2463 = vand.u32 %v1532, 4294901760
        %v2464 = vsub.f32 %v1532, %v2463
        %2465 = vmatmul.mubr.f32.gmra.mrb[0].mxu0 %v2464
        %v2466 = vpop.f32.mrb[0].mxu0
        %v2467 = vadd.f32 %v2165, %v2466
        %v2468 = vpop.f32.mrb[0].mxu0
        %v2469 = vadd.f32 %v2167, %v2468
        %2470 = vmatprep.mubr.f32.mxu0 0.0
        %v2471 = vand.u32 %v1535, 4294901760
        %v2472 = vsub.f32 %v1535, %v2471
        %2473 = vmatmul.mubr.f32.gmra.mrb[0].mxu0 %v2472
        %v2474 = vpop.f32.mrb[0].mxu0
        %v2475 = vadd.f32 %v2172, %v2474
        %v2476 = vpop.f32.mrb[0].mxu0
        %v2477 = vadd.f32 %v2174, %v2476
        %2478 = vmatprep.mubr.f32.mxu0 0.0
        %v2479 = vand.u32 %v1538, 4294901760
        %v2480 = vsub.f32 %v1538, %v2479
        %2481 = vmatmul.mubr.f32.gmra.mrb[0].mxu0 %v2480
        %v2482 = vpop.f32.mrb[0].mxu0
        %v2483 = vadd.f32 %v2179, %v2482
        %v2484 = vpop.f32.mrb[0].mxu0
        %v2485 = vadd.f32 %v2181, %v2484
        %2486 = vmatprep.mubr.f32.mxu0 0.0
        %v2487 = vand.u32 %v1541, 4294901760
        %v2488 = vsub.f32 %v1541, %v2487
        %2489 = vmatmul.mubr.f32.gmra.mrb[0].mxu0 %v2488
        %v2490 = vpop.f32.mrb[0].mxu0
        %v2491 = vadd.f32 %v2186, %v2490
        %v2492 = vpop.f32.mrb[0].mxu0
        %v2493 = vadd.f32 %v2188, %v2492
        %2494 = vmatprep.mubr.f32.mxu0 0.0
        %v2495 = vand.u32 %v1544, 4294901760
        %v2496 = vsub.f32 %v1544, %v2495
        %2497 = vmatmul.mubr.f32.gmra.mrb[0].mxu0 %v2496
        %v2498 = vpop.f32.mrb[0].mxu0
        %v2499 = vadd.f32 %v2193, %v2498
        %v2500 = vpop.f32.mrb[0].mxu0
        %v2501 = vadd.f32 %v2195, %v2500
        %2502 = vmatprep.mubr.f32.mxu0 0.0
        %v2503 = vand.u32 %v1547, 4294901760
        %v2504 = vsub.f32 %v1547, %v2503
        %2505 = vmatmul.mubr.f32.gmra.mrb[0].mxu0 %v2504
        %v2506 = vpop.f32.mrb[0].mxu0
        %v2507 = vadd.f32 %v2200, %v2506
        %v2508 = vpop.f32.mrb[0].mxu0
        %v2509 = vadd.f32 %v2202, %v2508
        %2510 = vmatprep.mubr.f32.mxu0 0.0
        %v2511 = vand.u32 %v1550, 4294901760
        %v2512 = vsub.f32 %v1550, %v2511
        %2513 = vmatmul.mubr.f32.gmra.mrb[0].mxu0 %v2512
        %v2514 = vpop.f32.mrb[0].mxu0
        %v2515 = vadd.f32 %v2207, %v2514
        %v2516 = vpop.f32.mrb[0].mxu0
        %v2517 = vadd.f32 %v2209, %v2516
        %2518 = vmatprep.mubr.f32.mxu0 0.0
        %v2519 = vand.u32 %v1553, 4294901760
        %v2520 = vsub.f32 %v1553, %v2519
        %2521 = vmatmul.mubr.f32.gmra.mrb[0].mxu0 %v2520
        %v2522 = vpop.f32.mrb[0].mxu0
        %v2523 = vadd.f32 %v2214, %v2522
        %v2524 = vpop.f32.mrb[0].mxu0
        %v2525 = vadd.f32 %v2216, %v2524
        %2526 = vmatprep.mubr.f32.mxu0 0.0
        %v2527 = vand.u32 %v1556, 4294901760
        %v2528 = vsub.f32 %v1556, %v2527
        %2529 = vmatmul.mubr.f32.gmra.mrb[0].mxu0 %v2528
        %v2530 = vpop.f32.mrb[0].mxu0
        %v2531 = vadd.f32 %v2221, %v2530
        %v2532 = vpop.f32.mrb[0].mxu0
        %v2533 = vadd.f32 %v2223, %v2532
        %2534 = vmatprep.mubr.f32.mxu0 0.0
        %v2535 = vand.u32 %v1559, 4294901760
        %v2536 = vsub.f32 %v1559, %v2535
        %2537 = vmatmul.mubr.f32.gmra.mrb[0].mxu0 %v2536
        %v2538 = vpop.f32.mrb[0].mxu0
        %v2539 = vadd.f32 %v2228, %v2538
        %v2540 = vpop.f32.mrb[0].mxu0
        %v2541 = vadd.f32 %v2230, %v2540
        %2542 = vmatprep.mubr.f32.mxu0 0.0
        %v2543 = vand.u32 %v1562, 4294901760
        %v2544 = vsub.f32 %v1562, %v2543
        %2545 = vmatmul.mubr.f32.gmra.mrb[0].mxu0 %v2544
        %v2546 = vpop.f32.mrb[0].mxu0
        %v2547 = vadd.f32 %v2235, %v2546
        %v2548 = vpop.f32.mrb[0].mxu0
        %v2549 = vadd.f32 %v2237, %v2548
        %2550 = vmatprep.mubr.f32.mxu0 0.0
        %v2551 = vand.u32 %v1565, 4294901760
        %v2552 = vsub.f32 %v1565, %v2551
        %2553 = vmatmul.mubr.f32.gmra.mrb[0].mxu0 %v2552
        %v2554 = vpop.f32.mrb[0].mxu0
        %v2555 = vadd.f32 %v2242, %v2554
        %v2556 = vpop.f32.mrb[0].mxu0
        %v2557 = vadd.f32 %v2244, %v2556
        %2558 = vmatprep.mubr.f32.mxu0 0.0
        %v2559 = vand.u32 %v1568, 4294901760
        %v2560 = vsub.f32 %v1568, %v2559
        %2561 = vmatmul.mubr.f32.gmra.mrb[0].mxu0 %v2560
        %v2562 = vpop.f32.mrb[0].mxu0
        %v2563 = vadd.f32 %v2249, %v2562
        %v2564 = vpop.f32.mrb[0].mxu0
        %v2565 = vadd.f32 %v2251, %v2564
        %2566 = vmatprep.mubr.f32.mxu0 0.0
        %v2567 = vand.u32 %v1571, 4294901760
        %v2568 = vsub.f32 %v1571, %v2567
        %2569 = vmatmul.mubr.f32.gmra.mrb[0].mxu0 %v2568
        %v2570 = vpop.f32.mrb[0].mxu0
        %v2571 = vadd.f32 %v2256, %v2570
        %v2572 = vpop.f32.mrb[0].mxu0
        %v2573 = vadd.f32 %v2258, %v2572
        %2574 = vmatprep.mubr.f32.mxu0 0.0
        %v2575 = vand.u32 %v1574, 4294901760
        %v2576 = vsub.f32 %v1574, %v2575
        %2577 = vmatmul.mubr.f32.gmra.mrb[0].mxu0 %v2576
        %v2578 = vpop.f32.mrb[0].mxu0
        %v2579 = vadd.f32 %v2263, %v2578
        %v2580 = vpop.f32.mrb[0].mxu0
        %v2581 = vadd.f32 %v2265, %v2580
        %2582 = vmatprep.mubr.f32.mxu0 0.0
        %v2583 = vand.u32 %v1577, 4294901760
        %v2584 = vsub.f32 %v1577, %v2583
        %2585 = vmatmul.mubr.f32.gmra.mrb[0].mxu0 %v2584
        %v2586 = vpop.f32.mrb[0].mxu0
        %v2587 = vadd.f32 %v2270, %v2586
        %v2588 = vpop.f32.mrb[0].mxu0
        %v2589 = vadd.f32 %v2272, %v2588
        %2590 = vmatprep.mubr.f32.mxu0 0.0
        %v2591 = vand.u32 %v1580, 4294901760
        %v2592 = vsub.f32 %v1580, %v2591
        %2593 = vmatmul.mubr.f32.gmra.mrb[0].mxu0 %v2592
        %v2594 = vpop.f32.mrb[0].mxu0
        %v2595 = vadd.f32 %v2277, %v2594
        %v2596 = vpop.f32.mrb[0].mxu0
        %v2597 = vadd.f32 %v2279, %v2596
        %2598 = vmatprep.mubr.f32.mxu0 0.0
        %v2599 = vand.u32 %v1583, 4294901760
        %v2600 = vsub.f32 %v1583, %v2599
        %2601 = vmatmul.mubr.f32.gmra.mrb[0].mxu0 %v2600
        %v2602 = vpop.f32.mrb[0].mxu0
        %v2603 = vadd.f32 %v2284, %v2602
        %v2604 = vpop.f32.mrb[0].mxu0
        %v2605 = vadd.f32 %v2286, %v2604
        %2606 = vmatprep.mubr.f32.mxu0 0.0
        %v2607 = vand.u32 %v1586, 4294901760
        %v2608 = vsub.f32 %v1586, %v2607
        %2609 = vmatmul.mubr.f32.gmra.mrb[0].mxu0 %v2608
        %v2610 = vpop.f32.mrb[0].mxu0
        %v2611 = vadd.f32 %v2291, %v2610
        %v2612 = vpop.f32.mrb[0].mxu0
        %v2613 = vadd.f32 %v2293, %v2612
        %2614 = vmatprep.mubr.f32.mxu0 0.0
        %v2615 = vand.u32 %v1589, 4294901760
        %v2616 = vsub.f32 %v1589, %v2615
        %2617 = vmatmul.mubr.f32.gmra.mrb[0].mxu0 %v2616
        %v2618 = vpop.f32.mrb[0].mxu0
        %v2619 = vadd.f32 %v2298, %v2618
        %v2620 = vpop.f32.mrb[0].mxu0
        %v2621 = vadd.f32 %v2300, %v2620
        %2622 = vmatprep.mubr.f32.mxu0 0.0
        %v2623 = vand.u32 %v1592, 4294901760
        %v2624 = vsub.f32 %v1592, %v2623
        %2625 = vmatmul.mubr.f32.gmra.mrb[0].mxu0 %v2624
        %v2626 = vpop.f32.mrb[0].mxu0
        %v2627 = vadd.f32 %v2305, %v2626
        %v2628 = vpop.f32.mrb[0].mxu0
        %v2629 = vadd.f32 %v2307, %v2628
        %2630 = vmatprep.mubr.f32.mxu0 0.0
        %v2631 = vand.u32 %v1595, 4294901760
        %v2632 = vsub.f32 %v1595, %v2631
        %2633 = vmatmul.mubr.f32.gmra.mrb[0].mxu0 %v2632
        %v2634 = vpop.f32.mrb[0].mxu0
        %v2635 = vadd.f32 %v2312, %v2634
        %v2636 = vpop.f32.mrb[0].mxu0
        %v2637 = vadd.f32 %v2314, %v2636
        %2638 = vmatprep.mubr.f32.mxu0 0.0
        %v2639 = vand.u32 %v1598, 4294901760
        %v2640 = vsub.f32 %v1598, %v2639
        %2641 = vmatmul.mubr.f32.gmra.mrb[0].mxu0 %v2640
        %v2642 = vpop.f32.mrb[0].mxu0
        %v2643 = vadd.f32 %v2319, %v2642
        %v2644 = vpop.f32.mrb[0].mxu0
        %v2645 = vadd.f32 %v2321, %v2644
        %2646 = vmatprep.mubr.f32.mxu0 0.0
        %v2647 = vand.u32 %v1601, 4294901760
        %v2648 = vsub.f32 %v1601, %v2647
        %2649 = vmatmul.mubr.f32.gmra.mrb[0].mxu0 %v2648
        %v2650 = vpop.f32.mrb[0].mxu0
        %v2651 = vadd.f32 %v2326, %v2650
        %v2652 = vpop.f32.mrb[0].mxu0
        %v2653 = vadd.f32 %v2328, %v2652
        %2654 = vdwg.mxu0
        %v2655 = vand.u32 %v1606, 4294901760
        %2656 = vmatprep.subr.mxu0 %v2655
        %v2657 = vand.u32 %v1604, 4294901760
        %2658 = vmatpush1.msra.mxu0 %v2657
        %2659 = vmatprep.subr.mxu0 0.0
        %2660 = vmatpush1.msra.mxu0 0.0
        %2661 = vmatprep.subr.mxu0 0.0
        %2662 = vmatpush1.msra.mxu0 0.0
        %2663 = vmatprep.subr.mxu0 0.0
        %2664 = vmatpush1.msra.mxu0 0.0
        %2665 = vmatprep.subr.mxu0 0.0
        %2666 = vmatpush1.msra.mxu0 0.0
        %2667 = vmatprep.subr.mxu0 0.0
        %2668 = vmatpush1.msra.mxu0 0.0
        %2669 = vmatprep.subr.mxu0 0.0
        %2670 = vmatpush1.msra.mxu0 0.0
        %2671 = vmatprep.subr.mxu0 0.0
        %2672 = vmatpush1.msra.mxu0 0.0
        %2673 = vmatprep.subr.mxu0 0.0
        %2674 = vmatpush1.msra.mxu0 0.0
        %2675 = vmatprep.subr.mxu0 0.0
        %2676 = vmatpush1.msra.mxu0 0.0
        %2677 = vmatprep.subr.mxu0 0.0
        %2678 = vmatpush1.msra.mxu0 0.0
        %2679 = vmatprep.subr.mxu0 0.0
        %2680 = vmatpush1.msra.mxu0 0.0
        %2681 = vmatprep.subr.mxu0 0.0
        %2682 = vmatpush1.msra.mxu0 0.0
        %2683 = vmatprep.subr.mxu0 0.0
        %2684 = vmatpush1.msra.mxu0 0.0
        %2685 = vmatprep.subr.mxu0 0.0
        %2686 = vmatpush1.msra.mxu0 0.0
        %2687 = vmatprep.subr.mxu0 0.0
        %2688 = vmatpush1.msra.mxu0 0.0
        %2689 = vmatprep.subr.mxu0 0.0
        %2690 = vmatpush1.msra.mxu0 0.0
        %2691 = vmatprep.subr.mxu0 0.0
        %2692 = vmatpush1.msra.mxu0 0.0
        %2693 = vmatprep.subr.mxu0 0.0
        %2694 = vmatpush1.msra.mxu0 0.0
        %2695 = vmatprep.subr.mxu0 0.0
        %2696 = vmatpush1.msra.mxu0 0.0
        %2697 = vmatprep.subr.mxu0 0.0
        %2698 = vmatpush1.msra.mxu0 0.0
        %2699 = vmatprep.subr.mxu0 0.0
        %2700 = vmatpush1.msra.mxu0 0.0
        %2701 = vmatprep.subr.mxu0 0.0
        %2702 = vmatpush1.msra.mxu0 0.0
        %2703 = vmatprep.subr.mxu0 0.0
        %2704 = vmatpush1.msra.mxu0 0.0
        %2705 = vmatprep.subr.mxu0 0.0
        %2706 = vmatpush1.msra.mxu0 0.0
        %2707 = vmatprep.subr.mxu0 0.0
        %2708 = vmatpush1.msra.mxu0 0.0
        %2709 = vmatprep.subr.mxu0 0.0
        %2710 = vmatpush1.msra.mxu0 0.0
        %2711 = vmatprep.subr.mxu0 0.0
        %2712 = vmatpush1.msra.mxu0 0.0
        %2713 = vmatprep.subr.mxu0 0.0
        %2714 = vmatpush1.msra.mxu0 0.0
        %2715 = vmatprep.subr.mxu0 0.0
        %2716 = vmatpush1.msra.mxu0 0.0
        %2717 = vmatprep.subr.mxu0 0.0
        %2718 = vmatpush1.msra.mxu0 0.0
        %2719 = vmatprep.subr.mxu0 0.0
        %2720 = vmatpush1.msra.mxu0 0.0
        %2721 = vmatprep.mubr.f32.mxu0 0.0
        %v2722 = vand.u32 %v1508, 4294901760
        %v2723 = vsub.f32 %v1508, %v2722
        %v2724 = vand.u32 %v2723, 4294901760
        %2725 = vmatmul.mubr.f32.gmra.mrb[0].mxu0 %v2724
        %v2726 = vpop.f32.mrb[0].mxu0
        %v2727 = vadd.f32 %v2403, %v2726
        %v2728 = vpop.f32.mrb[0].mxu0
        %v2729 = vadd.f32 %v2405, %v2728
        %2730 = vmatprep.mubr.f32.mxu0 0.0
        %v2731 = vand.u32 %v1511, 4294901760
        %v2732 = vsub.f32 %v1511, %v2731
        %v2733 = vand.u32 %v2732, 4294901760
        %2734 = vmatmul.mubr.f32.gmra.mrb[0].mxu0 %v2733
        %v2735 = vpop.f32.mrb[0].mxu0
        %v2736 = vadd.f32 %v2411, %v2735
        %v2737 = vpop.f32.mrb[0].mxu0
        %v2738 = vadd.f32 %v2413, %v2737
        %2739 = vmatprep.mubr.f32.mxu0 0.0
        %v2740 = vand.u32 %v1514, 4294901760
        %v2741 = vsub.f32 %v1514, %v2740
        %v2742 = vand.u32 %v2741, 4294901760
        %2743 = vmatmul.mubr.f32.gmra.mrb[0].mxu0 %v2742
        %v2744 = vpop.f32.mrb[0].mxu0
        %v2745 = vadd.f32 %v2419, %v2744
        %v2746 = vpop.f32.mrb[0].mxu0
        %v2747 = vadd.f32 %v2421, %v2746
        %2748 = vmatprep.mubr.f32.mxu0 0.0
        %v2749 = vand.u32 %v1517, 4294901760
        %v2750 = vsub.f32 %v1517, %v2749
        %v2751 = vand.u32 %v2750, 4294901760
        %2752 = vmatmul.mubr.f32.gmra.mrb[0].mxu0 %v2751
        %v2753 = vpop.f32.mrb[0].mxu0
        %v2754 = vadd.f32 %v2427, %v2753
        %v2755 = vpop.f32.mrb[0].mxu0
        %v2756 = vadd.f32 %v2429, %v2755
        %2757 = vmatprep.mubr.f32.mxu0 0.0
        %v2758 = vand.u32 %v1520, 4294901760
        %v2759 = vsub.f32 %v1520, %v2758
        %v2760 = vand.u32 %v2759, 4294901760
        %2761 = vmatmul.mubr.f32.gmra.mrb[0].mxu0 %v2760
        %v2762 = vpop.f32.mrb[0].mxu0
        %v2763 = vadd.f32 %v2435, %v2762
        %v2764 = vpop.f32.mrb[0].mxu0
        %v2765 = vadd.f32 %v2437, %v2764
        %2766 = vmatprep.mubr.f32.mxu0 0.0
        %v2767 = vand.u32 %v1523, 4294901760
        %v2768 = vsub.f32 %v1523, %v2767
        %v2769 = vand.u32 %v2768, 4294901760
        %2770 = vmatmul.mubr.f32.gmra.mrb[0].mxu0 %v2769
        %v2771 = vpop.f32.mrb[0].mxu0
        %v2772 = vadd.f32 %v2443, %v2771
        %v2773 = vpop.f32.mrb[0].mxu0
        %v2774 = vadd.f32 %v2445, %v2773
        %2775 = vmatprep.mubr.f32.mxu0 0.0
        %v2776 = vand.u32 %v1526, 4294901760
        %v2777 = vsub.f32 %v1526, %v2776
        %v2778 = vand.u32 %v2777, 4294901760
        %2779 = vmatmul.mubr.f32.gmra.mrb[0].mxu0 %v2778
        %v2780 = vpop.f32.mrb[0].mxu0
        %v2781 = vadd.f32 %v2451, %v2780
        %v2782 = vpop.f32.mrb[0].mxu0
        %v2783 = vadd.f32 %v2453, %v2782
        %2784 = vmatprep.mubr.f32.mxu0 0.0
        %v2785 = vand.u32 %v1529, 4294901760
        %v2786 = vsub.f32 %v1529, %v2785
        %v2787 = vand.u32 %v2786, 4294901760
        %2788 = vmatmul.mubr.f32.gmra.mrb[0].mxu0 %v2787
        %v2789 = vpop.f32.mrb[0].mxu0
        %v2790 = vadd.f32 %v2459, %v2789
        %v2791 = vpop.f32.mrb[0].mxu0
        %v2792 = vadd.f32 %v2461, %v2791
        %2793 = vmatprep.mubr.f32.mxu0 0.0
        %v2794 = vand.u32 %v1532, 4294901760
        %v2795 = vsub.f32 %v1532, %v2794
        %v2796 = vand.u32 %v2795, 4294901760
        %2797 = vmatmul.mubr.f32.gmra.mrb[0].mxu0 %v2796
        %v2798 = vpop.f32.mrb[0].mxu0
        %v2799 = vadd.f32 %v2467, %v2798
        %v2800 = vpop.f32.mrb[0].mxu0
        %v2801 = vadd.f32 %v2469, %v2800
        %2802 = vmatprep.mubr.f32.mxu0 0.0
        %v2803 = vand.u32 %v1535, 4294901760
        %v2804 = vsub.f32 %v1535, %v2803
        %v2805 = vand.u32 %v2804, 4294901760
        %2806 = vmatmul.mubr.f32.gmra.mrb[0].mxu0 %v2805
        %v2807 = vpop.f32.mrb[0].mxu0
        %v2808 = vadd.f32 %v2475, %v2807
        %v2809 = vpop.f32.mrb[0].mxu0
        %v2810 = vadd.f32 %v2477, %v2809
        %2811 = vmatprep.mubr.f32.mxu0 0.0
        %v2812 = vand.u32 %v1538, 4294901760
        %v2813 = vsub.f32 %v1538, %v2812
        %v2814 = vand.u32 %v2813, 4294901760
        %2815 = vmatmul.mubr.f32.gmra.mrb[0].mxu0 %v2814
        %v2816 = vpop.f32.mrb[0].mxu0
        %v2817 = vadd.f32 %v2483, %v2816
        %v2818 = vpop.f32.mrb[0].mxu0
        %v2819 = vadd.f32 %v2485, %v2818
        %2820 = vmatprep.mubr.f32.mxu0 0.0
        %v2821 = vand.u32 %v1541, 4294901760
        %v2822 = vsub.f32 %v1541, %v2821
        %v2823 = vand.u32 %v2822, 4294901760
        %2824 = vmatmul.mubr.f32.gmra.mrb[0].mxu0 %v2823
        %v2825 = vpop.f32.mrb[0].mxu0
        %v2826 = vadd.f32 %v2491, %v2825
        %v2827 = vpop.f32.mrb[0].mxu0
        %v2828 = vadd.f32 %v2493, %v2827
        %2829 = vmatprep.mubr.f32.mxu0 0.0
        %v2830 = vand.u32 %v1544, 4294901760
        %v2831 = vsub.f32 %v1544, %v2830
        %v2832 = vand.u32 %v2831, 4294901760
        %2833 = vmatmul.mubr.f32.gmra.mrb[0].mxu0 %v2832
        %v2834 = vpop.f32.mrb[0].mxu0
        %v2835 = vadd.f32 %v2499, %v2834
        %v2836 = vpop.f32.mrb[0].mxu0
        %v2837 = vadd.f32 %v2501, %v2836
        %2838 = vmatprep.mubr.f32.mxu0 0.0
        %v2839 = vand.u32 %v1547, 4294901760
        %v2840 = vsub.f32 %v1547, %v2839
        %v2841 = vand.u32 %v2840, 4294901760
        %2842 = vmatmul.mubr.f32.gmra.mrb[0].mxu0 %v2841
        %v2843 = vpop.f32.mrb[0].mxu0
        %v2844 = vadd.f32 %v2507, %v2843
        %v2845 = vpop.f32.mrb[0].mxu0
        %v2846 = vadd.f32 %v2509, %v2845
        %2847 = vmatprep.mubr.f32.mxu0 0.0
        %v2848 = vand.u32 %v1550, 4294901760
        %v2849 = vsub.f32 %v1550, %v2848
        %v2850 = vand.u32 %v2849, 4294901760
        %2851 = vmatmul.mubr.f32.gmra.mrb[0].mxu0 %v2850
        %v2852 = vpop.f32.mrb[0].mxu0
        %v2853 = vadd.f32 %v2515, %v2852
        %v2854 = vpop.f32.mrb[0].mxu0
        %v2855 = vadd.f32 %v2517, %v2854
        %2856 = vmatprep.mubr.f32.mxu0 0.0
        %v2857 = vand.u32 %v1553, 4294901760
        %v2858 = vsub.f32 %v1553, %v2857
        %v2859 = vand.u32 %v2858, 4294901760
        %2860 = vmatmul.mubr.f32.gmra.mrb[0].mxu0 %v2859
        %v2861 = vpop.f32.mrb[0].mxu0
        %v2862 = vadd.f32 %v2523, %v2861
        %v2863 = vpop.f32.mrb[0].mxu0
        %v2864 = vadd.f32 %v2525, %v2863
        %2865 = vmatprep.mubr.f32.mxu0 0.0
        %v2866 = vand.u32 %v1556, 4294901760
        %v2867 = vsub.f32 %v1556, %v2866
        %v2868 = vand.u32 %v2867, 4294901760
        %2869 = vmatmul.mubr.f32.gmra.mrb[0].mxu0 %v2868
        %v2870 = vpop.f32.mrb[0].mxu0
        %v2871 = vadd.f32 %v2531, %v2870
        %v2872 = vpop.f32.mrb[0].mxu0
        %v2873 = vadd.f32 %v2533, %v2872
        %2874 = vmatprep.mubr.f32.mxu0 0.0
        %v2875 = vand.u32 %v1559, 4294901760
        %v2876 = vsub.f32 %v1559, %v2875
        %v2877 = vand.u32 %v2876, 4294901760
        %2878 = vmatmul.mubr.f32.gmra.mrb[0].mxu0 %v2877
        %v2879 = vpop.f32.mrb[0].mxu0
        %v2880 = vadd.f32 %v2539, %v2879
        %v2881 = vpop.f32.mrb[0].mxu0
        %v2882 = vadd.f32 %v2541, %v2881
        %2883 = vmatprep.mubr.f32.mxu0 0.0
        %v2884 = vand.u32 %v1562, 4294901760
        %v2885 = vsub.f32 %v1562, %v2884
        %v2886 = vand.u32 %v2885, 4294901760
        %2887 = vmatmul.mubr.f32.gmra.mrb[0].mxu0 %v2886
        %v2888 = vpop.f32.mrb[0].mxu0
        %v2889 = vadd.f32 %v2547, %v2888
        %v2890 = vpop.f32.mrb[0].mxu0
        %v2891 = vadd.f32 %v2549, %v2890
        %2892 = vmatprep.mubr.f32.mxu0 0.0
        %v2893 = vand.u32 %v1565, 4294901760
        %v2894 = vsub.f32 %v1565, %v2893
        %v2895 = vand.u32 %v2894, 4294901760
        %2896 = vmatmul.mubr.f32.gmra.mrb[0].mxu0 %v2895
        %v2897 = vpop.f32.mrb[0].mxu0
        %v2898 = vadd.f32 %v2555, %v2897
        %v2899 = vpop.f32.mrb[0].mxu0
        %v2900 = vadd.f32 %v2557, %v2899
        %2901 = vmatprep.mubr.f32.mxu0 0.0
        %v2902 = vand.u32 %v1568, 4294901760
        %v2903 = vsub.f32 %v1568, %v2902
        %v2904 = vand.u32 %v2903, 4294901760
        %2905 = vmatmul.mubr.f32.gmra.mrb[0].mxu0 %v2904
        %v2906 = vpop.f32.mrb[0].mxu0
        %v2907 = vadd.f32 %v2563, %v2906
        %v2908 = vpop.f32.mrb[0].mxu0
        %v2909 = vadd.f32 %v2565, %v2908
        %2910 = vmatprep.mubr.f32.mxu0 0.0
        %v2911 = vand.u32 %v1571, 4294901760
        %v2912 = vsub.f32 %v1571, %v2911
        %v2913 = vand.u32 %v2912, 4294901760
        %2914 = vmatmul.mubr.f32.gmra.mrb[0].mxu0 %v2913
        %v2915 = vpop.f32.mrb[0].mxu0
        %v2916 = vadd.f32 %v2571, %v2915
        %v2917 = vpop.f32.mrb[0].mxu0
        %v2918 = vadd.f32 %v2573, %v2917
        %2919 = vmatprep.mubr.f32.mxu0 0.0
        %v2920 = vand.u32 %v1574, 4294901760
        %v2921 = vsub.f32 %v1574, %v2920
        %v2922 = vand.u32 %v2921, 4294901760
        %2923 = vmatmul.mubr.f32.gmra.mrb[0].mxu0 %v2922
        %v2924 = vpop.f32.mrb[0].mxu0
        %v2925 = vadd.f32 %v2579, %v2924
        %v2926 = vpop.f32.mrb[0].mxu0
        %v2927 = vadd.f32 %v2581, %v2926
        %2928 = vmatprep.mubr.f32.mxu0 0.0
        %v2929 = vand.u32 %v1577, 4294901760
        %v2930 = vsub.f32 %v1577, %v2929
        %v2931 = vand.u32 %v2930, 4294901760
        %2932 = vmatmul.mubr.f32.gmra.mrb[0].mxu0 %v2931
        %v2933 = vpop.f32.mrb[0].mxu0
        %v2934 = vadd.f32 %v2587, %v2933
        %v2935 = vpop.f32.mrb[0].mxu0
        %v2936 = vadd.f32 %v2589, %v2935
        %2937 = vmatprep.mubr.f32.mxu0 0.0
        %v2938 = vand.u32 %v1580, 4294901760
        %v2939 = vsub.f32 %v1580, %v2938
        %v2940 = vand.u32 %v2939, 4294901760
        %2941 = vmatmul.mubr.f32.gmra.mrb[0].mxu0 %v2940
        %v2942 = vpop.f32.mrb[0].mxu0
        %v2943 = vadd.f32 %v2595, %v2942
        %v2944 = vpop.f32.mrb[0].mxu0
        %v2945 = vadd.f32 %v2597, %v2944
        %2946 = vmatprep.mubr.f32.mxu0 0.0
        %v2947 = vand.u32 %v1583, 4294901760
        %v2948 = vsub.f32 %v1583, %v2947
        %v2949 = vand.u32 %v2948, 4294901760
        %2950 = vmatmul.mubr.f32.gmra.mrb[0].mxu0 %v2949
        %v2951 = vpop.f32.mrb[0].mxu0
        %v2952 = vadd.f32 %v2603, %v2951
        %v2953 = vpop.f32.mrb[0].mxu0
        %v2954 = vadd.f32 %v2605, %v2953
        %2955 = vmatprep.mubr.f32.mxu0 0.0
        %v2956 = vand.u32 %v1586, 4294901760
        %v2957 = vsub.f32 %v1586, %v2956
        %v2958 = vand.u32 %v2957, 4294901760
        %2959 = vmatmul.mubr.f32.gmra.mrb[0].mxu0 %v2958
        %v2960 = vpop.f32.mrb[0].mxu0
        %v2961 = vadd.f32 %v2611, %v2960
        %v2962 = vpop.f32.mrb[0].mxu0
        %v2963 = vadd.f32 %v2613, %v2962
        %2964 = vmatprep.mubr.f32.mxu0 0.0
        %v2965 = vand.u32 %v1589, 4294901760
        %v2966 = vsub.f32 %v1589, %v2965
        %v2967 = vand.u32 %v2966, 4294901760
        %2968 = vmatmul.mubr.f32.gmra.mrb[0].mxu0 %v2967
        %v2969 = vpop.f32.mrb[0].mxu0
        %v2970 = vadd.f32 %v2619, %v2969
        %v2971 = vpop.f32.mrb[0].mxu0
        %v2972 = vadd.f32 %v2621, %v2971
        %2973 = vmatprep.mubr.f32.mxu0 0.0
        %v2974 = vand.u32 %v1592, 4294901760
        %v2975 = vsub.f32 %v1592, %v2974
        %v2976 = vand.u32 %v2975, 4294901760
        %2977 = vmatmul.mubr.f32.gmra.mrb[0].mxu0 %v2976
        %v2978 = vpop.f32.mrb[0].mxu0
        %v2979 = vadd.f32 %v2627, %v2978
        %v2980 = vpop.f32.mrb[0].mxu0
        %v2981 = vadd.f32 %v2629, %v2980
        %2982 = vmatprep.mubr.f32.mxu0 0.0
        %v2983 = vand.u32 %v1595, 4294901760
        %v2984 = vsub.f32 %v1595, %v2983
        %v2985 = vand.u32 %v2984, 4294901760
        %2986 = vmatmul.mubr.f32.gmra.mrb[0].mxu0 %v2985
        %v2987 = vpop.f32.mrb[0].mxu0
        %v2988 = vadd.f32 %v2635, %v2987
        %v2989 = vpop.f32.mrb[0].mxu0
        %v2990 = vadd.f32 %v2637, %v2989
        %2991 = vmatprep.mubr.f32.mxu0 0.0
        %v2992 = vand.u32 %v1598, 4294901760
        %v2993 = vsub.f32 %v1598, %v2992
        %v2994 = vand.u32 %v2993, 4294901760
        %2995 = vmatmul.mubr.f32.gmra.mrb[0].mxu0 %v2994
        %v2996 = vpop.f32.mrb[0].mxu0
        %v2997 = vadd.f32 %v2643, %v2996
        %v2998 = vpop.f32.mrb[0].mxu0
        %v2999 = vadd.f32 %v2645, %v2998
        %3000 = vmatprep.mubr.f32.mxu0 0.0
        %v3001 = vand.u32 %v1601, 4294901760
        %v3002 = vsub.f32 %v1601, %v3001
        %v3003 = vand.u32 %v3002, 4294901760
        %3004 = vmatmul.mubr.f32.gmra.mrb[0].mxu0 %v3003
        %v3005 = vpop.f32.mrb[0].mxu0
        %v3006 = vadd.f32 %v2651, %v3005
        %v3007 = vpop.f32.mrb[0].mxu0
        %v3008 = vadd.f32 %v2653, %v3007
        %3009 = vdwg.mxu0
        %v3010 = vand.u32 %v1606, 4294901760
        %v3011 = vsub.f32 %v1606, %v3010
        %v3012 = vand.u32 %v3011, 4294901760
        %3013 = vmatprep.subr.mxu0 %v3012
        %v3014 = vand.u32 %v1604, 4294901760
        %v3015 = vsub.f32 %v1604, %v3014
        %v3016 = vand.u32 %v3015, 4294901760
        %3017 = vmatpush1.msra.mxu0 %v3016
        %3018 = vmatprep.subr.mxu0 0.0
        %3019 = vmatpush1.msra.mxu0 0.0
        %3020 = vmatprep.subr.mxu0 0.0
        %3021 = vmatpush1.msra.mxu0 0.0
        %3022 = vmatprep.subr.mxu0 0.0
        %3023 = vmatpush1.msra.mxu0 0.0
        %3024 = vmatprep.subr.mxu0 0.0
        %3025 = vmatpush1.msra.mxu0 0.0
        %3026 = vmatprep.subr.mxu0 0.0
        %3027 = vmatpush1.msra.mxu0 0.0
        %3028 = vmatprep.subr.mxu0 0.0
        %3029 = vmatpush1.msra.mxu0 0.0
        %3030 = vmatprep.subr.mxu0 0.0
        %3031 = vmatpush1.msra.mxu0 0.0
        %3032 = vmatprep.subr.mxu0 0.0
        %3033 = vmatpush1.msra.mxu0 0.0
        %3034 = vmatprep.subr.mxu0 0.0
        %3035 = vmatpush1.msra.mxu0 0.0
        %3036 = vmatprep.subr.mxu0 0.0
        %3037 = vmatpush1.msra.mxu0 0.0
        %3038 = vmatprep.subr.mxu0 0.0
        %3039 = vmatpush1.msra.mxu0 0.0
        %3040 = vmatprep.subr.mxu0 0.0
        %3041 = vmatpush1.msra.mxu0 0.0
        %3042 = vmatprep.subr.mxu0 0.0
        %3043 = vmatpush1.msra.mxu0 0.0
        %3044 = vmatprep.subr.mxu0 0.0
        %3045 = vmatpush1.msra.mxu0 0.0
        %3046 = vmatprep.subr.mxu0 0.0
        %3047 = vmatpush1.msra.mxu0 0.0
        %3048 = vmatprep.subr.mxu0 0.0
        %3049 = vmatpush1.msra.mxu0 0.0
        %3050 = vmatprep.subr.mxu0 0.0
        %3051 = vmatpush1.msra.mxu0 0.0
        %3052 = vmatprep.subr.mxu0 0.0
        %3053 = vmatpush1.msra.mxu0 0.0
        %3054 = vmatprep.subr.mxu0 0.0
        %3055 = vmatpush1.msra.mxu0 0.0
        %3056 = vmatprep.subr.mxu0 0.0
        %3057 = vmatpush1.msra.mxu0 0.0
        %3058 = vmatprep.subr.mxu0 0.0
        %3059 = vmatpush1.msra.mxu0 0.0
        %3060 = vmatprep.subr.mxu0 0.0
        %3061 = vmatpush1.msra.mxu0 0.0
        %3062 = vmatprep.subr.mxu0 0.0
        %3063 = vmatpush1.msra.mxu0 0.0
        %3064 = vmatprep.subr.mxu0 0.0
        %3065 = vmatpush1.msra.mxu0 0.0
        %3066 = vmatprep.subr.mxu0 0.0
        %3067 = vmatpush1.msra.mxu0 0.0
        %3068 = vmatprep.subr.mxu0 0.0
        %3069 = vmatpush1.msra.mxu0 0.0
        %3070 = vmatprep.subr.mxu0 0.0
        %3071 = vmatpush1.msra.mxu0 0.0
        %3072 = vmatprep.subr.mxu0 0.0
        %3073 = vmatpush1.msra.mxu0 0.0
        %3074 = vmatprep.subr.mxu0 0.0
        %3075 = vmatpush1.msra.mxu0 0.0
        %3076 = vmatprep.subr.mxu0 0.0
        %3077 = vmatpush1.msra.mxu0 0.0
        %3078 = vmatprep.subr.mxu0 0.0
        %3079 = vmatpush1.msra.mxu0 0.0
        %3080 = vmatprep.mubr.f32.mxu0 0.0
        %v3081 = vand.u32 %v1508, 4294901760
        %3082 = vmatmul.mubr.f32.gmra.mrb[0].mxu0 %v3081
        %v3083 = vpop.f32.mrb[0].mxu0
        %v3084 = vadd.f32 %v2727, %v3083
        %v3085 = vpop.f32.mrb[0].mxu0
        %v3086 = vadd.f32 %v2729, %v3085
        %3087 = vmatprep.mubr.f32.mxu0 0.0
        %v3088 = vand.u32 %v1511, 4294901760
        %3089 = vmatmul.mubr.f32.gmra.mrb[0].mxu0 %v3088
        %v3090 = vpop.f32.mrb[0].mxu0
        %v3091 = vadd.f32 %v2736, %v3090
        %v3092 = vpop.f32.mrb[0].mxu0
        %v3093 = vadd.f32 %v2738, %v3092
        %3094 = vmatprep.mubr.f32.mxu0 0.0
        %v3095 = vand.u32 %v1514, 4294901760
        %3096 = vmatmul.mubr.f32.gmra.mrb[0].mxu0 %v3095
        %v3097 = vpop.f32.mrb[0].mxu0
        %v3098 = vadd.f32 %v2745, %v3097
        %v3099 = vpop.f32.mrb[0].mxu0
        %v3100 = vadd.f32 %v2747, %v3099
        %3101 = vmatprep.mubr.f32.mxu0 0.0
        %v3102 = vand.u32 %v1517, 4294901760
        %3103 = vmatmul.mubr.f32.gmra.mrb[0].mxu0 %v3102
        %v3104 = vpop.f32.mrb[0].mxu0
        %v3105 = vadd.f32 %v2754, %v3104
        %v3106 = vpop.f32.mrb[0].mxu0
        %v3107 = vadd.f32 %v2756, %v3106
        %3108 = vmatprep.mubr.f32.mxu0 0.0
        %v3109 = vand.u32 %v1520, 4294901760
        %3110 = vmatmul.mubr.f32.gmra.mrb[0].mxu0 %v3109
        %v3111 = vpop.f32.mrb[0].mxu0
        %v3112 = vadd.f32 %v2763, %v3111
        %v3113 = vpop.f32.mrb[0].mxu0
        %v3114 = vadd.f32 %v2765, %v3113
        %3115 = vmatprep.mubr.f32.mxu0 0.0
        %v3116 = vand.u32 %v1523, 4294901760
        %3117 = vmatmul.mubr.f32.gmra.mrb[0].mxu0 %v3116
        %v3118 = vpop.f32.mrb[0].mxu0
        %v3119 = vadd.f32 %v2772, %v3118
        %v3120 = vpop.f32.mrb[0].mxu0
        %v3121 = vadd.f32 %v2774, %v3120
        %3122 = vmatprep.mubr.f32.mxu0 0.0
        %v3123 = vand.u32 %v1526, 4294901760
        %3124 = vmatmul.mubr.f32.gmra.mrb[0].mxu0 %v3123
        %v3125 = vpop.f32.mrb[0].mxu0
        %v3126 = vadd.f32 %v2781, %v3125
        %v3127 = vpop.f32.mrb[0].mxu0
        %v3128 = vadd.f32 %v2783, %v3127
        %3129 = vmatprep.mubr.f32.mxu0 0.0
        %v3130 = vand.u32 %v1529, 4294901760
        %3131 = vmatmul.mubr.f32.gmra.mrb[0].mxu0 %v3130
        %v3132 = vpop.f32.mrb[0].mxu0
        %v3133 = vadd.f32 %v2790, %v3132
        %v3134 = vpop.f32.mrb[0].mxu0
        %v3135 = vadd.f32 %v2792, %v3134
        %3136 = vmatprep.mubr.f32.mxu0 0.0
        %v3137 = vand.u32 %v1532, 4294901760
        %3138 = vmatmul.mubr.f32.gmra.mrb[0].mxu0 %v3137
        %v3139 = vpop.f32.mrb[0].mxu0
        %v3140 = vadd.f32 %v2799, %v3139
        %v3141 = vpop.f32.mrb[0].mxu0
        %v3142 = vadd.f32 %v2801, %v3141
        %3143 = vmatprep.mubr.f32.mxu0 0.0
        %v3144 = vand.u32 %v1535, 4294901760
        %3145 = vmatmul.mubr.f32.gmra.mrb[0].mxu0 %v3144
        %v3146 = vpop.f32.mrb[0].mxu0
        %v3147 = vadd.f32 %v2808, %v3146
        %v3148 = vpop.f32.mrb[0].mxu0
        %v3149 = vadd.f32 %v2810, %v3148
        %3150 = vmatprep.mubr.f32.mxu0 0.0
        %v3151 = vand.u32 %v1538, 4294901760
        %3152 = vmatmul.mubr.f32.gmra.mrb[0].mxu0 %v3151
        %v3153 = vpop.f32.mrb[0].mxu0
        %v3154 = vadd.f32 %v2817, %v3153
        %v3155 = vpop.f32.mrb[0].mxu0
        %v3156 = vadd.f32 %v2819, %v3155
        %3157 = vmatprep.mubr.f32.mxu0 0.0
        %v3158 = vand.u32 %v1541, 4294901760
        %3159 = vmatmul.mubr.f32.gmra.mrb[0].mxu0 %v3158
        %v3160 = vpop.f32.mrb[0].mxu0
        %v3161 = vadd.f32 %v2826, %v3160
        %v3162 = vpop.f32.mrb[0].mxu0
        %v3163 = vadd.f32 %v2828, %v3162
        %3164 = vmatprep.mubr.f32.mxu0 0.0
        %v3165 = vand.u32 %v1544, 4294901760
        %3166 = vmatmul.mubr.f32.gmra.mrb[0].mxu0 %v3165
        %v3167 = vpop.f32.mrb[0].mxu0
        %v3168 = vadd.f32 %v2835, %v3167
        %v3169 = vpop.f32.mrb[0].mxu0
        %v3170 = vadd.f32 %v2837, %v3169
        %3171 = vmatprep.mubr.f32.mxu0 0.0
        %v3172 = vand.u32 %v1547, 4294901760
        %3173 = vmatmul.mubr.f32.gmra.mrb[0].mxu0 %v3172
        %v3174 = vpop.f32.mrb[0].mxu0
        %v3175 = vadd.f32 %v2844, %v3174
        %v3176 = vpop.f32.mrb[0].mxu0
        %v3177 = vadd.f32 %v2846, %v3176
        %3178 = vmatprep.mubr.f32.mxu0 0.0
        %v3179 = vand.u32 %v1550, 4294901760
        %3180 = vmatmul.mubr.f32.gmra.mrb[0].mxu0 %v3179
        %v3181 = vpop.f32.mrb[0].mxu0
        %v3182 = vadd.f32 %v2853, %v3181
        %v3183 = vpop.f32.mrb[0].mxu0
        %v3184 = vadd.f32 %v2855, %v3183
        %3185 = vmatprep.mubr.f32.mxu0 0.0
        %v3186 = vand.u32 %v1553, 4294901760
        %3187 = vmatmul.mubr.f32.gmra.mrb[0].mxu0 %v3186
        %v3188 = vpop.f32.mrb[0].mxu0
        %v3189 = vadd.f32 %v2862, %v3188
        %v3190 = vpop.f32.mrb[0].mxu0
        %v3191 = vadd.f32 %v2864, %v3190
        %3192 = vmatprep.mubr.f32.mxu0 0.0
        %v3193 = vand.u32 %v1556, 4294901760
        %3194 = vmatmul.mubr.f32.gmra.mrb[0].mxu0 %v3193
        %v3195 = vpop.f32.mrb[0].mxu0
        %v3196 = vadd.f32 %v2871, %v3195
        %v3197 = vpop.f32.mrb[0].mxu0
        %v3198 = vadd.f32 %v2873, %v3197
        %3199 = vmatprep.mubr.f32.mxu0 0.0
        %v3200 = vand.u32 %v1559, 4294901760
        %3201 = vmatmul.mubr.f32.gmra.mrb[0].mxu0 %v3200
        %v3202 = vpop.f32.mrb[0].mxu0
        %v3203 = vadd.f32 %v2880, %v3202
        %v3204 = vpop.f32.mrb[0].mxu0
        %v3205 = vadd.f32 %v2882, %v3204
        %3206 = vmatprep.mubr.f32.mxu0 0.0
        %v3207 = vand.u32 %v1562, 4294901760
        %3208 = vmatmul.mubr.f32.gmra.mrb[0].mxu0 %v3207
        %v3209 = vpop.f32.mrb[0].mxu0
        %v3210 = vadd.f32 %v2889, %v3209
        %v3211 = vpop.f32.mrb[0].mxu0
        %v3212 = vadd.f32 %v2891, %v3211
        %3213 = vmatprep.mubr.f32.mxu0 0.0
        %v3214 = vand.u32 %v1565, 4294901760
        %3215 = vmatmul.mubr.f32.gmra.mrb[0].mxu0 %v3214
        %v3216 = vpop.f32.mrb[0].mxu0
        %v3217 = vadd.f32 %v2898, %v3216
        %v3218 = vpop.f32.mrb[0].mxu0
        %v3219 = vadd.f32 %v2900, %v3218
        %3220 = vmatprep.mubr.f32.mxu0 0.0
        %v3221 = vand.u32 %v1568, 4294901760
        %3222 = vmatmul.mubr.f32.gmra.mrb[0].mxu0 %v3221
        %v3223 = vpop.f32.mrb[0].mxu0
        %v3224 = vadd.f32 %v2907, %v3223
        %v3225 = vpop.f32.mrb[0].mxu0
        %v3226 = vadd.f32 %v2909, %v3225
        %3227 = vmatprep.mubr.f32.mxu0 0.0
        %v3228 = vand.u32 %v1571, 4294901760
        %3229 = vmatmul.mubr.f32.gmra.mrb[0].mxu0 %v3228
        %v3230 = vpop.f32.mrb[0].mxu0
        %v3231 = vadd.f32 %v2916, %v3230
        %v3232 = vpop.f32.mrb[0].mxu0
        %v3233 = vadd.f32 %v2918, %v3232
        %3234 = vmatprep.mubr.f32.mxu0 0.0
        %v3235 = vand.u32 %v1574, 4294901760
        %3236 = vmatmul.mubr.f32.gmra.mrb[0].mxu0 %v3235
        %v3237 = vpop.f32.mrb[0].mxu0
        %v3238 = vadd.f32 %v2925, %v3237
        %v3239 = vpop.f32.mrb[0].mxu0
        %v3240 = vadd.f32 %v2927, %v3239
        %3241 = vmatprep.mubr.f32.mxu0 0.0
        %v3242 = vand.u32 %v1577, 4294901760
        %3243 = vmatmul.mubr.f32.gmra.mrb[0].mxu0 %v3242
        %v3244 = vpop.f32.mrb[0].mxu0
        %v3245 = vadd.f32 %v2934, %v3244
        %v3246 = vpop.f32.mrb[0].mxu0
        %v3247 = vadd.f32 %v2936, %v3246
        %3248 = vmatprep.mubr.f32.mxu0 0.0
        %v3249 = vand.u32 %v1580, 4294901760
        %3250 = vmatmul.mubr.f32.gmra.mrb[0].mxu0 %v3249
        %v3251 = vpop.f32.mrb[0].mxu0
        %v3252 = vadd.f32 %v2943, %v3251
        %v3253 = vpop.f32.mrb[0].mxu0
        %v3254 = vadd.f32 %v2945, %v3253
        %3255 = vmatprep.mubr.f32.mxu0 0.0
        %v3256 = vand.u32 %v1583, 4294901760
        %3257 = vmatmul.mubr.f32.gmra.mrb[0].mxu0 %v3256
        %v3258 = vpop.f32.mrb[0].mxu0
        %v3259 = vadd.f32 %v2952, %v3258
        %v3260 = vpop.f32.mrb[0].mxu0
        %v3261 = vadd.f32 %v2954, %v3260
        %3262 = vmatprep.mubr.f32.mxu0 0.0
        %v3263 = vand.u32 %v1586, 4294901760
        %3264 = vmatmul.mubr.f32.gmra.mrb[0].mxu0 %v3263
        %v3265 = vpop.f32.mrb[0].mxu0
        %v3266 = vadd.f32 %v2961, %v3265
        %v3267 = vpop.f32.mrb[0].mxu0
        %v3268 = vadd.f32 %v2963, %v3267
        %3269 = vmatprep.mubr.f32.mxu0 0.0
        %v3270 = vand.u32 %v1589, 4294901760
        %3271 = vmatmul.mubr.f32.gmra.mrb[0].mxu0 %v3270
        %v3272 = vpop.f32.mrb[0].mxu0
        %v3273 = vadd.f32 %v2970, %v3272
        %v3274 = vpop.f32.mrb[0].mxu0
        %v3275 = vadd.f32 %v2972, %v3274
        %3276 = vmatprep.mubr.f32.mxu0 0.0
        %v3277 = vand.u32 %v1592, 4294901760
        %3278 = vmatmul.mubr.f32.gmra.mrb[0].mxu0 %v3277
        %v3279 = vpop.f32.mrb[0].mxu0
        %v3280 = vadd.f32 %v2979, %v3279
        %v3281 = vpop.f32.mrb[0].mxu0
        %v3282 = vadd.f32 %v2981, %v3281
        %3283 = vmatprep.mubr.f32.mxu0 0.0
        %v3284 = vand.u32 %v1595, 4294901760
        %3285 = vmatmul.mubr.f32.gmra.mrb[0].mxu0 %v3284
        %v3286 = vpop.f32.mrb[0].mxu0
        %v3287 = vadd.f32 %v2988, %v3286
        %v3288 = vpop.f32.mrb[0].mxu0
        %v3289 = vadd.f32 %v2990, %v3288
        %3290 = vmatprep.mubr.f32.mxu0 0.0
        %v3291 = vand.u32 %v1598, 4294901760
        %3292 = vmatmul.mubr.f32.gmra.mrb[0].mxu0 %v3291
        %v3293 = vpop.f32.mrb[0].mxu0
        %v3294 = vadd.f32 %v2997, %v3293
        %v3295 = vpop.f32.mrb[0].mxu0
        %v3296 = vadd.f32 %v2999, %v3295
        %3297 = vmatprep.mubr.f32.mxu0 0.0
        %v3298 = vand.u32 %v1601, 4294901760
        %3299 = vmatmul.mubr.f32.gmra.mrb[0].mxu0 %v3298
        %v3300 = vpop.f32.mrb[0].mxu0
        %v3301 = vadd.f32 %v3006, %v3300
        %v3302 = vpop.f32.mrb[0].mxu0
        %v3303 = vadd.f32 %v3008, %v3302
        %3304 = vdwg.mxu0
        %v3305 = vand.u32 %v1606, 4294901760
        %3306 = vmatprep.subr.mxu0 %v3305
        %v3307 = vand.u32 %v1604, 4294901760
        %3308 = vmatpush1.msra.mxu0 %v3307
        %3309 = vmatprep.subr.mxu0 0.0
        %3310 = vmatpush1.msra.mxu0 0.0
        %3311 = vmatprep.subr.mxu0 0.0
        %3312 = vmatpush1.msra.mxu0 0.0
        %3313 = vmatprep.subr.mxu0 0.0
        %3314 = vmatpush1.msra.mxu0 0.0
        %3315 = vmatprep.subr.mxu0 0.0
        %3316 = vmatpush1.msra.mxu0 0.0
        %3317 = vmatprep.subr.mxu0 0.0
        %3318 = vmatpush1.msra.mxu0 0.0
        %3319 = vmatprep.subr.mxu0 0.0
        %3320 = vmatpush1.msra.mxu0 0.0
        %3321 = vmatprep.subr.mxu0 0.0
        %3322 = vmatpush1.msra.mxu0 0.0
        %3323 = vmatprep.subr.mxu0 0.0
        %3324 = vmatpush1.msra.mxu0 0.0
        %3325 = vmatprep.subr.mxu0 0.0
        %3326 = vmatpush1.msra.mxu0 0.0
        %3327 = vmatprep.subr.mxu0 0.0
        %3328 = vmatpush1.msra.mxu0 0.0
        %3329 = vmatprep.subr.mxu0 0.0
        %3330 = vmatpush1.msra.mxu0 0.0
        %3331 = vmatprep.subr.mxu0 0.0
        %3332 = vmatpush1.msra.mxu0 0.0
        %3333 = vmatprep.subr.mxu0 0.0
        %3334 = vmatpush1.msra.mxu0 0.0
        %3335 = vmatprep.subr.mxu0 0.0
        %3336 = vmatpush1.msra.mxu0 0.0
        %3337 = vmatprep.subr.mxu0 0.0
        %3338 = vmatpush1.msra.mxu0 0.0
        %3339 = vmatprep.subr.mxu0 0.0
        %3340 = vmatpush1.msra.mxu0 0.0
        %3341 = vmatprep.subr.mxu0 0.0
        %3342 = vmatpush1.msra.mxu0 0.0
        %3343 = vmatprep.subr.mxu0 0.0
        %3344 = vmatpush1.msra.mxu0 0.0
        %3345 = vmatprep.subr.mxu0 0.0
        %3346 = vmatpush1.msra.mxu0 0.0
        %3347 = vmatprep.subr.mxu0 0.0
        %3348 = vmatpush1.msra.mxu0 0.0
        %3349 = vmatprep.subr.mxu0 0.0
        %3350 = vmatpush1.msra.mxu0 0.0
        %3351 = vmatprep.subr.mxu0 0.0
        %3352 = vmatpush1.msra.mxu0 0.0
        %3353 = vmatprep.subr.mxu0 0.0
        %3354 = vmatpush1.msra.mxu0 0.0
        %3355 = vmatprep.subr.mxu0 0.0
        %3356 = vmatpush1.msra.mxu0 0.0
        %3357 = vmatprep.subr.mxu0 0.0
        %3358 = vmatpush1.msra.mxu0 0.0
        %3359 = vmatprep.subr.mxu0 0.0
        %3360 = vmatpush1.msra.mxu0 0.0
        %3361 = vmatprep.subr.mxu0 0.0
        %3362 = vmatpush1.msra.mxu0 0.0
        %3363 = vmatprep.subr.mxu0 0.0
        %3364 = vmatpush1.msra.mxu0 0.0
        %3365 = vmatprep.subr.mxu0 0.0
        %3366 = vmatpush1.msra.mxu0 0.0
        %3367 = vmatprep.subr.mxu0 0.0
        %3368 = vmatpush1.msra.mxu0 0.0
        %3369 = vmatprep.subr.mxu0 0.0
        %3370 = vmatpush1.msra.mxu0 0.0
        %3371 = vmatprep.mubr.f32.mxu0 0.0
        %v3372 = vand.u32 %v1508, 4294901760
        %3373 = vmatmul.mubr.f32.gmra.mrb[0].mxu0 %v3372
        %v3374 = vpop.f32.mrb[0].mxu0
        %v3375 = vadd.f32 %v3084, %v3374
        %v3376 = vpop.f32.mrb[0].mxu0
        %v3377 = vadd.f32 %v3086, %v3376
        %3378 = vmatprep.mubr.f32.mxu0 0.0
        %v3379 = vand.u32 %v1511, 4294901760
        %3380 = vmatmul.mubr.f32.gmra.mrb[0].mxu0 %v3379
        %v3381 = vpop.f32.mrb[0].mxu0
        %v3382 = vadd.f32 %v3091, %v3381
        %v3383 = vpop.f32.mrb[0].mxu0
        %v3384 = vadd.f32 %v3093, %v3383
        %3385 = vmatprep.mubr.f32.mxu0 0.0
        %v3386 = vand.u32 %v1514, 4294901760
        %3387 = vmatmul.mubr.f32.gmra.mrb[0].mxu0 %v3386
        %v3388 = vpop.f32.mrb[0].mxu0
        %v3389 = vadd.f32 %v3098, %v3388
        %v3390 = vpop.f32.mrb[0].mxu0
        %v3391 = vadd.f32 %v3100, %v3390
        %3392 = vmatprep.mubr.f32.mxu0 0.0
        %v3393 = vand.u32 %v1517, 4294901760
        %3394 = vmatmul.mubr.f32.gmra.mrb[0].mxu0 %v3393
        %v3395 = vpop.f32.mrb[0].mxu0
        %v3396 = vadd.f32 %v3105, %v3395
        %v3397 = vpop.f32.mrb[0].mxu0
        %v3398 = vadd.f32 %v3107, %v3397
        %3399 = vmatprep.mubr.f32.mxu0 0.0
        %v3400 = vand.u32 %v1520, 4294901760
        %3401 = vmatmul.mubr.f32.gmra.mrb[0].mxu0 %v3400
        %v3402 = vpop.f32.mrb[0].mxu0
        %v3403 = vadd.f32 %v3112, %v3402
        %v3404 = vpop.f32.mrb[0].mxu0
        %v3405 = vadd.f32 %v3114, %v3404
        %3406 = vmatprep.mubr.f32.mxu0 0.0
        %v3407 = vand.u32 %v1523, 4294901760
        %3408 = vmatmul.mubr.f32.gmra.mrb[0].mxu0 %v3407
        %v3409 = vpop.f32.mrb[0].mxu0
        %v3410 = vadd.f32 %v3119, %v3409
        %v3411 = vpop.f32.mrb[0].mxu0
        %v3412 = vadd.f32 %v3121, %v3411
        %3413 = vmatprep.mubr.f32.mxu0 0.0
        %v3414 = vand.u32 %v1526, 4294901760
        %3415 = vmatmul.mubr.f32.gmra.mrb[0].mxu0 %v3414
        %v3416 = vpop.f32.mrb[0].mxu0
        %v3417 = vadd.f32 %v3126, %v3416
        %v3418 = vpop.f32.mrb[0].mxu0
        %v3419 = vadd.f32 %v3128, %v3418
        %3420 = vmatprep.mubr.f32.mxu0 0.0
        %v3421 = vand.u32 %v1529, 4294901760
        %3422 = vmatmul.mubr.f32.gmra.mrb[0].mxu0 %v3421
        %v3423 = vpop.f32.mrb[0].mxu0
        %v3424 = vadd.f32 %v3133, %v3423
        %v3425 = vpop.f32.mrb[0].mxu0
        %v3426 = vadd.f32 %v3135, %v3425
        %3427 = vmatprep.mubr.f32.mxu0 0.0
        %v3428 = vand.u32 %v1532, 4294901760
        %3429 = vmatmul.mubr.f32.gmra.mrb[0].mxu0 %v3428
        %v3430 = vpop.f32.mrb[0].mxu0
        %v3431 = vadd.f32 %v3140, %v3430
        %v3432 = vpop.f32.mrb[0].mxu0
        %v3433 = vadd.f32 %v3142, %v3432
        %3434 = vmatprep.mubr.f32.mxu0 0.0
        %v3435 = vand.u32 %v1535, 4294901760
        %3436 = vmatmul.mubr.f32.gmra.mrb[0].mxu0 %v3435
        %v3437 = vpop.f32.mrb[0].mxu0
        %v3438 = vadd.f32 %v3147, %v3437
        %v3439 = vpop.f32.mrb[0].mxu0
        %v3440 = vadd.f32 %v3149, %v3439
        %3441 = vmatprep.mubr.f32.mxu0 0.0
        %v3442 = vand.u32 %v1538, 4294901760
        %3443 = vmatmul.mubr.f32.gmra.mrb[0].mxu0 %v3442
        %v3444 = vpop.f32.mrb[0].mxu0
        %v3445 = vadd.f32 %v3154, %v3444
        %v3446 = vpop.f32.mrb[0].mxu0
        %v3447 = vadd.f32 %v3156, %v3446
        %3448 = vmatprep.mubr.f32.mxu0 0.0
        %v3449 = vand.u32 %v1541, 4294901760
        %3450 = vmatmul.mubr.f32.gmra.mrb[0].mxu0 %v3449
        %v3451 = vpop.f32.mrb[0].mxu0
        %v3452 = vadd.f32 %v3161, %v3451
        %v3453 = vpop.f32.mrb[0].mxu0
        %v3454 = vadd.f32 %v3163, %v3453
        %3455 = vmatprep.mubr.f32.mxu0 0.0
        %v3456 = vand.u32 %v1544, 4294901760
        %3457 = vmatmul.mubr.f32.gmra.mrb[0].mxu0 %v3456
        %v3458 = vpop.f32.mrb[0].mxu0
        %v3459 = vadd.f32 %v3168, %v3458
        %v3460 = vpop.f32.mrb[0].mxu0
        %v3461 = vadd.f32 %v3170, %v3460
        %3462 = vmatprep.mubr.f32.mxu0 0.0
        %v3463 = vand.u32 %v1547, 4294901760
        %3464 = vmatmul.mubr.f32.gmra.mrb[0].mxu0 %v3463
        %v3465 = vpop.f32.mrb[0].mxu0
        %v3466 = vadd.f32 %v3175, %v3465
        %v3467 = vpop.f32.mrb[0].mxu0
        %v3468 = vadd.f32 %v3177, %v3467
        %3469 = vmatprep.mubr.f32.mxu0 0.0
        %v3470 = vand.u32 %v1550, 4294901760
        %3471 = vmatmul.mubr.f32.gmra.mrb[0].mxu0 %v3470
        %v3472 = vpop.f32.mrb[0].mxu0
        %v3473 = vadd.f32 %v3182, %v3472
        %v3474 = vpop.f32.mrb[0].mxu0
        %v3475 = vadd.f32 %v3184, %v3474
        %3476 = vmatprep.mubr.f32.mxu0 0.0
        %v3477 = vand.u32 %v1553, 4294901760
        %3478 = vmatmul.mubr.f32.gmra.mrb[0].mxu0 %v3477
        %v3479 = vpop.f32.mrb[0].mxu0
        %v3480 = vadd.f32 %v3189, %v3479
        %v3481 = vpop.f32.mrb[0].mxu0
        %v3482 = vadd.f32 %v3191, %v3481
        %3483 = vmatprep.mubr.f32.mxu0 0.0
        %v3484 = vand.u32 %v1556, 4294901760
        %3485 = vmatmul.mubr.f32.gmra.mrb[0].mxu0 %v3484
        %v3486 = vpop.f32.mrb[0].mxu0
        %v3487 = vadd.f32 %v3196, %v3486
        %v3488 = vpop.f32.mrb[0].mxu0
        %v3489 = vadd.f32 %v3198, %v3488
        %3490 = vmatprep.mubr.f32.mxu0 0.0
        %v3491 = vand.u32 %v1559, 4294901760
        %3492 = vmatmul.mubr.f32.gmra.mrb[0].mxu0 %v3491
        %v3493 = vpop.f32.mrb[0].mxu0
        %v3494 = vadd.f32 %v3203, %v3493
        %v3495 = vpop.f32.mrb[0].mxu0
        %v3496 = vadd.f32 %v3205, %v3495
        %3497 = vmatprep.mubr.f32.mxu0 0.0
        %v3498 = vand.u32 %v1562, 4294901760
        %3499 = vmatmul.mubr.f32.gmra.mrb[0].mxu0 %v3498
        %v3500 = vpop.f32.mrb[0].mxu0
        %v3501 = vadd.f32 %v3210, %v3500
        %v3502 = vpop.f32.mrb[0].mxu0
        %v3503 = vadd.f32 %v3212, %v3502
        %3504 = vmatprep.mubr.f32.mxu0 0.0
        %v3505 = vand.u32 %v1565, 4294901760
        %3506 = vmatmul.mubr.f32.gmra.mrb[0].mxu0 %v3505
        %v3507 = vpop.f32.mrb[0].mxu0
        %v3508 = vadd.f32 %v3217, %v3507
        %v3509 = vpop.f32.mrb[0].mxu0
        %v3510 = vadd.f32 %v3219, %v3509
        %3511 = vmatprep.mubr.f32.mxu0 0.0
        %v3512 = vand.u32 %v1568, 4294901760
        %3513 = vmatmul.mubr.f32.gmra.mrb[0].mxu0 %v3512
        %v3514 = vpop.f32.mrb[0].mxu0
        %v3515 = vadd.f32 %v3224, %v3514
        %v3516 = vpop.f32.mrb[0].mxu0
        %v3517 = vadd.f32 %v3226, %v3516
        %3518 = vmatprep.mubr.f32.mxu0 0.0
        %v3519 = vand.u32 %v1571, 4294901760
        %3520 = vmatmul.mubr.f32.gmra.mrb[0].mxu0 %v3519
        %v3521 = vpop.f32.mrb[0].mxu0
        %v3522 = vadd.f32 %v3231, %v3521
        %v3523 = vpop.f32.mrb[0].mxu0
        %v3524 = vadd.f32 %v3233, %v3523
        %3525 = vmatprep.mubr.f32.mxu0 0.0
        %v3526 = vand.u32 %v1574, 4294901760
        %3527 = vmatmul.mubr.f32.gmra.mrb[0].mxu0 %v3526
        %v3528 = vpop.f32.mrb[0].mxu0
        %v3529 = vadd.f32 %v3238, %v3528
        %v3530 = vpop.f32.mrb[0].mxu0
        %v3531 = vadd.f32 %v3240, %v3530
        %3532 = vmatprep.mubr.f32.mxu0 0.0
        %v3533 = vand.u32 %v1577, 4294901760
        %3534 = vmatmul.mubr.f32.gmra.mrb[0].mxu0 %v3533
        %v3535 = vpop.f32.mrb[0].mxu0
        %v3536 = vadd.f32 %v3245, %v3535
        %v3537 = vpop.f32.mrb[0].mxu0
        %v3538 = vadd.f32 %v3247, %v3537
        %3539 = vmatprep.mubr.f32.mxu0 0.0
        %v3540 = vand.u32 %v1580, 4294901760
        %3541 = vmatmul.mubr.f32.gmra.mrb[0].mxu0 %v3540
        %v3542 = vpop.f32.mrb[0].mxu0
        %v3543 = vadd.f32 %v3252, %v3542
        %v3544 = vpop.f32.mrb[0].mxu0
        %v3545 = vadd.f32 %v3254, %v3544
        %3546 = vmatprep.mubr.f32.mxu0 0.0
        %v3547 = vand.u32 %v1583, 4294901760
        %3548 = vmatmul.mubr.f32.gmra.mrb[0].mxu0 %v3547
        %v3549 = vpop.f32.mrb[0].mxu0
        %v3550 = vadd.f32 %v3259, %v3549
        %v3551 = vpop.f32.mrb[0].mxu0
        %v3552 = vadd.f32 %v3261, %v3551
        %3553 = vmatprep.mubr.f32.mxu0 0.0
        %v3554 = vand.u32 %v1586, 4294901760
        %3555 = vmatmul.mubr.f32.gmra.mrb[0].mxu0 %v3554
        %v3556 = vpop.f32.mrb[0].mxu0
        %v3557 = vadd.f32 %v3266, %v3556
        %v3558 = vpop.f32.mrb[0].mxu0
        %v3559 = vadd.f32 %v3268, %v3558
        %3560 = vmatprep.mubr.f32.mxu0 0.0
        %v3561 = vand.u32 %v1589, 4294901760
        %3562 = vmatmul.mubr.f32.gmra.mrb[0].mxu0 %v3561
        %v3563 = vpop.f32.mrb[0].mxu0
        %v3564 = vadd.f32 %v3273, %v3563
        %v3565 = vpop.f32.mrb[0].mxu0
        %v3566 = vadd.f32 %v3275, %v3565
        %3567 = vmatprep.mubr.f32.mxu0 0.0
        %v3568 = vand.u32 %v1592, 4294901760
        %3569 = vmatmul.mubr.f32.gmra.mrb[0].mxu0 %v3568
        %v3570 = vpop.f32.mrb[0].mxu0
        %v3571 = vadd.f32 %v3280, %v3570
        %v3572 = vpop.f32.mrb[0].mxu0
        %v3573 = vadd.f32 %v3282, %v3572
        %3574 = vmatprep.mubr.f32.mxu0 0.0
        %v3575 = vand.u32 %v1595, 4294901760
        %3576 = vmatmul.mubr.f32.gmra.mrb[0].mxu0 %v3575
        %v3577 = vpop.f32.mrb[0].mxu0
        %v3578 = vadd.f32 %v3287, %v3577
        %v3579 = vpop.f32.mrb[0].mxu0
        %v3580 = vadd.f32 %v3289, %v3579
        %3581 = vmatprep.mubr.f32.mxu0 0.0
        %v3582 = vand.u32 %v1598, 4294901760
        %3583 = vmatmul.mubr.f32.gmra.mrb[0].mxu0 %v3582
        %v3584 = vpop.f32.mrb[0].mxu0
        %v3585 = vadd.f32 %v3294, %v3584
        %v3586 = vpop.f32.mrb[0].mxu0
        %v3587 = vadd.f32 %v3296, %v3586
        %3588 = vmatprep.mubr.f32.mxu0 0.0
        %v3589 = vand.u32 %v1601, 4294901760
        %3590 = vmatmul.mubr.f32.gmra.mrb[0].mxu0 %v3589
        %v3591 = vpop.f32.mrb[0].mxu0
        %v3592 = vadd.f32 %v3301, %v3591
        %v3593 = vpop.f32.mrb[0].mxu0
        %v3594 = vadd.f32 %v3303, %v3593
        %3595 = vdwg.mxu0
        %v3596 = vand.u32 %v1610, 4294901760
        %3597 = vmatprep.subr.mxu0 %v3596
        %v3598 = vand.u32 %v1608, 4294901760
        %3599 = vmatpush1.msra.mxu0 %v3598
        %3600 = vmatprep.subr.mxu0 0.0
        %3601 = vmatpush1.msra.mxu0 0.0
        %3602 = vmatprep.subr.mxu0 0.0
        %3603 = vmatpush1.msra.mxu0 0.0
        %3604 = vmatprep.subr.mxu0 0.0
        %3605 = vmatpush1.msra.mxu0 0.0
        %3606 = vmatprep.subr.mxu0 0.0
        %3607 = vmatpush1.msra.mxu0 0.0
        %3608 = vmatprep.subr.mxu0 0.0
        %3609 = vmatpush1.msra.mxu0 0.0
        %3610 = vmatprep.subr.mxu0 0.0
        %3611 = vmatpush1.msra.mxu0 0.0
        %3612 = vmatprep.subr.mxu0 0.0
        %3613 = vmatpush1.msra.mxu0 0.0
        %3614 = vmatprep.subr.mxu0 0.0
        %3615 = vmatpush1.msra.mxu0 0.0
        %3616 = vmatprep.subr.mxu0 0.0
        %3617 = vmatpush1.msra.mxu0 0.0
        %3618 = vmatprep.subr.mxu0 0.0
        %3619 = vmatpush1.msra.mxu0 0.0
        %3620 = vmatprep.subr.mxu0 0.0
        %3621 = vmatpush1.msra.mxu0 0.0
        %3622 = vmatprep.subr.mxu0 0.0
        %3623 = vmatpush1.msra.mxu0 0.0
        %3624 = vmatprep.subr.mxu0 0.0
        %3625 = vmatpush1.msra.mxu0 0.0
        %3626 = vmatprep.subr.mxu0 0.0
        %3627 = vmatpush1.msra.mxu0 0.0
        %3628 = vmatprep.subr.mxu0 0.0
        %3629 = vmatpush1.msra.mxu0 0.0
        %3630 = vmatprep.subr.mxu0 0.0
        %3631 = vmatpush1.msra.mxu0 0.0
        %3632 = vmatprep.subr.mxu0 0.0
        %3633 = vmatpush1.msra.mxu0 0.0
        %3634 = vmatprep.subr.mxu0 0.0
        %3635 = vmatpush1.msra.mxu0 0.0
        %3636 = vmatprep.subr.mxu0 0.0
        %3637 = vmatpush1.msra.mxu0 0.0
        %3638 = vmatprep.subr.mxu0 0.0
        %3639 = vmatpush1.msra.mxu0 0.0
        %3640 = vmatprep.subr.mxu0 0.0
        %3641 = vmatpush1.msra.mxu0 0.0
        %3642 = vmatprep.subr.mxu0 0.0
        %3643 = vmatpush1.msra.mxu0 0.0
        %3644 = vmatprep.subr.mxu0 0.0
        %3645 = vmatpush1.msra.mxu0 0.0
        %3646 = vmatprep.subr.mxu0 0.0
        %3647 = vmatpush1.msra.mxu0 0.0
        %3648 = vmatprep.subr.mxu0 0.0
        %3649 = vmatpush1.msra.mxu0 0.0
        %3650 = vmatprep.subr.mxu0 0.0
        %3651 = vmatpush1.msra.mxu0 0.0
        %3652 = vmatprep.subr.mxu0 0.0
        %3653 = vmatpush1.msra.mxu0 0.0
        %3654 = vmatprep.subr.mxu0 0.0
        %3655 = vmatpush1.msra.mxu0 0.0
        %3656 = vmatprep.subr.mxu0 0.0
        %3657 = vmatpush1.msra.mxu0 0.0
        %3658 = vmatprep.subr.mxu0 0.0
        %3659 = vmatpush1.msra.mxu0 0.0
        %3660 = vmatprep.subr.mxu0 0.0
        %3661 = vmatpush1.msra.mxu0 0.0
        %3662 = vmatprep.mubr.f32.mxu0 0.0
        %v3663 = vand.u32 %v1508, 4294901760
        %v3664 = vsub.f32 %v1508, %v3663
        %v3665 = vand.u32 %v3664, 4294901760
        %v3666 = vsub.f32 %v3664, %v3665
        %v3667 = vand.u32 %v3666, 4294901760
        %3668 = vmatmul.mubr.f32.gmra.mrb[0].mxu0 %v3667
        %v3669 = vpop.f32.mrb[0].mxu0
        %v3670 = vadd.f32 0.0, %v3669
        %v3671 = vpop.f32.mrb[0].mxu0
        %v3672 = vadd.f32 0.0, %v3671
        %3673 = vmatprep.mubr.f32.mxu0 0.0
        %v3674 = vand.u32 %v1511, 4294901760
        %v3675 = vsub.f32 %v1511, %v3674
        %v3676 = vand.u32 %v3675, 4294901760
        %v3677 = vsub.f32 %v3675, %v3676
        %v3678 = vand.u32 %v3677, 4294901760
        %3679 = vmatmul.mubr.f32.gmra.mrb[0].mxu0 %v3678
        %v3680 = vpop.f32.mrb[0].mxu0
        %v3681 = vadd.f32 0.0, %v3680
        %v3682 = vpop.f32.mrb[0].mxu0
        %v3683 = vadd.f32 0.0, %v3682
        %3684 = vmatprep.mubr.f32.mxu0 0.0
        %v3685 = vand.u32 %v1514, 4294901760
        %v3686 = vsub.f32 %v1514, %v3685
        %v3687 = vand.u32 %v3686, 4294901760
        %v3688 = vsub.f32 %v3686, %v3687
        %v3689 = vand.u32 %v3688, 4294901760
        %3690 = vmatmul.mubr.f32.gmra.mrb[0].mxu0 %v3689
        %v3691 = vpop.f32.mrb[0].mxu0
        %v3692 = vadd.f32 0.0, %v3691
        %v3693 = vpop.f32.mrb[0].mxu0
        %v3694 = vadd.f32 0.0, %v3693
        %3695 = vmatprep.mubr.f32.mxu0 0.0
        %v3696 = vand.u32 %v1517, 4294901760
        %v3697 = vsub.f32 %v1517, %v3696
        %v3698 = vand.u32 %v3697, 4294901760
        %v3699 = vsub.f32 %v3697, %v3698
        %v3700 = vand.u32 %v3699, 4294901760
        %3701 = vmatmul.mubr.f32.gmra.mrb[0].mxu0 %v3700
        %v3702 = vpop.f32.mrb[0].mxu0
        %v3703 = vadd.f32 0.0, %v3702
        %v3704 = vpop.f32.mrb[0].mxu0
        %v3705 = vadd.f32 0.0, %v3704
        %3706 = vmatprep.mubr.f32.mxu0 0.0
        %v3707 = vand.u32 %v1520, 4294901760
        %v3708 = vsub.f32 %v1520, %v3707
        %v3709 = vand.u32 %v3708, 4294901760
        %v3710 = vsub.f32 %v3708, %v3709
        %v3711 = vand.u32 %v3710, 4294901760
        %3712 = vmatmul.mubr.f32.gmra.mrb[0].mxu0 %v3711
        %v3713 = vpop.f32.mrb[0].mxu0
        %v3714 = vadd.f32 0.0, %v3713
        %v3715 = vpop.f32.mrb[0].mxu0
        %v3716 = vadd.f32 0.0, %v3715
        %3717 = vmatprep.mubr.f32.mxu0 0.0
        %v3718 = vand.u32 %v1523, 4294901760
        %v3719 = vsub.f32 %v1523, %v3718
        %v3720 = vand.u32 %v3719, 4294901760
        %v3721 = vsub.f32 %v3719, %v3720
        %v3722 = vand.u32 %v3721, 4294901760
        %3723 = vmatmul.mubr.f32.gmra.mrb[0].mxu0 %v3722
        %v3724 = vpop.f32.mrb[0].mxu0
        %v3725 = vadd.f32 0.0, %v3724
        %v3726 = vpop.f32.mrb[0].mxu0
        %v3727 = vadd.f32 0.0, %v3726
        %3728 = vmatprep.mubr.f32.mxu0 0.0
        %v3729 = vand.u32 %v1526, 4294901760
        %v3730 = vsub.f32 %v1526, %v3729
        %v3731 = vand.u32 %v3730, 4294901760
        %v3732 = vsub.f32 %v3730, %v3731
        %v3733 = vand.u32 %v3732, 4294901760
        %3734 = vmatmul.mubr.f32.gmra.mrb[0].mxu0 %v3733
        %v3735 = vpop.f32.mrb[0].mxu0
        %v3736 = vadd.f32 0.0, %v3735
        %v3737 = vpop.f32.mrb[0].mxu0
        %v3738 = vadd.f32 0.0, %v3737
        %3739 = vmatprep.mubr.f32.mxu0 0.0
        %v3740 = vand.u32 %v1529, 4294901760
        %v3741 = vsub.f32 %v1529, %v3740
        %v3742 = vand.u32 %v3741, 4294901760
        %v3743 = vsub.f32 %v3741, %v3742
        %v3744 = vand.u32 %v3743, 4294901760
        %3745 = vmatmul.mubr.f32.gmra.mrb[0].mxu0 %v3744
        %v3746 = vpop.f32.mrb[0].mxu0
        %v3747 = vadd.f32 0.0, %v3746
        %v3748 = vpop.f32.mrb[0].mxu0
        %v3749 = vadd.f32 0.0, %v3748
        %3750 = vmatprep.mubr.f32.mxu0 0.0
        %v3751 = vand.u32 %v1532, 4294901760
        %v3752 = vsub.f32 %v1532, %v3751
        %v3753 = vand.u32 %v3752, 4294901760
        %v3754 = vsub.f32 %v3752, %v3753
        %v3755 = vand.u32 %v3754, 4294901760
        %3756 = vmatmul.mubr.f32.gmra.mrb[0].mxu0 %v3755
        %v3757 = vpop.f32.mrb[0].mxu0
        %v3758 = vadd.f32 0.0, %v3757
        %v3759 = vpop.f32.mrb[0].mxu0
        %v3760 = vadd.f32 0.0, %v3759
        %3761 = vmatprep.mubr.f32.mxu0 0.0
        %v3762 = vand.u32 %v1535, 4294901760
        %v3763 = vsub.f32 %v1535, %v3762
        %v3764 = vand.u32 %v3763, 4294901760
        %v3765 = vsub.f32 %v3763, %v3764
        %v3766 = vand.u32 %v3765, 4294901760
        %3767 = vmatmul.mubr.f32.gmra.mrb[0].mxu0 %v3766
        %v3768 = vpop.f32.mrb[0].mxu0
        %v3769 = vadd.f32 0.0, %v3768
        %v3770 = vpop.f32.mrb[0].mxu0
        %v3771 = vadd.f32 0.0, %v3770
        %3772 = vmatprep.mubr.f32.mxu0 0.0
        %v3773 = vand.u32 %v1538, 4294901760
        %v3774 = vsub.f32 %v1538, %v3773
        %v3775 = vand.u32 %v3774, 4294901760
        %v3776 = vsub.f32 %v3774, %v3775
        %v3777 = vand.u32 %v3776, 4294901760
        %3778 = vmatmul.mubr.f32.gmra.mrb[0].mxu0 %v3777
        %v3779 = vpop.f32.mrb[0].mxu0
        %v3780 = vadd.f32 0.0, %v3779
        %v3781 = vpop.f32.mrb[0].mxu0
        %v3782 = vadd.f32 0.0, %v3781
        %3783 = vmatprep.mubr.f32.mxu0 0.0
        %v3784 = vand.u32 %v1541, 4294901760
        %v3785 = vsub.f32 %v1541, %v3784
        %v3786 = vand.u32 %v3785, 4294901760
        %v3787 = vsub.f32 %v3785, %v3786
        %v3788 = vand.u32 %v3787, 4294901760
        %3789 = vmatmul.mubr.f32.gmra.mrb[0].mxu0 %v3788
        %v3790 = vpop.f32.mrb[0].mxu0
        %v3791 = vadd.f32 0.0, %v3790
        %v3792 = vpop.f32.mrb[0].mxu0
        %v3793 = vadd.f32 0.0, %v3792
        %3794 = vmatprep.mubr.f32.mxu0 0.0
        %v3795 = vand.u32 %v1544, 4294901760
        %v3796 = vsub.f32 %v1544, %v3795
        %v3797 = vand.u32 %v3796, 4294901760
        %v3798 = vsub.f32 %v3796, %v3797
        %v3799 = vand.u32 %v3798, 4294901760
        %3800 = vmatmul.mubr.f32.gmra.mrb[0].mxu0 %v3799
        %v3801 = vpop.f32.mrb[0].mxu0
        %v3802 = vadd.f32 0.0, %v3801
        %v3803 = vpop.f32.mrb[0].mxu0
        %v3804 = vadd.f32 0.0, %v3803
        %3805 = vmatprep.mubr.f32.mxu0 0.0
        %v3806 = vand.u32 %v1547, 4294901760
        %v3807 = vsub.f32 %v1547, %v3806
        %v3808 = vand.u32 %v3807, 4294901760
        %v3809 = vsub.f32 %v3807, %v3808
        %v3810 = vand.u32 %v3809, 4294901760
        %3811 = vmatmul.mubr.f32.gmra.mrb[0].mxu0 %v3810
        %v3812 = vpop.f32.mrb[0].mxu0
        %v3813 = vadd.f32 0.0, %v3812
        %v3814 = vpop.f32.mrb[0].mxu0
        %v3815 = vadd.f32 0.0, %v3814
        %3816 = vmatprep.mubr.f32.mxu0 0.0
        %v3817 = vand.u32 %v1550, 4294901760
        %v3818 = vsub.f32 %v1550, %v3817
        %v3819 = vand.u32 %v3818, 4294901760
        %v3820 = vsub.f32 %v3818, %v3819
        %v3821 = vand.u32 %v3820, 4294901760
        %3822 = vmatmul.mubr.f32.gmra.mrb[0].mxu0 %v3821
        %v3823 = vpop.f32.mrb[0].mxu0
        %v3824 = vadd.f32 0.0, %v3823
        %v3825 = vpop.f32.mrb[0].mxu0
        %v3826 = vadd.f32 0.0, %v3825
        %3827 = vmatprep.mubr.f32.mxu0 0.0
        %v3828 = vand.u32 %v1553, 4294901760
        %v3829 = vsub.f32 %v1553, %v3828
        %v3830 = vand.u32 %v3829, 4294901760
        %v3831 = vsub.f32 %v3829, %v3830
        %v3832 = vand.u32 %v3831, 4294901760
        %3833 = vmatmul.mubr.f32.gmra.mrb[0].mxu0 %v3832
        %v3834 = vpop.f32.mrb[0].mxu0
        %v3835 = vadd.f32 0.0, %v3834
        %v3836 = vpop.f32.mrb[0].mxu0
        %v3837 = vadd.f32 0.0, %v3836
        %3838 = vmatprep.mubr.f32.mxu0 0.0
        %v3839 = vand.u32 %v1556, 4294901760
        %v3840 = vsub.f32 %v1556, %v3839
        %v3841 = vand.u32 %v3840, 4294901760
        %v3842 = vsub.f32 %v3840, %v3841
        %v3843 = vand.u32 %v3842, 4294901760
        %3844 = vmatmul.mubr.f32.gmra.mrb[0].mxu0 %v3843
        %v3845 = vpop.f32.mrb[0].mxu0
        %v3846 = vadd.f32 0.0, %v3845
        %v3847 = vpop.f32.mrb[0].mxu0
        %v3848 = vadd.f32 0.0, %v3847
        %3849 = vmatprep.mubr.f32.mxu0 0.0
        %v3850 = vand.u32 %v1559, 4294901760
        %v3851 = vsub.f32 %v1559, %v3850
        %v3852 = vand.u32 %v3851, 4294901760
        %v3853 = vsub.f32 %v3851, %v3852
        %v3854 = vand.u32 %v3853, 4294901760
        %3855 = vmatmul.mubr.f32.gmra.mrb[0].mxu0 %v3854
        %v3856 = vpop.f32.mrb[0].mxu0
        %v3857 = vadd.f32 0.0, %v3856
        %v3858 = vpop.f32.mrb[0].mxu0
        %v3859 = vadd.f32 0.0, %v3858
        %3860 = vmatprep.mubr.f32.mxu0 0.0
        %v3861 = vand.u32 %v1562, 4294901760
        %v3862 = vsub.f32 %v1562, %v3861
        %v3863 = vand.u32 %v3862, 4294901760
        %v3864 = vsub.f32 %v3862, %v3863
        %v3865 = vand.u32 %v3864, 4294901760
        %3866 = vmatmul.mubr.f32.gmra.mrb[0].mxu0 %v3865
        %v3867 = vpop.f32.mrb[0].mxu0
        %v3868 = vadd.f32 0.0, %v3867
        %v3869 = vpop.f32.mrb[0].mxu0
        %v3870 = vadd.f32 0.0, %v3869
        %3871 = vmatprep.mubr.f32.mxu0 0.0
        %v3872 = vand.u32 %v1565, 4294901760
        %v3873 = vsub.f32 %v1565, %v3872
        %v3874 = vand.u32 %v3873, 4294901760
        %v3875 = vsub.f32 %v3873, %v3874
        %v3876 = vand.u32 %v3875, 4294901760
        %3877 = vmatmul.mubr.f32.gmra.mrb[0].mxu0 %v3876
        %v3878 = vpop.f32.mrb[0].mxu0
        %v3879 = vadd.f32 0.0, %v3878
        %v3880 = vpop.f32.mrb[0].mxu0
        %v3881 = vadd.f32 0.0, %v3880
        %3882 = vmatprep.mubr.f32.mxu0 0.0
        %v3883 = vand.u32 %v1568, 4294901760
        %v3884 = vsub.f32 %v1568, %v3883
        %v3885 = vand.u32 %v3884, 4294901760
        %v3886 = vsub.f32 %v3884, %v3885
        %v3887 = vand.u32 %v3886, 4294901760
        %3888 = vmatmul.mubr.f32.gmra.mrb[0].mxu0 %v3887
        %v3889 = vpop.f32.mrb[0].mxu0
        %v3890 = vadd.f32 0.0, %v3889
        %v3891 = vpop.f32.mrb[0].mxu0
        %v3892 = vadd.f32 0.0, %v3891
        %3893 = vmatprep.mubr.f32.mxu0 0.0
        %v3894 = vand.u32 %v1571, 4294901760
        %v3895 = vsub.f32 %v1571, %v3894
        %v3896 = vand.u32 %v3895, 4294901760
        %v3897 = vsub.f32 %v3895, %v3896
        %v3898 = vand.u32 %v3897, 4294901760
        %3899 = vmatmul.mubr.f32.gmra.mrb[0].mxu0 %v3898
        %v3900 = vpop.f32.mrb[0].mxu0
        %v3901 = vadd.f32 0.0, %v3900
        %v3902 = vpop.f32.mrb[0].mxu0
        %v3903 = vadd.f32 0.0, %v3902
        %3904 = vmatprep.mubr.f32.mxu0 0.0
        %v3905 = vand.u32 %v1574, 4294901760
        %v3906 = vsub.f32 %v1574, %v3905
        %v3907 = vand.u32 %v3906, 4294901760
        %v3908 = vsub.f32 %v3906, %v3907
        %v3909 = vand.u32 %v3908, 4294901760
        %3910 = vmatmul.mubr.f32.gmra.mrb[0].mxu0 %v3909
        %v3911 = vpop.f32.mrb[0].mxu0
        %v3912 = vadd.f32 0.0, %v3911
        %v3913 = vpop.f32.mrb[0].mxu0
        %v3914 = vadd.f32 0.0, %v3913
        %3915 = vmatprep.mubr.f32.mxu0 0.0
        %v3916 = vand.u32 %v1577, 4294901760
        %v3917 = vsub.f32 %v1577, %v3916
        %v3918 = vand.u32 %v3917, 4294901760
        %v3919 = vsub.f32 %v3917, %v3918
        %v3920 = vand.u32 %v3919, 4294901760
        %3921 = vmatmul.mubr.f32.gmra.mrb[0].mxu0 %v3920
        %v3922 = vpop.f32.mrb[0].mxu0
        %v3923 = vadd.f32 0.0, %v3922
        %v3924 = vpop.f32.mrb[0].mxu0
        %v3925 = vadd.f32 0.0, %v3924
        %3926 = vmatprep.mubr.f32.mxu0 0.0
        %v3927 = vand.u32 %v1580, 4294901760
        %v3928 = vsub.f32 %v1580, %v3927
        %v3929 = vand.u32 %v3928, 4294901760
        %v3930 = vsub.f32 %v3928, %v3929
        %v3931 = vand.u32 %v3930, 4294901760
        %3932 = vmatmul.mubr.f32.gmra.mrb[0].mxu0 %v3931
        %v3933 = vpop.f32.mrb[0].mxu0
        %v3934 = vadd.f32 0.0, %v3933
        %v3935 = vpop.f32.mrb[0].mxu0
        %v3936 = vadd.f32 0.0, %v3935
        %3937 = vmatprep.mubr.f32.mxu0 0.0
        %v3938 = vand.u32 %v1583, 4294901760
        %v3939 = vsub.f32 %v1583, %v3938
        %v3940 = vand.u32 %v3939, 4294901760
        %v3941 = vsub.f32 %v3939, %v3940
        %v3942 = vand.u32 %v3941, 4294901760
        %3943 = vmatmul.mubr.f32.gmra.mrb[0].mxu0 %v3942
        %v3944 = vpop.f32.mrb[0].mxu0
        %v3945 = vadd.f32 0.0, %v3944
        %v3946 = vpop.f32.mrb[0].mxu0
        %v3947 = vadd.f32 0.0, %v3946
        %3948 = vmatprep.mubr.f32.mxu0 0.0
        %v3949 = vand.u32 %v1586, 4294901760
        %v3950 = vsub.f32 %v1586, %v3949
        %v3951 = vand.u32 %v3950, 4294901760
        %v3952 = vsub.f32 %v3950, %v3951
        %v3953 = vand.u32 %v3952, 4294901760
        %3954 = vmatmul.mubr.f32.gmra.mrb[0].mxu0 %v3953
        %v3955 = vpop.f32.mrb[0].mxu0
        %v3956 = vadd.f32 0.0, %v3955
        %v3957 = vpop.f32.mrb[0].mxu0
        %v3958 = vadd.f32 0.0, %v3957
        %3959 = vmatprep.mubr.f32.mxu0 0.0
        %v3960 = vand.u32 %v1589, 4294901760
        %v3961 = vsub.f32 %v1589, %v3960
        %v3962 = vand.u32 %v3961, 4294901760
        %v3963 = vsub.f32 %v3961, %v3962
        %v3964 = vand.u32 %v3963, 4294901760
        %3965 = vmatmul.mubr.f32.gmra.mrb[0].mxu0 %v3964
        %v3966 = vpop.f32.mrb[0].mxu0
        %v3967 = vadd.f32 0.0, %v3966
        %v3968 = vpop.f32.mrb[0].mxu0
        %v3969 = vadd.f32 0.0, %v3968
        %3970 = vmatprep.mubr.f32.mxu0 0.0
        %v3971 = vand.u32 %v1592, 4294901760
        %v3972 = vsub.f32 %v1592, %v3971
        %v3973 = vand.u32 %v3972, 4294901760
        %v3974 = vsub.f32 %v3972, %v3973
        %v3975 = vand.u32 %v3974, 4294901760
        %3976 = vmatmul.mubr.f32.gmra.mrb[0].mxu0 %v3975
        %v3977 = vpop.f32.mrb[0].mxu0
        %v3978 = vadd.f32 0.0, %v3977
        %v3979 = vpop.f32.mrb[0].mxu0
        %v3980 = vadd.f32 0.0, %v3979
        %3981 = vmatprep.mubr.f32.mxu0 0.0
        %v3982 = vand.u32 %v1595, 4294901760
        %v3983 = vsub.f32 %v1595, %v3982
        %v3984 = vand.u32 %v3983, 4294901760
        %v3985 = vsub.f32 %v3983, %v3984
        %v3986 = vand.u32 %v3985, 4294901760
        %3987 = vmatmul.mubr.f32.gmra.mrb[0].mxu0 %v3986
        %v3988 = vpop.f32.mrb[0].mxu0
        %v3989 = vadd.f32 0.0, %v3988
        %v3990 = vpop.f32.mrb[0].mxu0
        %v3991 = vadd.f32 0.0, %v3990
        %3992 = vmatprep.mubr.f32.mxu0 0.0
        %v3993 = vand.u32 %v1598, 4294901760
        %v3994 = vsub.f32 %v1598, %v3993
        %v3995 = vand.u32 %v3994, 4294901760
        %v3996 = vsub.f32 %v3994, %v3995
        %v3997 = vand.u32 %v3996, 4294901760
        %3998 = vmatmul.mubr.f32.gmra.mrb[0].mxu0 %v3997
        %v3999 = vpop.f32.mrb[0].mxu0
        %v4000 = vadd.f32 0.0, %v3999
        %v4001 = vpop.f32.mrb[0].mxu0
        %v4002 = vadd.f32 0.0, %v4001
        %4003 = vmatprep.mubr.f32.mxu0 0.0
        %v4004 = vand.u32 %v1601, 4294901760
        %v4005 = vsub.f32 %v1601, %v4004
        %v4006 = vand.u32 %v4005, 4294901760
        %v4007 = vsub.f32 %v4005, %v4006
        %v4008 = vand.u32 %v4007, 4294901760
        %4009 = vmatmul.mubr.f32.gmra.mrb[0].mxu0 %v4008
        %v4010 = vpop.f32.mrb[0].mxu0
        %v4011 = vadd.f32 0.0, %v4010
        %v4012 = vpop.f32.mrb[0].mxu0
        %v4013 = vadd.f32 0.0, %v4012
        %4014 = vdwg.mxu0
        %v4015 = vand.u32 %v1610, 4294901760
        %v4016 = vsub.f32 %v1610, %v4015
        %v4017 = vand.u32 %v4016, 4294901760
        %v4018 = vsub.f32 %v4016, %v4017
        %v4019 = vand.u32 %v4018, 4294901760
        %4020 = vmatprep.subr.mxu0 %v4019
        %v4021 = vand.u32 %v1608, 4294901760
        %v4022 = vsub.f32 %v1608, %v4021
        %v4023 = vand.u32 %v4022, 4294901760
        %v4024 = vsub.f32 %v4022, %v4023
        %v4025 = vand.u32 %v4024, 4294901760
        %4026 = vmatpush1.msra.mxu0 %v4025
        %4027 = vmatprep.subr.mxu0 0.0
        %4028 = vmatpush1.msra.mxu0 0.0
        %4029 = vmatprep.subr.mxu0 0.0
        %4030 = vmatpush1.msra.mxu0 0.0
        %4031 = vmatprep.subr.mxu0 0.0
        %4032 = vmatpush1.msra.mxu0 0.0
        %4033 = vmatprep.subr.mxu0 0.0
        %4034 = vmatpush1.msra.mxu0 0.0
        %4035 = vmatprep.subr.mxu0 0.0
        %4036 = vmatpush1.msra.mxu0 0.0
        %4037 = vmatprep.subr.mxu0 0.0
        %4038 = vmatpush1.msra.mxu0 0.0
        %4039 = vmatprep.subr.mxu0 0.0
        %4040 = vmatpush1.msra.mxu0 0.0
        %4041 = vmatprep.subr.mxu0 0.0
        %4042 = vmatpush1.msra.mxu0 0.0
        %4043 = vmatprep.subr.mxu0 0.0
        %4044 = vmatpush1.msra.mxu0 0.0
        %4045 = vmatprep.subr.mxu0 0.0
        %4046 = vmatpush1.msra.mxu0 0.0
        %4047 = vmatprep.subr.mxu0 0.0
        %4048 = vmatpush1.msra.mxu0 0.0
        %4049 = vmatprep.subr.mxu0 0.0
        %4050 = vmatpush1.msra.mxu0 0.0
        %4051 = vmatprep.subr.mxu0 0.0
        %4052 = vmatpush1.msra.mxu0 0.0
        %4053 = vmatprep.subr.mxu0 0.0
        %4054 = vmatpush1.msra.mxu0 0.0
        %4055 = vmatprep.subr.mxu0 0.0
        %4056 = vmatpush1.msra.mxu0 0.0
        %4057 = vmatprep.subr.mxu0 0.0
        %4058 = vmatpush1.msra.mxu0 0.0
        %4059 = vmatprep.subr.mxu0 0.0
        %4060 = vmatpush1.msra.mxu0 0.0
        %4061 = vmatprep.subr.mxu0 0.0
        %4062 = vmatpush1.msra.mxu0 0.0
        %4063 = vmatprep.subr.mxu0 0.0
        %4064 = vmatpush1.msra.mxu0 0.0
        %4065 = vmatprep.subr.mxu0 0.0
        %4066 = vmatpush1.msra.mxu0 0.0
        %4067 = vmatprep.subr.mxu0 0.0
        %4068 = vmatpush1.msra.mxu0 0.0
        %4069 = vmatprep.subr.mxu0 0.0
        %4070 = vmatpush1.msra.mxu0 0.0
        %4071 = vmatprep.subr.mxu0 0.0
        %4072 = vmatpush1.msra.mxu0 0.0
        %4073 = vmatprep.subr.mxu0 0.0
        %4074 = vmatpush1.msra.mxu0 0.0
        %4075 = vmatprep.subr.mxu0 0.0
        %4076 = vmatpush1.msra.mxu0 0.0
        %4077 = vmatprep.subr.mxu0 0.0
        %4078 = vmatpush1.msra.mxu0 0.0
        %4079 = vmatprep.subr.mxu0 0.0
        %4080 = vmatpush1.msra.mxu0 0.0
        %4081 = vmatprep.subr.mxu0 0.0
        %4082 = vmatpush1.msra.mxu0 0.0
        %4083 = vmatprep.subr.mxu0 0.0
        %4084 = vmatpush1.msra.mxu0 0.0
        %4085 = vmatprep.subr.mxu0 0.0
        %4086 = vmatpush1.msra.mxu0 0.0
        %4087 = vmatprep.subr.mxu0 0.0
        %4088 = vmatpush1.msra.mxu0 0.0
        %4089 = vmatprep.mubr.f32.mxu0 0.0
        %v4090 = vand.u32 %v1508, 4294901760
        %4091 = vmatmul.mubr.f32.gmra.mrb[0].mxu0 %v4090
        %v4092 = vpop.f32.mrb[0].mxu0
        %v4093 = vadd.f32 %v3670, %v4092
        %v4094 = vpop.f32.mrb[0].mxu0
        %v4095 = vadd.f32 %v3672, %v4094
        %4096 = vmatprep.mubr.f32.mxu0 0.0
        %v4097 = vand.u32 %v1511, 4294901760
        %4098 = vmatmul.mubr.f32.gmra.mrb[0].mxu0 %v4097
        %v4099 = vpop.f32.mrb[0].mxu0
        %v4100 = vadd.f32 %v3681, %v4099
        %v4101 = vpop.f32.mrb[0].mxu0
        %v4102 = vadd.f32 %v3683, %v4101
        %4103 = vmatprep.mubr.f32.mxu0 0.0
        %v4104 = vand.u32 %v1514, 4294901760
        %4105 = vmatmul.mubr.f32.gmra.mrb[0].mxu0 %v4104
        %v4106 = vpop.f32.mrb[0].mxu0
        %v4107 = vadd.f32 %v3692, %v4106
        %v4108 = vpop.f32.mrb[0].mxu0
        %v4109 = vadd.f32 %v3694, %v4108
        %4110 = vmatprep.mubr.f32.mxu0 0.0
        %v4111 = vand.u32 %v1517, 4294901760
        %4112 = vmatmul.mubr.f32.gmra.mrb[0].mxu0 %v4111
        %v4113 = vpop.f32.mrb[0].mxu0
        %v4114 = vadd.f32 %v3703, %v4113
        %v4115 = vpop.f32.mrb[0].mxu0
        %v4116 = vadd.f32 %v3705, %v4115
        %4117 = vmatprep.mubr.f32.mxu0 0.0
        %v4118 = vand.u32 %v1520, 4294901760
        %4119 = vmatmul.mubr.f32.gmra.mrb[0].mxu0 %v4118
        %v4120 = vpop.f32.mrb[0].mxu0
        %v4121 = vadd.f32 %v3714, %v4120
        %v4122 = vpop.f32.mrb[0].mxu0
        %v4123 = vadd.f32 %v3716, %v4122
        %4124 = vmatprep.mubr.f32.mxu0 0.0
        %v4125 = vand.u32 %v1523, 4294901760
        %4126 = vmatmul.mubr.f32.gmra.mrb[0].mxu0 %v4125
        %v4127 = vpop.f32.mrb[0].mxu0
        %v4128 = vadd.f32 %v3725, %v4127
        %v4129 = vpop.f32.mrb[0].mxu0
        %v4130 = vadd.f32 %v3727, %v4129
        %4131 = vmatprep.mubr.f32.mxu0 0.0
        %v4132 = vand.u32 %v1526, 4294901760
        %4133 = vmatmul.mubr.f32.gmra.mrb[0].mxu0 %v4132
        %v4134 = vpop.f32.mrb[0].mxu0
        %v4135 = vadd.f32 %v3736, %v4134
        %v4136 = vpop.f32.mrb[0].mxu0
        %v4137 = vadd.f32 %v3738, %v4136
        %4138 = vmatprep.mubr.f32.mxu0 0.0
        %v4139 = vand.u32 %v1529, 4294901760
        %4140 = vmatmul.mubr.f32.gmra.mrb[0].mxu0 %v4139
        %v4141 = vpop.f32.mrb[0].mxu0
        %v4142 = vadd.f32 %v3747, %v4141
        %v4143 = vpop.f32.mrb[0].mxu0
        %v4144 = vadd.f32 %v3749, %v4143
        %4145 = vmatprep.mubr.f32.mxu0 0.0
        %v4146 = vand.u32 %v1532, 4294901760
        %4147 = vmatmul.mubr.f32.gmra.mrb[0].mxu0 %v4146
        %v4148 = vpop.f32.mrb[0].mxu0
        %v4149 = vadd.f32 %v3758, %v4148
        %v4150 = vpop.f32.mrb[0].mxu0
        %v4151 = vadd.f32 %v3760, %v4150
        %4152 = vmatprep.mubr.f32.mxu0 0.0
        %v4153 = vand.u32 %v1535, 4294901760
        %4154 = vmatmul.mubr.f32.gmra.mrb[0].mxu0 %v4153
        %v4155 = vpop.f32.mrb[0].mxu0
        %v4156 = vadd.f32 %v3769, %v4155
        %v4157 = vpop.f32.mrb[0].mxu0
        %v4158 = vadd.f32 %v3771, %v4157
        %4159 = vmatprep.mubr.f32.mxu0 0.0
        %v4160 = vand.u32 %v1538, 4294901760
        %4161 = vmatmul.mubr.f32.gmra.mrb[0].mxu0 %v4160
        %v4162 = vpop.f32.mrb[0].mxu0
        %v4163 = vadd.f32 %v3780, %v4162
        %v4164 = vpop.f32.mrb[0].mxu0
        %v4165 = vadd.f32 %v3782, %v4164
        %4166 = vmatprep.mubr.f32.mxu0 0.0
        %v4167 = vand.u32 %v1541, 4294901760
        %4168 = vmatmul.mubr.f32.gmra.mrb[0].mxu0 %v4167
        %v4169 = vpop.f32.mrb[0].mxu0
        %v4170 = vadd.f32 %v3791, %v4169
        %v4171 = vpop.f32.mrb[0].mxu0
        %v4172 = vadd.f32 %v3793, %v4171
        %4173 = vmatprep.mubr.f32.mxu0 0.0
        %v4174 = vand.u32 %v1544, 4294901760
        %4175 = vmatmul.mubr.f32.gmra.mrb[0].mxu0 %v4174
        %v4176 = vpop.f32.mrb[0].mxu0
        %v4177 = vadd.f32 %v3802, %v4176
        %v4178 = vpop.f32.mrb[0].mxu0
        %v4179 = vadd.f32 %v3804, %v4178
        %4180 = vmatprep.mubr.f32.mxu0 0.0
        %v4181 = vand.u32 %v1547, 4294901760
        %4182 = vmatmul.mubr.f32.gmra.mrb[0].mxu0 %v4181
        %v4183 = vpop.f32.mrb[0].mxu0
        %v4184 = vadd.f32 %v3813, %v4183
        %v4185 = vpop.f32.mrb[0].mxu0
        %v4186 = vadd.f32 %v3815, %v4185
        %4187 = vmatprep.mubr.f32.mxu0 0.0
        %v4188 = vand.u32 %v1550, 4294901760
        %4189 = vmatmul.mubr.f32.gmra.mrb[0].mxu0 %v4188
        %v4190 = vpop.f32.mrb[0].mxu0
        %v4191 = vadd.f32 %v3824, %v4190
        %v4192 = vpop.f32.mrb[0].mxu0
        %v4193 = vadd.f32 %v3826, %v4192
        %4194 = vmatprep.mubr.f32.mxu0 0.0
        %v4195 = vand.u32 %v1553, 4294901760
        %4196 = vmatmul.mubr.f32.gmra.mrb[0].mxu0 %v4195
        %v4197 = vpop.f32.mrb[0].mxu0
        %v4198 = vadd.f32 %v3835, %v4197
        %v4199 = vpop.f32.mrb[0].mxu0
        %v4200 = vadd.f32 %v3837, %v4199
        %4201 = vmatprep.mubr.f32.mxu0 0.0
        %v4202 = vand.u32 %v1556, 4294901760
        %4203 = vmatmul.mubr.f32.gmra.mrb[0].mxu0 %v4202
        %v4204 = vpop.f32.mrb[0].mxu0
        %v4205 = vadd.f32 %v3846, %v4204
        %v4206 = vpop.f32.mrb[0].mxu0
        %v4207 = vadd.f32 %v3848, %v4206
        %4208 = vmatprep.mubr.f32.mxu0 0.0
        %v4209 = vand.u32 %v1559, 4294901760
        %4210 = vmatmul.mubr.f32.gmra.mrb[0].mxu0 %v4209
        %v4211 = vpop.f32.mrb[0].mxu0
        %v4212 = vadd.f32 %v3857, %v4211
        %v4213 = vpop.f32.mrb[0].mxu0
        %v4214 = vadd.f32 %v3859, %v4213
        %4215 = vmatprep.mubr.f32.mxu0 0.0
        %v4216 = vand.u32 %v1562, 4294901760
        %4217 = vmatmul.mubr.f32.gmra.mrb[0].mxu0 %v4216
        %v4218 = vpop.f32.mrb[0].mxu0
        %v4219 = vadd.f32 %v3868, %v4218
        %v4220 = vpop.f32.mrb[0].mxu0
        %v4221 = vadd.f32 %v3870, %v4220
        %4222 = vmatprep.mubr.f32.mxu0 0.0
        %v4223 = vand.u32 %v1565, 4294901760
        %4224 = vmatmul.mubr.f32.gmra.mrb[0].mxu0 %v4223
        %v4225 = vpop.f32.mrb[0].mxu0
        %v4226 = vadd.f32 %v3879, %v4225
        %v4227 = vpop.f32.mrb[0].mxu0
        %v4228 = vadd.f32 %v3881, %v4227
        %4229 = vmatprep.mubr.f32.mxu0 0.0
        %v4230 = vand.u32 %v1568, 4294901760
        %4231 = vmatmul.mubr.f32.gmra.mrb[0].mxu0 %v4230
        %v4232 = vpop.f32.mrb[0].mxu0
        %v4233 = vadd.f32 %v3890, %v4232
        %v4234 = vpop.f32.mrb[0].mxu0
        %v4235 = vadd.f32 %v3892, %v4234
        %4236 = vmatprep.mubr.f32.mxu0 0.0
        %v4237 = vand.u32 %v1571, 4294901760
        %4238 = vmatmul.mubr.f32.gmra.mrb[0].mxu0 %v4237
        %v4239 = vpop.f32.mrb[0].mxu0
        %v4240 = vadd.f32 %v3901, %v4239
        %v4241 = vpop.f32.mrb[0].mxu0
        %v4242 = vadd.f32 %v3903, %v4241
        %4243 = vmatprep.mubr.f32.mxu0 0.0
        %v4244 = vand.u32 %v1574, 4294901760
        %4245 = vmatmul.mubr.f32.gmra.mrb[0].mxu0 %v4244
        %v4246 = vpop.f32.mrb[0].mxu0
        %v4247 = vadd.f32 %v3912, %v4246
        %v4248 = vpop.f32.mrb[0].mxu0
        %v4249 = vadd.f32 %v3914, %v4248
        %4250 = vmatprep.mubr.f32.mxu0 0.0
        %v4251 = vand.u32 %v1577, 4294901760
        %4252 = vmatmul.mubr.f32.gmra.mrb[0].mxu0 %v4251
        %v4253 = vpop.f32.mrb[0].mxu0
        %v4254 = vadd.f32 %v3923, %v4253
        %v4255 = vpop.f32.mrb[0].mxu0
        %v4256 = vadd.f32 %v3925, %v4255
        %4257 = vmatprep.mubr.f32.mxu0 0.0
        %v4258 = vand.u32 %v1580, 4294901760
        %4259 = vmatmul.mubr.f32.gmra.mrb[0].mxu0 %v4258
        %v4260 = vpop.f32.mrb[0].mxu0
        %v4261 = vadd.f32 %v3934, %v4260
        %v4262 = vpop.f32.mrb[0].mxu0
        %v4263 = vadd.f32 %v3936, %v4262
        %4264 = vmatprep.mubr.f32.mxu0 0.0
        %v4265 = vand.u32 %v1583, 4294901760
        %4266 = vmatmul.mubr.f32.gmra.mrb[0].mxu0 %v4265
        %v4267 = vpop.f32.mrb[0].mxu0
        %v4268 = vadd.f32 %v3945, %v4267
        %v4269 = vpop.f32.mrb[0].mxu0
        %v4270 = vadd.f32 %v3947, %v4269
        %4271 = vmatprep.mubr.f32.mxu0 0.0
        %v4272 = vand.u32 %v1586, 4294901760
        %4273 = vmatmul.mubr.f32.gmra.mrb[0].mxu0 %v4272
        %v4274 = vpop.f32.mrb[0].mxu0
        %v4275 = vadd.f32 %v3956, %v4274
        %v4276 = vpop.f32.mrb[0].mxu0
        %v4277 = vadd.f32 %v3958, %v4276
        %4278 = vmatprep.mubr.f32.mxu0 0.0
        %v4279 = vand.u32 %v1589, 4294901760
        %4280 = vmatmul.mubr.f32.gmra.mrb[0].mxu0 %v4279
        %v4281 = vpop.f32.mrb[0].mxu0
        %v4282 = vadd.f32 %v3967, %v4281
        %v4283 = vpop.f32.mrb[0].mxu0
        %v4284 = vadd.f32 %v3969, %v4283
        %4285 = vmatprep.mubr.f32.mxu0 0.0
        %v4286 = vand.u32 %v1592, 4294901760
        %4287 = vmatmul.mubr.f32.gmra.mrb[0].mxu0 %v4286
        %v4288 = vpop.f32.mrb[0].mxu0
        %v4289 = vadd.f32 %v3978, %v4288
        %v4290 = vpop.f32.mrb[0].mxu0
        %v4291 = vadd.f32 %v3980, %v4290
        %4292 = vmatprep.mubr.f32.mxu0 0.0
        %v4293 = vand.u32 %v1595, 4294901760
        %4294 = vmatmul.mubr.f32.gmra.mrb[0].mxu0 %v4293
        %v4295 = vpop.f32.mrb[0].mxu0
        %v4296 = vadd.f32 %v3989, %v4295
        %v4297 = vpop.f32.mrb[0].mxu0
        %v4298 = vadd.f32 %v3991, %v4297
        %4299 = vmatprep.mubr.f32.mxu0 0.0
        %v4300 = vand.u32 %v1598, 4294901760
        %4301 = vmatmul.mubr.f32.gmra.mrb[0].mxu0 %v4300
        %v4302 = vpop.f32.mrb[0].mxu0
        %v4303 = vadd.f32 %v4000, %v4302
        %v4304 = vpop.f32.mrb[0].mxu0
        %v4305 = vadd.f32 %v4002, %v4304
        %4306 = vmatprep.mubr.f32.mxu0 0.0
        %v4307 = vand.u32 %v1601, 4294901760
        %4308 = vmatmul.mubr.f32.gmra.mrb[0].mxu0 %v4307
        %v4309 = vpop.f32.mrb[0].mxu0
        %v4310 = vadd.f32 %v4011, %v4309
        %v4311 = vpop.f32.mrb[0].mxu0
        %v4312 = vadd.f32 %v4013, %v4311
        %4313 = vdwg.mxu0
        %v4314 = vand.u32 %v1610, 4294901760
        %v4315 = vsub.f32 %v1610, %v4314
        %4316 = vmatprep.subr.mxu0 %v4315
        %v4317 = vand.u32 %v1608, 4294901760
        %v4318 = vsub.f32 %v1608, %v4317
        %4319 = vmatpush1.msra.mxu0 %v4318
        %4320 = vmatprep.subr.mxu0 0.0
        %4321 = vmatpush1.msra.mxu0 0.0
        %4322 = vmatprep.subr.mxu0 0.0
        %4323 = vmatpush1.msra.mxu0 0.0
        %4324 = vmatprep.subr.mxu0 0.0
        %4325 = vmatpush1.msra.mxu0 0.0
        %4326 = vmatprep.subr.mxu0 0.0
        %4327 = vmatpush1.msra.mxu0 0.0
        %4328 = vmatprep.subr.mxu0 0.0
        %4329 = vmatpush1.msra.mxu0 0.0
        %4330 = vmatprep.subr.mxu0 0.0
        %4331 = vmatpush1.msra.mxu0 0.0
        %4332 = vmatprep.subr.mxu0 0.0
        %4333 = vmatpush1.msra.mxu0 0.0
        %4334 = vmatprep.subr.mxu0 0.0
        %4335 = vmatpush1.msra.mxu0 0.0
        %4336 = vmatprep.subr.mxu0 0.0
        %4337 = vmatpush1.msra.mxu0 0.0
        %4338 = vmatprep.subr.mxu0 0.0
        %4339 = vmatpush1.msra.mxu0 0.0
        %4340 = vmatprep.subr.mxu0 0.0
        %4341 = vmatpush1.msra.mxu0 0.0
        %4342 = vmatprep.subr.mxu0 0.0
        %4343 = vmatpush1.msra.mxu0 0.0
        %4344 = vmatprep.subr.mxu0 0.0
        %4345 = vmatpush1.msra.mxu0 0.0
        %4346 = vmatprep.subr.mxu0 0.0
        %4347 = vmatpush1.msra.mxu0 0.0
        %4348 = vmatprep.subr.mxu0 0.0
        %4349 = vmatpush1.msra.mxu0 0.0
        %4350 = vmatprep.subr.mxu0 0.0
        %4351 = vmatpush1.msra.mxu0 0.0
        %4352 = vmatprep.subr.mxu0 0.0
        %4353 = vmatpush1.msra.mxu0 0.0
        %4354 = vmatprep.subr.mxu0 0.0
        %4355 = vmatpush1.msra.mxu0 0.0
        %4356 = vmatprep.subr.mxu0 0.0
        %4357 = vmatpush1.msra.mxu0 0.0
        %4358 = vmatprep.subr.mxu0 0.0
        %4359 = vmatpush1.msra.mxu0 0.0
        %4360 = vmatprep.subr.mxu0 0.0
        %4361 = vmatpush1.msra.mxu0 0.0
        %4362 = vmatprep.subr.mxu0 0.0
        %4363 = vmatpush1.msra.mxu0 0.0
        %4364 = vmatprep.subr.mxu0 0.0
        %4365 = vmatpush1.msra.mxu0 0.0
        %4366 = vmatprep.subr.mxu0 0.0
        %4367 = vmatpush1.msra.mxu0 0.0
        %4368 = vmatprep.subr.mxu0 0.0
        %4369 = vmatpush1.msra.mxu0 0.0
        %4370 = vmatprep.subr.mxu0 0.0
        %4371 = vmatpush1.msra.mxu0 0.0
        %4372 = vmatprep.subr.mxu0 0.0
        %4373 = vmatpush1.msra.mxu0 0.0
        %4374 = vmatprep.subr.mxu0 0.0
        %4375 = vmatpush1.msra.mxu0 0.0
        %4376 = vmatprep.subr.mxu0 0.0
        %4377 = vmatpush1.msra.mxu0 0.0
        %4378 = vmatprep.subr.mxu0 0.0
        %4379 = vmatpush1.msra.mxu0 0.0
        %4380 = vmatprep.subr.mxu0 0.0
        %4381 = vmatpush1.msra.mxu0 0.0
        %4382 = vmatprep.mubr.f32.mxu0 0.0
        %v4383 = vand.u32 %v1508, 4294901760
        %v4384 = vsub.f32 %v1508, %v4383
        %4385 = vmatmul.mubr.f32.gmra.mrb[0].mxu0 %v4384
        %v4386 = vpop.f32.mrb[0].mxu0
        %v4387 = vadd.f32 %v4093, %v4386
        %v4388 = vpop.f32.mrb[0].mxu0
        %v4389 = vadd.f32 %v4095, %v4388
        %4390 = vmatprep.mubr.f32.mxu0 0.0
        %v4391 = vand.u32 %v1511, 4294901760
        %v4392 = vsub.f32 %v1511, %v4391
        %4393 = vmatmul.mubr.f32.gmra.mrb[0].mxu0 %v4392
        %v4394 = vpop.f32.mrb[0].mxu0
        %v4395 = vadd.f32 %v4100, %v4394
        %v4396 = vpop.f32.mrb[0].mxu0
        %v4397 = vadd.f32 %v4102, %v4396
        %4398 = vmatprep.mubr.f32.mxu0 0.0
        %v4399 = vand.u32 %v1514, 4294901760
        %v4400 = vsub.f32 %v1514, %v4399
        %4401 = vmatmul.mubr.f32.gmra.mrb[0].mxu0 %v4400
        %v4402 = vpop.f32.mrb[0].mxu0
        %v4403 = vadd.f32 %v4107, %v4402
        %v4404 = vpop.f32.mrb[0].mxu0
        %v4405 = vadd.f32 %v4109, %v4404
        %4406 = vmatprep.mubr.f32.mxu0 0.0
        %v4407 = vand.u32 %v1517, 4294901760
        %v4408 = vsub.f32 %v1517, %v4407
        %4409 = vmatmul.mubr.f32.gmra.mrb[0].mxu0 %v4408
        %v4410 = vpop.f32.mrb[0].mxu0
        %v4411 = vadd.f32 %v4114, %v4410
        %v4412 = vpop.f32.mrb[0].mxu0
        %v4413 = vadd.f32 %v4116, %v4412
        %4414 = vmatprep.mubr.f32.mxu0 0.0
        %v4415 = vand.u32 %v1520, 4294901760
        %v4416 = vsub.f32 %v1520, %v4415
        %4417 = vmatmul.mubr.f32.gmra.mrb[0].mxu0 %v4416
        %v4418 = vpop.f32.mrb[0].mxu0
        %v4419 = vadd.f32 %v4121, %v4418
        %v4420 = vpop.f32.mrb[0].mxu0
        %v4421 = vadd.f32 %v4123, %v4420
        %4422 = vmatprep.mubr.f32.mxu0 0.0
        %v4423 = vand.u32 %v1523, 4294901760
        %v4424 = vsub.f32 %v1523, %v4423
        %4425 = vmatmul.mubr.f32.gmra.mrb[0].mxu0 %v4424
        %v4426 = vpop.f32.mrb[0].mxu0
        %v4427 = vadd.f32 %v4128, %v4426
        %v4428 = vpop.f32.mrb[0].mxu0
        %v4429 = vadd.f32 %v4130, %v4428
        %4430 = vmatprep.mubr.f32.mxu0 0.0
        %v4431 = vand.u32 %v1526, 4294901760
        %v4432 = vsub.f32 %v1526, %v4431
        %4433 = vmatmul.mubr.f32.gmra.mrb[0].mxu0 %v4432
        %v4434 = vpop.f32.mrb[0].mxu0
        %v4435 = vadd.f32 %v4135, %v4434
        %v4436 = vpop.f32.mrb[0].mxu0
        %v4437 = vadd.f32 %v4137, %v4436
        %4438 = vmatprep.mubr.f32.mxu0 0.0
        %v4439 = vand.u32 %v1529, 4294901760
        %v4440 = vsub.f32 %v1529, %v4439
        %4441 = vmatmul.mubr.f32.gmra.mrb[0].mxu0 %v4440
        %v4442 = vpop.f32.mrb[0].mxu0
        %v4443 = vadd.f32 %v4142, %v4442
        %v4444 = vpop.f32.mrb[0].mxu0
        %v4445 = vadd.f32 %v4144, %v4444
        %4446 = vmatprep.mubr.f32.mxu0 0.0
        %v4447 = vand.u32 %v1532, 4294901760
        %v4448 = vsub.f32 %v1532, %v4447
        %4449 = vmatmul.mubr.f32.gmra.mrb[0].mxu0 %v4448
        %v4450 = vpop.f32.mrb[0].mxu0
        %v4451 = vadd.f32 %v4149, %v4450
        %v4452 = vpop.f32.mrb[0].mxu0
        %v4453 = vadd.f32 %v4151, %v4452
        %4454 = vmatprep.mubr.f32.mxu0 0.0
        %v4455 = vand.u32 %v1535, 4294901760
        %v4456 = vsub.f32 %v1535, %v4455
        %4457 = vmatmul.mubr.f32.gmra.mrb[0].mxu0 %v4456
        %v4458 = vpop.f32.mrb[0].mxu0
        %v4459 = vadd.f32 %v4156, %v4458
        %v4460 = vpop.f32.mrb[0].mxu0
        %v4461 = vadd.f32 %v4158, %v4460
        %4462 = vmatprep.mubr.f32.mxu0 0.0
        %v4463 = vand.u32 %v1538, 4294901760
        %v4464 = vsub.f32 %v1538, %v4463
        %4465 = vmatmul.mubr.f32.gmra.mrb[0].mxu0 %v4464
        %v4466 = vpop.f32.mrb[0].mxu0
        %v4467 = vadd.f32 %v4163, %v4466
        %v4468 = vpop.f32.mrb[0].mxu0
        %v4469 = vadd.f32 %v4165, %v4468
        %4470 = vmatprep.mubr.f32.mxu0 0.0
        %v4471 = vand.u32 %v1541, 4294901760
        %v4472 = vsub.f32 %v1541, %v4471
        %4473 = vmatmul.mubr.f32.gmra.mrb[0].mxu0 %v4472
        %v4474 = vpop.f32.mrb[0].mxu0
        %v4475 = vadd.f32 %v4170, %v4474
        %v4476 = vpop.f32.mrb[0].mxu0
        %v4477 = vadd.f32 %v4172, %v4476
        %4478 = vmatprep.mubr.f32.mxu0 0.0
        %v4479 = vand.u32 %v1544, 4294901760
        %v4480 = vsub.f32 %v1544, %v4479
        %4481 = vmatmul.mubr.f32.gmra.mrb[0].mxu0 %v4480
        %v4482 = vpop.f32.mrb[0].mxu0
        %v4483 = vadd.f32 %v4177, %v4482
        %v4484 = vpop.f32.mrb[0].mxu0
        %v4485 = vadd.f32 %v4179, %v4484
        %4486 = vmatprep.mubr.f32.mxu0 0.0
        %v4487 = vand.u32 %v1547, 4294901760
        %v4488 = vsub.f32 %v1547, %v4487
        %4489 = vmatmul.mubr.f32.gmra.mrb[0].mxu0 %v4488
        %v4490 = vpop.f32.mrb[0].mxu0
        %v4491 = vadd.f32 %v4184, %v4490
        %v4492 = vpop.f32.mrb[0].mxu0
        %v4493 = vadd.f32 %v4186, %v4492
        %4494 = vmatprep.mubr.f32.mxu0 0.0
        %v4495 = vand.u32 %v1550, 4294901760
        %v4496 = vsub.f32 %v1550, %v4495
        %4497 = vmatmul.mubr.f32.gmra.mrb[0].mxu0 %v4496
        %v4498 = vpop.f32.mrb[0].mxu0
        %v4499 = vadd.f32 %v4191, %v4498
        %v4500 = vpop.f32.mrb[0].mxu0
        %v4501 = vadd.f32 %v4193, %v4500
        %4502 = vmatprep.mubr.f32.mxu0 0.0
        %v4503 = vand.u32 %v1553, 4294901760
        %v4504 = vsub.f32 %v1553, %v4503
        %4505 = vmatmul.mubr.f32.gmra.mrb[0].mxu0 %v4504
        %v4506 = vpop.f32.mrb[0].mxu0
        %v4507 = vadd.f32 %v4198, %v4506
        %v4508 = vpop.f32.mrb[0].mxu0
        %v4509 = vadd.f32 %v4200, %v4508
        %4510 = vmatprep.mubr.f32.mxu0 0.0
        %v4511 = vand.u32 %v1556, 4294901760
        %v4512 = vsub.f32 %v1556, %v4511
        %4513 = vmatmul.mubr.f32.gmra.mrb[0].mxu0 %v4512
        %v4514 = vpop.f32.mrb[0].mxu0
        %v4515 = vadd.f32 %v4205, %v4514
        %v4516 = vpop.f32.mrb[0].mxu0
        %v4517 = vadd.f32 %v4207, %v4516
        %4518 = vmatprep.mubr.f32.mxu0 0.0
        %v4519 = vand.u32 %v1559, 4294901760
        %v4520 = vsub.f32 %v1559, %v4519
        %4521 = vmatmul.mubr.f32.gmra.mrb[0].mxu0 %v4520
        %v4522 = vpop.f32.mrb[0].mxu0
        %v4523 = vadd.f32 %v4212, %v4522
        %v4524 = vpop.f32.mrb[0].mxu0
        %v4525 = vadd.f32 %v4214, %v4524
        %4526 = vmatprep.mubr.f32.mxu0 0.0
        %v4527 = vand.u32 %v1562, 4294901760
        %v4528 = vsub.f32 %v1562, %v4527
        %4529 = vmatmul.mubr.f32.gmra.mrb[0].mxu0 %v4528
        %v4530 = vpop.f32.mrb[0].mxu0
        %v4531 = vadd.f32 %v4219, %v4530
        %v4532 = vpop.f32.mrb[0].mxu0
        %v4533 = vadd.f32 %v4221, %v4532
        %4534 = vmatprep.mubr.f32.mxu0 0.0
        %v4535 = vand.u32 %v1565, 4294901760
        %v4536 = vsub.f32 %v1565, %v4535
        %4537 = vmatmul.mubr.f32.gmra.mrb[0].mxu0 %v4536
        %v4538 = vpop.f32.mrb[0].mxu0
        %v4539 = vadd.f32 %v4226, %v4538
        %v4540 = vpop.f32.mrb[0].mxu0
        %v4541 = vadd.f32 %v4228, %v4540
        %4542 = vmatprep.mubr.f32.mxu0 0.0
        %v4543 = vand.u32 %v1568, 4294901760
        %v4544 = vsub.f32 %v1568, %v4543
        %4545 = vmatmul.mubr.f32.gmra.mrb[0].mxu0 %v4544
        %v4546 = vpop.f32.mrb[0].mxu0
        %v4547 = vadd.f32 %v4233, %v4546
        %v4548 = vpop.f32.mrb[0].mxu0
        %v4549 = vadd.f32 %v4235, %v4548
        %4550 = vmatprep.mubr.f32.mxu0 0.0
        %v4551 = vand.u32 %v1571, 4294901760
        %v4552 = vsub.f32 %v1571, %v4551
        %4553 = vmatmul.mubr.f32.gmra.mrb[0].mxu0 %v4552
        %v4554 = vpop.f32.mrb[0].mxu0
        %v4555 = vadd.f32 %v4240, %v4554
        %v4556 = vpop.f32.mrb[0].mxu0
        %v4557 = vadd.f32 %v4242, %v4556
        %4558 = vmatprep.mubr.f32.mxu0 0.0
        %v4559 = vand.u32 %v1574, 4294901760
        %v4560 = vsub.f32 %v1574, %v4559
        %4561 = vmatmul.mubr.f32.gmra.mrb[0].mxu0 %v4560
        %v4562 = vpop.f32.mrb[0].mxu0
        %v4563 = vadd.f32 %v4247, %v4562
        %v4564 = vpop.f32.mrb[0].mxu0
        %v4565 = vadd.f32 %v4249, %v4564
        %4566 = vmatprep.mubr.f32.mxu0 0.0
        %v4567 = vand.u32 %v1577, 4294901760
        %v4568 = vsub.f32 %v1577, %v4567
        %4569 = vmatmul.mubr.f32.gmra.mrb[0].mxu0 %v4568
        %v4570 = vpop.f32.mrb[0].mxu0
        %v4571 = vadd.f32 %v4254, %v4570
        %v4572 = vpop.f32.mrb[0].mxu0
        %v4573 = vadd.f32 %v4256, %v4572
        %4574 = vmatprep.mubr.f32.mxu0 0.0
        %v4575 = vand.u32 %v1580, 4294901760
        %v4576 = vsub.f32 %v1580, %v4575
        %4577 = vmatmul.mubr.f32.gmra.mrb[0].mxu0 %v4576
        %v4578 = vpop.f32.mrb[0].mxu0
        %v4579 = vadd.f32 %v4261, %v4578
        %v4580 = vpop.f32.mrb[0].mxu0
        %v4581 = vadd.f32 %v4263, %v4580
        %4582 = vmatprep.mubr.f32.mxu0 0.0
        %v4583 = vand.u32 %v1583, 4294901760
        %v4584 = vsub.f32 %v1583, %v4583
        %4585 = vmatmul.mubr.f32.gmra.mrb[0].mxu0 %v4584
        %v4586 = vpop.f32.mrb[0].mxu0
        %v4587 = vadd.f32 %v4268, %v4586
        %v4588 = vpop.f32.mrb[0].mxu0
        %v4589 = vadd.f32 %v4270, %v4588
        %4590 = vmatprep.mubr.f32.mxu0 0.0
        %v4591 = vand.u32 %v1586, 4294901760
        %v4592 = vsub.f32 %v1586, %v4591
        %4593 = vmatmul.mubr.f32.gmra.mrb[0].mxu0 %v4592
        %v4594 = vpop.f32.mrb[0].mxu0
        %v4595 = vadd.f32 %v4275, %v4594
        %v4596 = vpop.f32.mrb[0].mxu0
        %v4597 = vadd.f32 %v4277, %v4596
        %4598 = vmatprep.mubr.f32.mxu0 0.0
        %v4599 = vand.u32 %v1589, 4294901760
        %v4600 = vsub.f32 %v1589, %v4599
        %4601 = vmatmul.mubr.f32.gmra.mrb[0].mxu0 %v4600
        %v4602 = vpop.f32.mrb[0].mxu0
        %v4603 = vadd.f32 %v4282, %v4602
        %v4604 = vpop.f32.mrb[0].mxu0
        %v4605 = vadd.f32 %v4284, %v4604
        %4606 = vmatprep.mubr.f32.mxu0 0.0
        %v4607 = vand.u32 %v1592, 4294901760
        %v4608 = vsub.f32 %v1592, %v4607
        %4609 = vmatmul.mubr.f32.gmra.mrb[0].mxu0 %v4608
        %v4610 = vpop.f32.mrb[0].mxu0
        %v4611 = vadd.f32 %v4289, %v4610
        %v4612 = vpop.f32.mrb[0].mxu0
        %v4613 = vadd.f32 %v4291, %v4612
        %4614 = vmatprep.mubr.f32.mxu0 0.0
        %v4615 = vand.u32 %v1595, 4294901760
        %v4616 = vsub.f32 %v1595, %v4615
        %4617 = vmatmul.mubr.f32.gmra.mrb[0].mxu0 %v4616
        %v4618 = vpop.f32.mrb[0].mxu0
        %v4619 = vadd.f32 %v4296, %v4618
        %v4620 = vpop.f32.mrb[0].mxu0
        %v4621 = vadd.f32 %v4298, %v4620
        %4622 = vmatprep.mubr.f32.mxu0 0.0
        %v4623 = vand.u32 %v1598, 4294901760
        %v4624 = vsub.f32 %v1598, %v4623
        %4625 = vmatmul.mubr.f32.gmra.mrb[0].mxu0 %v4624
        %v4626 = vpop.f32.mrb[0].mxu0
        %v4627 = vadd.f32 %v4303, %v4626
        %v4628 = vpop.f32.mrb[0].mxu0
        %v4629 = vadd.f32 %v4305, %v4628
        %4630 = vmatprep.mubr.f32.mxu0 0.0
        %v4631 = vand.u32 %v1601, 4294901760
        %v4632 = vsub.f32 %v1601, %v4631
        %4633 = vmatmul.mubr.f32.gmra.mrb[0].mxu0 %v4632
        %v4634 = vpop.f32.mrb[0].mxu0
        %v4635 = vadd.f32 %v4310, %v4634
        %v4636 = vpop.f32.mrb[0].mxu0
        %v4637 = vadd.f32 %v4312, %v4636
        %4638 = vdwg.mxu0
        %v4639 = vand.u32 %v1610, 4294901760
        %4640 = vmatprep.subr.mxu0 %v4639
        %v4641 = vand.u32 %v1608, 4294901760
        %4642 = vmatpush1.msra.mxu0 %v4641
        %4643 = vmatprep.subr.mxu0 0.0
        %4644 = vmatpush1.msra.mxu0 0.0
        %4645 = vmatprep.subr.mxu0 0.0
        %4646 = vmatpush1.msra.mxu0 0.0
        %4647 = vmatprep.subr.mxu0 0.0
        %4648 = vmatpush1.msra.mxu0 0.0
        %4649 = vmatprep.subr.mxu0 0.0
        %4650 = vmatpush1.msra.mxu0 0.0
        %4651 = vmatprep.subr.mxu0 0.0
        %4652 = vmatpush1.msra.mxu0 0.0
        %4653 = vmatprep.subr.mxu0 0.0
        %4654 = vmatpush1.msra.mxu0 0.0
        %4655 = vmatprep.subr.mxu0 0.0
        %4656 = vmatpush1.msra.mxu0 0.0
        %4657 = vmatprep.subr.mxu0 0.0
        %4658 = vmatpush1.msra.mxu0 0.0
        %4659 = vmatprep.subr.mxu0 0.0
        %4660 = vmatpush1.msra.mxu0 0.0
        %4661 = vmatprep.subr.mxu0 0.0
        %4662 = vmatpush1.msra.mxu0 0.0
        %4663 = vmatprep.subr.mxu0 0.0
        %4664 = vmatpush1.msra.mxu0 0.0
        %4665 = vmatprep.subr.mxu0 0.0
        %4666 = vmatpush1.msra.mxu0 0.0
        %4667 = vmatprep.subr.mxu0 0.0
        %4668 = vmatpush1.msra.mxu0 0.0
        %4669 = vmatprep.subr.mxu0 0.0
        %4670 = vmatpush1.msra.mxu0 0.0
        %4671 = vmatprep.subr.mxu0 0.0
        %4672 = vmatpush1.msra.mxu0 0.0
        %4673 = vmatprep.subr.mxu0 0.0
        %4674 = vmatpush1.msra.mxu0 0.0
        %4675 = vmatprep.subr.mxu0 0.0
        %4676 = vmatpush1.msra.mxu0 0.0
        %4677 = vmatprep.subr.mxu0 0.0
        %4678 = vmatpush1.msra.mxu0 0.0
        %4679 = vmatprep.subr.mxu0 0.0
        %4680 = vmatpush1.msra.mxu0 0.0
        %4681 = vmatprep.subr.mxu0 0.0
        %4682 = vmatpush1.msra.mxu0 0.0
        %4683 = vmatprep.subr.mxu0 0.0
        %4684 = vmatpush1.msra.mxu0 0.0
        %4685 = vmatprep.subr.mxu0 0.0
        %4686 = vmatpush1.msra.mxu0 0.0
        %4687 = vmatprep.subr.mxu0 0.0
        %4688 = vmatpush1.msra.mxu0 0.0
        %4689 = vmatprep.subr.mxu0 0.0
        %4690 = vmatpush1.msra.mxu0 0.0
        %4691 = vmatprep.subr.mxu0 0.0
        %4692 = vmatpush1.msra.mxu0 0.0
        %4693 = vmatprep.subr.mxu0 0.0
        %4694 = vmatpush1.msra.mxu0 0.0
        %4695 = vmatprep.subr.mxu0 0.0
        %4696 = vmatpush1.msra.mxu0 0.0
        %4697 = vmatprep.subr.mxu0 0.0
        %4698 = vmatpush1.msra.mxu0 0.0
        %4699 = vmatprep.subr.mxu0 0.0
        %4700 = vmatpush1.msra.mxu0 0.0
        %4701 = vmatprep.subr.mxu0 0.0
        %4702 = vmatpush1.msra.mxu0 0.0
        %4703 = vmatprep.subr.mxu0 0.0
        %4704 = vmatpush1.msra.mxu0 0.0
        %4705 = vmatprep.mubr.f32.mxu0 0.0
        %v4706 = vand.u32 %v1508, 4294901760
        %v4707 = vsub.f32 %v1508, %v4706
        %v4708 = vand.u32 %v4707, 4294901760
        %4709 = vmatmul.mubr.f32.gmra.mrb[0].mxu0 %v4708
        %v4710 = vpop.f32.mrb[0].mxu0
        %v4711 = vadd.f32 %v4387, %v4710
        %v4712 = vpop.f32.mrb[0].mxu0
        %v4713 = vadd.f32 %v4389, %v4712
        %4714 = vmatprep.mubr.f32.mxu0 0.0
        %v4715 = vand.u32 %v1511, 4294901760
        %v4716 = vsub.f32 %v1511, %v4715
        %v4717 = vand.u32 %v4716, 4294901760
        %4718 = vmatmul.mubr.f32.gmra.mrb[0].mxu0 %v4717
        %v4719 = vpop.f32.mrb[0].mxu0
        %v4720 = vadd.f32 %v4395, %v4719
        %v4721 = vpop.f32.mrb[0].mxu0
        %v4722 = vadd.f32 %v4397, %v4721
        %4723 = vmatprep.mubr.f32.mxu0 0.0
        %v4724 = vand.u32 %v1514, 4294901760
        %v4725 = vsub.f32 %v1514, %v4724
        %v4726 = vand.u32 %v4725, 4294901760
        %4727 = vmatmul.mubr.f32.gmra.mrb[0].mxu0 %v4726
        %v4728 = vpop.f32.mrb[0].mxu0
        %v4729 = vadd.f32 %v4403, %v4728
        %v4730 = vpop.f32.mrb[0].mxu0
        %v4731 = vadd.f32 %v4405, %v4730
        %4732 = vmatprep.mubr.f32.mxu0 0.0
        %v4733 = vand.u32 %v1517, 4294901760
        %v4734 = vsub.f32 %v1517, %v4733
        %v4735 = vand.u32 %v4734, 4294901760
        %4736 = vmatmul.mubr.f32.gmra.mrb[0].mxu0 %v4735
        %v4737 = vpop.f32.mrb[0].mxu0
        %v4738 = vadd.f32 %v4411, %v4737
        %v4739 = vpop.f32.mrb[0].mxu0
        %v4740 = vadd.f32 %v4413, %v4739
        %4741 = vmatprep.mubr.f32.mxu0 0.0
        %v4742 = vand.u32 %v1520, 4294901760
        %v4743 = vsub.f32 %v1520, %v4742
        %v4744 = vand.u32 %v4743, 4294901760
        %4745 = vmatmul.mubr.f32.gmra.mrb[0].mxu0 %v4744
        %v4746 = vpop.f32.mrb[0].mxu0
        %v4747 = vadd.f32 %v4419, %v4746
        %v4748 = vpop.f32.mrb[0].mxu0
        %v4749 = vadd.f32 %v4421, %v4748
        %4750 = vmatprep.mubr.f32.mxu0 0.0
        %v4751 = vand.u32 %v1523, 4294901760
        %v4752 = vsub.f32 %v1523, %v4751
        %v4753 = vand.u32 %v4752, 4294901760
        %4754 = vmatmul.mubr.f32.gmra.mrb[0].mxu0 %v4753
        %v4755 = vpop.f32.mrb[0].mxu0
        %v4756 = vadd.f32 %v4427, %v4755
        %v4757 = vpop.f32.mrb[0].mxu0
        %v4758 = vadd.f32 %v4429, %v4757
        %4759 = vmatprep.mubr.f32.mxu0 0.0
        %v4760 = vand.u32 %v1526, 4294901760
        %v4761 = vsub.f32 %v1526, %v4760
        %v4762 = vand.u32 %v4761, 4294901760
        %4763 = vmatmul.mubr.f32.gmra.mrb[0].mxu0 %v4762
        %v4764 = vpop.f32.mrb[0].mxu0
        %v4765 = vadd.f32 %v4435, %v4764
        %v4766 = vpop.f32.mrb[0].mxu0
        %v4767 = vadd.f32 %v4437, %v4766
        %4768 = vmatprep.mubr.f32.mxu0 0.0
        %v4769 = vand.u32 %v1529, 4294901760
        %v4770 = vsub.f32 %v1529, %v4769
        %v4771 = vand.u32 %v4770, 4294901760
        %4772 = vmatmul.mubr.f32.gmra.mrb[0].mxu0 %v4771
        %v4773 = vpop.f32.mrb[0].mxu0
        %v4774 = vadd.f32 %v4443, %v4773
        %v4775 = vpop.f32.mrb[0].mxu0
        %v4776 = vadd.f32 %v4445, %v4775
        %4777 = vmatprep.mubr.f32.mxu0 0.0
        %v4778 = vand.u32 %v1532, 4294901760
        %v4779 = vsub.f32 %v1532, %v4778
        %v4780 = vand.u32 %v4779, 4294901760
        %4781 = vmatmul.mubr.f32.gmra.mrb[0].mxu0 %v4780
        %v4782 = vpop.f32.mrb[0].mxu0
        %v4783 = vadd.f32 %v4451, %v4782
        %v4784 = vpop.f32.mrb[0].mxu0
        %v4785 = vadd.f32 %v4453, %v4784
        %4786 = vmatprep.mubr.f32.mxu0 0.0
        %v4787 = vand.u32 %v1535, 4294901760
        %v4788 = vsub.f32 %v1535, %v4787
        %v4789 = vand.u32 %v4788, 4294901760
        %4790 = vmatmul.mubr.f32.gmra.mrb[0].mxu0 %v4789
        %v4791 = vpop.f32.mrb[0].mxu0
        %v4792 = vadd.f32 %v4459, %v4791
        %v4793 = vpop.f32.mrb[0].mxu0
        %v4794 = vadd.f32 %v4461, %v4793
        %4795 = vmatprep.mubr.f32.mxu0 0.0
        %v4796 = vand.u32 %v1538, 4294901760
        %v4797 = vsub.f32 %v1538, %v4796
        %v4798 = vand.u32 %v4797, 4294901760
        %4799 = vmatmul.mubr.f32.gmra.mrb[0].mxu0 %v4798
        %v4800 = vpop.f32.mrb[0].mxu0
        %v4801 = vadd.f32 %v4467, %v4800
        %v4802 = vpop.f32.mrb[0].mxu0
        %v4803 = vadd.f32 %v4469, %v4802
        %4804 = vmatprep.mubr.f32.mxu0 0.0
        %v4805 = vand.u32 %v1541, 4294901760
        %v4806 = vsub.f32 %v1541, %v4805
        %v4807 = vand.u32 %v4806, 4294901760
        %4808 = vmatmul.mubr.f32.gmra.mrb[0].mxu0 %v4807
        %v4809 = vpop.f32.mrb[0].mxu0
        %v4810 = vadd.f32 %v4475, %v4809
        %v4811 = vpop.f32.mrb[0].mxu0
        %v4812 = vadd.f32 %v4477, %v4811
        %4813 = vmatprep.mubr.f32.mxu0 0.0
        %v4814 = vand.u32 %v1544, 4294901760
        %v4815 = vsub.f32 %v1544, %v4814
        %v4816 = vand.u32 %v4815, 4294901760
        %4817 = vmatmul.mubr.f32.gmra.mrb[0].mxu0 %v4816
        %v4818 = vpop.f32.mrb[0].mxu0
        %v4819 = vadd.f32 %v4483, %v4818
        %v4820 = vpop.f32.mrb[0].mxu0
        %v4821 = vadd.f32 %v4485, %v4820
        %4822 = vmatprep.mubr.f32.mxu0 0.0
        %v4823 = vand.u32 %v1547, 4294901760
        %v4824 = vsub.f32 %v1547, %v4823
        %v4825 = vand.u32 %v4824, 4294901760
        %4826 = vmatmul.mubr.f32.gmra.mrb[0].mxu0 %v4825
        %v4827 = vpop.f32.mrb[0].mxu0
        %v4828 = vadd.f32 %v4491, %v4827
        %v4829 = vpop.f32.mrb[0].mxu0
        %v4830 = vadd.f32 %v4493, %v4829
        %4831 = vmatprep.mubr.f32.mxu0 0.0
        %v4832 = vand.u32 %v1550, 4294901760
        %v4833 = vsub.f32 %v1550, %v4832
        %v4834 = vand.u32 %v4833, 4294901760
        %4835 = vmatmul.mubr.f32.gmra.mrb[0].mxu0 %v4834
        %v4836 = vpop.f32.mrb[0].mxu0
        %v4837 = vadd.f32 %v4499, %v4836
        %v4838 = vpop.f32.mrb[0].mxu0
        %v4839 = vadd.f32 %v4501, %v4838
        %4840 = vmatprep.mubr.f32.mxu0 0.0
        %v4841 = vand.u32 %v1553, 4294901760
        %v4842 = vsub.f32 %v1553, %v4841
        %v4843 = vand.u32 %v4842, 4294901760
        %4844 = vmatmul.mubr.f32.gmra.mrb[0].mxu0 %v4843
        %v4845 = vpop.f32.mrb[0].mxu0
        %v4846 = vadd.f32 %v4507, %v4845
        %v4847 = vpop.f32.mrb[0].mxu0
        %v4848 = vadd.f32 %v4509, %v4847
        %4849 = vmatprep.mubr.f32.mxu0 0.0
        %v4850 = vand.u32 %v1556, 4294901760
        %v4851 = vsub.f32 %v1556, %v4850
        %v4852 = vand.u32 %v4851, 4294901760
        %4853 = vmatmul.mubr.f32.gmra.mrb[0].mxu0 %v4852
        %v4854 = vpop.f32.mrb[0].mxu0
        %v4855 = vadd.f32 %v4515, %v4854
        %v4856 = vpop.f32.mrb[0].mxu0
        %v4857 = vadd.f32 %v4517, %v4856
        %4858 = vmatprep.mubr.f32.mxu0 0.0
        %v4859 = vand.u32 %v1559, 4294901760
        %v4860 = vsub.f32 %v1559, %v4859
        %v4861 = vand.u32 %v4860, 4294901760
        %4862 = vmatmul.mubr.f32.gmra.mrb[0].mxu0 %v4861
        %v4863 = vpop.f32.mrb[0].mxu0
        %v4864 = vadd.f32 %v4523, %v4863
        %v4865 = vpop.f32.mrb[0].mxu0
        %v4866 = vadd.f32 %v4525, %v4865
        %4867 = vmatprep.mubr.f32.mxu0 0.0
        %v4868 = vand.u32 %v1562, 4294901760
        %v4869 = vsub.f32 %v1562, %v4868
        %v4870 = vand.u32 %v4869, 4294901760
        %4871 = vmatmul.mubr.f32.gmra.mrb[0].mxu0 %v4870
        %v4872 = vpop.f32.mrb[0].mxu0
        %v4873 = vadd.f32 %v4531, %v4872
        %v4874 = vpop.f32.mrb[0].mxu0
        %v4875 = vadd.f32 %v4533, %v4874
        %4876 = vmatprep.mubr.f32.mxu0 0.0
        %v4877 = vand.u32 %v1565, 4294901760
        %v4878 = vsub.f32 %v1565, %v4877
        %v4879 = vand.u32 %v4878, 4294901760
        %4880 = vmatmul.mubr.f32.gmra.mrb[0].mxu0 %v4879
        %v4881 = vpop.f32.mrb[0].mxu0
        %v4882 = vadd.f32 %v4539, %v4881
        %v4883 = vpop.f32.mrb[0].mxu0
        %v4884 = vadd.f32 %v4541, %v4883
        %4885 = vmatprep.mubr.f32.mxu0 0.0
        %v4886 = vand.u32 %v1568, 4294901760
        %v4887 = vsub.f32 %v1568, %v4886
        %v4888 = vand.u32 %v4887, 4294901760
        %4889 = vmatmul.mubr.f32.gmra.mrb[0].mxu0 %v4888
        %v4890 = vpop.f32.mrb[0].mxu0
        %v4891 = vadd.f32 %v4547, %v4890
        %v4892 = vpop.f32.mrb[0].mxu0
        %v4893 = vadd.f32 %v4549, %v4892
        %4894 = vmatprep.mubr.f32.mxu0 0.0
        %v4895 = vand.u32 %v1571, 4294901760
        %v4896 = vsub.f32 %v1571, %v4895
        %v4897 = vand.u32 %v4896, 4294901760
        %4898 = vmatmul.mubr.f32.gmra.mrb[0].mxu0 %v4897
        %v4899 = vpop.f32.mrb[0].mxu0
        %v4900 = vadd.f32 %v4555, %v4899
        %v4901 = vpop.f32.mrb[0].mxu0
        %v4902 = vadd.f32 %v4557, %v4901
        %4903 = vmatprep.mubr.f32.mxu0 0.0
        %v4904 = vand.u32 %v1574, 4294901760
        %v4905 = vsub.f32 %v1574, %v4904
        %v4906 = vand.u32 %v4905, 4294901760
        %4907 = vmatmul.mubr.f32.gmra.mrb[0].mxu0 %v4906
        %v4908 = vpop.f32.mrb[0].mxu0
        %v4909 = vadd.f32 %v4563, %v4908
        %v4910 = vpop.f32.mrb[0].mxu0
        %v4911 = vadd.f32 %v4565, %v4910
        %4912 = vmatprep.mubr.f32.mxu0 0.0
        %v4913 = vand.u32 %v1577, 4294901760
        %v4914 = vsub.f32 %v1577, %v4913
        %v4915 = vand.u32 %v4914, 4294901760
        %4916 = vmatmul.mubr.f32.gmra.mrb[0].mxu0 %v4915
        %v4917 = vpop.f32.mrb[0].mxu0
        %v4918 = vadd.f32 %v4571, %v4917
        %v4919 = vpop.f32.mrb[0].mxu0
        %v4920 = vadd.f32 %v4573, %v4919
        %4921 = vmatprep.mubr.f32.mxu0 0.0
        %v4922 = vand.u32 %v1580, 4294901760
        %v4923 = vsub.f32 %v1580, %v4922
        %v4924 = vand.u32 %v4923, 4294901760
        %4925 = vmatmul.mubr.f32.gmra.mrb[0].mxu0 %v4924
        %v4926 = vpop.f32.mrb[0].mxu0
        %v4927 = vadd.f32 %v4579, %v4926
        %v4928 = vpop.f32.mrb[0].mxu0
        %v4929 = vadd.f32 %v4581, %v4928
        %4930 = vmatprep.mubr.f32.mxu0 0.0
        %v4931 = vand.u32 %v1583, 4294901760
        %v4932 = vsub.f32 %v1583, %v4931
        %v4933 = vand.u32 %v4932, 4294901760
        %4934 = vmatmul.mubr.f32.gmra.mrb[0].mxu0 %v4933
        %v4935 = vpop.f32.mrb[0].mxu0
        %v4936 = vadd.f32 %v4587, %v4935
        %v4937 = vpop.f32.mrb[0].mxu0
        %v4938 = vadd.f32 %v4589, %v4937
        %4939 = vmatprep.mubr.f32.mxu0 0.0
        %v4940 = vand.u32 %v1586, 4294901760
        %v4941 = vsub.f32 %v1586, %v4940
        %v4942 = vand.u32 %v4941, 4294901760
        %4943 = vmatmul.mubr.f32.gmra.mrb[0].mxu0 %v4942
        %v4944 = vpop.f32.mrb[0].mxu0
        %v4945 = vadd.f32 %v4595, %v4944
        %v4946 = vpop.f32.mrb[0].mxu0
        %v4947 = vadd.f32 %v4597, %v4946
        %4948 = vmatprep.mubr.f32.mxu0 0.0
        %v4949 = vand.u32 %v1589, 4294901760
        %v4950 = vsub.f32 %v1589, %v4949
        %v4951 = vand.u32 %v4950, 4294901760
        %4952 = vmatmul.mubr.f32.gmra.mrb[0].mxu0 %v4951
        %v4953 = vpop.f32.mrb[0].mxu0
        %v4954 = vadd.f32 %v4603, %v4953
        %v4955 = vpop.f32.mrb[0].mxu0
        %v4956 = vadd.f32 %v4605, %v4955
        %4957 = vmatprep.mubr.f32.mxu0 0.0
        %v4958 = vand.u32 %v1592, 4294901760
        %v4959 = vsub.f32 %v1592, %v4958
        %v4960 = vand.u32 %v4959, 4294901760
        %4961 = vmatmul.mubr.f32.gmra.mrb[0].mxu0 %v4960
        %v4962 = vpop.f32.mrb[0].mxu0
        %v4963 = vadd.f32 %v4611, %v4962
        %v4964 = vpop.f32.mrb[0].mxu0
        %v4965 = vadd.f32 %v4613, %v4964
        %4966 = vmatprep.mubr.f32.mxu0 0.0
        %v4967 = vand.u32 %v1595, 4294901760
        %v4968 = vsub.f32 %v1595, %v4967
        %v4969 = vand.u32 %v4968, 4294901760
        %4970 = vmatmul.mubr.f32.gmra.mrb[0].mxu0 %v4969
        %v4971 = vpop.f32.mrb[0].mxu0
        %v4972 = vadd.f32 %v4619, %v4971
        %v4973 = vpop.f32.mrb[0].mxu0
        %v4974 = vadd.f32 %v4621, %v4973
        %4975 = vmatprep.mubr.f32.mxu0 0.0
        %v4976 = vand.u32 %v1598, 4294901760
        %v4977 = vsub.f32 %v1598, %v4976
        %v4978 = vand.u32 %v4977, 4294901760
        %4979 = vmatmul.mubr.f32.gmra.mrb[0].mxu0 %v4978
        %v4980 = vpop.f32.mrb[0].mxu0
        %v4981 = vadd.f32 %v4627, %v4980
        %v4982 = vpop.f32.mrb[0].mxu0
        %v4983 = vadd.f32 %v4629, %v4982
        %4984 = vmatprep.mubr.f32.mxu0 0.0
        %v4985 = vand.u32 %v1601, 4294901760
        %v4986 = vsub.f32 %v1601, %v4985
        %v4987 = vand.u32 %v4986, 4294901760
        %4988 = vmatmul.mubr.f32.gmra.mrb[0].mxu0 %v4987
        %v4989 = vpop.f32.mrb[0].mxu0
        %v4990 = vadd.f32 %v4635, %v4989
        %v4991 = vpop.f32.mrb[0].mxu0
        %v4992 = vadd.f32 %v4637, %v4991
        %4993 = vdwg.mxu0
        %v4994 = vand.u32 %v1610, 4294901760
        %v4995 = vsub.f32 %v1610, %v4994
        %v4996 = vand.u32 %v4995, 4294901760
        %4997 = vmatprep.subr.mxu0 %v4996
        %v4998 = vand.u32 %v1608, 4294901760
        %v4999 = vsub.f32 %v1608, %v4998
        %v5000 = vand.u32 %v4999, 4294901760
        %5001 = vmatpush1.msra.mxu0 %v5000
        %5002 = vmatprep.subr.mxu0 0.0
        %5003 = vmatpush1.msra.mxu0 0.0
        %5004 = vmatprep.subr.mxu0 0.0
        %5005 = vmatpush1.msra.mxu0 0.0
        %5006 = vmatprep.subr.mxu0 0.0
        %5007 = vmatpush1.msra.mxu0 0.0
        %5008 = vmatprep.subr.mxu0 0.0
        %5009 = vmatpush1.msra.mxu0 0.0
        %5010 = vmatprep.subr.mxu0 0.0
        %5011 = vmatpush1.msra.mxu0 0.0
        %5012 = vmatprep.subr.mxu0 0.0
        %5013 = vmatpush1.msra.mxu0 0.0
        %5014 = vmatprep.subr.mxu0 0.0
        %5015 = vmatpush1.msra.mxu0 0.0
        %5016 = vmatprep.subr.mxu0 0.0
        %5017 = vmatpush1.msra.mxu0 0.0
        %5018 = vmatprep.subr.mxu0 0.0
        %5019 = vmatpush1.msra.mxu0 0.0
        %5020 = vmatprep.subr.mxu0 0.0
        %5021 = vmatpush1.msra.mxu0 0.0
        %5022 = vmatprep.subr.mxu0 0.0
        %5023 = vmatpush1.msra.mxu0 0.0
        %5024 = vmatprep.subr.mxu0 0.0
        %5025 = vmatpush1.msra.mxu0 0.0
        %5026 = vmatprep.subr.mxu0 0.0
        %5027 = vmatpush1.msra.mxu0 0.0
        %5028 = vmatprep.subr.mxu0 0.0
        %5029 = vmatpush1.msra.mxu0 0.0
        %5030 = vmatprep.subr.mxu0 0.0
        %5031 = vmatpush1.msra.mxu0 0.0
        %5032 = vmatprep.subr.mxu0 0.0
        %5033 = vmatpush1.msra.mxu0 0.0
        %5034 = vmatprep.subr.mxu0 0.0
        %5035 = vmatpush1.msra.mxu0 0.0
        %5036 = vmatprep.subr.mxu0 0.0
        %5037 = vmatpush1.msra.mxu0 0.0
        %5038 = vmatprep.subr.mxu0 0.0
        %5039 = vmatpush1.msra.mxu0 0.0
        %5040 = vmatprep.subr.mxu0 0.0
        %5041 = vmatpush1.msra.mxu0 0.0
        %5042 = vmatprep.subr.mxu0 0.0
        %5043 = vmatpush1.msra.mxu0 0.0
        %5044 = vmatprep.subr.mxu0 0.0
        %5045 = vmatpush1.msra.mxu0 0.0
        %5046 = vmatprep.subr.mxu0 0.0
        %5047 = vmatpush1.msra.mxu0 0.0
        %5048 = vmatprep.subr.mxu0 0.0
        %5049 = vmatpush1.msra.mxu0 0.0
        %5050 = vmatprep.subr.mxu0 0.0
        %5051 = vmatpush1.msra.mxu0 0.0
        %5052 = vmatprep.subr.mxu0 0.0
        %5053 = vmatpush1.msra.mxu0 0.0
        %5054 = vmatprep.subr.mxu0 0.0
        %5055 = vmatpush1.msra.mxu0 0.0
        %5056 = vmatprep.subr.mxu0 0.0
        %5057 = vmatpush1.msra.mxu0 0.0
        %5058 = vmatprep.subr.mxu0 0.0
        %5059 = vmatpush1.msra.mxu0 0.0
        %5060 = vmatprep.subr.mxu0 0.0
        %5061 = vmatpush1.msra.mxu0 0.0
        %5062 = vmatprep.subr.mxu0 0.0
        %5063 = vmatpush1.msra.mxu0 0.0
        %5064 = vmatprep.mubr.f32.mxu0 0.0
        %v5065 = vand.u32 %v1508, 4294901760
        %5066 = vmatmul.mubr.f32.gmra.mrb[0].mxu0 %v5065
        %v5067 = vpop.f32.mrb[0].mxu0
        %v5068 = vadd.f32 %v4711, %v5067
        %v5069 = vpop.f32.mrb[0].mxu0
        %v5070 = vadd.f32 %v4713, %v5069
        %5071 = vmatprep.mubr.f32.mxu0 0.0
        %v5072 = vand.u32 %v1511, 4294901760
        %5073 = vmatmul.mubr.f32.gmra.mrb[0].mxu0 %v5072
        %v5074 = vpop.f32.mrb[0].mxu0
        %v5075 = vadd.f32 %v4720, %v5074
        %v5076 = vpop.f32.mrb[0].mxu0
        %v5077 = vadd.f32 %v4722, %v5076
        %5078 = vmatprep.mubr.f32.mxu0 0.0
        %v5079 = vand.u32 %v1514, 4294901760
        %5080 = vmatmul.mubr.f32.gmra.mrb[0].mxu0 %v5079
        %v5081 = vpop.f32.mrb[0].mxu0
        %v5082 = vadd.f32 %v4729, %v5081
        %v5083 = vpop.f32.mrb[0].mxu0
        %v5084 = vadd.f32 %v4731, %v5083
        %5085 = vmatprep.mubr.f32.mxu0 0.0
        %v5086 = vand.u32 %v1517, 4294901760
        %5087 = vmatmul.mubr.f32.gmra.mrb[0].mxu0 %v5086
        %v5088 = vpop.f32.mrb[0].mxu0
        %v5089 = vadd.f32 %v4738, %v5088
        %v5090 = vpop.f32.mrb[0].mxu0
        %v5091 = vadd.f32 %v4740, %v5090
        %5092 = vmatprep.mubr.f32.mxu0 0.0
        %v5093 = vand.u32 %v1520, 4294901760
        %5094 = vmatmul.mubr.f32.gmra.mrb[0].mxu0 %v5093
        %v5095 = vpop.f32.mrb[0].mxu0
        %v5096 = vadd.f32 %v4747, %v5095
        %v5097 = vpop.f32.mrb[0].mxu0
        %v5098 = vadd.f32 %v4749, %v5097
        %5099 = vmatprep.mubr.f32.mxu0 0.0
        %v5100 = vand.u32 %v1523, 4294901760
        %5101 = vmatmul.mubr.f32.gmra.mrb[0].mxu0 %v5100
        %v5102 = vpop.f32.mrb[0].mxu0
        %v5103 = vadd.f32 %v4756, %v5102
        %v5104 = vpop.f32.mrb[0].mxu0
        %v5105 = vadd.f32 %v4758, %v5104
        %5106 = vmatprep.mubr.f32.mxu0 0.0
        %v5107 = vand.u32 %v1526, 4294901760
        %5108 = vmatmul.mubr.f32.gmra.mrb[0].mxu0 %v5107
        %v5109 = vpop.f32.mrb[0].mxu0
        %v5110 = vadd.f32 %v4765, %v5109
        %v5111 = vpop.f32.mrb[0].mxu0
        %v5112 = vadd.f32 %v4767, %v5111
        %5113 = vmatprep.mubr.f32.mxu0 0.0
        %v5114 = vand.u32 %v1529, 4294901760
        %5115 = vmatmul.mubr.f32.gmra.mrb[0].mxu0 %v5114
        %v5116 = vpop.f32.mrb[0].mxu0
        %v5117 = vadd.f32 %v4774, %v5116
        %v5118 = vpop.f32.mrb[0].mxu0
        %v5119 = vadd.f32 %v4776, %v5118
        %5120 = vmatprep.mubr.f32.mxu0 0.0
        %v5121 = vand.u32 %v1532, 4294901760
        %5122 = vmatmul.mubr.f32.gmra.mrb[0].mxu0 %v5121
        %v5123 = vpop.f32.mrb[0].mxu0
        %v5124 = vadd.f32 %v4783, %v5123
        %v5125 = vpop.f32.mrb[0].mxu0
        %v5126 = vadd.f32 %v4785, %v5125
        %5127 = vmatprep.mubr.f32.mxu0 0.0
        %v5128 = vand.u32 %v1535, 4294901760
        %5129 = vmatmul.mubr.f32.gmra.mrb[0].mxu0 %v5128
        %v5130 = vpop.f32.mrb[0].mxu0
        %v5131 = vadd.f32 %v4792, %v5130
        %v5132 = vpop.f32.mrb[0].mxu0
        %v5133 = vadd.f32 %v4794, %v5132
        %5134 = vmatprep.mubr.f32.mxu0 0.0
        %v5135 = vand.u32 %v1538, 4294901760
        %5136 = vmatmul.mubr.f32.gmra.mrb[0].mxu0 %v5135
        %v5137 = vpop.f32.mrb[0].mxu0
        %v5138 = vadd.f32 %v4801, %v5137
        %v5139 = vpop.f32.mrb[0].mxu0
        %v5140 = vadd.f32 %v4803, %v5139
        %5141 = vmatprep.mubr.f32.mxu0 0.0
        %v5142 = vand.u32 %v1541, 4294901760
        %5143 = vmatmul.mubr.f32.gmra.mrb[0].mxu0 %v5142
        %v5144 = vpop.f32.mrb[0].mxu0
        %v5145 = vadd.f32 %v4810, %v5144
        %v5146 = vpop.f32.mrb[0].mxu0
        %v5147 = vadd.f32 %v4812, %v5146
        %5148 = vmatprep.mubr.f32.mxu0 0.0
        %v5149 = vand.u32 %v1544, 4294901760
        %5150 = vmatmul.mubr.f32.gmra.mrb[0].mxu0 %v5149
        %v5151 = vpop.f32.mrb[0].mxu0
        %v5152 = vadd.f32 %v4819, %v5151
        %v5153 = vpop.f32.mrb[0].mxu0
        %v5154 = vadd.f32 %v4821, %v5153
        %5155 = vmatprep.mubr.f32.mxu0 0.0
        %v5156 = vand.u32 %v1547, 4294901760
        %5157 = vmatmul.mubr.f32.gmra.mrb[0].mxu0 %v5156
        %v5158 = vpop.f32.mrb[0].mxu0
        %v5159 = vadd.f32 %v4828, %v5158
        %v5160 = vpop.f32.mrb[0].mxu0
        %v5161 = vadd.f32 %v4830, %v5160
        %5162 = vmatprep.mubr.f32.mxu0 0.0
        %v5163 = vand.u32 %v1550, 4294901760
        %5164 = vmatmul.mubr.f32.gmra.mrb[0].mxu0 %v5163
        %v5165 = vpop.f32.mrb[0].mxu0
        %v5166 = vadd.f32 %v4837, %v5165
        %v5167 = vpop.f32.mrb[0].mxu0
        %v5168 = vadd.f32 %v4839, %v5167
        %5169 = vmatprep.mubr.f32.mxu0 0.0
        %v5170 = vand.u32 %v1553, 4294901760
        %5171 = vmatmul.mubr.f32.gmra.mrb[0].mxu0 %v5170
        %v5172 = vpop.f32.mrb[0].mxu0
        %v5173 = vadd.f32 %v4846, %v5172
        %v5174 = vpop.f32.mrb[0].mxu0
        %v5175 = vadd.f32 %v4848, %v5174
        %5176 = vmatprep.mubr.f32.mxu0 0.0
        %v5177 = vand.u32 %v1556, 4294901760
        %5178 = vmatmul.mubr.f32.gmra.mrb[0].mxu0 %v5177
        %v5179 = vpop.f32.mrb[0].mxu0
        %v5180 = vadd.f32 %v4855, %v5179
        %v5181 = vpop.f32.mrb[0].mxu0
        %v5182 = vadd.f32 %v4857, %v5181
        %5183 = vmatprep.mubr.f32.mxu0 0.0
        %v5184 = vand.u32 %v1559, 4294901760
        %5185 = vmatmul.mubr.f32.gmra.mrb[0].mxu0 %v5184
        %v5186 = vpop.f32.mrb[0].mxu0
        %v5187 = vadd.f32 %v4864, %v5186
        %v5188 = vpop.f32.mrb[0].mxu0
        %v5189 = vadd.f32 %v4866, %v5188
        %5190 = vmatprep.mubr.f32.mxu0 0.0
        %v5191 = vand.u32 %v1562, 4294901760
        %5192 = vmatmul.mubr.f32.gmra.mrb[0].mxu0 %v5191
        %v5193 = vpop.f32.mrb[0].mxu0
        %v5194 = vadd.f32 %v4873, %v5193
        %v5195 = vpop.f32.mrb[0].mxu0
        %v5196 = vadd.f32 %v4875, %v5195
        %5197 = vmatprep.mubr.f32.mxu0 0.0
        %v5198 = vand.u32 %v1565, 4294901760
        %5199 = vmatmul.mubr.f32.gmra.mrb[0].mxu0 %v5198
        %v5200 = vpop.f32.mrb[0].mxu0
        %v5201 = vadd.f32 %v4882, %v5200
        %v5202 = vpop.f32.mrb[0].mxu0
        %v5203 = vadd.f32 %v4884, %v5202
        %5204 = vmatprep.mubr.f32.mxu0 0.0
        %v5205 = vand.u32 %v1568, 4294901760
        %5206 = vmatmul.mubr.f32.gmra.mrb[0].mxu0 %v5205
        %v5207 = vpop.f32.mrb[0].mxu0
        %v5208 = vadd.f32 %v4891, %v5207
        %v5209 = vpop.f32.mrb[0].mxu0
        %v5210 = vadd.f32 %v4893, %v5209
        %5211 = vmatprep.mubr.f32.mxu0 0.0
        %v5212 = vand.u32 %v1571, 4294901760
        %5213 = vmatmul.mubr.f32.gmra.mrb[0].mxu0 %v5212
        %v5214 = vpop.f32.mrb[0].mxu0
        %v5215 = vadd.f32 %v4900, %v5214
        %v5216 = vpop.f32.mrb[0].mxu0
        %v5217 = vadd.f32 %v4902, %v5216
        %5218 = vmatprep.mubr.f32.mxu0 0.0
        %v5219 = vand.u32 %v1574, 4294901760
        %5220 = vmatmul.mubr.f32.gmra.mrb[0].mxu0 %v5219
        %v5221 = vpop.f32.mrb[0].mxu0
        %v5222 = vadd.f32 %v4909, %v5221
        %v5223 = vpop.f32.mrb[0].mxu0
        %v5224 = vadd.f32 %v4911, %v5223
        %5225 = vmatprep.mubr.f32.mxu0 0.0
        %v5226 = vand.u32 %v1577, 4294901760
        %5227 = vmatmul.mubr.f32.gmra.mrb[0].mxu0 %v5226
        %v5228 = vpop.f32.mrb[0].mxu0
        %v5229 = vadd.f32 %v4918, %v5228
        %v5230 = vpop.f32.mrb[0].mxu0
        %v5231 = vadd.f32 %v4920, %v5230
        %5232 = vmatprep.mubr.f32.mxu0 0.0
        %v5233 = vand.u32 %v1580, 4294901760
        %5234 = vmatmul.mubr.f32.gmra.mrb[0].mxu0 %v5233
        %v5235 = vpop.f32.mrb[0].mxu0
        %v5236 = vadd.f32 %v4927, %v5235
        %v5237 = vpop.f32.mrb[0].mxu0
        %v5238 = vadd.f32 %v4929, %v5237
        %5239 = vmatprep.mubr.f32.mxu0 0.0
        %v5240 = vand.u32 %v1583, 4294901760
        %5241 = vmatmul.mubr.f32.gmra.mrb[0].mxu0 %v5240
        %v5242 = vpop.f32.mrb[0].mxu0
        %v5243 = vadd.f32 %v4936, %v5242
        %v5244 = vpop.f32.mrb[0].mxu0
        %v5245 = vadd.f32 %v4938, %v5244
        %5246 = vmatprep.mubr.f32.mxu0 0.0
        %v5247 = vand.u32 %v1586, 4294901760
        %5248 = vmatmul.mubr.f32.gmra.mrb[0].mxu0 %v5247
        %v5249 = vpop.f32.mrb[0].mxu0
        %v5250 = vadd.f32 %v4945, %v5249
        %v5251 = vpop.f32.mrb[0].mxu0
        %v5252 = vadd.f32 %v4947, %v5251
        %5253 = vmatprep.mubr.f32.mxu0 0.0
        %v5254 = vand.u32 %v1589, 4294901760
        %5255 = vmatmul.mubr.f32.gmra.mrb[0].mxu0 %v5254
        %v5256 = vpop.f32.mrb[0].mxu0
        %v5257 = vadd.f32 %v4954, %v5256
        %v5258 = vpop.f32.mrb[0].mxu0
        %v5259 = vadd.f32 %v4956, %v5258
        %5260 = vmatprep.mubr.f32.mxu0 0.0
        %v5261 = vand.u32 %v1592, 4294901760
        %5262 = vmatmul.mubr.f32.gmra.mrb[0].mxu0 %v5261
        %v5263 = vpop.f32.mrb[0].mxu0
        %v5264 = vadd.f32 %v4963, %v5263
        %v5265 = vpop.f32.mrb[0].mxu0
        %v5266 = vadd.f32 %v4965, %v5265
        %5267 = vmatprep.mubr.f32.mxu0 0.0
        %v5268 = vand.u32 %v1595, 4294901760
        %5269 = vmatmul.mubr.f32.gmra.mrb[0].mxu0 %v5268
        %v5270 = vpop.f32.mrb[0].mxu0
        %v5271 = vadd.f32 %v4972, %v5270
        %v5272 = vpop.f32.mrb[0].mxu0
        %v5273 = vadd.f32 %v4974, %v5272
        %5274 = vmatprep.mubr.f32.mxu0 0.0
        %v5275 = vand.u32 %v1598, 4294901760
        %5276 = vmatmul.mubr.f32.gmra.mrb[0].mxu0 %v5275
        %v5277 = vpop.f32.mrb[0].mxu0
        %v5278 = vadd.f32 %v4981, %v5277
        %v5279 = vpop.f32.mrb[0].mxu0
        %v5280 = vadd.f32 %v4983, %v5279
        %5281 = vmatprep.mubr.f32.mxu0 0.0
        %v5282 = vand.u32 %v1601, 4294901760
        %5283 = vmatmul.mubr.f32.gmra.mrb[0].mxu0 %v5282
        %v5284 = vpop.f32.mrb[0].mxu0
        %v5285 = vadd.f32 %v4990, %v5284
        %v5286 = vpop.f32.mrb[0].mxu0
        %v5287 = vadd.f32 %v4992, %v5286
        %5288 = vdwg.mxu0
        %v5289 = vand.u32 %v1610, 4294901760
        %5290 = vmatprep.subr.mxu0 %v5289
        %v5291 = vand.u32 %v1608, 4294901760
        %5292 = vmatpush1.msra.mxu0 %v5291
        %5293 = vmatprep.subr.mxu0 0.0
        %5294 = vmatpush1.msra.mxu0 0.0
        %5295 = vmatprep.subr.mxu0 0.0
        %5296 = vmatpush1.msra.mxu0 0.0
        %5297 = vmatprep.subr.mxu0 0.0
        %5298 = vmatpush1.msra.mxu0 0.0
        %5299 = vmatprep.subr.mxu0 0.0
        %5300 = vmatpush1.msra.mxu0 0.0
        %5301 = vmatprep.subr.mxu0 0.0
        %5302 = vmatpush1.msra.mxu0 0.0
        %5303 = vmatprep.subr.mxu0 0.0
        %5304 = vmatpush1.msra.mxu0 0.0
        %5305 = vmatprep.subr.mxu0 0.0
        %5306 = vmatpush1.msra.mxu0 0.0
        %5307 = vmatprep.subr.mxu0 0.0
        %5308 = vmatpush1.msra.mxu0 0.0
        %5309 = vmatprep.subr.mxu0 0.0
        %5310 = vmatpush1.msra.mxu0 0.0
        %5311 = vmatprep.subr.mxu0 0.0
        %5312 = vmatpush1.msra.mxu0 0.0
        %5313 = vmatprep.subr.mxu0 0.0
        %5314 = vmatpush1.msra.mxu0 0.0
        %5315 = vmatprep.subr.mxu0 0.0
        %5316 = vmatpush1.msra.mxu0 0.0
        %5317 = vmatprep.subr.mxu0 0.0
        %5318 = vmatpush1.msra.mxu0 0.0
        %5319 = vmatprep.subr.mxu0 0.0
        %5320 = vmatpush1.msra.mxu0 0.0
        %5321 = vmatprep.subr.mxu0 0.0
        %5322 = vmatpush1.msra.mxu0 0.0
        %5323 = vmatprep.subr.mxu0 0.0
        %5324 = vmatpush1.msra.mxu0 0.0
        %5325 = vmatprep.subr.mxu0 0.0
        %5326 = vmatpush1.msra.mxu0 0.0
        %5327 = vmatprep.subr.mxu0 0.0
        %5328 = vmatpush1.msra.mxu0 0.0
        %5329 = vmatprep.subr.mxu0 0.0
        %5330 = vmatpush1.msra.mxu0 0.0
        %5331 = vmatprep.subr.mxu0 0.0
        %5332 = vmatpush1.msra.mxu0 0.0
        %5333 = vmatprep.subr.mxu0 0.0
        %5334 = vmatpush1.msra.mxu0 0.0
        %5335 = vmatprep.subr.mxu0 0.0
        %5336 = vmatpush1.msra.mxu0 0.0
        %5337 = vmatprep.subr.mxu0 0.0
        %5338 = vmatpush1.msra.mxu0 0.0
        %5339 = vmatprep.subr.mxu0 0.0
        %5340 = vmatpush1.msra.mxu0 0.0
        %5341 = vmatprep.subr.mxu0 0.0
        %5342 = vmatpush1.msra.mxu0 0.0
        %5343 = vmatprep.subr.mxu0 0.0
        %5344 = vmatpush1.msra.mxu0 0.0
        %5345 = vmatprep.subr.mxu0 0.0
        %5346 = vmatpush1.msra.mxu0 0.0
        %5347 = vmatprep.subr.mxu0 0.0
        %5348 = vmatpush1.msra.mxu0 0.0
        %5349 = vmatprep.subr.mxu0 0.0
        %5350 = vmatpush1.msra.mxu0 0.0
        %5351 = vmatprep.subr.mxu0 0.0
        %5352 = vmatpush1.msra.mxu0 0.0
        %5353 = vmatprep.subr.mxu0 0.0
        %5354 = vmatpush1.msra.mxu0 0.0
        %5355 = vmatprep.mubr.f32.mxu0 0.0
        %v5356 = vand.u32 %v1508, 4294901760
        %5357 = vmatmul.mubr.f32.gmra.mrb[0].mxu0 %v5356
        %v5358 = vpop.f32.mrb[0].mxu0
        %v5359 = vadd.f32 %v5068, %v5358
        %v5360 = vpop.f32.mrb[0].mxu0
        %v5361 = vadd.f32 %v5070, %v5360
        %5362 = vmatprep.mubr.f32.mxu0 0.0
        %v5363 = vand.u32 %v1511, 4294901760
        %5364 = vmatmul.mubr.f32.gmra.mrb[0].mxu0 %v5363
        %v5365 = vpop.f32.mrb[0].mxu0
        %v5366 = vadd.f32 %v5075, %v5365
        %v5367 = vpop.f32.mrb[0].mxu0
        %v5368 = vadd.f32 %v5077, %v5367
        %5369 = vmatprep.mubr.f32.mxu0 0.0
        %v5370 = vand.u32 %v1514, 4294901760
        %5371 = vmatmul.mubr.f32.gmra.mrb[0].mxu0 %v5370
        %v5372 = vpop.f32.mrb[0].mxu0
        %v5373 = vadd.f32 %v5082, %v5372
        %v5374 = vpop.f32.mrb[0].mxu0
        %v5375 = vadd.f32 %v5084, %v5374
        %5376 = vmatprep.mubr.f32.mxu0 0.0
        %v5377 = vand.u32 %v1517, 4294901760
        %5378 = vmatmul.mubr.f32.gmra.mrb[0].mxu0 %v5377
        %v5379 = vpop.f32.mrb[0].mxu0
        %v5380 = vadd.f32 %v5089, %v5379
        %v5381 = vpop.f32.mrb[0].mxu0
        %v5382 = vadd.f32 %v5091, %v5381
        %5383 = vmatprep.mubr.f32.mxu0 0.0
        %v5384 = vand.u32 %v1520, 4294901760
        %5385 = vmatmul.mubr.f32.gmra.mrb[0].mxu0 %v5384
        %v5386 = vpop.f32.mrb[0].mxu0
        %v5387 = vadd.f32 %v5096, %v5386
        %v5388 = vpop.f32.mrb[0].mxu0
        %v5389 = vadd.f32 %v5098, %v5388
        %5390 = vmatprep.mubr.f32.mxu0 0.0
        %v5391 = vand.u32 %v1523, 4294901760
        %5392 = vmatmul.mubr.f32.gmra.mrb[0].mxu0 %v5391
        %v5393 = vpop.f32.mrb[0].mxu0
        %v5394 = vadd.f32 %v5103, %v5393
        %v5395 = vpop.f32.mrb[0].mxu0
        %v5396 = vadd.f32 %v5105, %v5395
        %5397 = vmatprep.mubr.f32.mxu0 0.0
        %v5398 = vand.u32 %v1526, 4294901760
        %5399 = vmatmul.mubr.f32.gmra.mrb[0].mxu0 %v5398
        %v5400 = vpop.f32.mrb[0].mxu0
        %v5401 = vadd.f32 %v5110, %v5400
        %v5402 = vpop.f32.mrb[0].mxu0
        %v5403 = vadd.f32 %v5112, %v5402
        %5404 = vmatprep.mubr.f32.mxu0 0.0
        %v5405 = vand.u32 %v1529, 4294901760
        %5406 = vmatmul.mubr.f32.gmra.mrb[0].mxu0 %v5405
        %v5407 = vpop.f32.mrb[0].mxu0
        %v5408 = vadd.f32 %v5117, %v5407
        %v5409 = vpop.f32.mrb[0].mxu0
        %v5410 = vadd.f32 %v5119, %v5409
        %5411 = vmatprep.mubr.f32.mxu0 0.0
        %v5412 = vand.u32 %v1532, 4294901760
        %5413 = vmatmul.mubr.f32.gmra.mrb[0].mxu0 %v5412
        %v5414 = vpop.f32.mrb[0].mxu0
        %v5415 = vadd.f32 %v5124, %v5414
        %v5416 = vpop.f32.mrb[0].mxu0
        %v5417 = vadd.f32 %v5126, %v5416
        %5418 = vmatprep.mubr.f32.mxu0 0.0
        %v5419 = vand.u32 %v1535, 4294901760
        %5420 = vmatmul.mubr.f32.gmra.mrb[0].mxu0 %v5419
        %v5421 = vpop.f32.mrb[0].mxu0
        %v5422 = vadd.f32 %v5131, %v5421
        %v5423 = vpop.f32.mrb[0].mxu0
        %v5424 = vadd.f32 %v5133, %v5423
        %5425 = vmatprep.mubr.f32.mxu0 0.0
        %v5426 = vand.u32 %v1538, 4294901760
        %5427 = vmatmul.mubr.f32.gmra.mrb[0].mxu0 %v5426
        %v5428 = vpop.f32.mrb[0].mxu0
        %v5429 = vadd.f32 %v5138, %v5428
        %v5430 = vpop.f32.mrb[0].mxu0
        %v5431 = vadd.f32 %v5140, %v5430
        %5432 = vmatprep.mubr.f32.mxu0 0.0
        %v5433 = vand.u32 %v1541, 4294901760
        %5434 = vmatmul.mubr.f32.gmra.mrb[0].mxu0 %v5433
        %v5435 = vpop.f32.mrb[0].mxu0
        %v5436 = vadd.f32 %v5145, %v5435
        %v5437 = vpop.f32.mrb[0].mxu0
        %v5438 = vadd.f32 %v5147, %v5437
        %5439 = vmatprep.mubr.f32.mxu0 0.0
        %v5440 = vand.u32 %v1544, 4294901760
        %5441 = vmatmul.mubr.f32.gmra.mrb[0].mxu0 %v5440
        %v5442 = vpop.f32.mrb[0].mxu0
        %v5443 = vadd.f32 %v5152, %v5442
        %v5444 = vpop.f32.mrb[0].mxu0
        %v5445 = vadd.f32 %v5154, %v5444
        %5446 = vmatprep.mubr.f32.mxu0 0.0
        %v5447 = vand.u32 %v1547, 4294901760
        %5448 = vmatmul.mubr.f32.gmra.mrb[0].mxu0 %v5447
        %v5449 = vpop.f32.mrb[0].mxu0
        %v5450 = vadd.f32 %v5159, %v5449
        %v5451 = vpop.f32.mrb[0].mxu0
        %v5452 = vadd.f32 %v5161, %v5451
        %5453 = vmatprep.mubr.f32.mxu0 0.0
        %v5454 = vand.u32 %v1550, 4294901760
        %5455 = vmatmul.mubr.f32.gmra.mrb[0].mxu0 %v5454
        %v5456 = vpop.f32.mrb[0].mxu0
        %v5457 = vadd.f32 %v5166, %v5456
        %v5458 = vpop.f32.mrb[0].mxu0
        %v5459 = vadd.f32 %v5168, %v5458
        %5460 = vmatprep.mubr.f32.mxu0 0.0
        %v5461 = vand.u32 %v1553, 4294901760
        %5462 = vmatmul.mubr.f32.gmra.mrb[0].mxu0 %v5461
        %v5463 = vpop.f32.mrb[0].mxu0
        %v5464 = vadd.f32 %v5173, %v5463
        %v5465 = vpop.f32.mrb[0].mxu0
        %v5466 = vadd.f32 %v5175, %v5465
        %5467 = vmatprep.mubr.f32.mxu0 0.0
        %v5468 = vand.u32 %v1556, 4294901760
        %5469 = vmatmul.mubr.f32.gmra.mrb[0].mxu0 %v5468
        %v5470 = vpop.f32.mrb[0].mxu0
        %v5471 = vadd.f32 %v5180, %v5470
        %v5472 = vpop.f32.mrb[0].mxu0
        %v5473 = vadd.f32 %v5182, %v5472
        %5474 = vmatprep.mubr.f32.mxu0 0.0
        %v5475 = vand.u32 %v1559, 4294901760
        %5476 = vmatmul.mubr.f32.gmra.mrb[0].mxu0 %v5475
        %v5477 = vpop.f32.mrb[0].mxu0
        %v5478 = vadd.f32 %v5187, %v5477
        %v5479 = vpop.f32.mrb[0].mxu0
        %v5480 = vadd.f32 %v5189, %v5479
        %5481 = vmatprep.mubr.f32.mxu0 0.0
        %v5482 = vand.u32 %v1562, 4294901760
        %5483 = vmatmul.mubr.f32.gmra.mrb[0].mxu0 %v5482
        %v5484 = vpop.f32.mrb[0].mxu0
        %v5485 = vadd.f32 %v5194, %v5484
        %v5486 = vpop.f32.mrb[0].mxu0
        %v5487 = vadd.f32 %v5196, %v5486
        %5488 = vmatprep.mubr.f32.mxu0 0.0
        %v5489 = vand.u32 %v1565, 4294901760
        %5490 = vmatmul.mubr.f32.gmra.mrb[0].mxu0 %v5489
        %v5491 = vpop.f32.mrb[0].mxu0
        %v5492 = vadd.f32 %v5201, %v5491
        %v5493 = vpop.f32.mrb[0].mxu0
        %v5494 = vadd.f32 %v5203, %v5493
        %5495 = vmatprep.mubr.f32.mxu0 0.0
        %v5496 = vand.u32 %v1568, 4294901760
        %5497 = vmatmul.mubr.f32.gmra.mrb[0].mxu0 %v5496
        %v5498 = vpop.f32.mrb[0].mxu0
        %v5499 = vadd.f32 %v5208, %v5498
        %v5500 = vpop.f32.mrb[0].mxu0
        %v5501 = vadd.f32 %v5210, %v5500
        %5502 = vmatprep.mubr.f32.mxu0 0.0
        %v5503 = vand.u32 %v1571, 4294901760
        %5504 = vmatmul.mubr.f32.gmra.mrb[0].mxu0 %v5503
        %v5505 = vpop.f32.mrb[0].mxu0
        %v5506 = vadd.f32 %v5215, %v5505
        %v5507 = vpop.f32.mrb[0].mxu0
        %v5508 = vadd.f32 %v5217, %v5507
        %5509 = vmatprep.mubr.f32.mxu0 0.0
        %v5510 = vand.u32 %v1574, 4294901760
        %5511 = vmatmul.mubr.f32.gmra.mrb[0].mxu0 %v5510
        %v5512 = vpop.f32.mrb[0].mxu0
        %v5513 = vadd.f32 %v5222, %v5512
        %v5514 = vpop.f32.mrb[0].mxu0
        %v5515 = vadd.f32 %v5224, %v5514
        %5516 = vmatprep.mubr.f32.mxu0 0.0
        %v5517 = vand.u32 %v1577, 4294901760
        %5518 = vmatmul.mubr.f32.gmra.mrb[0].mxu0 %v5517
        %v5519 = vpop.f32.mrb[0].mxu0
        %v5520 = vadd.f32 %v5229, %v5519
        %v5521 = vpop.f32.mrb[0].mxu0
        %v5522 = vadd.f32 %v5231, %v5521
        %5523 = vmatprep.mubr.f32.mxu0 0.0
        %v5524 = vand.u32 %v1580, 4294901760
        %5525 = vmatmul.mubr.f32.gmra.mrb[0].mxu0 %v5524
        %v5526 = vpop.f32.mrb[0].mxu0
        %v5527 = vadd.f32 %v5236, %v5526
        %v5528 = vpop.f32.mrb[0].mxu0
        %v5529 = vadd.f32 %v5238, %v5528
        %5530 = vmatprep.mubr.f32.mxu0 0.0
        %v5531 = vand.u32 %v1583, 4294901760
        %5532 = vmatmul.mubr.f32.gmra.mrb[0].mxu0 %v5531
        %v5533 = vpop.f32.mrb[0].mxu0
        %v5534 = vadd.f32 %v5243, %v5533
        %v5535 = vpop.f32.mrb[0].mxu0
        %v5536 = vadd.f32 %v5245, %v5535
        %5537 = vmatprep.mubr.f32.mxu0 0.0
        %v5538 = vand.u32 %v1586, 4294901760
        %5539 = vmatmul.mubr.f32.gmra.mrb[0].mxu0 %v5538
        %v5540 = vpop.f32.mrb[0].mxu0
        %v5541 = vadd.f32 %v5250, %v5540
        %v5542 = vpop.f32.mrb[0].mxu0
        %v5543 = vadd.f32 %v5252, %v5542
        %5544 = vmatprep.mubr.f32.mxu0 0.0
        %v5545 = vand.u32 %v1589, 4294901760
        %5546 = vmatmul.mubr.f32.gmra.mrb[0].mxu0 %v5545
        %v5547 = vpop.f32.mrb[0].mxu0
        %v5548 = vadd.f32 %v5257, %v5547
        %v5549 = vpop.f32.mrb[0].mxu0
        %v5550 = vadd.f32 %v5259, %v5549
        %5551 = vmatprep.mubr.f32.mxu0 0.0
        %v5552 = vand.u32 %v1592, 4294901760
        %5553 = vmatmul.mubr.f32.gmra.mrb[0].mxu0 %v5552
        %v5554 = vpop.f32.mrb[0].mxu0
        %v5555 = vadd.f32 %v5264, %v5554
        %v5556 = vpop.f32.mrb[0].mxu0
        %v5557 = vadd.f32 %v5266, %v5556
        %5558 = vmatprep.mubr.f32.mxu0 0.0
        %v5559 = vand.u32 %v1595, 4294901760
        %5560 = vmatmul.mubr.f32.gmra.mrb[0].mxu0 %v5559
        %v5561 = vpop.f32.mrb[0].mxu0
        %v5562 = vadd.f32 %v5271, %v5561
        %v5563 = vpop.f32.mrb[0].mxu0
        %v5564 = vadd.f32 %v5273, %v5563
        %5565 = vmatprep.mubr.f32.mxu0 0.0
        %v5566 = vand.u32 %v1598, 4294901760
        %5567 = vmatmul.mubr.f32.gmra.mrb[0].mxu0 %v5566
        %v5568 = vpop.f32.mrb[0].mxu0
        %v5569 = vadd.f32 %v5278, %v5568
        %v5570 = vpop.f32.mrb[0].mxu0
        %v5571 = vadd.f32 %v5280, %v5570
        %5572 = vmatprep.mubr.f32.mxu0 0.0
        %v5573 = vand.u32 %v1601, 4294901760
        %5574 = vmatmul.mubr.f32.gmra.mrb[0].mxu0 %v5573
        %v5575 = vpop.f32.mrb[0].mxu0
        %v5576 = vadd.f32 %v5285, %v5575
        %v5577 = vpop.f32.mrb[0].mxu0
        %v5578 = vadd.f32 %v5287, %v5577
        %5579 = vdwg.mxu0
        %v5580 = vld [vmem:[#allocation3] sm:$0xf]
        %v5581 = vmax.f32 %v3375, %v3382
        %v5582 = vmax.f32 %v5581, %v3389
        %v5583 = vmax.f32 %v5582, %v3396
        %v5584 = vmax.f32 %v5583, %v3403
        %v5585 = vmax.f32 %v5584, %v3410
        %v5586 = vmax.f32 %v5585, %v3417
        %v5587 = vmax.f32 %v5586, %v3424
        %v5588 = vmax.f32 %v5587, %v3431
        %v5589 = vmax.f32 %v5588, %v3438
        %v5590 = vmax.f32 %v5589, %v3445
        %v5591 = vmax.f32 %v5590, %v3452
        %v5592 = vmax.f32 %v5591, %v3459
        %v5593 = vmax.f32 %v5592, %v3466
        %v5594 = vmax.f32 %v5593, %v3473
        %v5595 = vmax.f32 %v5594, %v3480
        %v5596 = vmax.f32 %v5595, %v3487
        %v5597 = vmax.f32 %v5596, %v3494
        %v5598 = vmax.f32 %v5597, %v3501
        %v5599 = vmax.f32 %v5598, %v3508
        %v5600 = vmax.f32 %v5599, %v3515
        %v5601 = vmax.f32 %v5600, %v3522
        %v5602 = vmax.f32 %v5601, %v3529
        %v5603 = vmax.f32 %v5602, %v3536
        %v5604 = vmax.f32 %v5603, %v3543
        %v5605 = vmax.f32 %v5604, %v3550
        %v5606 = vmax.f32 %v5605, %v3557
        %v5607 = vmax.f32 %v5606, %v3564
        %v5608 = vmax.f32 %v5607, %v3571
        %v5609 = vmax.f32 %v5608, %v3578
        %v5610 = vmax.f32 %v5609, %v3585
        %v5611 = vmax.f32 %v5610, %v3592
        %v5612 = vrot.slane %v5611, 4
        %v5613 = vmax.f32 %v5611, %v5612
        %v5614 = vrot.slane %v5613, 2
        %v5615 = vmax.f32 %v5613, %v5614
        %v5616 = vrot.slane %v5615, 1
        %v5617 = vmax.f32 %v5615, %v5616
        %v5618 = vmax.f32 %v3377, %v3384
        %v5619 = vmax.f32 %v5618, %v3391
        %v5620 = vmax.f32 %v5619, %v3398
        %v5621 = vmax.f32 %v5620, %v3405
        %v5622 = vmax.f32 %v5621, %v3412
        %v5623 = vmax.f32 %v5622, %v3419
        %v5624 = vmax.f32 %v5623, %v3426
        %v5625 = vmax.f32 %v5624, %v3433
        %v5626 = vmax.f32 %v5625, %v3440
        %v5627 = vmax.f32 %v5626, %v3447
        %v5628 = vmax.f32 %v5627, %v3454
        %v5629 = vmax.f32 %v5628, %v3461
        %v5630 = vmax.f32 %v5629, %v3468
        %v5631 = vmax.f32 %v5630, %v3475
        %v5632 = vmax.f32 %v5631, %v3482
        %v5633 = vmax.f32 %v5632, %v3489
        %v5634 = vmax.f32 %v5633, %v3496
        %v5635 = vmax.f32 %v5634, %v3503
        %v5636 = vmax.f32 %v5635, %v3510
        %v5637 = vmax.f32 %v5636, %v3517
        %v5638 = vmax.f32 %v5637, %v3524
        %v5639 = vmax.f32 %v5638, %v3531
        %v5640 = vmax.f32 %v5639, %v3538
        %v5641 = vmax.f32 %v5640, %v3545
        %v5642 = vmax.f32 %v5641, %v3552
        %v5643 = vmax.f32 %v5642, %v3559
        %v5644 = vmax.f32 %v5643, %v3566
        %v5645 = vmax.f32 %v5644, %v3573
        %v5646 = vmax.f32 %v5645, %v3580
        %v5647 = vmax.f32 %v5646, %v3587
        %v5648 = vmax.f32 %v5647, %v3594
        %v5649 = vrot.slane %v5648, 4
        %v5650 = vmax.f32 %v5648, %v5649
        %v5651 = vrot.slane %v5650, 2
        %v5652 = vmax.f32 %v5650, %v5651
        %v5653 = vrot.slane %v5652, 1
        %v5654 = vmax.f32 %v5652, %v5653
        %v5655 = vmax.f32 %v5359, %v5366
        %v5656 = vmax.f32 %v5655, %v5373
        %v5657 = vmax.f32 %v5656, %v5380
        %v5658 = vmax.f32 %v5657, %v5387
        %v5659 = vmax.f32 %v5658, %v5394
        %v5660 = vmax.f32 %v5659, %v5401
        %v5661 = vmax.f32 %v5660, %v5408
        %v5662 = vmax.f32 %v5661, %v5415
        %v5663 = vmax.f32 %v5662, %v5422
        %v5664 = vmax.f32 %v5663, %v5429
        %v5665 = vmax.f32 %v5664, %v5436
        %v5666 = vmax.f32 %v5665, %v5443
        %v5667 = vmax.f32 %v5666, %v5450
        %v5668 = vmax.f32 %v5667, %v5457
        %v5669 = vmax.f32 %v5668, %v5464
        %v5670 = vmax.f32 %v5669, %v5471
        %v5671 = vmax.f32 %v5670, %v5478
        %v5672 = vmax.f32 %v5671, %v5485
        %v5673 = vmax.f32 %v5672, %v5492
        %v5674 = vmax.f32 %v5673, %v5499
        %v5675 = vmax.f32 %v5674, %v5506
        %v5676 = vmax.f32 %v5675, %v5513
        %v5677 = vmax.f32 %v5676, %v5520
        %v5678 = vmax.f32 %v5677, %v5527
        %v5679 = vmax.f32 %v5678, %v5534
        %v5680 = vmax.f32 %v5679, %v5541
        %v5681 = vmax.f32 %v5680, %v5548
        %v5682 = vmax.f32 %v5681, %v5555
        %v5683 = vmax.f32 %v5682, %v5562
        %v5684 = vmax.f32 %v5683, %v5569
        %v5685 = vmax.f32 %v5684, %v5576
        %v5686 = vrot.slane %v5685, 4
        %v5687 = vmax.f32 %v5685, %v5686
        %v5688 = vrot.slane %v5687, 2
        %v5689 = vmax.f32 %v5687, %v5688
        %v5690 = vrot.slane %v5689, 1
        %v5691 = vmax.f32 %v5689, %v5690
        %v5692 = vmax.f32 %v5361, %v5368
        %v5693 = vmax.f32 %v5692, %v5375
        %v5694 = vmax.f32 %v5693, %v5382
        %v5695 = vmax.f32 %v5694, %v5389
        %v5696 = vmax.f32 %v5695, %v5396
        %v5697 = vmax.f32 %v5696, %v5403
        %v5698 = vmax.f32 %v5697, %v5410
        %v5699 = vmax.f32 %v5698, %v5417
        %v5700 = vmax.f32 %v5699, %v5424
        %v5701 = vmax.f32 %v5700, %v5431
        %v5702 = vmax.f32 %v5701, %v5438
        %v5703 = vmax.f32 %v5702, %v5445
        %v5704 = vmax.f32 %v5703, %v5452
        %v5705 = vmax.f32 %v5704, %v5459
        %v5706 = vmax.f32 %v5705, %v5466
        %v5707 = vmax.f32 %v5706, %v5473
        %v5708 = vmax.f32 %v5707, %v5480
        %v5709 = vmax.f32 %v5708, %v5487
        %v5710 = vmax.f32 %v5709, %v5494
        %v5711 = vmax.f32 %v5710, %v5501
        %v5712 = vmax.f32 %v5711, %v5508
        %v5713 = vmax.f32 %v5712, %v5515
        %v5714 = vmax.f32 %v5713, %v5522
        %v5715 = vmax.f32 %v5714, %v5529
        %v5716 = vmax.f32 %v5715, %v5536
        %v5717 = vmax.f32 %v5716, %v5543
        %v5718 = vmax.f32 %v5717, %v5550
        %v5719 = vmax.f32 %v5718, %v5557
        %v5720 = vmax.f32 %v5719, %v5564
        %v5721 = vmax.f32 %v5720, %v5571
        %v5722 = vmax.f32 %v5721, %v5578
        %v5723 = vrot.slane %v5722, 4
        %v5724 = vmax.f32 %v5722, %v5723
        %v5725 = vrot.slane %v5724, 2
        %v5726 = vmax.f32 %v5724, %v5725
        %v5727 = vrot.slane %v5726, 1
        %v5728 = vmax.f32 %v5726, %v5727
        %v5733 = vcombine.low %v5617, %v5654
        %v5734 = vcombine.low %v5691, %v5728
        %v5736 = vunpack.c.l.s4 1966171168
        %v5737 = vunpack.c.0.s8 %v5736
        %v5738 = vlaneseq
        %v5739 = vshrl.u32 %v5738, 7
        %v5740 = vsub.s32 %v5737, %v5739
        %v5741 = vrot.slane %v5733, %v5740
        %v5743 = vunpack.c.l.s4 1966171168
        %v5744 = vunpack.c.0.s8 %v5743
        %v5745 = vlaneseq
        %v5746 = vshrl.u32 %v5745, 7
        %v5747 = vsub.s32 %v5744, %v5746
        %v5748 = vrot.slane %v5734, %v5747
        %v5749 = vcombine.low %v5741, %v5748
        %v5751 = vunpack.c.l.s4 1966171168
        %v5752 = vunpack.c.0.s8 %v5751
        %v5753 = vlaneseq
        %v5754 = vshrl.u32 %v5753, 7
        %v5755 = vsub.s32 %v5752, %v5754
        %v5756 = vrot.slane %v5749, %v5755
        %v5758 = vmax.f32 %v5580, %v5756
        %v5759 = vsub.f32 %v5580, %v5758
        %v5760 = vmul.f32 %v5759, 1.442695
        %v5761 = vpow.pop %v5760
        %v5763 = vlaneseq
        %v5764 = vshrl.u32 %v5763, 7
        %v5765 = vsub.s32 0, %v5764
        %v5766 = vrot.slane %v5758, %v5765
        %v5767 = vlaneseq
        %v5768 = vshrl.u32 %v5767, 7
        %v5769 = vsub.s32 1, %v5768
        %v5770 = vrot.slane %v5758, %v5769
        %v5771 = vlaneseq
        %v5772 = vshrl.u32 %v5771, 7
        %v5773 = vsub.s32 2, %v5772
        %v5774 = vrot.slane %v5758, %v5773
        %v5775 = vlaneseq
        %v5776 = vshrl.u32 %v5775, 7
        %v5777 = vsub.s32 3, %v5776
        %v5778 = vrot.slane %v5758, %v5777
        %v5783 = vsub.f32 %v3375, %v5766
        %v5784 = vsub.f32 %v3377, %v5770
        %v5785 = vsub.f32 %v5359, %v5774
        %v5786 = vsub.f32 %v5361, %v5778
        %v5787 = vsub.f32 %v3382, %v5766
        %v5788 = vsub.f32 %v3384, %v5770
        %v5789 = vsub.f32 %v5366, %v5774
        %v5790 = vsub.f32 %v5368, %v5778
        %v5791 = vsub.f32 %v3389, %v5766
        %v5792 = vsub.f32 %v3391, %v5770
        %v5793 = vsub.f32 %v5373, %v5774
        %v5794 = vsub.f32 %v5375, %v5778
        %v5795 = vsub.f32 %v3396, %v5766
        %v5796 = vsub.f32 %v3398, %v5770
        %v5797 = vsub.f32 %v5380, %v5774
        %v5798 = vsub.f32 %v5382, %v5778
        %v5799 = vsub.f32 %v3403, %v5766
        %v5800 = vsub.f32 %v3405, %v5770
        %v5801 = vsub.f32 %v5387, %v5774
        %v5802 = vsub.f32 %v5389, %v5778
        %v5803 = vsub.f32 %v3410, %v5766
        %v5804 = vsub.f32 %v3412, %v5770
        %v5805 = vsub.f32 %v5394, %v5774
        %v5806 = vsub.f32 %v5396, %v5778
        %v5807 = vsub.f32 %v3417, %v5766
        %v5808 = vsub.f32 %v3419, %v5770
        %v5809 = vsub.f32 %v5401, %v5774
        %v5810 = vsub.f32 %v5403, %v5778
        %v5811 = vsub.f32 %v3424, %v5766
        %v5812 = vsub.f32 %v3426, %v5770
        %v5813 = vsub.f32 %v5408, %v5774
        %v5814 = vsub.f32 %v5410, %v5778
        %v5815 = vsub.f32 %v3431, %v5766
        %v5816 = vsub.f32 %v3433, %v5770
        %v5817 = vsub.f32 %v5415, %v5774
        %v5818 = vsub.f32 %v5417, %v5778
        %v5819 = vsub.f32 %v3438, %v5766
        %v5820 = vsub.f32 %v3440, %v5770
        %v5821 = vsub.f32 %v5422, %v5774
        %v5822 = vsub.f32 %v5424, %v5778
        %v5823 = vsub.f32 %v3445, %v5766
        %v5824 = vsub.f32 %v3447, %v5770
        %v5825 = vsub.f32 %v5429, %v5774
        %v5826 = vsub.f32 %v5431, %v5778
        %v5827 = vsub.f32 %v3452, %v5766
        %v5828 = vsub.f32 %v3454, %v5770
        %v5829 = vsub.f32 %v5436, %v5774
        %v5830 = vsub.f32 %v5438, %v5778
        %v5831 = vsub.f32 %v3459, %v5766
        %v5832 = vsub.f32 %v3461, %v5770
        %v5833 = vsub.f32 %v5443, %v5774
        %v5834 = vsub.f32 %v5445, %v5778
        %v5835 = vsub.f32 %v3466, %v5766
        %v5836 = vsub.f32 %v3468, %v5770
        %v5837 = vsub.f32 %v5450, %v5774
        %v5838 = vsub.f32 %v5452, %v5778
        %v5839 = vsub.f32 %v3473, %v5766
        %v5840 = vsub.f32 %v3475, %v5770
        %v5841 = vsub.f32 %v5457, %v5774
        %v5842 = vsub.f32 %v5459, %v5778
        %v5843 = vsub.f32 %v3480, %v5766
        %v5844 = vsub.f32 %v3482, %v5770
        %v5845 = vsub.f32 %v5464, %v5774
        %v5846 = vsub.f32 %v5466, %v5778
        %v5847 = vsub.f32 %v3487, %v5766
        %v5848 = vsub.f32 %v3489, %v5770
        %v5849 = vsub.f32 %v5471, %v5774
        %v5850 = vsub.f32 %v5473, %v5778
        %v5851 = vsub.f32 %v3494, %v5766
        %v5852 = vsub.f32 %v3496, %v5770
        %v5853 = vsub.f32 %v5478, %v5774
        %v5854 = vsub.f32 %v5480, %v5778
        %v5855 = vsub.f32 %v3501, %v5766
        %v5856 = vsub.f32 %v3503, %v5770
        %v5857 = vsub.f32 %v5485, %v5774
        %v5858 = vsub.f32 %v5487, %v5778
        %v5859 = vsub.f32 %v3508, %v5766
        %v5860 = vsub.f32 %v3510, %v5770
        %v5861 = vsub.f32 %v5492, %v5774
        %v5862 = vsub.f32 %v5494, %v5778
        %v5863 = vsub.f32 %v3515, %v5766
        %v5864 = vsub.f32 %v3517, %v5770
        %v5865 = vsub.f32 %v5499, %v5774
        %v5866 = vsub.f32 %v5501, %v5778
        %v5867 = vsub.f32 %v3522, %v5766
        %v5868 = vsub.f32 %v3524, %v5770
        %v5869 = vsub.f32 %v5506, %v5774
        %v5870 = vsub.f32 %v5508, %v5778
        %v5871 = vsub.f32 %v3529, %v5766
        %v5872 = vsub.f32 %v3531, %v5770
        %v5873 = vsub.f32 %v5513, %v5774
        %v5874 = vsub.f32 %v5515, %v5778
        %v5875 = vsub.f32 %v3536, %v5766
        %v5876 = vsub.f32 %v3538, %v5770
        %v5877 = vsub.f32 %v5520, %v5774
        %v5878 = vsub.f32 %v5522, %v5778
        %v5879 = vsub.f32 %v3543, %v5766
        %v5880 = vsub.f32 %v3545, %v5770
        %v5881 = vsub.f32 %v5527, %v5774
        %v5882 = vsub.f32 %v5529, %v5778
        %v5883 = vsub.f32 %v3550, %v5766
        %v5884 = vsub.f32 %v3552, %v5770
        %v5885 = vsub.f32 %v5534, %v5774
        %v5886 = vsub.f32 %v5536, %v5778
        %v5887 = vsub.f32 %v3557, %v5766
        %v5888 = vsub.f32 %v3559, %v5770
        %v5889 = vsub.f32 %v5541, %v5774
        %v5890 = vsub.f32 %v5543, %v5778
        %v5891 = vsub.f32 %v3564, %v5766
        %v5892 = vsub.f32 %v3566, %v5770
        %v5893 = vsub.f32 %v5548, %v5774
        %v5894 = vsub.f32 %v5550, %v5778
        %v5895 = vsub.f32 %v3571, %v5766
        %v5896 = vsub.f32 %v3573, %v5770
        %v5897 = vsub.f32 %v5555, %v5774
        %v5898 = vsub.f32 %v5557, %v5778
        %v5899 = vsub.f32 %v3578, %v5766
        %v5900 = vsub.f32 %v3580, %v5770
        %v5901 = vsub.f32 %v5562, %v5774
        %v5902 = vsub.f32 %v5564, %v5778
        %v5903 = vsub.f32 %v3585, %v5766
        %v5904 = vsub.f32 %v3587, %v5770
        %v5905 = vsub.f32 %v5569, %v5774
        %v5906 = vsub.f32 %v5571, %v5778
        %v5907 = vsub.f32 %v3592, %v5766
        %v5908 = vsub.f32 %v3594, %v5770
        %v5909 = vsub.f32 %v5576, %v5774
        %v5910 = vsub.f32 %v5578, %v5778
        %v5911 = vmul.f32 %v5783, 1.442695
        %v5912 = vpow.pop %v5911
        %v5913 = vmul.f32 %v5784, 1.442695
        %v5914 = vpow.pop %v5913
        %v5915 = vmul.f32 %v5785, 1.442695
        %v5916 = vpow.pop %v5915
        %v5917 = vmul.f32 %v5786, 1.442695
        %v5918 = vpow.pop %v5917
        %v5919 = vmul.f32 %v5787, 1.442695
        %v5920 = vpow.pop %v5919
        %v5921 = vmul.f32 %v5788, 1.442695
        %v5922 = vpow.pop %v5921
        %v5923 = vmul.f32 %v5789, 1.442695
        %v5924 = vpow.pop %v5923
        %v5925 = vmul.f32 %v5790, 1.442695
        %v5926 = vpow.pop %v5925
        %v5927 = vmul.f32 %v5791, 1.442695
        %v5928 = vpow.pop %v5927
        %v5929 = vmul.f32 %v5792, 1.442695
        %v5930 = vpow.pop %v5929
        %v5931 = vmul.f32 %v5793, 1.442695
        %v5932 = vpow.pop %v5931
        %v5933 = vmul.f32 %v5794, 1.442695
        %v5934 = vpow.pop %v5933
        %v5935 = vmul.f32 %v5795, 1.442695
        %v5936 = vpow.pop %v5935
        %v5937 = vmul.f32 %v5796, 1.442695
        %v5938 = vpow.pop %v5937
        %v5939 = vmul.f32 %v5797, 1.442695
        %v5940 = vpow.pop %v5939
        %v5941 = vmul.f32 %v5798, 1.442695
        %v5942 = vpow.pop %v5941
        %v5943 = vmul.f32 %v5799, 1.442695
        %v5944 = vpow.pop %v5943
        %v5945 = vmul.f32 %v5800, 1.442695
        %v5946 = vpow.pop %v5945
        %v5947 = vmul.f32 %v5801, 1.442695
        %v5948 = vpow.pop %v5947
        %v5949 = vmul.f32 %v5802, 1.442695
        %v5950 = vpow.pop %v5949
        %v5951 = vmul.f32 %v5803, 1.442695
        %v5952 = vpow.pop %v5951
        %v5953 = vmul.f32 %v5804, 1.442695
        %v5954 = vpow.pop %v5953
        %v5955 = vmul.f32 %v5805, 1.442695
        %v5956 = vpow.pop %v5955
        %v5957 = vmul.f32 %v5806, 1.442695
        %v5958 = vpow.pop %v5957
        %v5959 = vmul.f32 %v5807, 1.442695
        %v5960 = vpow.pop %v5959
        %v5961 = vmul.f32 %v5808, 1.442695
        %v5962 = vpow.pop %v5961
        %v5963 = vmul.f32 %v5809, 1.442695
        %v5964 = vpow.pop %v5963
        %v5965 = vmul.f32 %v5810, 1.442695
        %v5966 = vpow.pop %v5965
        %v5967 = vmul.f32 %v5811, 1.442695
        %v5968 = vpow.pop %v5967
        %v5969 = vmul.f32 %v5812, 1.442695
        %v5970 = vpow.pop %v5969
        %v5971 = vmul.f32 %v5813, 1.442695
        %v5972 = vpow.pop %v5971
        %v5973 = vmul.f32 %v5814, 1.442695
        %v5974 = vpow.pop %v5973
        %v5975 = vmul.f32 %v5815, 1.442695
        %v5976 = vpow.pop %v5975
        %v5977 = vmul.f32 %v5816, 1.442695
        %v5978 = vpow.pop %v5977
        %v5979 = vmul.f32 %v5817, 1.442695
        %v5980 = vpow.pop %v5979
        %v5981 = vmul.f32 %v5818, 1.442695
        %v5982 = vpow.pop %v5981
        %v5983 = vmul.f32 %v5819, 1.442695
        %v5984 = vpow.pop %v5983
        %v5985 = vmul.f32 %v5820, 1.442695
        %v5986 = vpow.pop %v5985
        %v5987 = vmul.f32 %v5821, 1.442695
        %v5988 = vpow.pop %v5987
        %v5989 = vmul.f32 %v5822, 1.442695
        %v5990 = vpow.pop %v5989
        %v5991 = vmul.f32 %v5823, 1.442695
        %v5992 = vpow.pop %v5991
        %v5993 = vmul.f32 %v5824, 1.442695
        %v5994 = vpow.pop %v5993
        %v5995 = vmul.f32 %v5825, 1.442695
        %v5996 = vpow.pop %v5995
        %v5997 = vmul.f32 %v5826, 1.442695
        %v5998 = vpow.pop %v5997
        %v5999 = vmul.f32 %v5827, 1.442695
        %v6000 = vpow.pop %v5999
        %v6001 = vmul.f32 %v5828, 1.442695
        %v6002 = vpow.pop %v6001
        %v6003 = vmul.f32 %v5829, 1.442695
        %v6004 = vpow.pop %v6003
        %v6005 = vmul.f32 %v5830, 1.442695
        %v6006 = vpow.pop %v6005
        %v6007 = vmul.f32 %v5831, 1.442695
        %v6008 = vpow.pop %v6007
        %v6009 = vmul.f32 %v5832, 1.442695
        %v6010 = vpow.pop %v6009
        %v6011 = vmul.f32 %v5833, 1.442695
        %v6012 = vpow.pop %v6011
        %v6013 = vmul.f32 %v5834, 1.442695
        %v6014 = vpow.pop %v6013
        %v6015 = vmul.f32 %v5835, 1.442695
        %v6016 = vpow.pop %v6015
        %v6017 = vmul.f32 %v5836, 1.442695
        %v6018 = vpow.pop %v6017
        %v6019 = vmul.f32 %v5837, 1.442695
        %v6020 = vpow.pop %v6019
        %v6021 = vmul.f32 %v5838, 1.442695
        %v6022 = vpow.pop %v6021
        %v6023 = vmul.f32 %v5839, 1.442695
        %v6024 = vpow.pop %v6023
        %v6025 = vmul.f32 %v5840, 1.442695
        %v6026 = vpow.pop %v6025
        %v6027 = vmul.f32 %v5841, 1.442695
        %v6028 = vpow.pop %v6027
        %v6029 = vmul.f32 %v5842, 1.442695
        %v6030 = vpow.pop %v6029
        %v6031 = vmul.f32 %v5843, 1.442695
        %v6032 = vpow.pop %v6031
        %v6033 = vmul.f32 %v5844, 1.442695
        %v6034 = vpow.pop %v6033
        %v6035 = vmul.f32 %v5845, 1.442695
        %v6036 = vpow.pop %v6035
        %v6037 = vmul.f32 %v5846, 1.442695
        %v6038 = vpow.pop %v6037
        %v6039 = vmul.f32 %v5847, 1.442695
        %v6040 = vpow.pop %v6039
        %v6041 = vmul.f32 %v5848, 1.442695
        %v6042 = vpow.pop %v6041
        %v6043 = vmul.f32 %v5849, 1.442695
        %v6044 = vpow.pop %v6043
        %v6045 = vmul.f32 %v5850, 1.442695
        %v6046 = vpow.pop %v6045
        %v6047 = vmul.f32 %v5851, 1.442695
        %v6048 = vpow.pop %v6047
        %v6049 = vmul.f32 %v5852, 1.442695
        %v6050 = vpow.pop %v6049
        %v6051 = vmul.f32 %v5853, 1.442695
        %v6052 = vpow.pop %v6051
        %v6053 = vmul.f32 %v5854, 1.442695
        %v6054 = vpow.pop %v6053
        %v6055 = vmul.f32 %v5855, 1.442695
        %v6056 = vpow.pop %v6055
        %v6057 = vmul.f32 %v5856, 1.442695
        %v6058 = vpow.pop %v6057
        %v6059 = vmul.f32 %v5857, 1.442695
        %v6060 = vpow.pop %v6059
        %v6061 = vmul.f32 %v5858, 1.442695
        %v6062 = vpow.pop %v6061
        %v6063 = vmul.f32 %v5859, 1.442695
        %v6064 = vpow.pop %v6063
        %v6065 = vmul.f32 %v5860, 1.442695
        %v6066 = vpow.pop %v6065
        %v6067 = vmul.f32 %v5861, 1.442695
        %v6068 = vpow.pop %v6067
        %v6069 = vmul.f32 %v5862, 1.442695
        %v6070 = vpow.pop %v6069
        %v6071 = vmul.f32 %v5863, 1.442695
        %v6072 = vpow.pop %v6071
        %v6073 = vmul.f32 %v5864, 1.442695
        %v6074 = vpow.pop %v6073
        %v6075 = vmul.f32 %v5865, 1.442695
        %v6076 = vpow.pop %v6075
        %v6077 = vmul.f32 %v5866, 1.442695
        %v6078 = vpow.pop %v6077
        %v6079 = vmul.f32 %v5867, 1.442695
        %v6080 = vpow.pop %v6079
        %v6081 = vmul.f32 %v5868, 1.442695
        %v6082 = vpow.pop %v6081
        %v6083 = vmul.f32 %v5869, 1.442695
        %v6084 = vpow.pop %v6083
        %v6085 = vmul.f32 %v5870, 1.442695
        %v6086 = vpow.pop %v6085
        %v6087 = vmul.f32 %v5871, 1.442695
        %v6088 = vpow.pop %v6087
        %v6089 = vmul.f32 %v5872, 1.442695
        %v6090 = vpow.pop %v6089
        %v6091 = vmul.f32 %v5873, 1.442695
        %v6092 = vpow.pop %v6091
        %v6093 = vmul.f32 %v5874, 1.442695
        %v6094 = vpow.pop %v6093
        %v6095 = vmul.f32 %v5875, 1.442695
        %v6096 = vpow.pop %v6095
        %v6097 = vmul.f32 %v5876, 1.442695
        %v6098 = vpow.pop %v6097
        %v6099 = vmul.f32 %v5877, 1.442695
        %v6100 = vpow.pop %v6099
        %v6101 = vmul.f32 %v5878, 1.442695
        %v6102 = vpow.pop %v6101
        %v6103 = vmul.f32 %v5879, 1.442695
        %v6104 = vpow.pop %v6103
        %v6105 = vmul.f32 %v5880, 1.442695
        %v6106 = vpow.pop %v6105
        %v6107 = vmul.f32 %v5881, 1.442695
        %v6108 = vpow.pop %v6107
        %v6109 = vmul.f32 %v5882, 1.442695
        %v6110 = vpow.pop %v6109
        %v6111 = vmul.f32 %v5883, 1.442695
        %v6112 = vpow.pop %v6111
        %v6113 = vmul.f32 %v5884, 1.442695
        %v6114 = vpow.pop %v6113
        %v6115 = vmul.f32 %v5885, 1.442695
        %v6116 = vpow.pop %v6115
        %v6117 = vmul.f32 %v5886, 1.442695
        %v6118 = vpow.pop %v6117
        %v6119 = vmul.f32 %v5887, 1.442695
        %v6120 = vpow.pop %v6119
        %v6121 = vmul.f32 %v5888, 1.442695
        %v6122 = vpow.pop %v6121
        %v6123 = vmul.f32 %v5889, 1.442695
        %v6124 = vpow.pop %v6123
        %v6125 = vmul.f32 %v5890, 1.442695
        %v6126 = vpow.pop %v6125
        %v6127 = vmul.f32 %v5891, 1.442695
        %v6128 = vpow.pop %v6127
        %v6129 = vmul.f32 %v5892, 1.442695
        %v6130 = vpow.pop %v6129
        %v6131 = vmul.f32 %v5893, 1.442695
        %v6132 = vpow.pop %v6131
        %v6133 = vmul.f32 %v5894, 1.442695
        %v6134 = vpow.pop %v6133
        %v6135 = vmul.f32 %v5895, 1.442695
        %v6136 = vpow.pop %v6135
        %v6137 = vmul.f32 %v5896, 1.442695
        %v6138 = vpow.pop %v6137
        %v6139 = vmul.f32 %v5897, 1.442695
        %v6140 = vpow.pop %v6139
        %v6141 = vmul.f32 %v5898, 1.442695
        %v6142 = vpow.pop %v6141
        %v6143 = vmul.f32 %v5899, 1.442695
        %v6144 = vpow.pop %v6143
        %v6145 = vmul.f32 %v5900, 1.442695
        %v6146 = vpow.pop %v6145
        %v6147 = vmul.f32 %v5901, 1.442695
        %v6148 = vpow.pop %v6147
        %v6149 = vmul.f32 %v5902, 1.442695
        %v6150 = vpow.pop %v6149
        %v6151 = vmul.f32 %v5903, 1.442695
        %v6152 = vpow.pop %v6151
        %v6153 = vmul.f32 %v5904, 1.442695
        %v6154 = vpow.pop %v6153
        %v6155 = vmul.f32 %v5905, 1.442695
        %v6156 = vpow.pop %v6155
        %v6157 = vmul.f32 %v5906, 1.442695
        %v6158 = vpow.pop %v6157
        %v6159 = vmul.f32 %v5907, 1.442695
        %v6160 = vpow.pop %v6159
        %v6161 = vmul.f32 %v5908, 1.442695
        %v6162 = vpow.pop %v6161
        %v6163 = vmul.f32 %v5909, 1.442695
        %v6164 = vpow.pop %v6163
        %v6165 = vmul.f32 %v5910, 1.442695
        %v6166 = vpow.pop %v6165
        %v6167 = vld [vmem:[#allocation4] sm:$0xf]
        %v6168 = vmul.f32 %v5761, %v6167
        %v6169 = vadd.f32 %v5912, %v5920
        %v6170 = vadd.f32 %v6169, %v5928
        %v6171 = vadd.f32 %v6170, %v5936
        %v6172 = vadd.f32 %v6171, %v5944
        %v6173 = vadd.f32 %v6172, %v5952
        %v6174 = vadd.f32 %v6173, %v5960
        %v6175 = vadd.f32 %v6174, %v5968
        %v6176 = vadd.f32 %v6175, %v5976
        %v6177 = vadd.f32 %v6176, %v5984
        %v6178 = vadd.f32 %v6177, %v5992
        %v6179 = vadd.f32 %v6178, %v6000
        %v6180 = vadd.f32 %v6179, %v6008
        %v6181 = vadd.f32 %v6180, %v6016
        %v6182 = vadd.f32 %v6181, %v6024
        %v6183 = vadd.f32 %v6182, %v6032
        %v6184 = vadd.f32 %v6183, %v6040
        %v6185 = vadd.f32 %v6184, %v6048
        %v6186 = vadd.f32 %v6185, %v6056
        %v6187 = vadd.f32 %v6186, %v6064
        %v6188 = vadd.f32 %v6187, %v6072
        %v6189 = vadd.f32 %v6188, %v6080
        %v6190 = vadd.f32 %v6189, %v6088
        %v6191 = vadd.f32 %v6190, %v6096
        %v6192 = vadd.f32 %v6191, %v6104
        %v6193 = vadd.f32 %v6192, %v6112
        %v6194 = vadd.f32 %v6193, %v6120
        %v6195 = vadd.f32 %v6194, %v6128
        %v6196 = vadd.f32 %v6195, %v6136
        %v6197 = vadd.f32 %v6196, %v6144
        %v6198 = vadd.f32 %v6197, %v6152
        %v6199 = vadd.f32 %v6198, %v6160
        %v6200 = vrot.slane %v6199, 4
        %v6201 = vadd.f32 %v6199, %v6200
        %v6202 = vrot.slane %v6201, 2
        %v6203 = vadd.f32 %v6201, %v6202
        %v6204 = vrot.slane %v6203, 1
        %v6205 = vadd.f32 %v6203, %v6204
        %v6206 = vadd.f32 %v5914, %v5922
        %v6207 = vadd.f32 %v6206, %v5930
        %v6208 = vadd.f32 %v6207, %v5938
        %v6209 = vadd.f32 %v6208, %v5946
        %v6210 = vadd.f32 %v6209, %v5954
        %v6211 = vadd.f32 %v6210, %v5962
        %v6212 = vadd.f32 %v6211, %v5970
        %v6213 = vadd.f32 %v6212, %v5978
        %v6214 = vadd.f32 %v6213, %v5986
        %v6215 = vadd.f32 %v6214, %v5994
        %v6216 = vadd.f32 %v6215, %v6002
        %v6217 = vadd.f32 %v6216, %v6010
        %v6218 = vadd.f32 %v6217, %v6018
        %v6219 = vadd.f32 %v6218, %v6026
        %v6220 = vadd.f32 %v6219, %v6034
        %v6221 = vadd.f32 %v6220, %v6042
        %v6222 = vadd.f32 %v6221, %v6050
        %v6223 = vadd.f32 %v6222, %v6058
        %v6224 = vadd.f32 %v6223, %v6066
        %v6225 = vadd.f32 %v6224, %v6074
        %v6226 = vadd.f32 %v6225, %v6082
        %v6227 = vadd.f32 %v6226, %v6090
        %v6228 = vadd.f32 %v6227, %v6098
        %v6229 = vadd.f32 %v6228, %v6106
        %v6230 = vadd.f32 %v6229, %v6114
        %v6231 = vadd.f32 %v6230, %v6122
        %v6232 = vadd.f32 %v6231, %v6130
        %v6233 = vadd.f32 %v6232, %v6138
        %v6234 = vadd.f32 %v6233, %v6146
        %v6235 = vadd.f32 %v6234, %v6154
        %v6236 = vadd.f32 %v6235, %v6162
        %v6237 = vrot.slane %v6236, 4
        %v6238 = vadd.f32 %v6236, %v6237
        %v6239 = vrot.slane %v6238, 2
        %v6240 = vadd.f32 %v6238, %v6239
        %v6241 = vrot.slane %v6240, 1
        %v6242 = vadd.f32 %v6240, %v6241
        %v6243 = vadd.f32 %v5916, %v5924
        %v6244 = vadd.f32 %v6243, %v5932
        %v6245 = vadd.f32 %v6244, %v5940
        %v6246 = vadd.f32 %v6245, %v5948
        %v6247 = vadd.f32 %v6246, %v5956
        %v6248 = vadd.f32 %v6247, %v5964
        %v6249 = vadd.f32 %v6248, %v5972
        %v6250 = vadd.f32 %v6249, %v5980
        %v6251 = vadd.f32 %v6250, %v5988
        %v6252 = vadd.f32 %v6251, %v5996
        %v6253 = vadd.f32 %v6252, %v6004
        %v6254 = vadd.f32 %v6253, %v6012
        %v6255 = vadd.f32 %v6254, %v6020
        %v6256 = vadd.f32 %v6255, %v6028
        %v6257 = vadd.f32 %v6256, %v6036
        %v6258 = vadd.f32 %v6257, %v6044
        %v6259 = vadd.f32 %v6258, %v6052
        %v6260 = vadd.f32 %v6259, %v6060
        %v6261 = vadd.f32 %v6260, %v6068
        %v6262 = vadd.f32 %v6261, %v6076
        %v6263 = vadd.f32 %v6262, %v6084
        %v6264 = vadd.f32 %v6263, %v6092
        %v6265 = vadd.f32 %v6264, %v6100
        %v6266 = vadd.f32 %v6265, %v6108
        %v6267 = vadd.f32 %v6266, %v6116
        %v6268 = vadd.f32 %v6267, %v6124
        %v6269 = vadd.f32 %v6268, %v6132
        %v6270 = vadd.f32 %v6269, %v6140
        %v6271 = vadd.f32 %v6270, %v6148
        %v6272 = vadd.f32 %v6271, %v6156
        %v6273 = vadd.f32 %v6272, %v6164
        %v6274 = vrot.slane %v6273, 4
        %v6275 = vadd.f32 %v6273, %v6274
        %v6276 = vrot.slane %v6275, 2
        %v6277 = vadd.f32 %v6275, %v6276
        %v6278 = vrot.slane %v6277, 1
        %v6279 = vadd.f32 %v6277, %v6278
        %v6280 = vadd.f32 %v5918, %v5926
        %v6281 = vadd.f32 %v6280, %v5934
        %v6282 = vadd.f32 %v6281, %v5942
        %v6283 = vadd.f32 %v6282, %v5950
        %v6284 = vadd.f32 %v6283, %v5958
        %v6285 = vadd.f32 %v6284, %v5966
        %v6286 = vadd.f32 %v6285, %v5974
        %v6287 = vadd.f32 %v6286, %v5982
        %v6288 = vadd.f32 %v6287, %v5990
        %v6289 = vadd.f32 %v6288, %v5998
        %v6290 = vadd.f32 %v6289, %v6006
        %v6291 = vadd.f32 %v6290, %v6014
        %v6292 = vadd.f32 %v6291, %v6022
        %v6293 = vadd.f32 %v6292, %v6030
        %v6294 = vadd.f32 %v6293, %v6038
        %v6295 = vadd.f32 %v6294, %v6046
        %v6296 = vadd.f32 %v6295, %v6054
        %v6297 = vadd.f32 %v6296, %v6062
        %v6298 = vadd.f32 %v6297, %v6070
        %v6299 = vadd.f32 %v6298, %v6078
        %v6300 = vadd.f32 %v6299, %v6086
        %v6301 = vadd.f32 %v6300, %v6094
        %v6302 = vadd.f32 %v6301, %v6102
        %v6303 = vadd.f32 %v6302, %v6110
        %v6304 = vadd.f32 %v6303, %v6118
        %v6305 = vadd.f32 %v6304, %v6126
        %v6306 = vadd.f32 %v6305, %v6134
        %v6307 = vadd.f32 %v6306, %v6142
        %v6308 = vadd.f32 %v6307, %v6150
        %v6309 = vadd.f32 %v6308, %v6158
        %v6310 = vadd.f32 %v6309, %v6166
        %v6311 = vrot.slane %v6310, 4
        %v6312 = vadd.f32 %v6310, %v6311
        %v6313 = vrot.slane %v6312, 2
        %v6314 = vadd.f32 %v6312, %v6313
        %v6315 = vrot.slane %v6314, 1
        %v6316 = vadd.f32 %v6314, %v6315
        %v6321 = vcombine.low %v6205, %v6242
        %v6322 = vcombine.low %v6279, %v6316
        %v6324 = vunpack.c.l.s4 1966171168
        %v6325 = vunpack.c.0.s8 %v6324
        %v6326 = vlaneseq
        %v6327 = vshrl.u32 %v6326, 7
        %v6328 = vsub.s32 %v6325, %v6327
        %v6329 = vrot.slane %v6321, %v6328
        %v6331 = vunpack.c.l.s4 1966171168
        %v6332 = vunpack.c.0.s8 %v6331
        %v6333 = vlaneseq
        %v6334 = vshrl.u32 %v6333, 7
        %v6335 = vsub.s32 %v6332, %v6334
        %v6336 = vrot.slane %v6322, %v6335
        %v6337 = vcombine.low %v6329, %v6336
        %v6339 = vunpack.c.l.s4 1966171168
        %v6340 = vunpack.c.0.s8 %v6339
        %v6341 = vlaneseq
        %v6342 = vshrl.u32 %v6341, 7
        %v6343 = vsub.s32 %v6340, %v6342
        %v6344 = vrot.slane %v6337, %v6343
        %v6346 = vadd.f32 %v6168, %v6344
        %v6347 = vlaneseq
        %vm6348 = vcmp.ge.s32.totalorder %v6347, 0
        %vm6349 = vcmp.lt.s32.totalorder %v6347, 512
        %vm6350 = vmand %vm6348, %vm6349
        %6351 = vst.msk [vmem:[#allocation4] sm:$0xf] %vm6350, %v6346
        %v6352 = vld [vmem:[#allocation5] sm:$0xff]
        %v6353 = vld [vmem:[#allocation5 + $0x8] sm:$0xff]
        %v6355 = vlaneseq
        %v6356 = vshrl.u32 %v6355, 7
        %v6357 = vsub.s32 0, %v6356
        %v6358 = vrot.slane %v5761, %v6357
        %v6359 = vlaneseq
        %v6360 = vshrl.u32 %v6359, 7
        %v6361 = vsub.s32 1, %v6360
        %v6362 = vrot.slane %v5761, %v6361
        %v6363 = vlaneseq
        %v6364 = vshrl.u32 %v6363, 7
        %v6365 = vsub.s32 2, %v6364
        %v6366 = vrot.slane %v5761, %v6365
        %v6367 = vlaneseq
        %v6368 = vshrl.u32 %v6367, 7
        %v6369 = vsub.s32 3, %v6368
        %v6370 = vrot.slane %v5761, %v6369
        %v6377 = vcombine.high %v6352, %v6352
        %v6378 = vcombine.high %v6353, %v6353
        %v6381 = vmul.f32 %v6358, %v6352
        %v6382 = vmul.f32 %v6362, %v6377
        %v6383 = vmul.f32 %v6366, %v6353
        %v6384 = vmul.f32 %v6370, %v6378
        %v6386 = vcombine.high %v1432, %v1432
        %v6388 = vand.u32 %v5914, 4294901760
        %6389 = vmatprep.subr.mxu0 %v6388
        %v6390 = vand.u32 %v5912, 4294901760
        %6391 = vmatpush1.msra.mxu0 %v6390
        %v6392 = vand.u32 %v5922, 4294901760
        %6393 = vmatprep.subr.mxu0 %v6392
        %v6394 = vand.u32 %v5920, 4294901760
        %6395 = vmatpush1.msra.mxu0 %v6394
        %v6396 = vand.u32 %v5930, 4294901760
        %6397 = vmatprep.subr.mxu0 %v6396
        %v6398 = vand.u32 %v5928, 4294901760
        %6399 = vmatpush1.msra.mxu0 %v6398
        %v6400 = vand.u32 %v5938, 4294901760
        %6401 = vmatprep.subr.mxu0 %v6400
        %v6402 = vand.u32 %v5936, 4294901760
        %6403 = vmatpush1.msra.mxu0 %v6402
        %v6404 = vand.u32 %v5946, 4294901760
        %6405 = vmatprep.subr.mxu0 %v6404
        %v6406 = vand.u32 %v5944, 4294901760
        %6407 = vmatpush1.msra.mxu0 %v6406
        %v6408 = vand.u32 %v5954, 4294901760
        %6409 = vmatprep.subr.mxu0 %v6408
        %v6410 = vand.u32 %v5952, 4294901760
        %6411 = vmatpush1.msra.mxu0 %v6410
        %v6412 = vand.u32 %v5962, 4294901760
        %6413 = vmatprep.subr.mxu0 %v6412
        %v6414 = vand.u32 %v5960, 4294901760
        %6415 = vmatpush1.msra.mxu0 %v6414
        %v6416 = vand.u32 %v5970, 4294901760
        %6417 = vmatprep.subr.mxu0 %v6416
        %v6418 = vand.u32 %v5968, 4294901760
        %6419 = vmatpush1.msra.mxu0 %v6418
        %v6420 = vand.u32 %v5978, 4294901760
        %6421 = vmatprep.subr.mxu0 %v6420
        %v6422 = vand.u32 %v5976, 4294901760
        %6423 = vmatpush1.msra.mxu0 %v6422
        %v6424 = vand.u32 %v5986, 4294901760
        %6425 = vmatprep.subr.mxu0 %v6424
        %v6426 = vand.u32 %v5984, 4294901760
        %6427 = vmatpush1.msra.mxu0 %v6426
        %v6428 = vand.u32 %v5994, 4294901760
        %6429 = vmatprep.subr.mxu0 %v6428
        %v6430 = vand.u32 %v5992, 4294901760
        %6431 = vmatpush1.msra.mxu0 %v6430
        %v6432 = vand.u32 %v6002, 4294901760
        %6433 = vmatprep.subr.mxu0 %v6432
        %v6434 = vand.u32 %v6000, 4294901760
        %6435 = vmatpush1.msra.mxu0 %v6434
        %v6436 = vand.u32 %v6010, 4294901760
        %6437 = vmatprep.subr.mxu0 %v6436
        %v6438 = vand.u32 %v6008, 4294901760
        %6439 = vmatpush1.msra.mxu0 %v6438
        %v6440 = vand.u32 %v6018, 4294901760
        %6441 = vmatprep.subr.mxu0 %v6440
        %v6442 = vand.u32 %v6016, 4294901760
        %6443 = vmatpush1.msra.mxu0 %v6442
        %v6444 = vand.u32 %v6026, 4294901760
        %6445 = vmatprep.subr.mxu0 %v6444
        %v6446 = vand.u32 %v6024, 4294901760
        %6447 = vmatpush1.msra.mxu0 %v6446
        %v6448 = vand.u32 %v6034, 4294901760
        %6449 = vmatprep.subr.mxu0 %v6448
        %v6450 = vand.u32 %v6032, 4294901760
        %6451 = vmatpush1.msra.mxu0 %v6450
        %v6452 = vand.u32 %v6042, 4294901760
        %6453 = vmatprep.subr.mxu0 %v6452
        %v6454 = vand.u32 %v6040, 4294901760
        %6455 = vmatpush1.msra.mxu0 %v6454
        %v6456 = vand.u32 %v6050, 4294901760
        %6457 = vmatprep.subr.mxu0 %v6456
        %v6458 = vand.u32 %v6048, 4294901760
        %6459 = vmatpush1.msra.mxu0 %v6458
        %v6460 = vand.u32 %v6058, 4294901760
        %6461 = vmatprep.subr.mxu0 %v6460
        %v6462 = vand.u32 %v6056, 4294901760
        %6463 = vmatpush1.msra.mxu0 %v6462
        %v6464 = vand.u32 %v6066, 4294901760
        %6465 = vmatprep.subr.mxu0 %v6464
        %v6466 = vand.u32 %v6064, 4294901760
        %6467 = vmatpush1.msra.mxu0 %v6466
        %v6468 = vand.u32 %v6074, 4294901760
        %6469 = vmatprep.subr.mxu0 %v6468
        %v6470 = vand.u32 %v6072, 4294901760
        %6471 = vmatpush1.msra.mxu0 %v6470
        %v6472 = vand.u32 %v6082, 4294901760
        %6473 = vmatprep.subr.mxu0 %v6472
        %v6474 = vand.u32 %v6080, 4294901760
        %6475 = vmatpush1.msra.mxu0 %v6474
        %v6476 = vand.u32 %v6090, 4294901760
        %6477 = vmatprep.subr.mxu0 %v6476
        %v6478 = vand.u32 %v6088, 4294901760
        %6479 = vmatpush1.msra.mxu0 %v6478
        %v6480 = vand.u32 %v6098, 4294901760
        %6481 = vmatprep.subr.mxu0 %v6480
        %v6482 = vand.u32 %v6096, 4294901760
        %6483 = vmatpush1.msra.mxu0 %v6482
        %v6484 = vand.u32 %v6106, 4294901760
        %6485 = vmatprep.subr.mxu0 %v6484
        %v6486 = vand.u32 %v6104, 4294901760
        %6487 = vmatpush1.msra.mxu0 %v6486
        %v6488 = vand.u32 %v6114, 4294901760
        %6489 = vmatprep.subr.mxu0 %v6488
        %v6490 = vand.u32 %v6112, 4294901760
        %6491 = vmatpush1.msra.mxu0 %v6490
        %v6492 = vand.u32 %v6122, 4294901760
        %6493 = vmatprep.subr.mxu0 %v6492
        %v6494 = vand.u32 %v6120, 4294901760
        %6495 = vmatpush1.msra.mxu0 %v6494
        %v6496 = vand.u32 %v6130, 4294901760
        %6497 = vmatprep.subr.mxu0 %v6496
        %v6498 = vand.u32 %v6128, 4294901760
        %6499 = vmatpush1.msra.mxu0 %v6498
        %v6500 = vand.u32 %v6138, 4294901760
        %6501 = vmatprep.subr.mxu0 %v6500
        %v6502 = vand.u32 %v6136, 4294901760
        %6503 = vmatpush1.msra.mxu0 %v6502
        %v6504 = vand.u32 %v6146, 4294901760
        %6505 = vmatprep.subr.mxu0 %v6504
        %v6506 = vand.u32 %v6144, 4294901760
        %6507 = vmatpush1.msra.mxu0 %v6506
        %v6508 = vand.u32 %v6154, 4294901760
        %6509 = vmatprep.subr.mxu0 %v6508
        %v6510 = vand.u32 %v6152, 4294901760
        %6511 = vmatpush1.msra.mxu0 %v6510
        %v6512 = vand.u32 %v6162, 4294901760
        %6513 = vmatprep.subr.mxu0 %v6512
        %v6514 = vand.u32 %v6160, 4294901760
        %6515 = vmatpush1.msra.mxu0 %v6514
        %v6516 = vand.u32 %v6386, 4294901760
        %v6517 = vsub.f32 %v6386, %v6516
        %v6518 = vand.u32 %v6517, 4294901760
        %v6519 = vsub.f32 %v6517, %v6518
        %v6520 = vand.u32 %v6519, 4294901760
        %6521 = vmatprep.mubr.f32.mxu0 %v6520
        %v6522 = vand.u32 %v1432, 4294901760
        %v6523 = vsub.f32 %v1432, %v6522
        %v6524 = vand.u32 %v6523, 4294901760
        %v6525 = vsub.f32 %v6523, %v6524
        %v6526 = vand.u32 %v6525, 4294901760
        %6527 = vmatmul.mubr.f32.gmra.mrb[0].mxu0 %v6526
        %v6528 = vpop.f32.mrb[0].mxu0
        %v6529 = vadd.f32 0.0, %v6528
        %v6530 = vpop.f32.mrb[0].mxu0
        %v6531 = vadd.f32 0.0, %v6530
        %6532 = vdwg.mxu0
        %v6533 = vand.u32 %v5914, 4294901760
        %v6534 = vsub.f32 %v5914, %v6533
        %v6535 = vand.u32 %v6534, 4294901760
        %v6536 = vsub.f32 %v6534, %v6535
        %v6537 = vand.u32 %v6536, 4294901760
        %6538 = vmatprep.subr.mxu0 %v6537
        %v6539 = vand.u32 %v5912, 4294901760
        %v6540 = vsub.f32 %v5912, %v6539
        %v6541 = vand.u32 %v6540, 4294901760
        %v6542 = vsub.f32 %v6540, %v6541
        %v6543 = vand.u32 %v6542, 4294901760
        %6544 = vmatpush1.msra.mxu0 %v6543
        %v6545 = vand.u32 %v5922, 4294901760
        %v6546 = vsub.f32 %v5922, %v6545
        %v6547 = vand.u32 %v6546, 4294901760
        %v6548 = vsub.f32 %v6546, %v6547
        %v6549 = vand.u32 %v6548, 4294901760
        %6550 = vmatprep.subr.mxu0 %v6549
        %v6551 = vand.u32 %v5920, 4294901760
        %v6552 = vsub.f32 %v5920, %v6551
        %v6553 = vand.u32 %v6552, 4294901760
        %v6554 = vsub.f32 %v6552, %v6553
        %v6555 = vand.u32 %v6554, 4294901760
        %6556 = vmatpush1.msra.mxu0 %v6555
        %v6557 = vand.u32 %v5930, 4294901760
        %v6558 = vsub.f32 %v5930, %v6557
        %v6559 = vand.u32 %v6558, 4294901760
        %v6560 = vsub.f32 %v6558, %v6559
        %v6561 = vand.u32 %v6560, 4294901760
        %6562 = vmatprep.subr.mxu0 %v6561
        %v6563 = vand.u32 %v5928, 4294901760
        %v6564 = vsub.f32 %v5928, %v6563
        %v6565 = vand.u32 %v6564, 4294901760
        %v6566 = vsub.f32 %v6564, %v6565
        %v6567 = vand.u32 %v6566, 4294901760
        %6568 = vmatpush1.msra.mxu0 %v6567
        %v6569 = vand.u32 %v5938, 4294901760
        %v6570 = vsub.f32 %v5938, %v6569
        %v6571 = vand.u32 %v6570, 4294901760
        %v6572 = vsub.f32 %v6570, %v6571
        %v6573 = vand.u32 %v6572, 4294901760
        %6574 = vmatprep.subr.mxu0 %v6573
        %v6575 = vand.u32 %v5936, 4294901760
        %v6576 = vsub.f32 %v5936, %v6575
        %v6577 = vand.u32 %v6576, 4294901760
        %v6578 = vsub.f32 %v6576, %v6577
        %v6579 = vand.u32 %v6578, 4294901760
        %6580 = vmatpush1.msra.mxu0 %v6579
        %v6581 = vand.u32 %v5946, 4294901760
        %v6582 = vsub.f32 %v5946, %v6581
        %v6583 = vand.u32 %v6582, 4294901760
        %v6584 = vsub.f32 %v6582, %v6583
        %v6585 = vand.u32 %v6584, 4294901760
        %6586 = vmatprep.subr.mxu0 %v6585
        %v6587 = vand.u32 %v5944, 4294901760
        %v6588 = vsub.f32 %v5944, %v6587
        %v6589 = vand.u32 %v6588, 4294901760
        %v6590 = vsub.f32 %v6588, %v6589
        %v6591 = vand.u32 %v6590, 4294901760
        %6592 = vmatpush1.msra.mxu0 %v6591
        %v6593 = vand.u32 %v5954, 4294901760
        %v6594 = vsub.f32 %v5954, %v6593
        %v6595 = vand.u32 %v6594, 4294901760
        %v6596 = vsub.f32 %v6594, %v6595
        %v6597 = vand.u32 %v6596, 4294901760
        %6598 = vmatprep.subr.mxu0 %v6597
        %v6599 = vand.u32 %v5952, 4294901760
        %v6600 = vsub.f32 %v5952, %v6599
        %v6601 = vand.u32 %v6600, 4294901760
        %v6602 = vsub.f32 %v6600, %v6601
        %v6603 = vand.u32 %v6602, 4294901760
        %6604 = vmatpush1.msra.mxu0 %v6603
        %v6605 = vand.u32 %v5962, 4294901760
        %v6606 = vsub.f32 %v5962, %v6605
        %v6607 = vand.u32 %v6606, 4294901760
        %v6608 = vsub.f32 %v6606, %v6607
        %v6609 = vand.u32 %v6608, 4294901760
        %6610 = vmatprep.subr.mxu0 %v6609
        %v6611 = vand.u32 %v5960, 4294901760
        %v6612 = vsub.f32 %v5960, %v6611
        %v6613 = vand.u32 %v6612, 4294901760
        %v6614 = vsub.f32 %v6612, %v6613
        %v6615 = vand.u32 %v6614, 4294901760
        %6616 = vmatpush1.msra.mxu0 %v6615
        %v6617 = vand.u32 %v5970, 4294901760
        %v6618 = vsub.f32 %v5970, %v6617
        %v6619 = vand.u32 %v6618, 4294901760
        %v6620 = vsub.f32 %v6618, %v6619
        %v6621 = vand.u32 %v6620, 4294901760
        %6622 = vmatprep.subr.mxu0 %v6621
        %v6623 = vand.u32 %v5968, 4294901760
        %v6624 = vsub.f32 %v5968, %v6623
        %v6625 = vand.u32 %v6624, 4294901760
        %v6626 = vsub.f32 %v6624, %v6625
        %v6627 = vand.u32 %v6626, 4294901760
        %6628 = vmatpush1.msra.mxu0 %v6627
        %v6629 = vand.u32 %v5978, 4294901760
        %v6630 = vsub.f32 %v5978, %v6629
        %v6631 = vand.u32 %v6630, 4294901760
        %v6632 = vsub.f32 %v6630, %v6631
        %v6633 = vand.u32 %v6632, 4294901760
        %6634 = vmatprep.subr.mxu0 %v6633
        %v6635 = vand.u32 %v5976, 4294901760
        %v6636 = vsub.f32 %v5976, %v6635
        %v6637 = vand.u32 %v6636, 4294901760
        %v6638 = vsub.f32 %v6636, %v6637
        %v6639 = vand.u32 %v6638, 4294901760
        %6640 = vmatpush1.msra.mxu0 %v6639
        %v6641 = vand.u32 %v5986, 4294901760
        %v6642 = vsub.f32 %v5986, %v6641
        %v6643 = vand.u32 %v6642, 4294901760
        %v6644 = vsub.f32 %v6642, %v6643
        %v6645 = vand.u32 %v6644, 4294901760
        %6646 = vmatprep.subr.mxu0 %v6645
        %v6647 = vand.u32 %v5984, 4294901760
        %v6648 = vsub.f32 %v5984, %v6647
        %v6649 = vand.u32 %v6648, 4294901760
        %v6650 = vsub.f32 %v6648, %v6649
        %v6651 = vand.u32 %v6650, 4294901760
        %6652 = vmatpush1.msra.mxu0 %v6651
        %v6653 = vand.u32 %v5994, 4294901760
        %v6654 = vsub.f32 %v5994, %v6653
        %v6655 = vand.u32 %v6654, 4294901760
        %v6656 = vsub.f32 %v6654, %v6655
        %v6657 = vand.u32 %v6656, 4294901760
        %6658 = vmatprep.subr.mxu0 %v6657
        %v6659 = vand.u32 %v5992, 4294901760
        %v6660 = vsub.f32 %v5992, %v6659
        %v6661 = vand.u32 %v6660, 4294901760
        %v6662 = vsub.f32 %v6660, %v6661
        %v6663 = vand.u32 %v6662, 4294901760
        %6664 = vmatpush1.msra.mxu0 %v6663
        %v6665 = vand.u32 %v6002, 4294901760
        %v6666 = vsub.f32 %v6002, %v6665
        %v6667 = vand.u32 %v6666, 4294901760
        %v6668 = vsub.f32 %v6666, %v6667
        %v6669 = vand.u32 %v6668, 4294901760
        %6670 = vmatprep.subr.mxu0 %v6669
        %v6671 = vand.u32 %v6000, 4294901760
        %v6672 = vsub.f32 %v6000, %v6671
        %v6673 = vand.u32 %v6672, 4294901760
        %v6674 = vsub.f32 %v6672, %v6673
        %v6675 = vand.u32 %v6674, 4294901760
        %6676 = vmatpush1.msra.mxu0 %v6675
        %v6677 = vand.u32 %v6010, 4294901760
        %v6678 = vsub.f32 %v6010, %v6677
        %v6679 = vand.u32 %v6678, 4294901760
        %v6680 = vsub.f32 %v6678, %v6679
        %v6681 = vand.u32 %v6680, 4294901760
        %6682 = vmatprep.subr.mxu0 %v6681
        %v6683 = vand.u32 %v6008, 4294901760
        %v6684 = vsub.f32 %v6008, %v6683
        %v6685 = vand.u32 %v6684, 4294901760
        %v6686 = vsub.f32 %v6684, %v6685
        %v6687 = vand.u32 %v6686, 4294901760
        %6688 = vmatpush1.msra.mxu0 %v6687
        %v6689 = vand.u32 %v6018, 4294901760
        %v6690 = vsub.f32 %v6018, %v6689
        %v6691 = vand.u32 %v6690, 4294901760
        %v6692 = vsub.f32 %v6690, %v6691
        %v6693 = vand.u32 %v6692, 4294901760
        %6694 = vmatprep.subr.mxu0 %v6693
        %v6695 = vand.u32 %v6016, 4294901760
        %v6696 = vsub.f32 %v6016, %v6695
        %v6697 = vand.u32 %v6696, 4294901760
        %v6698 = vsub.f32 %v6696, %v6697
        %v6699 = vand.u32 %v6698, 4294901760
        %6700 = vmatpush1.msra.mxu0 %v6699
        %v6701 = vand.u32 %v6026, 4294901760
        %v6702 = vsub.f32 %v6026, %v6701
        %v6703 = vand.u32 %v6702, 4294901760
        %v6704 = vsub.f32 %v6702, %v6703
        %v6705 = vand.u32 %v6704, 4294901760
        %6706 = vmatprep.subr.mxu0 %v6705
        %v6707 = vand.u32 %v6024, 4294901760
        %v6708 = vsub.f32 %v6024, %v6707
        %v6709 = vand.u32 %v6708, 4294901760
        %v6710 = vsub.f32 %v6708, %v6709
        %v6711 = vand.u32 %v6710, 4294901760
        %6712 = vmatpush1.msra.mxu0 %v6711
        %v6713 = vand.u32 %v6034, 4294901760
        %v6714 = vsub.f32 %v6034, %v6713
        %v6715 = vand.u32 %v6714, 4294901760
        %v6716 = vsub.f32 %v6714, %v6715
        %v6717 = vand.u32 %v6716, 4294901760
        %6718 = vmatprep.subr.mxu0 %v6717
        %v6719 = vand.u32 %v6032, 4294901760
        %v6720 = vsub.f32 %v6032, %v6719
        %v6721 = vand.u32 %v6720, 4294901760
        %v6722 = vsub.f32 %v6720, %v6721
        %v6723 = vand.u32 %v6722, 4294901760
        %6724 = vmatpush1.msra.mxu0 %v6723
        %v6725 = vand.u32 %v6042, 4294901760
        %v6726 = vsub.f32 %v6042, %v6725
        %v6727 = vand.u32 %v6726, 4294901760
        %v6728 = vsub.f32 %v6726, %v6727
        %v6729 = vand.u32 %v6728, 4294901760
        %6730 = vmatprep.subr.mxu0 %v6729
        %v6731 = vand.u32 %v6040, 4294901760
        %v6732 = vsub.f32 %v6040, %v6731
        %v6733 = vand.u32 %v6732, 4294901760
        %v6734 = vsub.f32 %v6732, %v6733
        %v6735 = vand.u32 %v6734, 4294901760
        %6736 = vmatpush1.msra.mxu0 %v6735
        %v6737 = vand.u32 %v6050, 4294901760
        %v6738 = vsub.f32 %v6050, %v6737
        %v6739 = vand.u32 %v6738, 4294901760
        %v6740 = vsub.f32 %v6738, %v6739
        %v6741 = vand.u32 %v6740, 4294901760
        %6742 = vmatprep.subr.mxu0 %v6741
        %v6743 = vand.u32 %v6048, 4294901760
        %v6744 = vsub.f32 %v6048, %v6743
        %v6745 = vand.u32 %v6744, 4294901760
        %v6746 = vsub.f32 %v6744, %v6745
        %v6747 = vand.u32 %v6746, 4294901760
        %6748 = vmatpush1.msra.mxu0 %v6747
        %v6749 = vand.u32 %v6058, 4294901760
        %v6750 = vsub.f32 %v6058, %v6749
        %v6751 = vand.u32 %v6750, 4294901760
        %v6752 = vsub.f32 %v6750, %v6751
        %v6753 = vand.u32 %v6752, 4294901760
        %6754 = vmatprep.subr.mxu0 %v6753
        %v6755 = vand.u32 %v6056, 4294901760
        %v6756 = vsub.f32 %v6056, %v6755
        %v6757 = vand.u32 %v6756, 4294901760
        %v6758 = vsub.f32 %v6756, %v6757
        %v6759 = vand.u32 %v6758, 4294901760
        %6760 = vmatpush1.msra.mxu0 %v6759
        %v6761 = vand.u32 %v6066, 4294901760
        %v6762 = vsub.f32 %v6066, %v6761
        %v6763 = vand.u32 %v6762, 4294901760
        %v6764 = vsub.f32 %v6762, %v6763
        %v6765 = vand.u32 %v6764, 4294901760
        %6766 = vmatprep.subr.mxu0 %v6765
        %v6767 = vand.u32 %v6064, 4294901760
        %v6768 = vsub.f32 %v6064, %v6767
        %v6769 = vand.u32 %v6768, 4294901760
        %v6770 = vsub.f32 %v6768, %v6769
        %v6771 = vand.u32 %v6770, 4294901760
        %6772 = vmatpush1.msra.mxu0 %v6771
        %v6773 = vand.u32 %v6074, 4294901760
        %v6774 = vsub.f32 %v6074, %v6773
        %v6775 = vand.u32 %v6774, 4294901760
        %v6776 = vsub.f32 %v6774, %v6775
        %v6777 = vand.u32 %v6776, 4294901760
        %6778 = vmatprep.subr.mxu0 %v6777
        %v6779 = vand.u32 %v6072, 4294901760
        %v6780 = vsub.f32 %v6072, %v6779
        %v6781 = vand.u32 %v6780, 4294901760
        %v6782 = vsub.f32 %v6780, %v6781
        %v6783 = vand.u32 %v6782, 4294901760
        %6784 = vmatpush1.msra.mxu0 %v6783
        %v6785 = vand.u32 %v6082, 4294901760
        %v6786 = vsub.f32 %v6082, %v6785
        %v6787 = vand.u32 %v6786, 4294901760
        %v6788 = vsub.f32 %v6786, %v6787
        %v6789 = vand.u32 %v6788, 4294901760
        %6790 = vmatprep.subr.mxu0 %v6789
        %v6791 = vand.u32 %v6080, 4294901760
        %v6792 = vsub.f32 %v6080, %v6791
        %v6793 = vand.u32 %v6792, 4294901760
        %v6794 = vsub.f32 %v6792, %v6793
        %v6795 = vand.u32 %v6794, 4294901760
        %6796 = vmatpush1.msra.mxu0 %v6795
        %v6797 = vand.u32 %v6090, 4294901760
        %v6798 = vsub.f32 %v6090, %v6797
        %v6799 = vand.u32 %v6798, 4294901760
        %v6800 = vsub.f32 %v6798, %v6799
        %v6801 = vand.u32 %v6800, 4294901760
        %6802 = vmatprep.subr.mxu0 %v6801
        %v6803 = vand.u32 %v6088, 4294901760
        %v6804 = vsub.f32 %v6088, %v6803
        %v6805 = vand.u32 %v6804, 4294901760
        %v6806 = vsub.f32 %v6804, %v6805
        %v6807 = vand.u32 %v6806, 4294901760
        %6808 = vmatpush1.msra.mxu0 %v6807
        %v6809 = vand.u32 %v6098, 4294901760
        %v6810 = vsub.f32 %v6098, %v6809
        %v6811 = vand.u32 %v6810, 4294901760
        %v6812 = vsub.f32 %v6810, %v6811
        %v6813 = vand.u32 %v6812, 4294901760
        %6814 = vmatprep.subr.mxu0 %v6813
        %v6815 = vand.u32 %v6096, 4294901760
        %v6816 = vsub.f32 %v6096, %v6815
        %v6817 = vand.u32 %v6816, 4294901760
        %v6818 = vsub.f32 %v6816, %v6817
        %v6819 = vand.u32 %v6818, 4294901760
        %6820 = vmatpush1.msra.mxu0 %v6819
        %v6821 = vand.u32 %v6106, 4294901760
        %v6822 = vsub.f32 %v6106, %v6821
        %v6823 = vand.u32 %v6822, 4294901760
        %v6824 = vsub.f32 %v6822, %v6823
        %v6825 = vand.u32 %v6824, 4294901760
        %6826 = vmatprep.subr.mxu0 %v6825
        %v6827 = vand.u32 %v6104, 4294901760
        %v6828 = vsub.f32 %v6104, %v6827
        %v6829 = vand.u32 %v6828, 4294901760
        %v6830 = vsub.f32 %v6828, %v6829
        %v6831 = vand.u32 %v6830, 4294901760
        %6832 = vmatpush1.msra.mxu0 %v6831
        %v6833 = vand.u32 %v6114, 4294901760
        %v6834 = vsub.f32 %v6114, %v6833
        %v6835 = vand.u32 %v6834, 4294901760
        %v6836 = vsub.f32 %v6834, %v6835
        %v6837 = vand.u32 %v6836, 4294901760
        %6838 = vmatprep.subr.mxu0 %v6837
        %v6839 = vand.u32 %v6112, 4294901760
        %v6840 = vsub.f32 %v6112, %v6839
        %v6841 = vand.u32 %v6840, 4294901760
        %v6842 = vsub.f32 %v6840, %v6841
        %v6843 = vand.u32 %v6842, 4294901760
        %6844 = vmatpush1.msra.mxu0 %v6843
        %v6845 = vand.u32 %v6122, 4294901760
        %v6846 = vsub.f32 %v6122, %v6845
        %v6847 = vand.u32 %v6846, 4294901760
        %v6848 = vsub.f32 %v6846, %v6847
        %v6849 = vand.u32 %v6848, 4294901760
        %6850 = vmatprep.subr.mxu0 %v6849
        %v6851 = vand.u32 %v6120, 4294901760
        %v6852 = vsub.f32 %v6120, %v6851
        %v6853 = vand.u32 %v6852, 4294901760
        %v6854 = vsub.f32 %v6852, %v6853
        %v6855 = vand.u32 %v6854, 4294901760
        %6856 = vmatpush1.msra.mxu0 %v6855
        %v6857 = vand.u32 %v6130, 4294901760
        %v6858 = vsub.f32 %v6130, %v6857
        %v6859 = vand.u32 %v6858, 4294901760
        %v6860 = vsub.f32 %v6858, %v6859
        %v6861 = vand.u32 %v6860, 4294901760
        %6862 = vmatprep.subr.mxu0 %v6861
        %v6863 = vand.u32 %v6128, 4294901760
        %v6864 = vsub.f32 %v6128, %v6863
        %v6865 = vand.u32 %v6864, 4294901760
        %v6866 = vsub.f32 %v6864, %v6865
        %v6867 = vand.u32 %v6866, 4294901760
        %6868 = vmatpush1.msra.mxu0 %v6867
        %v6869 = vand.u32 %v6138, 4294901760
        %v6870 = vsub.f32 %v6138, %v6869
        %v6871 = vand.u32 %v6870, 4294901760
        %v6872 = vsub.f32 %v6870, %v6871
        %v6873 = vand.u32 %v6872, 4294901760
        %6874 = vmatprep.subr.mxu0 %v6873
        %v6875 = vand.u32 %v6136, 4294901760
        %v6876 = vsub.f32 %v6136, %v6875
        %v6877 = vand.u32 %v6876, 4294901760
        %v6878 = vsub.f32 %v6876, %v6877
        %v6879 = vand.u32 %v6878, 4294901760
        %6880 = vmatpush1.msra.mxu0 %v6879
        %v6881 = vand.u32 %v6146, 4294901760
        %v6882 = vsub.f32 %v6146, %v6881
        %v6883 = vand.u32 %v6882, 4294901760
        %v6884 = vsub.f32 %v6882, %v6883
        %v6885 = vand.u32 %v6884, 4294901760
        %6886 = vmatprep.subr.mxu0 %v6885
        %v6887 = vand.u32 %v6144, 4294901760
        %v6888 = vsub.f32 %v6144, %v6887
        %v6889 = vand.u32 %v6888, 4294901760
        %v6890 = vsub.f32 %v6888, %v6889
        %v6891 = vand.u32 %v6890, 4294901760
        %6892 = vmatpush1.msra.mxu0 %v6891
        %v6893 = vand.u32 %v6154, 4294901760
        %v6894 = vsub.f32 %v6154, %v6893
        %v6895 = vand.u32 %v6894, 4294901760
        %v6896 = vsub.f32 %v6894, %v6895
        %v6897 = vand.u32 %v6896, 4294901760
        %6898 = vmatprep.subr.mxu0 %v6897
        %v6899 = vand.u32 %v6152, 4294901760
        %v6900 = vsub.f32 %v6152, %v6899
        %v6901 = vand.u32 %v6900, 4294901760
        %v6902 = vsub.f32 %v6900, %v6901
        %v6903 = vand.u32 %v6902, 4294901760
        %6904 = vmatpush1.msra.mxu0 %v6903
        %v6905 = vand.u32 %v6162, 4294901760
        %v6906 = vsub.f32 %v6162, %v6905
        %v6907 = vand.u32 %v6906, 4294901760
        %v6908 = vsub.f32 %v6906, %v6907
        %v6909 = vand.u32 %v6908, 4294901760
        %6910 = vmatprep.subr.mxu0 %v6909
        %v6911 = vand.u32 %v6160, 4294901760
        %v6912 = vsub.f32 %v6160, %v6911
        %v6913 = vand.u32 %v6912, 4294901760
        %v6914 = vsub.f32 %v6912, %v6913
        %v6915 = vand.u32 %v6914, 4294901760
        %6916 = vmatpush1.msra.mxu0 %v6915
        %v6917 = vand.u32 %v6386, 4294901760
        %6918 = vmatprep.mubr.f32.mxu0 %v6917
        %v6919 = vand.u32 %v1432, 4294901760
        %6920 = vmatmul.mubr.f32.gmra.mrb[0].mxu0 %v6919
        %v6921 = vpop.f32.mrb[0].mxu0
        %v6922 = vadd.f32 %v6529, %v6921
        %v6923 = vpop.f32.mrb[0].mxu0
        %v6924 = vadd.f32 %v6531, %v6923
        %6925 = vdwg.mxu0
        %v6926 = vand.u32 %v5914, 4294901760
        %v6927 = vsub.f32 %v5914, %v6926
        %6928 = vmatprep.subr.mxu0 %v6927
        %v6929 = vand.u32 %v5912, 4294901760
        %v6930 = vsub.f32 %v5912, %v6929
        %6931 = vmatpush1.msra.mxu0 %v6930
        %v6932 = vand.u32 %v5922, 4294901760
        %v6933 = vsub.f32 %v5922, %v6932
        %6934 = vmatprep.subr.mxu0 %v6933
        %v6935 = vand.u32 %v5920, 4294901760
        %v6936 = vsub.f32 %v5920, %v6935
        %6937 = vmatpush1.msra.mxu0 %v6936
        %v6938 = vand.u32 %v5930, 4294901760
        %v6939 = vsub.f32 %v5930, %v6938
        %6940 = vmatprep.subr.mxu0 %v6939
        %v6941 = vand.u32 %v5928, 4294901760
        %v6942 = vsub.f32 %v5928, %v6941
        %6943 = vmatpush1.msra.mxu0 %v6942
        %v6944 = vand.u32 %v5938, 4294901760
        %v6945 = vsub.f32 %v5938, %v6944
        %6946 = vmatprep.subr.mxu0 %v6945
        %v6947 = vand.u32 %v5936, 4294901760
        %v6948 = vsub.f32 %v5936, %v6947
        %6949 = vmatpush1.msra.mxu0 %v6948
        %v6950 = vand.u32 %v5946, 4294901760
        %v6951 = vsub.f32 %v5946, %v6950
        %6952 = vmatprep.subr.mxu0 %v6951
        %v6953 = vand.u32 %v5944, 4294901760
        %v6954 = vsub.f32 %v5944, %v6953
        %6955 = vmatpush1.msra.mxu0 %v6954
        %v6956 = vand.u32 %v5954, 4294901760
        %v6957 = vsub.f32 %v5954, %v6956
        %6958 = vmatprep.subr.mxu0 %v6957
        %v6959 = vand.u32 %v5952, 4294901760
        %v6960 = vsub.f32 %v5952, %v6959
        %6961 = vmatpush1.msra.mxu0 %v6960
        %v6962 = vand.u32 %v5962, 4294901760
        %v6963 = vsub.f32 %v5962, %v6962
        %6964 = vmatprep.subr.mxu0 %v6963
        %v6965 = vand.u32 %v5960, 4294901760
        %v6966 = vsub.f32 %v5960, %v6965
        %6967 = vmatpush1.msra.mxu0 %v6966
        %v6968 = vand.u32 %v5970, 4294901760
        %v6969 = vsub.f32 %v5970, %v6968
        %6970 = vmatprep.subr.mxu0 %v6969
        %v6971 = vand.u32 %v5968, 4294901760
        %v6972 = vsub.f32 %v5968, %v6971
        %6973 = vmatpush1.msra.mxu0 %v6972
        %v6974 = vand.u32 %v5978, 4294901760
        %v6975 = vsub.f32 %v5978, %v6974
        %6976 = vmatprep.subr.mxu0 %v6975
        %v6977 = vand.u32 %v5976, 4294901760
        %v6978 = vsub.f32 %v5976, %v6977
        %6979 = vmatpush1.msra.mxu0 %v6978
        %v6980 = vand.u32 %v5986, 4294901760
        %v6981 = vsub.f32 %v5986, %v6980
        %6982 = vmatprep.subr.mxu0 %v6981
        %v6983 = vand.u32 %v5984, 4294901760
        %v6984 = vsub.f32 %v5984, %v6983
        %6985 = vmatpush1.msra.mxu0 %v6984
        %v6986 = vand.u32 %v5994, 4294901760
        %v6987 = vsub.f32 %v5994, %v6986
        %6988 = vmatprep.subr.mxu0 %v6987
        %v6989 = vand.u32 %v5992, 4294901760
        %v6990 = vsub.f32 %v5992, %v6989
        %6991 = vmatpush1.msra.mxu0 %v6990
        %v6992 = vand.u32 %v6002, 4294901760
        %v6993 = vsub.f32 %v6002, %v6992
        %6994 = vmatprep.subr.mxu0 %v6993
        %v6995 = vand.u32 %v6000, 4294901760
        %v6996 = vsub.f32 %v6000, %v6995
        %6997 = vmatpush1.msra.mxu0 %v6996
        %v6998 = vand.u32 %v6010, 4294901760
        %v6999 = vsub.f32 %v6010, %v6998
        %7000 = vmatprep.subr.mxu0 %v6999
        %v7001 = vand.u32 %v6008, 4294901760
        %v7002 = vsub.f32 %v6008, %v7001
        %7003 = vmatpush1.msra.mxu0 %v7002
        %v7004 = vand.u32 %v6018, 4294901760
        %v7005 = vsub.f32 %v6018, %v7004
        %7006 = vmatprep.subr.mxu0 %v7005
        %v7007 = vand.u32 %v6016, 4294901760
        %v7008 = vsub.f32 %v6016, %v7007
        %7009 = vmatpush1.msra.mxu0 %v7008
        %v7010 = vand.u32 %v6026, 4294901760
        %v7011 = vsub.f32 %v6026, %v7010
        %7012 = vmatprep.subr.mxu0 %v7011
        %v7013 = vand.u32 %v6024, 4294901760
        %v7014 = vsub.f32 %v6024, %v7013
        %7015 = vmatpush1.msra.mxu0 %v7014
        %v7016 = vand.u32 %v6034, 4294901760
        %v7017 = vsub.f32 %v6034, %v7016
        %7018 = vmatprep.subr.mxu0 %v7017
        %v7019 = vand.u32 %v6032, 4294901760
        %v7020 = vsub.f32 %v6032, %v7019
        %7021 = vmatpush1.msra.mxu0 %v7020
        %v7022 = vand.u32 %v6042, 4294901760
        %v7023 = vsub.f32 %v6042, %v7022
        %7024 = vmatprep.subr.mxu0 %v7023
        %v7025 = vand.u32 %v6040, 4294901760
        %v7026 = vsub.f32 %v6040, %v7025
        %7027 = vmatpush1.msra.mxu0 %v7026
        %v7028 = vand.u32 %v6050, 4294901760
        %v7029 = vsub.f32 %v6050, %v7028
        %7030 = vmatprep.subr.mxu0 %v7029
        %v7031 = vand.u32 %v6048, 4294901760
        %v7032 = vsub.f32 %v6048, %v7031
        %7033 = vmatpush1.msra.mxu0 %v7032
        %v7034 = vand.u32 %v6058, 4294901760
        %v7035 = vsub.f32 %v6058, %v7034
        %7036 = vmatprep.subr.mxu0 %v7035
        %v7037 = vand.u32 %v6056, 4294901760
        %v7038 = vsub.f32 %v6056, %v7037
        %7039 = vmatpush1.msra.mxu0 %v7038
        %v7040 = vand.u32 %v6066, 4294901760
        %v7041 = vsub.f32 %v6066, %v7040
        %7042 = vmatprep.subr.mxu0 %v7041
        %v7043 = vand.u32 %v6064, 4294901760
        %v7044 = vsub.f32 %v6064, %v7043
        %7045 = vmatpush1.msra.mxu0 %v7044
        %v7046 = vand.u32 %v6074, 4294901760
        %v7047 = vsub.f32 %v6074, %v7046
        %7048 = vmatprep.subr.mxu0 %v7047
        %v7049 = vand.u32 %v6072, 4294901760
        %v7050 = vsub.f32 %v6072, %v7049
        %7051 = vmatpush1.msra.mxu0 %v7050
        %v7052 = vand.u32 %v6082, 4294901760
        %v7053 = vsub.f32 %v6082, %v7052
        %7054 = vmatprep.subr.mxu0 %v7053
        %v7055 = vand.u32 %v6080, 4294901760
        %v7056 = vsub.f32 %v6080, %v7055
        %7057 = vmatpush1.msra.mxu0 %v7056
        %v7058 = vand.u32 %v6090, 4294901760
        %v7059 = vsub.f32 %v6090, %v7058
        %7060 = vmatprep.subr.mxu0 %v7059
        %v7061 = vand.u32 %v6088, 4294901760
        %v7062 = vsub.f32 %v6088, %v7061
        %7063 = vmatpush1.msra.mxu0 %v7062
        %v7064 = vand.u32 %v6098, 4294901760
        %v7065 = vsub.f32 %v6098, %v7064
        %7066 = vmatprep.subr.mxu0 %v7065
        %v7067 = vand.u32 %v6096, 4294901760
        %v7068 = vsub.f32 %v6096, %v7067
        %7069 = vmatpush1.msra.mxu0 %v7068
        %v7070 = vand.u32 %v6106, 4294901760
        %v7071 = vsub.f32 %v6106, %v7070
        %7072 = vmatprep.subr.mxu0 %v7071
        %v7073 = vand.u32 %v6104, 4294901760
        %v7074 = vsub.f32 %v6104, %v7073
        %7075 = vmatpush1.msra.mxu0 %v7074
        %v7076 = vand.u32 %v6114, 4294901760
        %v7077 = vsub.f32 %v6114, %v7076
        %7078 = vmatprep.subr.mxu0 %v7077
        %v7079 = vand.u32 %v6112, 4294901760
        %v7080 = vsub.f32 %v6112, %v7079
        %7081 = vmatpush1.msra.mxu0 %v7080
        %v7082 = vand.u32 %v6122, 4294901760
        %v7083 = vsub.f32 %v6122, %v7082
        %7084 = vmatprep.subr.mxu0 %v7083
        %v7085 = vand.u32 %v6120, 4294901760
        %v7086 = vsub.f32 %v6120, %v7085
        %7087 = vmatpush1.msra.mxu0 %v7086
        %v7088 = vand.u32 %v6130, 4294901760
        %v7089 = vsub.f32 %v6130, %v7088
        %7090 = vmatprep.subr.mxu0 %v7089
        %v7091 = vand.u32 %v6128, 4294901760
        %v7092 = vsub.f32 %v6128, %v7091
        %7093 = vmatpush1.msra.mxu0 %v7092
        %v7094 = vand.u32 %v6138, 4294901760
        %v7095 = vsub.f32 %v6138, %v7094
        %7096 = vmatprep.subr.mxu0 %v7095
        %v7097 = vand.u32 %v6136, 4294901760
        %v7098 = vsub.f32 %v6136, %v7097
        %7099 = vmatpush1.msra.mxu0 %v7098
        %v7100 = vand.u32 %v6146, 4294901760
        %v7101 = vsub.f32 %v6146, %v7100
        %7102 = vmatprep.subr.mxu0 %v7101
        %v7103 = vand.u32 %v6144, 4294901760
        %v7104 = vsub.f32 %v6144, %v7103
        %7105 = vmatpush1.msra.mxu0 %v7104
        %v7106 = vand.u32 %v6154, 4294901760
        %v7107 = vsub.f32 %v6154, %v7106
        %7108 = vmatprep.subr.mxu0 %v7107
        %v7109 = vand.u32 %v6152, 4294901760
        %v7110 = vsub.f32 %v6152, %v7109
        %7111 = vmatpush1.msra.mxu0 %v7110
        %v7112 = vand.u32 %v6162, 4294901760
        %v7113 = vsub.f32 %v6162, %v7112
        %7114 = vmatprep.subr.mxu0 %v7113
        %v7115 = vand.u32 %v6160, 4294901760
        %v7116 = vsub.f32 %v6160, %v7115
        %7117 = vmatpush1.msra.mxu0 %v7116
        %v7118 = vand.u32 %v6386, 4294901760
        %v7119 = vsub.f32 %v6386, %v7118
        %7120 = vmatprep.mubr.f32.mxu0 %v7119
        %v7121 = vand.u32 %v1432, 4294901760
        %v7122 = vsub.f32 %v1432, %v7121
        %7123 = vmatmul.mubr.f32.gmra.mrb[0].mxu0 %v7122
        %v7124 = vpop.f32.mrb[0].mxu0
        %v7125 = vadd.f32 %v6922, %v7124
        %v7126 = vpop.f32.mrb[0].mxu0
        %v7127 = vadd.f32 %v6924, %v7126
        %7128 = vdwg.mxu0
        %v7129 = vand.u32 %v5914, 4294901760
        %7130 = vmatprep.subr.mxu0 %v7129
        %v7131 = vand.u32 %v5912, 4294901760
        %7132 = vmatpush1.msra.mxu0 %v7131
        %v7133 = vand.u32 %v5922, 4294901760
        %7134 = vmatprep.subr.mxu0 %v7133
        %v7135 = vand.u32 %v5920, 4294901760
        %7136 = vmatpush1.msra.mxu0 %v7135
        %v7137 = vand.u32 %v5930, 4294901760
        %7138 = vmatprep.subr.mxu0 %v7137
        %v7139 = vand.u32 %v5928, 4294901760
        %7140 = vmatpush1.msra.mxu0 %v7139
        %v7141 = vand.u32 %v5938, 4294901760
        %7142 = vmatprep.subr.mxu0 %v7141
        %v7143 = vand.u32 %v5936, 4294901760
        %7144 = vmatpush1.msra.mxu0 %v7143
        %v7145 = vand.u32 %v5946, 4294901760
        %7146 = vmatprep.subr.mxu0 %v7145
        %v7147 = vand.u32 %v5944, 4294901760
        %7148 = vmatpush1.msra.mxu0 %v7147
        %v7149 = vand.u32 %v5954, 4294901760
        %7150 = vmatprep.subr.mxu0 %v7149
        %v7151 = vand.u32 %v5952, 4294901760
        %7152 = vmatpush1.msra.mxu0 %v7151
        %v7153 = vand.u32 %v5962, 4294901760
        %7154 = vmatprep.subr.mxu0 %v7153
        %v7155 = vand.u32 %v5960, 4294901760
        %7156 = vmatpush1.msra.mxu0 %v7155
        %v7157 = vand.u32 %v5970, 4294901760
        %7158 = vmatprep.subr.mxu0 %v7157
        %v7159 = vand.u32 %v5968, 4294901760
        %7160 = vmatpush1.msra.mxu0 %v7159
        %v7161 = vand.u32 %v5978, 4294901760
        %7162 = vmatprep.subr.mxu0 %v7161
        %v7163 = vand.u32 %v5976, 4294901760
        %7164 = vmatpush1.msra.mxu0 %v7163
        %v7165 = vand.u32 %v5986, 4294901760
        %7166 = vmatprep.subr.mxu0 %v7165
        %v7167 = vand.u32 %v5984, 4294901760
        %7168 = vmatpush1.msra.mxu0 %v7167
        %v7169 = vand.u32 %v5994, 4294901760
        %7170 = vmatprep.subr.mxu0 %v7169
        %v7171 = vand.u32 %v5992, 4294901760
        %7172 = vmatpush1.msra.mxu0 %v7171
        %v7173 = vand.u32 %v6002, 4294901760
        %7174 = vmatprep.subr.mxu0 %v7173
        %v7175 = vand.u32 %v6000, 4294901760
        %7176 = vmatpush1.msra.mxu0 %v7175
        %v7177 = vand.u32 %v6010, 4294901760
        %7178 = vmatprep.subr.mxu0 %v7177
        %v7179 = vand.u32 %v6008, 4294901760
        %7180 = vmatpush1.msra.mxu0 %v7179
        %v7181 = vand.u32 %v6018, 4294901760
        %7182 = vmatprep.subr.mxu0 %v7181
        %v7183 = vand.u32 %v6016, 4294901760
        %7184 = vmatpush1.msra.mxu0 %v7183
        %v7185 = vand.u32 %v6026, 4294901760
        %7186 = vmatprep.subr.mxu0 %v7185
        %v7187 = vand.u32 %v6024, 4294901760
        %7188 = vmatpush1.msra.mxu0 %v7187
        %v7189 = vand.u32 %v6034, 4294901760
        %7190 = vmatprep.subr.mxu0 %v7189
        %v7191 = vand.u32 %v6032, 4294901760
        %7192 = vmatpush1.msra.mxu0 %v7191
        %v7193 = vand.u32 %v6042, 4294901760
        %7194 = vmatprep.subr.mxu0 %v7193
        %v7195 = vand.u32 %v6040, 4294901760
        %7196 = vmatpush1.msra.mxu0 %v7195
        %v7197 = vand.u32 %v6050, 4294901760
        %7198 = vmatprep.subr.mxu0 %v7197
        %v7199 = vand.u32 %v6048, 4294901760
        %7200 = vmatpush1.msra.mxu0 %v7199
        %v7201 = vand.u32 %v6058, 4294901760
        %7202 = vmatprep.subr.mxu0 %v7201
        %v7203 = vand.u32 %v6056, 4294901760
        %7204 = vmatpush1.msra.mxu0 %v7203
        %v7205 = vand.u32 %v6066, 4294901760
        %7206 = vmatprep.subr.mxu0 %v7205
        %v7207 = vand.u32 %v6064, 4294901760
        %7208 = vmatpush1.msra.mxu0 %v7207
        %v7209 = vand.u32 %v6074, 4294901760
        %7210 = vmatprep.subr.mxu0 %v7209
        %v7211 = vand.u32 %v6072, 4294901760
        %7212 = vmatpush1.msra.mxu0 %v7211
        %v7213 = vand.u32 %v6082, 4294901760
        %7214 = vmatprep.subr.mxu0 %v7213
        %v7215 = vand.u32 %v6080, 4294901760
        %7216 = vmatpush1.msra.mxu0 %v7215
        %v7217 = vand.u32 %v6090, 4294901760
        %7218 = vmatprep.subr.mxu0 %v7217
        %v7219 = vand.u32 %v6088, 4294901760
        %7220 = vmatpush1.msra.mxu0 %v7219
        %v7221 = vand.u32 %v6098, 4294901760
        %7222 = vmatprep.subr.mxu0 %v7221
        %v7223 = vand.u32 %v6096, 4294901760
        %7224 = vmatpush1.msra.mxu0 %v7223
        %v7225 = vand.u32 %v6106, 4294901760
        %7226 = vmatprep.subr.mxu0 %v7225
        %v7227 = vand.u32 %v6104, 4294901760
        %7228 = vmatpush1.msra.mxu0 %v7227
        %v7229 = vand.u32 %v6114, 4294901760
        %7230 = vmatprep.subr.mxu0 %v7229
        %v7231 = vand.u32 %v6112, 4294901760
        %7232 = vmatpush1.msra.mxu0 %v7231
        %v7233 = vand.u32 %v6122, 4294901760
        %7234 = vmatprep.subr.mxu0 %v7233
        %v7235 = vand.u32 %v6120, 4294901760
        %7236 = vmatpush1.msra.mxu0 %v7235
        %v7237 = vand.u32 %v6130, 4294901760
        %7238 = vmatprep.subr.mxu0 %v7237
        %v7239 = vand.u32 %v6128, 4294901760
        %7240 = vmatpush1.msra.mxu0 %v7239
        %v7241 = vand.u32 %v6138, 4294901760
        %7242 = vmatprep.subr.mxu0 %v7241
        %v7243 = vand.u32 %v6136, 4294901760
        %7244 = vmatpush1.msra.mxu0 %v7243
        %v7245 = vand.u32 %v6146, 4294901760
        %7246 = vmatprep.subr.mxu0 %v7245
        %v7247 = vand.u32 %v6144, 4294901760
        %7248 = vmatpush1.msra.mxu0 %v7247
        %v7249 = vand.u32 %v6154, 4294901760
        %7250 = vmatprep.subr.mxu0 %v7249
        %v7251 = vand.u32 %v6152, 4294901760
        %7252 = vmatpush1.msra.mxu0 %v7251
        %v7253 = vand.u32 %v6162, 4294901760
        %7254 = vmatprep.subr.mxu0 %v7253
        %v7255 = vand.u32 %v6160, 4294901760
        %7256 = vmatpush1.msra.mxu0 %v7255
        %v7257 = vand.u32 %v6386, 4294901760
        %v7258 = vsub.f32 %v6386, %v7257
        %v7259 = vand.u32 %v7258, 4294901760
        %7260 = vmatprep.mubr.f32.mxu0 %v7259
        %v7261 = vand.u32 %v1432, 4294901760
        %v7262 = vsub.f32 %v1432, %v7261
        %v7263 = vand.u32 %v7262, 4294901760
        %7264 = vmatmul.mubr.f32.gmra.mrb[0].mxu0 %v7263
        %v7265 = vpop.f32.mrb[0].mxu0
        %v7266 = vadd.f32 %v7125, %v7265
        %v7267 = vpop.f32.mrb[0].mxu0
        %v7268 = vadd.f32 %v7127, %v7267
        %7269 = vdwg.mxu0
        %v7270 = vand.u32 %v5914, 4294901760
        %v7271 = vsub.f32 %v5914, %v7270
        %v7272 = vand.u32 %v7271, 4294901760
        %7273 = vmatprep.subr.mxu0 %v7272
        %v7274 = vand.u32 %v5912, 4294901760
        %v7275 = vsub.f32 %v5912, %v7274
        %v7276 = vand.u32 %v7275, 4294901760
        %7277 = vmatpush1.msra.mxu0 %v7276
        %v7278 = vand.u32 %v5922, 4294901760
        %v7279 = vsub.f32 %v5922, %v7278
        %v7280 = vand.u32 %v7279, 4294901760
        %7281 = vmatprep.subr.mxu0 %v7280
        %v7282 = vand.u32 %v5920, 4294901760
        %v7283 = vsub.f32 %v5920, %v7282
        %v7284 = vand.u32 %v7283, 4294901760
        %7285 = vmatpush1.msra.mxu0 %v7284
        %v7286 = vand.u32 %v5930, 4294901760
        %v7287 = vsub.f32 %v5930, %v7286
        %v7288 = vand.u32 %v7287, 4294901760
        %7289 = vmatprep.subr.mxu0 %v7288
        %v7290 = vand.u32 %v5928, 4294901760
        %v7291 = vsub.f32 %v5928, %v7290
        %v7292 = vand.u32 %v7291, 4294901760
        %7293 = vmatpush1.msra.mxu0 %v7292
        %v7294 = vand.u32 %v5938, 4294901760
        %v7295 = vsub.f32 %v5938, %v7294
        %v7296 = vand.u32 %v7295, 4294901760
        %7297 = vmatprep.subr.mxu0 %v7296
        %v7298 = vand.u32 %v5936, 4294901760
        %v7299 = vsub.f32 %v5936, %v7298
        %v7300 = vand.u32 %v7299, 4294901760
        %7301 = vmatpush1.msra.mxu0 %v7300
        %v7302 = vand.u32 %v5946, 4294901760
        %v7303 = vsub.f32 %v5946, %v7302
        %v7304 = vand.u32 %v7303, 4294901760
        %7305 = vmatprep.subr.mxu0 %v7304
        %v7306 = vand.u32 %v5944, 4294901760
        %v7307 = vsub.f32 %v5944, %v7306
        %v7308 = vand.u32 %v7307, 4294901760
        %7309 = vmatpush1.msra.mxu0 %v7308
        %v7310 = vand.u32 %v5954, 4294901760
        %v7311 = vsub.f32 %v5954, %v7310
        %v7312 = vand.u32 %v7311, 4294901760
        %7313 = vmatprep.subr.mxu0 %v7312
        %v7314 = vand.u32 %v5952, 4294901760
        %v7315 = vsub.f32 %v5952, %v7314
        %v7316 = vand.u32 %v7315, 4294901760
        %7317 = vmatpush1.msra.mxu0 %v7316
        %v7318 = vand.u32 %v5962, 4294901760
        %v7319 = vsub.f32 %v5962, %v7318
        %v7320 = vand.u32 %v7319, 4294901760
        %7321 = vmatprep.subr.mxu0 %v7320
        %v7322 = vand.u32 %v5960, 4294901760
        %v7323 = vsub.f32 %v5960, %v7322
        %v7324 = vand.u32 %v7323, 4294901760
        %7325 = vmatpush1.msra.mxu0 %v7324
        %v7326 = vand.u32 %v5970, 4294901760
        %v7327 = vsub.f32 %v5970, %v7326
        %v7328 = vand.u32 %v7327, 4294901760
        %7329 = vmatprep.subr.mxu0 %v7328
        %v7330 = vand.u32 %v5968, 4294901760
        %v7331 = vsub.f32 %v5968, %v7330
        %v7332 = vand.u32 %v7331, 4294901760
        %7333 = vmatpush1.msra.mxu0 %v7332
        %v7334 = vand.u32 %v5978, 4294901760
        %v7335 = vsub.f32 %v5978, %v7334
        %v7336 = vand.u32 %v7335, 4294901760
        %7337 = vmatprep.subr.mxu0 %v7336
        %v7338 = vand.u32 %v5976, 4294901760
        %v7339 = vsub.f32 %v5976, %v7338
        %v7340 = vand.u32 %v7339, 4294901760
        %7341 = vmatpush1.msra.mxu0 %v7340
        %v7342 = vand.u32 %v5986, 4294901760
        %v7343 = vsub.f32 %v5986, %v7342
        %v7344 = vand.u32 %v7343, 4294901760
        %7345 = vmatprep.subr.mxu0 %v7344
        %v7346 = vand.u32 %v5984, 4294901760
        %v7347 = vsub.f32 %v5984, %v7346
        %v7348 = vand.u32 %v7347, 4294901760
        %7349 = vmatpush1.msra.mxu0 %v7348
        %v7350 = vand.u32 %v5994, 4294901760
        %v7351 = vsub.f32 %v5994, %v7350
        %v7352 = vand.u32 %v7351, 4294901760
        %7353 = vmatprep.subr.mxu0 %v7352
        %v7354 = vand.u32 %v5992, 4294901760
        %v7355 = vsub.f32 %v5992, %v7354
        %v7356 = vand.u32 %v7355, 4294901760
        %7357 = vmatpush1.msra.mxu0 %v7356
        %v7358 = vand.u32 %v6002, 4294901760
        %v7359 = vsub.f32 %v6002, %v7358
        %v7360 = vand.u32 %v7359, 4294901760
        %7361 = vmatprep.subr.mxu0 %v7360
        %v7362 = vand.u32 %v6000, 4294901760
        %v7363 = vsub.f32 %v6000, %v7362
        %v7364 = vand.u32 %v7363, 4294901760
        %7365 = vmatpush1.msra.mxu0 %v7364
        %v7366 = vand.u32 %v6010, 4294901760
        %v7367 = vsub.f32 %v6010, %v7366
        %v7368 = vand.u32 %v7367, 4294901760
        %7369 = vmatprep.subr.mxu0 %v7368
        %v7370 = vand.u32 %v6008, 4294901760
        %v7371 = vsub.f32 %v6008, %v7370
        %v7372 = vand.u32 %v7371, 4294901760
        %7373 = vmatpush1.msra.mxu0 %v7372
        %v7374 = vand.u32 %v6018, 4294901760
        %v7375 = vsub.f32 %v6018, %v7374
        %v7376 = vand.u32 %v7375, 4294901760
        %7377 = vmatprep.subr.mxu0 %v7376
        %v7378 = vand.u32 %v6016, 4294901760
        %v7379 = vsub.f32 %v6016, %v7378
        %v7380 = vand.u32 %v7379, 4294901760
        %7381 = vmatpush1.msra.mxu0 %v7380
        %v7382 = vand.u32 %v6026, 4294901760
        %v7383 = vsub.f32 %v6026, %v7382
        %v7384 = vand.u32 %v7383, 4294901760
        %7385 = vmatprep.subr.mxu0 %v7384
        %v7386 = vand.u32 %v6024, 4294901760
        %v7387 = vsub.f32 %v6024, %v7386
        %v7388 = vand.u32 %v7387, 4294901760
        %7389 = vmatpush1.msra.mxu0 %v7388
        %v7390 = vand.u32 %v6034, 4294901760
        %v7391 = vsub.f32 %v6034, %v7390
        %v7392 = vand.u32 %v7391, 4294901760
        %7393 = vmatprep.subr.mxu0 %v7392
        %v7394 = vand.u32 %v6032, 4294901760
        %v7395 = vsub.f32 %v6032, %v7394
        %v7396 = vand.u32 %v7395, 4294901760
        %7397 = vmatpush1.msra.mxu0 %v7396
        %v7398 = vand.u32 %v6042, 4294901760
        %v7399 = vsub.f32 %v6042, %v7398
        %v7400 = vand.u32 %v7399, 4294901760
        %7401 = vmatprep.subr.mxu0 %v7400
        %v7402 = vand.u32 %v6040, 4294901760
        %v7403 = vsub.f32 %v6040, %v7402
        %v7404 = vand.u32 %v7403, 4294901760
        %7405 = vmatpush1.msra.mxu0 %v7404
        %v7406 = vand.u32 %v6050, 4294901760
        %v7407 = vsub.f32 %v6050, %v7406
        %v7408 = vand.u32 %v7407, 4294901760
        %7409 = vmatprep.subr.mxu0 %v7408
        %v7410 = vand.u32 %v6048, 4294901760
        %v7411 = vsub.f32 %v6048, %v7410
        %v7412 = vand.u32 %v7411, 4294901760
        %7413 = vmatpush1.msra.mxu0 %v7412
        %v7414 = vand.u32 %v6058, 4294901760
        %v7415 = vsub.f32 %v6058, %v7414
        %v7416 = vand.u32 %v7415, 4294901760
        %7417 = vmatprep.subr.mxu0 %v7416
        %v7418 = vand.u32 %v6056, 4294901760
        %v7419 = vsub.f32 %v6056, %v7418
        %v7420 = vand.u32 %v7419, 4294901760
        %7421 = vmatpush1.msra.mxu0 %v7420
        %v7422 = vand.u32 %v6066, 4294901760
        %v7423 = vsub.f32 %v6066, %v7422
        %v7424 = vand.u32 %v7423, 4294901760
        %7425 = vmatprep.subr.mxu0 %v7424
        %v7426 = vand.u32 %v6064, 4294901760
        %v7427 = vsub.f32 %v6064, %v7426
        %v7428 = vand.u32 %v7427, 4294901760
        %7429 = vmatpush1.msra.mxu0 %v7428
        %v7430 = vand.u32 %v6074, 4294901760
        %v7431 = vsub.f32 %v6074, %v7430
        %v7432 = vand.u32 %v7431, 4294901760
        %7433 = vmatprep.subr.mxu0 %v7432
        %v7434 = vand.u32 %v6072, 4294901760
        %v7435 = vsub.f32 %v6072, %v7434
        %v7436 = vand.u32 %v7435, 4294901760
        %7437 = vmatpush1.msra.mxu0 %v7436
        %v7438 = vand.u32 %v6082, 4294901760
        %v7439 = vsub.f32 %v6082, %v7438
        %v7440 = vand.u32 %v7439, 4294901760
        %7441 = vmatprep.subr.mxu0 %v7440
        %v7442 = vand.u32 %v6080, 4294901760
        %v7443 = vsub.f32 %v6080, %v7442
        %v7444 = vand.u32 %v7443, 4294901760
        %7445 = vmatpush1.msra.mxu0 %v7444
        %v7446 = vand.u32 %v6090, 4294901760
        %v7447 = vsub.f32 %v6090, %v7446
        %v7448 = vand.u32 %v7447, 4294901760
        %7449 = vmatprep.subr.mxu0 %v7448
        %v7450 = vand.u32 %v6088, 4294901760
        %v7451 = vsub.f32 %v6088, %v7450
        %v7452 = vand.u32 %v7451, 4294901760
        %7453 = vmatpush1.msra.mxu0 %v7452
        %v7454 = vand.u32 %v6098, 4294901760
        %v7455 = vsub.f32 %v6098, %v7454
        %v7456 = vand.u32 %v7455, 4294901760
        %7457 = vmatprep.subr.mxu0 %v7456
        %v7458 = vand.u32 %v6096, 4294901760
        %v7459 = vsub.f32 %v6096, %v7458
        %v7460 = vand.u32 %v7459, 4294901760
        %7461 = vmatpush1.msra.mxu0 %v7460
        %v7462 = vand.u32 %v6106, 4294901760
        %v7463 = vsub.f32 %v6106, %v7462
        %v7464 = vand.u32 %v7463, 4294901760
        %7465 = vmatprep.subr.mxu0 %v7464
        %v7466 = vand.u32 %v6104, 4294901760
        %v7467 = vsub.f32 %v6104, %v7466
        %v7468 = vand.u32 %v7467, 4294901760
        %7469 = vmatpush1.msra.mxu0 %v7468
        %v7470 = vand.u32 %v6114, 4294901760
        %v7471 = vsub.f32 %v6114, %v7470
        %v7472 = vand.u32 %v7471, 4294901760
        %7473 = vmatprep.subr.mxu0 %v7472
        %v7474 = vand.u32 %v6112, 4294901760
        %v7475 = vsub.f32 %v6112, %v7474
        %v7476 = vand.u32 %v7475, 4294901760
        %7477 = vmatpush1.msra.mxu0 %v7476
        %v7478 = vand.u32 %v6122, 4294901760
        %v7479 = vsub.f32 %v6122, %v7478
        %v7480 = vand.u32 %v7479, 4294901760
        %7481 = vmatprep.subr.mxu0 %v7480
        %v7482 = vand.u32 %v6120, 4294901760
        %v7483 = vsub.f32 %v6120, %v7482
        %v7484 = vand.u32 %v7483, 4294901760
        %7485 = vmatpush1.msra.mxu0 %v7484
        %v7486 = vand.u32 %v6130, 4294901760
        %v7487 = vsub.f32 %v6130, %v7486
        %v7488 = vand.u32 %v7487, 4294901760
        %7489 = vmatprep.subr.mxu0 %v7488
        %v7490 = vand.u32 %v6128, 4294901760
        %v7491 = vsub.f32 %v6128, %v7490
        %v7492 = vand.u32 %v7491, 4294901760
        %7493 = vmatpush1.msra.mxu0 %v7492
        %v7494 = vand.u32 %v6138, 4294901760
        %v7495 = vsub.f32 %v6138, %v7494
        %v7496 = vand.u32 %v7495, 4294901760
        %7497 = vmatprep.subr.mxu0 %v7496
        %v7498 = vand.u32 %v6136, 4294901760
        %v7499 = vsub.f32 %v6136, %v7498
        %v7500 = vand.u32 %v7499, 4294901760
        %7501 = vmatpush1.msra.mxu0 %v7500
        %v7502 = vand.u32 %v6146, 4294901760
        %v7503 = vsub.f32 %v6146, %v7502
        %v7504 = vand.u32 %v7503, 4294901760
        %7505 = vmatprep.subr.mxu0 %v7504
        %v7506 = vand.u32 %v6144, 4294901760
        %v7507 = vsub.f32 %v6144, %v7506
        %v7508 = vand.u32 %v7507, 4294901760
        %7509 = vmatpush1.msra.mxu0 %v7508
        %v7510 = vand.u32 %v6154, 4294901760
        %v7511 = vsub.f32 %v6154, %v7510
        %v7512 = vand.u32 %v7511, 4294901760
        %7513 = vmatprep.subr.mxu0 %v7512
        %v7514 = vand.u32 %v6152, 4294901760
        %v7515 = vsub.f32 %v6152, %v7514
        %v7516 = vand.u32 %v7515, 4294901760
        %7517 = vmatpush1.msra.mxu0 %v7516
        %v7518 = vand.u32 %v6162, 4294901760
        %v7519 = vsub.f32 %v6162, %v7518
        %v7520 = vand.u32 %v7519, 4294901760
        %7521 = vmatprep.subr.mxu0 %v7520
        %v7522 = vand.u32 %v6160, 4294901760
        %v7523 = vsub.f32 %v6160, %v7522
        %v7524 = vand.u32 %v7523, 4294901760
        %7525 = vmatpush1.msra.mxu0 %v7524
        %v7526 = vand.u32 %v6386, 4294901760
        %7527 = vmatprep.mubr.f32.mxu0 %v7526
        %v7528 = vand.u32 %v1432, 4294901760
        %7529 = vmatmul.mubr.f32.gmra.mrb[0].mxu0 %v7528
        %v7530 = vpop.f32.mrb[0].mxu0
        %v7531 = vadd.f32 %v7266, %v7530
        %v7532 = vpop.f32.mrb[0].mxu0
        %v7533 = vadd.f32 %v7268, %v7532
        %7534 = vdwg.mxu0
        %v7535 = vand.u32 %v5914, 4294901760
        %7536 = vmatprep.subr.mxu0 %v7535
        %v7537 = vand.u32 %v5912, 4294901760
        %7538 = vmatpush1.msra.mxu0 %v7537
        %v7539 = vand.u32 %v5922, 4294901760
        %7540 = vmatprep.subr.mxu0 %v7539
        %v7541 = vand.u32 %v5920, 4294901760
        %7542 = vmatpush1.msra.mxu0 %v7541
        %v7543 = vand.u32 %v5930, 4294901760
        %7544 = vmatprep.subr.mxu0 %v7543
        %v7545 = vand.u32 %v5928, 4294901760
        %7546 = vmatpush1.msra.mxu0 %v7545
        %v7547 = vand.u32 %v5938, 4294901760
        %7548 = vmatprep.subr.mxu0 %v7547
        %v7549 = vand.u32 %v5936, 4294901760
        %7550 = vmatpush1.msra.mxu0 %v7549
        %v7551 = vand.u32 %v5946, 4294901760
        %7552 = vmatprep.subr.mxu0 %v7551
        %v7553 = vand.u32 %v5944, 4294901760
        %7554 = vmatpush1.msra.mxu0 %v7553
        %v7555 = vand.u32 %v5954, 4294901760
        %7556 = vmatprep.subr.mxu0 %v7555
        %v7557 = vand.u32 %v5952, 4294901760
        %7558 = vmatpush1.msra.mxu0 %v7557
        %v7559 = vand.u32 %v5962, 4294901760
        %7560 = vmatprep.subr.mxu0 %v7559
        %v7561 = vand.u32 %v5960, 4294901760
        %7562 = vmatpush1.msra.mxu0 %v7561
        %v7563 = vand.u32 %v5970, 4294901760
        %7564 = vmatprep.subr.mxu0 %v7563
        %v7565 = vand.u32 %v5968, 4294901760
        %7566 = vmatpush1.msra.mxu0 %v7565
        %v7567 = vand.u32 %v5978, 4294901760
        %7568 = vmatprep.subr.mxu0 %v7567
        %v7569 = vand.u32 %v5976, 4294901760
        %7570 = vmatpush1.msra.mxu0 %v7569
        %v7571 = vand.u32 %v5986, 4294901760
        %7572 = vmatprep.subr.mxu0 %v7571
        %v7573 = vand.u32 %v5984, 4294901760
        %7574 = vmatpush1.msra.mxu0 %v7573
        %v7575 = vand.u32 %v5994, 4294901760
        %7576 = vmatprep.subr.mxu0 %v7575
        %v7577 = vand.u32 %v5992, 4294901760
        %7578 = vmatpush1.msra.mxu0 %v7577
        %v7579 = vand.u32 %v6002, 4294901760
        %7580 = vmatprep.subr.mxu0 %v7579
        %v7581 = vand.u32 %v6000, 4294901760
        %7582 = vmatpush1.msra.mxu0 %v7581
        %v7583 = vand.u32 %v6010, 4294901760
        %7584 = vmatprep.subr.mxu0 %v7583
        %v7585 = vand.u32 %v6008, 4294901760
        %7586 = vmatpush1.msra.mxu0 %v7585
        %v7587 = vand.u32 %v6018, 4294901760
        %7588 = vmatprep.subr.mxu0 %v7587
        %v7589 = vand.u32 %v6016, 4294901760
        %7590 = vmatpush1.msra.mxu0 %v7589
        %v7591 = vand.u32 %v6026, 4294901760
        %7592 = vmatprep.subr.mxu0 %v7591
        %v7593 = vand.u32 %v6024, 4294901760
        %7594 = vmatpush1.msra.mxu0 %v7593
        %v7595 = vand.u32 %v6034, 4294901760
        %7596 = vmatprep.subr.mxu0 %v7595
        %v7597 = vand.u32 %v6032, 4294901760
        %7598 = vmatpush1.msra.mxu0 %v7597
        %v7599 = vand.u32 %v6042, 4294901760
        %7600 = vmatprep.subr.mxu0 %v7599
        %v7601 = vand.u32 %v6040, 4294901760
        %7602 = vmatpush1.msra.mxu0 %v7601
        %v7603 = vand.u32 %v6050, 4294901760
        %7604 = vmatprep.subr.mxu0 %v7603
        %v7605 = vand.u32 %v6048, 4294901760
        %7606 = vmatpush1.msra.mxu0 %v7605
        %v7607 = vand.u32 %v6058, 4294901760
        %7608 = vmatprep.subr.mxu0 %v7607
        %v7609 = vand.u32 %v6056, 4294901760
        %7610 = vmatpush1.msra.mxu0 %v7609
        %v7611 = vand.u32 %v6066, 4294901760
        %7612 = vmatprep.subr.mxu0 %v7611
        %v7613 = vand.u32 %v6064, 4294901760
        %7614 = vmatpush1.msra.mxu0 %v7613
        %v7615 = vand.u32 %v6074, 4294901760
        %7616 = vmatprep.subr.mxu0 %v7615
        %v7617 = vand.u32 %v6072, 4294901760
        %7618 = vmatpush1.msra.mxu0 %v7617
        %v7619 = vand.u32 %v6082, 4294901760
        %7620 = vmatprep.subr.mxu0 %v7619
        %v7621 = vand.u32 %v6080, 4294901760
        %7622 = vmatpush1.msra.mxu0 %v7621
        %v7623 = vand.u32 %v6090, 4294901760
        %7624 = vmatprep.subr.mxu0 %v7623
        %v7625 = vand.u32 %v6088, 4294901760
        %7626 = vmatpush1.msra.mxu0 %v7625
        %v7627 = vand.u32 %v6098, 4294901760
        %7628 = vmatprep.subr.mxu0 %v7627
        %v7629 = vand.u32 %v6096, 4294901760
        %7630 = vmatpush1.msra.mxu0 %v7629
        %v7631 = vand.u32 %v6106, 4294901760
        %7632 = vmatprep.subr.mxu0 %v7631
        %v7633 = vand.u32 %v6104, 4294901760
        %7634 = vmatpush1.msra.mxu0 %v7633
        %v7635 = vand.u32 %v6114, 4294901760
        %7636 = vmatprep.subr.mxu0 %v7635
        %v7637 = vand.u32 %v6112, 4294901760
        %7638 = vmatpush1.msra.mxu0 %v7637
        %v7639 = vand.u32 %v6122, 4294901760
        %7640 = vmatprep.subr.mxu0 %v7639
        %v7641 = vand.u32 %v6120, 4294901760
        %7642 = vmatpush1.msra.mxu0 %v7641
        %v7643 = vand.u32 %v6130, 4294901760
        %7644 = vmatprep.subr.mxu0 %v7643
        %v7645 = vand.u32 %v6128, 4294901760
        %7646 = vmatpush1.msra.mxu0 %v7645
        %v7647 = vand.u32 %v6138, 4294901760
        %7648 = vmatprep.subr.mxu0 %v7647
        %v7649 = vand.u32 %v6136, 4294901760
        %7650 = vmatpush1.msra.mxu0 %v7649
        %v7651 = vand.u32 %v6146, 4294901760
        %7652 = vmatprep.subr.mxu0 %v7651
        %v7653 = vand.u32 %v6144, 4294901760
        %7654 = vmatpush1.msra.mxu0 %v7653
        %v7655 = vand.u32 %v6154, 4294901760
        %7656 = vmatprep.subr.mxu0 %v7655
        %v7657 = vand.u32 %v6152, 4294901760
        %7658 = vmatpush1.msra.mxu0 %v7657
        %v7659 = vand.u32 %v6162, 4294901760
        %7660 = vmatprep.subr.mxu0 %v7659
        %v7661 = vand.u32 %v6160, 4294901760
        %7662 = vmatpush1.msra.mxu0 %v7661
        %v7663 = vand.u32 %v6386, 4294901760
        %7664 = vmatprep.mubr.f32.mxu0 %v7663
        %v7665 = vand.u32 %v1432, 4294901760
        %7666 = vmatmul.mubr.f32.gmra.mrb[0].mxu0 %v7665
        %v7667 = vpop.f32.mrb[0].mxu0
        %v7668 = vadd.f32 %v7531, %v7667
        %v7669 = vpop.f32.mrb[0].mxu0
        %v7670 = vadd.f32 %v7533, %v7669
        %7671 = vdwg.mxu0
        %v7672 = vand.u32 %v5918, 4294901760
        %7673 = vmatprep.subr.mxu0 %v7672
        %v7674 = vand.u32 %v5916, 4294901760
        %7675 = vmatpush1.msra.mxu0 %v7674
        %v7676 = vand.u32 %v5926, 4294901760
        %7677 = vmatprep.subr.mxu0 %v7676
        %v7678 = vand.u32 %v5924, 4294901760
        %7679 = vmatpush1.msra.mxu0 %v7678
        %v7680 = vand.u32 %v5934, 4294901760
        %7681 = vmatprep.subr.mxu0 %v7680
        %v7682 = vand.u32 %v5932, 4294901760
        %7683 = vmatpush1.msra.mxu0 %v7682
        %v7684 = vand.u32 %v5942, 4294901760
        %7685 = vmatprep.subr.mxu0 %v7684
        %v7686 = vand.u32 %v5940, 4294901760
        %7687 = vmatpush1.msra.mxu0 %v7686
        %v7688 = vand.u32 %v5950, 4294901760
        %7689 = vmatprep.subr.mxu0 %v7688
        %v7690 = vand.u32 %v5948, 4294901760
        %7691 = vmatpush1.msra.mxu0 %v7690
        %v7692 = vand.u32 %v5958, 4294901760
        %7693 = vmatprep.subr.mxu0 %v7692
        %v7694 = vand.u32 %v5956, 4294901760
        %7695 = vmatpush1.msra.mxu0 %v7694
        %v7696 = vand.u32 %v5966, 4294901760
        %7697 = vmatprep.subr.mxu0 %v7696
        %v7698 = vand.u32 %v5964, 4294901760
        %7699 = vmatpush1.msra.mxu0 %v7698
        %v7700 = vand.u32 %v5974, 4294901760
        %7701 = vmatprep.subr.mxu0 %v7700
        %v7702 = vand.u32 %v5972, 4294901760
        %7703 = vmatpush1.msra.mxu0 %v7702
        %v7704 = vand.u32 %v5982, 4294901760
        %7705 = vmatprep.subr.mxu0 %v7704
        %v7706 = vand.u32 %v5980, 4294901760
        %7707 = vmatpush1.msra.mxu0 %v7706
        %v7708 = vand.u32 %v5990, 4294901760
        %7709 = vmatprep.subr.mxu0 %v7708
        %v7710 = vand.u32 %v5988, 4294901760
        %7711 = vmatpush1.msra.mxu0 %v7710
        %v7712 = vand.u32 %v5998, 4294901760
        %7713 = vmatprep.subr.mxu0 %v7712
        %v7714 = vand.u32 %v5996, 4294901760
        %7715 = vmatpush1.msra.mxu0 %v7714
        %v7716 = vand.u32 %v6006, 4294901760
        %7717 = vmatprep.subr.mxu0 %v7716
        %v7718 = vand.u32 %v6004, 4294901760
        %7719 = vmatpush1.msra.mxu0 %v7718
        %v7720 = vand.u32 %v6014, 4294901760
        %7721 = vmatprep.subr.mxu0 %v7720
        %v7722 = vand.u32 %v6012, 4294901760
        %7723 = vmatpush1.msra.mxu0 %v7722
        %v7724 = vand.u32 %v6022, 4294901760
        %7725 = vmatprep.subr.mxu0 %v7724
        %v7726 = vand.u32 %v6020, 4294901760
        %7727 = vmatpush1.msra.mxu0 %v7726
        %v7728 = vand.u32 %v6030, 4294901760
        %7729 = vmatprep.subr.mxu0 %v7728
        %v7730 = vand.u32 %v6028, 4294901760
        %7731 = vmatpush1.msra.mxu0 %v7730
        %v7732 = vand.u32 %v6038, 4294901760
        %7733 = vmatprep.subr.mxu0 %v7732
        %v7734 = vand.u32 %v6036, 4294901760
        %7735 = vmatpush1.msra.mxu0 %v7734
        %v7736 = vand.u32 %v6046, 4294901760
        %7737 = vmatprep.subr.mxu0 %v7736
        %v7738 = vand.u32 %v6044, 4294901760
        %7739 = vmatpush1.msra.mxu0 %v7738
        %v7740 = vand.u32 %v6054, 4294901760
        %7741 = vmatprep.subr.mxu0 %v7740
        %v7742 = vand.u32 %v6052, 4294901760
        %7743 = vmatpush1.msra.mxu0 %v7742
        %v7744 = vand.u32 %v6062, 4294901760
        %7745 = vmatprep.subr.mxu0 %v7744
        %v7746 = vand.u32 %v6060, 4294901760
        %7747 = vmatpush1.msra.mxu0 %v7746
        %v7748 = vand.u32 %v6070, 4294901760
        %7749 = vmatprep.subr.mxu0 %v7748
        %v7750 = vand.u32 %v6068, 4294901760
        %7751 = vmatpush1.msra.mxu0 %v7750
        %v7752 = vand.u32 %v6078, 4294901760
        %7753 = vmatprep.subr.mxu0 %v7752
        %v7754 = vand.u32 %v6076, 4294901760
        %7755 = vmatpush1.msra.mxu0 %v7754
        %v7756 = vand.u32 %v6086, 4294901760
        %7757 = vmatprep.subr.mxu0 %v7756
        %v7758 = vand.u32 %v6084, 4294901760
        %7759 = vmatpush1.msra.mxu0 %v7758
        %v7760 = vand.u32 %v6094, 4294901760
        %7761 = vmatprep.subr.mxu0 %v7760
        %v7762 = vand.u32 %v6092, 4294901760
        %7763 = vmatpush1.msra.mxu0 %v7762
        %v7764 = vand.u32 %v6102, 4294901760
        %7765 = vmatprep.subr.mxu0 %v7764
        %v7766 = vand.u32 %v6100, 4294901760
        %7767 = vmatpush1.msra.mxu0 %v7766
        %v7768 = vand.u32 %v6110, 4294901760
        %7769 = vmatprep.subr.mxu0 %v7768
        %v7770 = vand.u32 %v6108, 4294901760
        %7771 = vmatpush1.msra.mxu0 %v7770
        %v7772 = vand.u32 %v6118, 4294901760
        %7773 = vmatprep.subr.mxu0 %v7772
        %v7774 = vand.u32 %v6116, 4294901760
        %7775 = vmatpush1.msra.mxu0 %v7774
        %v7776 = vand.u32 %v6126, 4294901760
        %7777 = vmatprep.subr.mxu0 %v7776
        %v7778 = vand.u32 %v6124, 4294901760
        %7779 = vmatpush1.msra.mxu0 %v7778
        %v7780 = vand.u32 %v6134, 4294901760
        %7781 = vmatprep.subr.mxu0 %v7780
        %v7782 = vand.u32 %v6132, 4294901760
        %7783 = vmatpush1.msra.mxu0 %v7782
        %v7784 = vand.u32 %v6142, 4294901760
        %7785 = vmatprep.subr.mxu0 %v7784
        %v7786 = vand.u32 %v6140, 4294901760
        %7787 = vmatpush1.msra.mxu0 %v7786
        %v7788 = vand.u32 %v6150, 4294901760
        %7789 = vmatprep.subr.mxu0 %v7788
        %v7790 = vand.u32 %v6148, 4294901760
        %7791 = vmatpush1.msra.mxu0 %v7790
        %v7792 = vand.u32 %v6158, 4294901760
        %7793 = vmatprep.subr.mxu0 %v7792
        %v7794 = vand.u32 %v6156, 4294901760
        %7795 = vmatpush1.msra.mxu0 %v7794
        %v7796 = vand.u32 %v6166, 4294901760
        %7797 = vmatprep.subr.mxu0 %v7796
        %v7798 = vand.u32 %v6164, 4294901760
        %7799 = vmatpush1.msra.mxu0 %v7798
        %v7800 = vand.u32 %v6386, 4294901760
        %v7801 = vsub.f32 %v6386, %v7800
        %v7802 = vand.u32 %v7801, 4294901760
        %v7803 = vsub.f32 %v7801, %v7802
        %v7804 = vand.u32 %v7803, 4294901760
        %7805 = vmatprep.mubr.f32.mxu0 %v7804
        %v7806 = vand.u32 %v1432, 4294901760
        %v7807 = vsub.f32 %v1432, %v7806
        %v7808 = vand.u32 %v7807, 4294901760
        %v7809 = vsub.f32 %v7807, %v7808
        %v7810 = vand.u32 %v7809, 4294901760
        %7811 = vmatmul.mubr.f32.gmra.mrb[0].mxu0 %v7810
        %v7812 = vpop.f32.mrb[0].mxu0
        %v7813 = vadd.f32 0.0, %v7812
        %v7814 = vpop.f32.mrb[0].mxu0
        %v7815 = vadd.f32 0.0, %v7814
        %7816 = vdwg.mxu0
        %v7817 = vand.u32 %v5918, 4294901760
        %v7818 = vsub.f32 %v5918, %v7817
        %v7819 = vand.u32 %v7818, 4294901760
        %v7820 = vsub.f32 %v7818, %v7819
        %v7821 = vand.u32 %v7820, 4294901760
        %7822 = vmatprep.subr.mxu0 %v7821
        %v7823 = vand.u32 %v5916, 4294901760
        %v7824 = vsub.f32 %v5916, %v7823
        %v7825 = vand.u32 %v7824, 4294901760
        %v7826 = vsub.f32 %v7824, %v7825
        %v7827 = vand.u32 %v7826, 4294901760
        %7828 = vmatpush1.msra.mxu0 %v7827
        %v7829 = vand.u32 %v5926, 4294901760
        %v7830 = vsub.f32 %v5926, %v7829
        %v7831 = vand.u32 %v7830, 4294901760
        %v7832 = vsub.f32 %v7830, %v7831
        %v7833 = vand.u32 %v7832, 4294901760
        %7834 = vmatprep.subr.mxu0 %v7833
        %v7835 = vand.u32 %v5924, 4294901760
        %v7836 = vsub.f32 %v5924, %v7835
        %v7837 = vand.u32 %v7836, 4294901760
        %v7838 = vsub.f32 %v7836, %v7837
        %v7839 = vand.u32 %v7838, 4294901760
        %7840 = vmatpush1.msra.mxu0 %v7839
        %v7841 = vand.u32 %v5934, 4294901760
        %v7842 = vsub.f32 %v5934, %v7841
        %v7843 = vand.u32 %v7842, 4294901760
        %v7844 = vsub.f32 %v7842, %v7843
        %v7845 = vand.u32 %v7844, 4294901760
        %7846 = vmatprep.subr.mxu0 %v7845
        %v7847 = vand.u32 %v5932, 4294901760
        %v7848 = vsub.f32 %v5932, %v7847
        %v7849 = vand.u32 %v7848, 4294901760
        %v7850 = vsub.f32 %v7848, %v7849
        %v7851 = vand.u32 %v7850, 4294901760
        %7852 = vmatpush1.msra.mxu0 %v7851
        %v7853 = vand.u32 %v5942, 4294901760
        %v7854 = vsub.f32 %v5942, %v7853
        %v7855 = vand.u32 %v7854, 4294901760
        %v7856 = vsub.f32 %v7854, %v7855
        %v7857 = vand.u32 %v7856, 4294901760
        %7858 = vmatprep.subr.mxu0 %v7857
        %v7859 = vand.u32 %v5940, 4294901760
        %v7860 = vsub.f32 %v5940, %v7859
        %v7861 = vand.u32 %v7860, 4294901760
        %v7862 = vsub.f32 %v7860, %v7861
        %v7863 = vand.u32 %v7862, 4294901760
        %7864 = vmatpush1.msra.mxu0 %v7863
        %v7865 = vand.u32 %v5950, 4294901760
        %v7866 = vsub.f32 %v5950, %v7865
        %v7867 = vand.u32 %v7866, 4294901760
        %v7868 = vsub.f32 %v7866, %v7867
        %v7869 = vand.u32 %v7868, 4294901760
        %7870 = vmatprep.subr.mxu0 %v7869
        %v7871 = vand.u32 %v5948, 4294901760
        %v7872 = vsub.f32 %v5948, %v7871
        %v7873 = vand.u32 %v7872, 4294901760
        %v7874 = vsub.f32 %v7872, %v7873
        %v7875 = vand.u32 %v7874, 4294901760
        %7876 = vmatpush1.msra.mxu0 %v7875
        %v7877 = vand.u32 %v5958, 4294901760
        %v7878 = vsub.f32 %v5958, %v7877
        %v7879 = vand.u32 %v7878, 4294901760
        %v7880 = vsub.f32 %v7878, %v7879
        %v7881 = vand.u32 %v7880, 4294901760
        %7882 = vmatprep.subr.mxu0 %v7881
        %v7883 = vand.u32 %v5956, 4294901760
        %v7884 = vsub.f32 %v5956, %v7883
        %v7885 = vand.u32 %v7884, 4294901760
        %v7886 = vsub.f32 %v7884, %v7885
        %v7887 = vand.u32 %v7886, 4294901760
        %7888 = vmatpush1.msra.mxu0 %v7887
        %v7889 = vand.u32 %v5966, 4294901760
        %v7890 = vsub.f32 %v5966, %v7889
        %v7891 = vand.u32 %v7890, 4294901760
        %v7892 = vsub.f32 %v7890, %v7891
        %v7893 = vand.u32 %v7892, 4294901760
        %7894 = vmatprep.subr.mxu0 %v7893
        %v7895 = vand.u32 %v5964, 4294901760
        %v7896 = vsub.f32 %v5964, %v7895
        %v7897 = vand.u32 %v7896, 4294901760
        %v7898 = vsub.f32 %v7896, %v7897
        %v7899 = vand.u32 %v7898, 4294901760
        %7900 = vmatpush1.msra.mxu0 %v7899
        %v7901 = vand.u32 %v5974, 4294901760
        %v7902 = vsub.f32 %v5974, %v7901
        %v7903 = vand.u32 %v7902, 4294901760
        %v7904 = vsub.f32 %v7902, %v7903
        %v7905 = vand.u32 %v7904, 4294901760
        %7906 = vmatprep.subr.mxu0 %v7905
        %v7907 = vand.u32 %v5972, 4294901760
        %v7908 = vsub.f32 %v5972, %v7907
        %v7909 = vand.u32 %v7908, 4294901760
        %v7910 = vsub.f32 %v7908, %v7909
        %v7911 = vand.u32 %v7910, 4294901760
        %7912 = vmatpush1.msra.mxu0 %v7911
        %v7913 = vand.u32 %v5982, 4294901760
        %v7914 = vsub.f32 %v5982, %v7913
        %v7915 = vand.u32 %v7914, 4294901760
        %v7916 = vsub.f32 %v7914, %v7915
        %v7917 = vand.u32 %v7916, 4294901760
        %7918 = vmatprep.subr.mxu0 %v7917
        %v7919 = vand.u32 %v5980, 4294901760
        %v7920 = vsub.f32 %v5980, %v7919
        %v7921 = vand.u32 %v7920, 4294901760
        %v7922 = vsub.f32 %v7920, %v7921
        %v7923 = vand.u32 %v7922, 4294901760
        %7924 = vmatpush1.msra.mxu0 %v7923
        %v7925 = vand.u32 %v5990, 4294901760
        %v7926 = vsub.f32 %v5990, %v7925
        %v7927 = vand.u32 %v7926, 4294901760
        %v7928 = vsub.f32 %v7926, %v7927
        %v7929 = vand.u32 %v7928, 4294901760
        %7930 = vmatprep.subr.mxu0 %v7929
        %v7931 = vand.u32 %v5988, 4294901760
        %v7932 = vsub.f32 %v5988, %v7931
        %v7933 = vand.u32 %v7932, 4294901760
        %v7934 = vsub.f32 %v7932, %v7933
        %v7935 = vand.u32 %v7934, 4294901760
        %7936 = vmatpush1.msra.mxu0 %v7935
        %v7937 = vand.u32 %v5998, 4294901760
        %v7938 = vsub.f32 %v5998, %v7937
        %v7939 = vand.u32 %v7938, 4294901760
        %v7940 = vsub.f32 %v7938, %v7939
        %v7941 = vand.u32 %v7940, 4294901760
        %7942 = vmatprep.subr.mxu0 %v7941
        %v7943 = vand.u32 %v5996, 4294901760
        %v7944 = vsub.f32 %v5996, %v7943
        %v7945 = vand.u32 %v7944, 4294901760
        %v7946 = vsub.f32 %v7944, %v7945
        %v7947 = vand.u32 %v7946, 4294901760
        %7948 = vmatpush1.msra.mxu0 %v7947
        %v7949 = vand.u32 %v6006, 4294901760
        %v7950 = vsub.f32 %v6006, %v7949
        %v7951 = vand.u32 %v7950, 4294901760
        %v7952 = vsub.f32 %v7950, %v7951
        %v7953 = vand.u32 %v7952, 4294901760
        %7954 = vmatprep.subr.mxu0 %v7953
        %v7955 = vand.u32 %v6004, 4294901760
        %v7956 = vsub.f32 %v6004, %v7955
        %v7957 = vand.u32 %v7956, 4294901760
        %v7958 = vsub.f32 %v7956, %v7957
        %v7959 = vand.u32 %v7958, 4294901760
        %7960 = vmatpush1.msra.mxu0 %v7959
        %v7961 = vand.u32 %v6014, 4294901760
        %v7962 = vsub.f32 %v6014, %v7961
        %v7963 = vand.u32 %v7962, 4294901760
        %v7964 = vsub.f32 %v7962, %v7963
        %v7965 = vand.u32 %v7964, 4294901760
        %7966 = vmatprep.subr.mxu0 %v7965
        %v7967 = vand.u32 %v6012, 4294901760
        %v7968 = vsub.f32 %v6012, %v7967
        %v7969 = vand.u32 %v7968, 4294901760
        %v7970 = vsub.f32 %v7968, %v7969
        %v7971 = vand.u32 %v7970, 4294901760
        %7972 = vmatpush1.msra.mxu0 %v7971
        %v7973 = vand.u32 %v6022, 4294901760
        %v7974 = vsub.f32 %v6022, %v7973
        %v7975 = vand.u32 %v7974, 4294901760
        %v7976 = vsub.f32 %v7974, %v7975
        %v7977 = vand.u32 %v7976, 4294901760
        %7978 = vmatprep.subr.mxu0 %v7977
        %v7979 = vand.u32 %v6020, 4294901760
        %v7980 = vsub.f32 %v6020, %v7979
        %v7981 = vand.u32 %v7980, 4294901760
        %v7982 = vsub.f32 %v7980, %v7981
        %v7983 = vand.u32 %v7982, 4294901760
        %7984 = vmatpush1.msra.mxu0 %v7983
        %v7985 = vand.u32 %v6030, 4294901760
        %v7986 = vsub.f32 %v6030, %v7985
        %v7987 = vand.u32 %v7986, 4294901760
        %v7988 = vsub.f32 %v7986, %v7987
        %v7989 = vand.u32 %v7988, 4294901760
        %7990 = vmatprep.subr.mxu0 %v7989
        %v7991 = vand.u32 %v6028, 4294901760
        %v7992 = vsub.f32 %v6028, %v7991
        %v7993 = vand.u32 %v7992, 4294901760
        %v7994 = vsub.f32 %v7992, %v7993
        %v7995 = vand.u32 %v7994, 4294901760
        %7996 = vmatpush1.msra.mxu0 %v7995
        %v7997 = vand.u32 %v6038, 4294901760
        %v7998 = vsub.f32 %v6038, %v7997
        %v7999 = vand.u32 %v7998, 4294901760
        %v8000 = vsub.f32 %v7998, %v7999
        %v8001 = vand.u32 %v8000, 4294901760
        %8002 = vmatprep.subr.mxu0 %v8001
        %v8003 = vand.u32 %v6036, 4294901760
        %v8004 = vsub.f32 %v6036, %v8003
        %v8005 = vand.u32 %v8004, 4294901760
        %v8006 = vsub.f32 %v8004, %v8005
        %v8007 = vand.u32 %v8006, 4294901760
        %8008 = vmatpush1.msra.mxu0 %v8007
        %v8009 = vand.u32 %v6046, 4294901760
        %v8010 = vsub.f32 %v6046, %v8009
        %v8011 = vand.u32 %v8010, 4294901760
        %v8012 = vsub.f32 %v8010, %v8011
        %v8013 = vand.u32 %v8012, 4294901760
        %8014 = vmatprep.subr.mxu0 %v8013
        %v8015 = vand.u32 %v6044, 4294901760
        %v8016 = vsub.f32 %v6044, %v8015
        %v8017 = vand.u32 %v8016, 4294901760
        %v8018 = vsub.f32 %v8016, %v8017
        %v8019 = vand.u32 %v8018, 4294901760
        %8020 = vmatpush1.msra.mxu0 %v8019
        %v8021 = vand.u32 %v6054, 4294901760
        %v8022 = vsub.f32 %v6054, %v8021
        %v8023 = vand.u32 %v8022, 4294901760
        %v8024 = vsub.f32 %v8022, %v8023
        %v8025 = vand.u32 %v8024, 4294901760
        %8026 = vmatprep.subr.mxu0 %v8025
        %v8027 = vand.u32 %v6052, 4294901760
        %v8028 = vsub.f32 %v6052, %v8027
        %v8029 = vand.u32 %v8028, 4294901760
        %v8030 = vsub.f32 %v8028, %v8029
        %v8031 = vand.u32 %v8030, 4294901760
        %8032 = vmatpush1.msra.mxu0 %v8031
        %v8033 = vand.u32 %v6062, 4294901760
        %v8034 = vsub.f32 %v6062, %v8033
        %v8035 = vand.u32 %v8034, 4294901760
        %v8036 = vsub.f32 %v8034, %v8035
        %v8037 = vand.u32 %v8036, 4294901760
        %8038 = vmatprep.subr.mxu0 %v8037
        %v8039 = vand.u32 %v6060, 4294901760
        %v8040 = vsub.f32 %v6060, %v8039
        %v8041 = vand.u32 %v8040, 4294901760
        %v8042 = vsub.f32 %v8040, %v8041
        %v8043 = vand.u32 %v8042, 4294901760
        %8044 = vmatpush1.msra.mxu0 %v8043
        %v8045 = vand.u32 %v6070, 4294901760
        %v8046 = vsub.f32 %v6070, %v8045
        %v8047 = vand.u32 %v8046, 4294901760
        %v8048 = vsub.f32 %v8046, %v8047
        %v8049 = vand.u32 %v8048, 4294901760
        %8050 = vmatprep.subr.mxu0 %v8049
        %v8051 = vand.u32 %v6068, 4294901760
        %v8052 = vsub.f32 %v6068, %v8051
        %v8053 = vand.u32 %v8052, 4294901760
        %v8054 = vsub.f32 %v8052, %v8053
        %v8055 = vand.u32 %v8054, 4294901760
        %8056 = vmatpush1.msra.mxu0 %v8055
        %v8057 = vand.u32 %v6078, 4294901760
        %v8058 = vsub.f32 %v6078, %v8057
        %v8059 = vand.u32 %v8058, 4294901760
        %v8060 = vsub.f32 %v8058, %v8059
        %v8061 = vand.u32 %v8060, 4294901760
        %8062 = vmatprep.subr.mxu0 %v8061
        %v8063 = vand.u32 %v6076, 4294901760
        %v8064 = vsub.f32 %v6076, %v8063
        %v8065 = vand.u32 %v8064, 4294901760
        %v8066 = vsub.f32 %v8064, %v8065
        %v8067 = vand.u32 %v8066, 4294901760
        %8068 = vmatpush1.msra.mxu0 %v8067
        %v8069 = vand.u32 %v6086, 4294901760
        %v8070 = vsub.f32 %v6086, %v8069
        %v8071 = vand.u32 %v8070, 4294901760
        %v8072 = vsub.f32 %v8070, %v8071
        %v8073 = vand.u32 %v8072, 4294901760
        %8074 = vmatprep.subr.mxu0 %v8073
        %v8075 = vand.u32 %v6084, 4294901760
        %v8076 = vsub.f32 %v6084, %v8075
        %v8077 = vand.u32 %v8076, 4294901760
        %v8078 = vsub.f32 %v8076, %v8077
        %v8079 = vand.u32 %v8078, 4294901760
        %8080 = vmatpush1.msra.mxu0 %v8079
        %v8081 = vand.u32 %v6094, 4294901760
        %v8082 = vsub.f32 %v6094, %v8081
        %v8083 = vand.u32 %v8082, 4294901760
        %v8084 = vsub.f32 %v8082, %v8083
        %v8085 = vand.u32 %v8084, 4294901760
        %8086 = vmatprep.subr.mxu0 %v8085
        %v8087 = vand.u32 %v6092, 4294901760
        %v8088 = vsub.f32 %v6092, %v8087
        %v8089 = vand.u32 %v8088, 4294901760
        %v8090 = vsub.f32 %v8088, %v8089
        %v8091 = vand.u32 %v8090, 4294901760
        %8092 = vmatpush1.msra.mxu0 %v8091
        %v8093 = vand.u32 %v6102, 4294901760
        %v8094 = vsub.f32 %v6102, %v8093
        %v8095 = vand.u32 %v8094, 4294901760
        %v8096 = vsub.f32 %v8094, %v8095
        %v8097 = vand.u32 %v8096, 4294901760
        %8098 = vmatprep.subr.mxu0 %v8097
        %v8099 = vand.u32 %v6100, 4294901760
        %v8100 = vsub.f32 %v6100, %v8099
        %v8101 = vand.u32 %v8100, 4294901760
        %v8102 = vsub.f32 %v8100, %v8101
        %v8103 = vand.u32 %v8102, 4294901760
        %8104 = vmatpush1.msra.mxu0 %v8103
        %v8105 = vand.u32 %v6110, 4294901760
        %v8106 = vsub.f32 %v6110, %v8105
        %v8107 = vand.u32 %v8106, 4294901760
        %v8108 = vsub.f32 %v8106, %v8107
        %v8109 = vand.u32 %v8108, 4294901760
        %8110 = vmatprep.subr.mxu0 %v8109
        %v8111 = vand.u32 %v6108, 4294901760
        %v8112 = vsub.f32 %v6108, %v8111
        %v8113 = vand.u32 %v8112, 4294901760
        %v8114 = vsub.f32 %v8112, %v8113
        %v8115 = vand.u32 %v8114, 4294901760
        %8116 = vmatpush1.msra.mxu0 %v8115
        %v8117 = vand.u32 %v6118, 4294901760
        %v8118 = vsub.f32 %v6118, %v8117
        %v8119 = vand.u32 %v8118, 4294901760
        %v8120 = vsub.f32 %v8118, %v8119
        %v8121 = vand.u32 %v8120, 4294901760
        %8122 = vmatprep.subr.mxu0 %v8121
        %v8123 = vand.u32 %v6116, 4294901760
        %v8124 = vsub.f32 %v6116, %v8123
        %v8125 = vand.u32 %v8124, 4294901760
        %v8126 = vsub.f32 %v8124, %v8125
        %v8127 = vand.u32 %v8126, 4294901760
        %8128 = vmatpush1.msra.mxu0 %v8127
        %v8129 = vand.u32 %v6126, 4294901760
        %v8130 = vsub.f32 %v6126, %v8129
        %v8131 = vand.u32 %v8130, 4294901760
        %v8132 = vsub.f32 %v8130, %v8131
        %v8133 = vand.u32 %v8132, 4294901760
        %8134 = vmatprep.subr.mxu0 %v8133
        %v8135 = vand.u32 %v6124, 4294901760
        %v8136 = vsub.f32 %v6124, %v8135
        %v8137 = vand.u32 %v8136, 4294901760
        %v8138 = vsub.f32 %v8136, %v8137
        %v8139 = vand.u32 %v8138, 4294901760
        %8140 = vmatpush1.msra.mxu0 %v8139
        %v8141 = vand.u32 %v6134, 4294901760
        %v8142 = vsub.f32 %v6134, %v8141
        %v8143 = vand.u32 %v8142, 4294901760
        %v8144 = vsub.f32 %v8142, %v8143
        %v8145 = vand.u32 %v8144, 4294901760
        %8146 = vmatprep.subr.mxu0 %v8145
        %v8147 = vand.u32 %v6132, 4294901760
        %v8148 = vsub.f32 %v6132, %v8147
        %v8149 = vand.u32 %v8148, 4294901760
        %v8150 = vsub.f32 %v8148, %v8149
        %v8151 = vand.u32 %v8150, 4294901760
        %8152 = vmatpush1.msra.mxu0 %v8151
        %v8153 = vand.u32 %v6142, 4294901760
        %v8154 = vsub.f32 %v6142, %v8153
        %v8155 = vand.u32 %v8154, 4294901760
        %v8156 = vsub.f32 %v8154, %v8155
        %v8157 = vand.u32 %v8156, 4294901760
        %8158 = vmatprep.subr.mxu0 %v8157
        %v8159 = vand.u32 %v6140, 4294901760
        %v8160 = vsub.f32 %v6140, %v8159
        %v8161 = vand.u32 %v8160, 4294901760
        %v8162 = vsub.f32 %v8160, %v8161
        %v8163 = vand.u32 %v8162, 4294901760
        %8164 = vmatpush1.msra.mxu0 %v8163
        %v8165 = vand.u32 %v6150, 4294901760
        %v8166 = vsub.f32 %v6150, %v8165
        %v8167 = vand.u32 %v8166, 4294901760
        %v8168 = vsub.f32 %v8166, %v8167
        %v8169 = vand.u32 %v8168, 4294901760
        %8170 = vmatprep.subr.mxu0 %v8169
        %v8171 = vand.u32 %v6148, 4294901760
        %v8172 = vsub.f32 %v6148, %v8171
        %v8173 = vand.u32 %v8172, 4294901760
        %v8174 = vsub.f32 %v8172, %v8173
        %v8175 = vand.u32 %v8174, 4294901760
        %8176 = vmatpush1.msra.mxu0 %v8175
        %v8177 = vand.u32 %v6158, 4294901760
        %v8178 = vsub.f32 %v6158, %v8177
        %v8179 = vand.u32 %v8178, 4294901760
        %v8180 = vsub.f32 %v8178, %v8179
        %v8181 = vand.u32 %v8180, 4294901760
        %8182 = vmatprep.subr.mxu0 %v8181
        %v8183 = vand.u32 %v6156, 4294901760
        %v8184 = vsub.f32 %v6156, %v8183
        %v8185 = vand.u32 %v8184, 4294901760
        %v8186 = vsub.f32 %v8184, %v8185
        %v8187 = vand.u32 %v8186, 4294901760
        %8188 = vmatpush1.msra.mxu0 %v8187
        %v8189 = vand.u32 %v6166, 4294901760
        %v8190 = vsub.f32 %v6166, %v8189
        %v8191 = vand.u32 %v8190, 4294901760
        %v8192 = vsub.f32 %v8190, %v8191
        %v8193 = vand.u32 %v8192, 4294901760
        %8194 = vmatprep.subr.mxu0 %v8193
        %v8195 = vand.u32 %v6164, 4294901760
        %v8196 = vsub.f32 %v6164, %v8195
        %v8197 = vand.u32 %v8196, 4294901760
        %v8198 = vsub.f32 %v8196, %v8197
        %v8199 = vand.u32 %v8198, 4294901760
        %8200 = vmatpush1.msra.mxu0 %v8199
        %v8201 = vand.u32 %v6386, 4294901760
        %8202 = vmatprep.mubr.f32.mxu0 %v8201
        %v8203 = vand.u32 %v1432, 4294901760
        %8204 = vmatmul.mubr.f32.gmra.mrb[0].mxu0 %v8203
        %v8205 = vpop.f32.mrb[0].mxu0
        %v8206 = vadd.f32 %v7813, %v8205
        %v8207 = vpop.f32.mrb[0].mxu0
        %v8208 = vadd.f32 %v7815, %v8207
        %8209 = vdwg.mxu0
        %v8210 = vand.u32 %v5918, 4294901760
        %v8211 = vsub.f32 %v5918, %v8210
        %8212 = vmatprep.subr.mxu0 %v8211
        %v8213 = vand.u32 %v5916, 4294901760
        %v8214 = vsub.f32 %v5916, %v8213
        %8215 = vmatpush1.msra.mxu0 %v8214
        %v8216 = vand.u32 %v5926, 4294901760
        %v8217 = vsub.f32 %v5926, %v8216
        %8218 = vmatprep.subr.mxu0 %v8217
        %v8219 = vand.u32 %v5924, 4294901760
        %v8220 = vsub.f32 %v5924, %v8219
        %8221 = vmatpush1.msra.mxu0 %v8220
        %v8222 = vand.u32 %v5934, 4294901760
        %v8223 = vsub.f32 %v5934, %v8222
        %8224 = vmatprep.subr.mxu0 %v8223
        %v8225 = vand.u32 %v5932, 4294901760
        %v8226 = vsub.f32 %v5932, %v8225
        %8227 = vmatpush1.msra.mxu0 %v8226
        %v8228 = vand.u32 %v5942, 4294901760
        %v8229 = vsub.f32 %v5942, %v8228
        %8230 = vmatprep.subr.mxu0 %v8229
        %v8231 = vand.u32 %v5940, 4294901760
        %v8232 = vsub.f32 %v5940, %v8231
        %8233 = vmatpush1.msra.mxu0 %v8232
        %v8234 = vand.u32 %v5950, 4294901760
        %v8235 = vsub.f32 %v5950, %v8234
        %8236 = vmatprep.subr.mxu0 %v8235
        %v8237 = vand.u32 %v5948, 4294901760
        %v8238 = vsub.f32 %v5948, %v8237
        %8239 = vmatpush1.msra.mxu0 %v8238
        %v8240 = vand.u32 %v5958, 4294901760
        %v8241 = vsub.f32 %v5958, %v8240
        %8242 = vmatprep.subr.mxu0 %v8241
        %v8243 = vand.u32 %v5956, 4294901760
        %v8244 = vsub.f32 %v5956, %v8243
        %8245 = vmatpush1.msra.mxu0 %v8244
        %v8246 = vand.u32 %v5966, 4294901760
        %v8247 = vsub.f32 %v5966, %v8246
        %8248 = vmatprep.subr.mxu0 %v8247
        %v8249 = vand.u32 %v5964, 4294901760
        %v8250 = vsub.f32 %v5964, %v8249
        %8251 = vmatpush1.msra.mxu0 %v8250
        %v8252 = vand.u32 %v5974, 4294901760
        %v8253 = vsub.f32 %v5974, %v8252
        %8254 = vmatprep.subr.mxu0 %v8253
        %v8255 = vand.u32 %v5972, 4294901760
        %v8256 = vsub.f32 %v5972, %v8255
        %8257 = vmatpush1.msra.mxu0 %v8256
        %v8258 = vand.u32 %v5982, 4294901760
        %v8259 = vsub.f32 %v5982, %v8258
        %8260 = vmatprep.subr.mxu0 %v8259
        %v8261 = vand.u32 %v5980, 4294901760
        %v8262 = vsub.f32 %v5980, %v8261
        %8263 = vmatpush1.msra.mxu0 %v8262
        %v8264 = vand.u32 %v5990, 4294901760
        %v8265 = vsub.f32 %v5990, %v8264
        %8266 = vmatprep.subr.mxu0 %v8265
        %v8267 = vand.u32 %v5988, 4294901760
        %v8268 = vsub.f32 %v5988, %v8267
        %8269 = vmatpush1.msra.mxu0 %v8268
        %v8270 = vand.u32 %v5998, 4294901760
        %v8271 = vsub.f32 %v5998, %v8270
        %8272 = vmatprep.subr.mxu0 %v8271
        %v8273 = vand.u32 %v5996, 4294901760
        %v8274 = vsub.f32 %v5996, %v8273
        %8275 = vmatpush1.msra.mxu0 %v8274
        %v8276 = vand.u32 %v6006, 4294901760
        %v8277 = vsub.f32 %v6006, %v8276
        %8278 = vmatprep.subr.mxu0 %v8277
        %v8279 = vand.u32 %v6004, 4294901760
        %v8280 = vsub.f32 %v6004, %v8279
        %8281 = vmatpush1.msra.mxu0 %v8280
        %v8282 = vand.u32 %v6014, 4294901760
        %v8283 = vsub.f32 %v6014, %v8282
        %8284 = vmatprep.subr.mxu0 %v8283
        %v8285 = vand.u32 %v6012, 4294901760
        %v8286 = vsub.f32 %v6012, %v8285
        %8287 = vmatpush1.msra.mxu0 %v8286
        %v8288 = vand.u32 %v6022, 4294901760
        %v8289 = vsub.f32 %v6022, %v8288
        %8290 = vmatprep.subr.mxu0 %v8289
        %v8291 = vand.u32 %v6020, 4294901760
        %v8292 = vsub.f32 %v6020, %v8291
        %8293 = vmatpush1.msra.mxu0 %v8292
        %v8294 = vand.u32 %v6030, 4294901760
        %v8295 = vsub.f32 %v6030, %v8294
        %8296 = vmatprep.subr.mxu0 %v8295
        %v8297 = vand.u32 %v6028, 4294901760
        %v8298 = vsub.f32 %v6028, %v8297
        %8299 = vmatpush1.msra.mxu0 %v8298
        %v8300 = vand.u32 %v6038, 4294901760
        %v8301 = vsub.f32 %v6038, %v8300
        %8302 = vmatprep.subr.mxu0 %v8301
        %v8303 = vand.u32 %v6036, 4294901760
        %v8304 = vsub.f32 %v6036, %v8303
        %8305 = vmatpush1.msra.mxu0 %v8304
        %v8306 = vand.u32 %v6046, 4294901760
        %v8307 = vsub.f32 %v6046, %v8306
        %8308 = vmatprep.subr.mxu0 %v8307
        %v8309 = vand.u32 %v6044, 4294901760
        %v8310 = vsub.f32 %v6044, %v8309
        %8311 = vmatpush1.msra.mxu0 %v8310
        %v8312 = vand.u32 %v6054, 4294901760
        %v8313 = vsub.f32 %v6054, %v8312
        %8314 = vmatprep.subr.mxu0 %v8313
        %v8315 = vand.u32 %v6052, 4294901760
        %v8316 = vsub.f32 %v6052, %v8315
        %8317 = vmatpush1.msra.mxu0 %v8316
        %v8318 = vand.u32 %v6062, 4294901760
        %v8319 = vsub.f32 %v6062, %v8318
        %8320 = vmatprep.subr.mxu0 %v8319
        %v8321 = vand.u32 %v6060, 4294901760
        %v8322 = vsub.f32 %v6060, %v8321
        %8323 = vmatpush1.msra.mxu0 %v8322
        %v8324 = vand.u32 %v6070, 4294901760
        %v8325 = vsub.f32 %v6070, %v8324
        %8326 = vmatprep.subr.mxu0 %v8325
        %v8327 = vand.u32 %v6068, 4294901760
        %v8328 = vsub.f32 %v6068, %v8327
        %8329 = vmatpush1.msra.mxu0 %v8328
        %v8330 = vand.u32 %v6078, 4294901760
        %v8331 = vsub.f32 %v6078, %v8330
        %8332 = vmatprep.subr.mxu0 %v8331
        %v8333 = vand.u32 %v6076, 4294901760
        %v8334 = vsub.f32 %v6076, %v8333
        %8335 = vmatpush1.msra.mxu0 %v8334
        %v8336 = vand.u32 %v6086, 4294901760
        %v8337 = vsub.f32 %v6086, %v8336
        %8338 = vmatprep.subr.mxu0 %v8337
        %v8339 = vand.u32 %v6084, 4294901760
        %v8340 = vsub.f32 %v6084, %v8339
        %8341 = vmatpush1.msra.mxu0 %v8340
        %v8342 = vand.u32 %v6094, 4294901760
        %v8343 = vsub.f32 %v6094, %v8342
        %8344 = vmatprep.subr.mxu0 %v8343
        %v8345 = vand.u32 %v6092, 4294901760
        %v8346 = vsub.f32 %v6092, %v8345
        %8347 = vmatpush1.msra.mxu0 %v8346
        %v8348 = vand.u32 %v6102, 4294901760
        %v8349 = vsub.f32 %v6102, %v8348
        %8350 = vmatprep.subr.mxu0 %v8349
        %v8351 = vand.u32 %v6100, 4294901760
        %v8352 = vsub.f32 %v6100, %v8351
        %8353 = vmatpush1.msra.mxu0 %v8352
        %v8354 = vand.u32 %v6110, 4294901760
        %v8355 = vsub.f32 %v6110, %v8354
        %8356 = vmatprep.subr.mxu0 %v8355
        %v8357 = vand.u32 %v6108, 4294901760
        %v8358 = vsub.f32 %v6108, %v8357
        %8359 = vmatpush1.msra.mxu0 %v8358
        %v8360 = vand.u32 %v6118, 4294901760
        %v8361 = vsub.f32 %v6118, %v8360
        %8362 = vmatprep.subr.mxu0 %v8361
        %v8363 = vand.u32 %v6116, 4294901760
        %v8364 = vsub.f32 %v6116, %v8363
        %8365 = vmatpush1.msra.mxu0 %v8364
        %v8366 = vand.u32 %v6126, 4294901760
        %v8367 = vsub.f32 %v6126, %v8366
        %8368 = vmatprep.subr.mxu0 %v8367
        %v8369 = vand.u32 %v6124, 4294901760
        %v8370 = vsub.f32 %v6124, %v8369
        %8371 = vmatpush1.msra.mxu0 %v8370
        %v8372 = vand.u32 %v6134, 4294901760
        %v8373 = vsub.f32 %v6134, %v8372
        %8374 = vmatprep.subr.mxu0 %v8373
        %v8375 = vand.u32 %v6132, 4294901760
        %v8376 = vsub.f32 %v6132, %v8375
        %8377 = vmatpush1.msra.mxu0 %v8376
        %v8378 = vand.u32 %v6142, 4294901760
        %v8379 = vsub.f32 %v6142, %v8378
        %8380 = vmatprep.subr.mxu0 %v8379
        %v8381 = vand.u32 %v6140, 4294901760
        %v8382 = vsub.f32 %v6140, %v8381
        %8383 = vmatpush1.msra.mxu0 %v8382
        %v8384 = vand.u32 %v6150, 4294901760
        %v8385 = vsub.f32 %v6150, %v8384
        %8386 = vmatprep.subr.mxu0 %v8385
        %v8387 = vand.u32 %v6148, 4294901760
        %v8388 = vsub.f32 %v6148, %v8387
        %8389 = vmatpush1.msra.mxu0 %v8388
        %v8390 = vand.u32 %v6158, 4294901760
        %v8391 = vsub.f32 %v6158, %v8390
        %8392 = vmatprep.subr.mxu0 %v8391
        %v8393 = vand.u32 %v6156, 4294901760
        %v8394 = vsub.f32 %v6156, %v8393
        %8395 = vmatpush1.msra.mxu0 %v8394
        %v8396 = vand.u32 %v6166, 4294901760
        %v8397 = vsub.f32 %v6166, %v8396
        %8398 = vmatprep.subr.mxu0 %v8397
        %v8399 = vand.u32 %v6164, 4294901760
        %v8400 = vsub.f32 %v6164, %v8399
        %8401 = vmatpush1.msra.mxu0 %v8400
        %v8402 = vand.u32 %v6386, 4294901760
        %v8403 = vsub.f32 %v6386, %v8402
        %8404 = vmatprep.mubr.f32.mxu0 %v8403
        %v8405 = vand.u32 %v1432, 4294901760
        %v8406 = vsub.f32 %v1432, %v8405
        %8407 = vmatmul.mubr.f32.gmra.mrb[0].mxu0 %v8406
        %v8408 = vpop.f32.mrb[0].mxu0
        %v8409 = vadd.f32 %v8206, %v8408
        %v8410 = vpop.f32.mrb[0].mxu0
        %v8411 = vadd.f32 %v8208, %v8410
        %8412 = vdwg.mxu0
        %v8413 = vand.u32 %v5918, 4294901760
        %8414 = vmatprep.subr.mxu0 %v8413
        %v8415 = vand.u32 %v5916, 4294901760
        %8416 = vmatpush1.msra.mxu0 %v8415
        %v8417 = vand.u32 %v5926, 4294901760
        %8418 = vmatprep.subr.mxu0 %v8417
        %v8419 = vand.u32 %v5924, 4294901760
        %8420 = vmatpush1.msra.mxu0 %v8419
        %v8421 = vand.u32 %v5934, 4294901760
        %8422 = vmatprep.subr.mxu0 %v8421
        %v8423 = vand.u32 %v5932, 4294901760
        %8424 = vmatpush1.msra.mxu0 %v8423
        %v8425 = vand.u32 %v5942, 4294901760
        %8426 = vmatprep.subr.mxu0 %v8425
        %v8427 = vand.u32 %v5940, 4294901760
        %8428 = vmatpush1.msra.mxu0 %v8427
        %v8429 = vand.u32 %v5950, 4294901760
        %8430 = vmatprep.subr.mxu0 %v8429
        %v8431 = vand.u32 %v5948, 4294901760
        %8432 = vmatpush1.msra.mxu0 %v8431
        %v8433 = vand.u32 %v5958, 4294901760
        %8434 = vmatprep.subr.mxu0 %v8433
        %v8435 = vand.u32 %v5956, 4294901760
        %8436 = vmatpush1.msra.mxu0 %v8435
        %v8437 = vand.u32 %v5966, 4294901760
        %8438 = vmatprep.subr.mxu0 %v8437
        %v8439 = vand.u32 %v5964, 4294901760
        %8440 = vmatpush1.msra.mxu0 %v8439
        %v8441 = vand.u32 %v5974, 4294901760
        %8442 = vmatprep.subr.mxu0 %v8441
        %v8443 = vand.u32 %v5972, 4294901760
        %8444 = vmatpush1.msra.mxu0 %v8443
        %v8445 = vand.u32 %v5982, 4294901760
        %8446 = vmatprep.subr.mxu0 %v8445
        %v8447 = vand.u32 %v5980, 4294901760
        %8448 = vmatpush1.msra.mxu0 %v8447
        %v8449 = vand.u32 %v5990, 4294901760
        %8450 = vmatprep.subr.mxu0 %v8449
        %v8451 = vand.u32 %v5988, 4294901760
        %8452 = vmatpush1.msra.mxu0 %v8451
        %v8453 = vand.u32 %v5998, 4294901760
        %8454 = vmatprep.subr.mxu0 %v8453
        %v8455 = vand.u32 %v5996, 4294901760
        %8456 = vmatpush1.msra.mxu0 %v8455
        %v8457 = vand.u32 %v6006, 4294901760
        %8458 = vmatprep.subr.mxu0 %v8457
        %v8459 = vand.u32 %v6004, 4294901760
        %8460 = vmatpush1.msra.mxu0 %v8459
        %v8461 = vand.u32 %v6014, 4294901760
        %8462 = vmatprep.subr.mxu0 %v8461
        %v8463 = vand.u32 %v6012, 4294901760
        %8464 = vmatpush1.msra.mxu0 %v8463
        %v8465 = vand.u32 %v6022, 4294901760
        %8466 = vmatprep.subr.mxu0 %v8465
        %v8467 = vand.u32 %v6020, 4294901760
        %8468 = vmatpush1.msra.mxu0 %v8467
        %v8469 = vand.u32 %v6030, 4294901760
        %8470 = vmatprep.subr.mxu0 %v8469
        %v8471 = vand.u32 %v6028, 4294901760
        %8472 = vmatpush1.msra.mxu0 %v8471
        %v8473 = vand.u32 %v6038, 4294901760
        %8474 = vmatprep.subr.mxu0 %v8473
        %v8475 = vand.u32 %v6036, 4294901760
        %8476 = vmatpush1.msra.mxu0 %v8475
        %v8477 = vand.u32 %v6046, 4294901760
        %8478 = vmatprep.subr.mxu0 %v8477
        %v8479 = vand.u32 %v6044, 4294901760
        %8480 = vmatpush1.msra.mxu0 %v8479
        %v8481 = vand.u32 %v6054, 4294901760
        %8482 = vmatprep.subr.mxu0 %v8481
        %v8483 = vand.u32 %v6052, 4294901760
        %8484 = vmatpush1.msra.mxu0 %v8483
        %v8485 = vand.u32 %v6062, 4294901760
        %8486 = vmatprep.subr.mxu0 %v8485
        %v8487 = vand.u32 %v6060, 4294901760
        %8488 = vmatpush1.msra.mxu0 %v8487
        %v8489 = vand.u32 %v6070, 4294901760
        %8490 = vmatprep.subr.mxu0 %v8489
        %v8491 = vand.u32 %v6068, 4294901760
        %8492 = vmatpush1.msra.mxu0 %v8491
        %v8493 = vand.u32 %v6078, 4294901760
        %8494 = vmatprep.subr.mxu0 %v8493
        %v8495 = vand.u32 %v6076, 4294901760
        %8496 = vmatpush1.msra.mxu0 %v8495
        %v8497 = vand.u32 %v6086, 4294901760
        %8498 = vmatprep.subr.mxu0 %v8497
        %v8499 = vand.u32 %v6084, 4294901760
        %8500 = vmatpush1.msra.mxu0 %v8499
        %v8501 = vand.u32 %v6094, 4294901760
        %8502 = vmatprep.subr.mxu0 %v8501
        %v8503 = vand.u32 %v6092, 4294901760
        %8504 = vmatpush1.msra.mxu0 %v8503
        %v8505 = vand.u32 %v6102, 4294901760
        %8506 = vmatprep.subr.mxu0 %v8505
        %v8507 = vand.u32 %v6100, 4294901760
        %8508 = vmatpush1.msra.mxu0 %v8507
        %v8509 = vand.u32 %v6110, 4294901760
        %8510 = vmatprep.subr.mxu0 %v8509
        %v8511 = vand.u32 %v6108, 4294901760
        %8512 = vmatpush1.msra.mxu0 %v8511
        %v8513 = vand.u32 %v6118, 4294901760
        %8514 = vmatprep.subr.mxu0 %v8513
        %v8515 = vand.u32 %v6116, 4294901760
        %8516 = vmatpush1.msra.mxu0 %v8515
        %v8517 = vand.u32 %v6126, 4294901760
        %8518 = vmatprep.subr.mxu0 %v8517
        %v8519 = vand.u32 %v6124, 4294901760
        %8520 = vmatpush1.msra.mxu0 %v8519
        %v8521 = vand.u32 %v6134, 4294901760
        %8522 = vmatprep.subr.mxu0 %v8521
        %v8523 = vand.u32 %v6132, 4294901760
        %8524 = vmatpush1.msra.mxu0 %v8523
        %v8525 = vand.u32 %v6142, 4294901760
        %8526 = vmatprep.subr.mxu0 %v8525
        %v8527 = vand.u32 %v6140, 4294901760
        %8528 = vmatpush1.msra.mxu0 %v8527
        %v8529 = vand.u32 %v6150, 4294901760
        %8530 = vmatprep.subr.mxu0 %v8529
        %v8531 = vand.u32 %v6148, 4294901760
        %8532 = vmatpush1.msra.mxu0 %v8531
        %v8533 = vand.u32 %v6158, 4294901760
        %8534 = vmatprep.subr.mxu0 %v8533
        %v8535 = vand.u32 %v6156, 4294901760
        %8536 = vmatpush1.msra.mxu0 %v8535
        %v8537 = vand.u32 %v6166, 4294901760
        %8538 = vmatprep.subr.mxu0 %v8537
        %v8539 = vand.u32 %v6164, 4294901760
        %8540 = vmatpush1.msra.mxu0 %v8539
        %v8541 = vand.u32 %v6386, 4294901760
        %v8542 = vsub.f32 %v6386, %v8541
        %v8543 = vand.u32 %v8542, 4294901760
        %8544 = vmatprep.mubr.f32.mxu0 %v8543
        %v8545 = vand.u32 %v1432, 4294901760
        %v8546 = vsub.f32 %v1432, %v8545
        %v8547 = vand.u32 %v8546, 4294901760
        %8548 = vmatmul.mubr.f32.gmra.mrb[0].mxu0 %v8547
        %v8549 = vpop.f32.mrb[0].mxu0
        %v8550 = vadd.f32 %v8409, %v8549
        %v8551 = vpop.f32.mrb[0].mxu0
        %v8552 = vadd.f32 %v8411, %v8551
        %8553 = vdwg.mxu0
        %v8554 = vand.u32 %v5918, 4294901760
        %v8555 = vsub.f32 %v5918, %v8554
        %v8556 = vand.u32 %v8555, 4294901760
        %8557 = vmatprep.subr.mxu0 %v8556
        %v8558 = vand.u32 %v5916, 4294901760
        %v8559 = vsub.f32 %v5916, %v8558
        %v8560 = vand.u32 %v8559, 4294901760
        %8561 = vmatpush1.msra.mxu0 %v8560
        %v8562 = vand.u32 %v5926, 4294901760
        %v8563 = vsub.f32 %v5926, %v8562
        %v8564 = vand.u32 %v8563, 4294901760
        %8565 = vmatprep.subr.mxu0 %v8564
        %v8566 = vand.u32 %v5924, 4294901760
        %v8567 = vsub.f32 %v5924, %v8566
        %v8568 = vand.u32 %v8567, 4294901760
        %8569 = vmatpush1.msra.mxu0 %v8568
        %v8570 = vand.u32 %v5934, 4294901760
        %v8571 = vsub.f32 %v5934, %v8570
        %v8572 = vand.u32 %v8571, 4294901760
        %8573 = vmatprep.subr.mxu0 %v8572
        %v8574 = vand.u32 %v5932, 4294901760
        %v8575 = vsub.f32 %v5932, %v8574
        %v8576 = vand.u32 %v8575, 4294901760
        %8577 = vmatpush1.msra.mxu0 %v8576
        %v8578 = vand.u32 %v5942, 4294901760
        %v8579 = vsub.f32 %v5942, %v8578
        %v8580 = vand.u32 %v8579, 4294901760
        %8581 = vmatprep.subr.mxu0 %v8580
        %v8582 = vand.u32 %v5940, 4294901760
        %v8583 = vsub.f32 %v5940, %v8582
        %v8584 = vand.u32 %v8583, 4294901760
        %8585 = vmatpush1.msra.mxu0 %v8584
        %v8586 = vand.u32 %v5950, 4294901760
        %v8587 = vsub.f32 %v5950, %v8586
        %v8588 = vand.u32 %v8587, 4294901760
        %8589 = vmatprep.subr.mxu0 %v8588
        %v8590 = vand.u32 %v5948, 4294901760
        %v8591 = vsub.f32 %v5948, %v8590
        %v8592 = vand.u32 %v8591, 4294901760
        %8593 = vmatpush1.msra.mxu0 %v8592
        %v8594 = vand.u32 %v5958, 4294901760
        %v8595 = vsub.f32 %v5958, %v8594
        %v8596 = vand.u32 %v8595, 4294901760
        %8597 = vmatprep.subr.mxu0 %v8596
        %v8598 = vand.u32 %v5956, 4294901760
        %v8599 = vsub.f32 %v5956, %v8598
        %v8600 = vand.u32 %v8599, 4294901760
        %8601 = vmatpush1.msra.mxu0 %v8600
        %v8602 = vand.u32 %v5966, 4294901760
        %v8603 = vsub.f32 %v5966, %v8602
        %v8604 = vand.u32 %v8603, 4294901760
        %8605 = vmatprep.subr.mxu0 %v8604
        %v8606 = vand.u32 %v5964, 4294901760
        %v8607 = vsub.f32 %v5964, %v8606
        %v8608 = vand.u32 %v8607, 4294901760
        %8609 = vmatpush1.msra.mxu0 %v8608
        %v8610 = vand.u32 %v5974, 4294901760
        %v8611 = vsub.f32 %v5974, %v8610
        %v8612 = vand.u32 %v8611, 4294901760
        %8613 = vmatprep.subr.mxu0 %v8612
        %v8614 = vand.u32 %v5972, 4294901760
        %v8615 = vsub.f32 %v5972, %v8614
        %v8616 = vand.u32 %v8615, 4294901760
        %8617 = vmatpush1.msra.mxu0 %v8616
        %v8618 = vand.u32 %v5982, 4294901760
        %v8619 = vsub.f32 %v5982, %v8618
        %v8620 = vand.u32 %v8619, 4294901760
        %8621 = vmatprep.subr.mxu0 %v8620
        %v8622 = vand.u32 %v5980, 4294901760
        %v8623 = vsub.f32 %v5980, %v8622
        %v8624 = vand.u32 %v8623, 4294901760
        %8625 = vmatpush1.msra.mxu0 %v8624
        %v8626 = vand.u32 %v5990, 4294901760
        %v8627 = vsub.f32 %v5990, %v8626
        %v8628 = vand.u32 %v8627, 4294901760
        %8629 = vmatprep.subr.mxu0 %v8628
        %v8630 = vand.u32 %v5988, 4294901760
        %v8631 = vsub.f32 %v5988, %v8630
        %v8632 = vand.u32 %v8631, 4294901760
        %8633 = vmatpush1.msra.mxu0 %v8632
        %v8634 = vand.u32 %v5998, 4294901760
        %v8635 = vsub.f32 %v5998, %v8634
        %v8636 = vand.u32 %v8635, 4294901760
        %8637 = vmatprep.subr.mxu0 %v8636
        %v8638 = vand.u32 %v5996, 4294901760
        %v8639 = vsub.f32 %v5996, %v8638
        %v8640 = vand.u32 %v8639, 4294901760
        %8641 = vmatpush1.msra.mxu0 %v8640
        %v8642 = vand.u32 %v6006, 4294901760
        %v8643 = vsub.f32 %v6006, %v8642
        %v8644 = vand.u32 %v8643, 4294901760
        %8645 = vmatprep.subr.mxu0 %v8644
        %v8646 = vand.u32 %v6004, 4294901760
        %v8647 = vsub.f32 %v6004, %v8646
        %v8648 = vand.u32 %v8647, 4294901760
        %8649 = vmatpush1.msra.mxu0 %v8648
        %v8650 = vand.u32 %v6014, 4294901760
        %v8651 = vsub.f32 %v6014, %v8650
        %v8652 = vand.u32 %v8651, 4294901760
        %8653 = vmatprep.subr.mxu0 %v8652
        %v8654 = vand.u32 %v6012, 4294901760
        %v8655 = vsub.f32 %v6012, %v8654
        %v8656 = vand.u32 %v8655, 4294901760
        %8657 = vmatpush1.msra.mxu0 %v8656
        %v8658 = vand.u32 %v6022, 4294901760
        %v8659 = vsub.f32 %v6022, %v8658
        %v8660 = vand.u32 %v8659, 4294901760
        %8661 = vmatprep.subr.mxu0 %v8660
        %v8662 = vand.u32 %v6020, 4294901760
        %v8663 = vsub.f32 %v6020, %v8662
        %v8664 = vand.u32 %v8663, 4294901760
        %8665 = vmatpush1.msra.mxu0 %v8664
        %v8666 = vand.u32 %v6030, 4294901760
        %v8667 = vsub.f32 %v6030, %v8666
        %v8668 = vand.u32 %v8667, 4294901760
        %8669 = vmatprep.subr.mxu0 %v8668
        %v8670 = vand.u32 %v6028, 4294901760
        %v8671 = vsub.f32 %v6028, %v8670
        %v8672 = vand.u32 %v8671, 4294901760
        %8673 = vmatpush1.msra.mxu0 %v8672
        %v8674 = vand.u32 %v6038, 4294901760
        %v8675 = vsub.f32 %v6038, %v8674
        %v8676 = vand.u32 %v8675, 4294901760
        %8677 = vmatprep.subr.mxu0 %v8676
        %v8678 = vand.u32 %v6036, 4294901760
        %v8679 = vsub.f32 %v6036, %v8678
        %v8680 = vand.u32 %v8679, 4294901760
        %8681 = vmatpush1.msra.mxu0 %v8680
        %v8682 = vand.u32 %v6046, 4294901760
        %v8683 = vsub.f32 %v6046, %v8682
        %v8684 = vand.u32 %v8683, 4294901760
        %8685 = vmatprep.subr.mxu0 %v8684
        %v8686 = vand.u32 %v6044, 4294901760
        %v8687 = vsub.f32 %v6044, %v8686
        %v8688 = vand.u32 %v8687, 4294901760
        %8689 = vmatpush1.msra.mxu0 %v8688
        %v8690 = vand.u32 %v6054, 4294901760
        %v8691 = vsub.f32 %v6054, %v8690
        %v8692 = vand.u32 %v8691, 4294901760
        %8693 = vmatprep.subr.mxu0 %v8692
        %v8694 = vand.u32 %v6052, 4294901760
        %v8695 = vsub.f32 %v6052, %v8694
        %v8696 = vand.u32 %v8695, 4294901760
        %8697 = vmatpush1.msra.mxu0 %v8696
        %v8698 = vand.u32 %v6062, 4294901760
        %v8699 = vsub.f32 %v6062, %v8698
        %v8700 = vand.u32 %v8699, 4294901760
        %8701 = vmatprep.subr.mxu0 %v8700
        %v8702 = vand.u32 %v6060, 4294901760
        %v8703 = vsub.f32 %v6060, %v8702
        %v8704 = vand.u32 %v8703, 4294901760
        %8705 = vmatpush1.msra.mxu0 %v8704
        %v8706 = vand.u32 %v6070, 4294901760
        %v8707 = vsub.f32 %v6070, %v8706
        %v8708 = vand.u32 %v8707, 4294901760
        %8709 = vmatprep.subr.mxu0 %v8708
        %v8710 = vand.u32 %v6068, 4294901760
        %v8711 = vsub.f32 %v6068, %v8710
        %v8712 = vand.u32 %v8711, 4294901760
        %8713 = vmatpush1.msra.mxu0 %v8712
        %v8714 = vand.u32 %v6078, 4294901760
        %v8715 = vsub.f32 %v6078, %v8714
        %v8716 = vand.u32 %v8715, 4294901760
        %8717 = vmatprep.subr.mxu0 %v8716
        %v8718 = vand.u32 %v6076, 4294901760
        %v8719 = vsub.f32 %v6076, %v8718
        %v8720 = vand.u32 %v8719, 4294901760
        %8721 = vmatpush1.msra.mxu0 %v8720
        %v8722 = vand.u32 %v6086, 4294901760
        %v8723 = vsub.f32 %v6086, %v8722
        %v8724 = vand.u32 %v8723, 4294901760
        %8725 = vmatprep.subr.mxu0 %v8724
        %v8726 = vand.u32 %v6084, 4294901760
        %v8727 = vsub.f32 %v6084, %v8726
        %v8728 = vand.u32 %v8727, 4294901760
        %8729 = vmatpush1.msra.mxu0 %v8728
        %v8730 = vand.u32 %v6094, 4294901760
        %v8731 = vsub.f32 %v6094, %v8730
        %v8732 = vand.u32 %v8731, 4294901760
        %8733 = vmatprep.subr.mxu0 %v8732
        %v8734 = vand.u32 %v6092, 4294901760
        %v8735 = vsub.f32 %v6092, %v8734
        %v8736 = vand.u32 %v8735, 4294901760
        %8737 = vmatpush1.msra.mxu0 %v8736
        %v8738 = vand.u32 %v6102, 4294901760
        %v8739 = vsub.f32 %v6102, %v8738
        %v8740 = vand.u32 %v8739, 4294901760
        %8741 = vmatprep.subr.mxu0 %v8740
        %v8742 = vand.u32 %v6100, 4294901760
        %v8743 = vsub.f32 %v6100, %v8742
        %v8744 = vand.u32 %v8743, 4294901760
        %8745 = vmatpush1.msra.mxu0 %v8744
        %v8746 = vand.u32 %v6110, 4294901760
        %v8747 = vsub.f32 %v6110, %v8746
        %v8748 = vand.u32 %v8747, 4294901760
        %8749 = vmatprep.subr.mxu0 %v8748
        %v8750 = vand.u32 %v6108, 4294901760
        %v8751 = vsub.f32 %v6108, %v8750
        %v8752 = vand.u32 %v8751, 4294901760
        %8753 = vmatpush1.msra.mxu0 %v8752
        %v8754 = vand.u32 %v6118, 4294901760
        %v8755 = vsub.f32 %v6118, %v8754
        %v8756 = vand.u32 %v8755, 4294901760
        %8757 = vmatprep.subr.mxu0 %v8756
        %v8758 = vand.u32 %v6116, 4294901760
        %v8759 = vsub.f32 %v6116, %v8758
        %v8760 = vand.u32 %v8759, 4294901760
        %8761 = vmatpush1.msra.mxu0 %v8760
        %v8762 = vand.u32 %v6126, 4294901760
        %v8763 = vsub.f32 %v6126, %v8762
        %v8764 = vand.u32 %v8763, 4294901760
        %8765 = vmatprep.subr.mxu0 %v8764
        %v8766 = vand.u32 %v6124, 4294901760
        %v8767 = vsub.f32 %v6124, %v8766
        %v8768 = vand.u32 %v8767, 4294901760
        %8769 = vmatpush1.msra.mxu0 %v8768
        %v8770 = vand.u32 %v6134, 4294901760
        %v8771 = vsub.f32 %v6134, %v8770
        %v8772 = vand.u32 %v8771, 4294901760
        %8773 = vmatprep.subr.mxu0 %v8772
        %v8774 = vand.u32 %v6132, 4294901760
        %v8775 = vsub.f32 %v6132, %v8774
        %v8776 = vand.u32 %v8775, 4294901760
        %8777 = vmatpush1.msra.mxu0 %v8776
        %v8778 = vand.u32 %v6142, 4294901760
        %v8779 = vsub.f32 %v6142, %v8778
        %v8780 = vand.u32 %v8779, 4294901760
        %8781 = vmatprep.subr.mxu0 %v8780
        %v8782 = vand.u32 %v6140, 4294901760
        %v8783 = vsub.f32 %v6140, %v8782
        %v8784 = vand.u32 %v8783, 4294901760
        %8785 = vmatpush1.msra.mxu0 %v8784
        %v8786 = vand.u32 %v6150, 4294901760
        %v8787 = vsub.f32 %v6150, %v8786
        %v8788 = vand.u32 %v8787, 4294901760
        %8789 = vmatprep.subr.mxu0 %v8788
        %v8790 = vand.u32 %v6148, 4294901760
        %v8791 = vsub.f32 %v6148, %v8790
        %v8792 = vand.u32 %v8791, 4294901760
        %8793 = vmatpush1.msra.mxu0 %v8792
        %v8794 = vand.u32 %v6158, 4294901760
        %v8795 = vsub.f32 %v6158, %v8794
        %v8796 = vand.u32 %v8795, 4294901760
        %8797 = vmatprep.subr.mxu0 %v8796
        %v8798 = vand.u32 %v6156, 4294901760
        %v8799 = vsub.f32 %v6156, %v8798
        %v8800 = vand.u32 %v8799, 4294901760
        %8801 = vmatpush1.msra.mxu0 %v8800
        %v8802 = vand.u32 %v6166, 4294901760
        %v8803 = vsub.f32 %v6166, %v8802
        %v8804 = vand.u32 %v8803, 4294901760
        %8805 = vmatprep.subr.mxu0 %v8804
        %v8806 = vand.u32 %v6164, 4294901760
        %v8807 = vsub.f32 %v6164, %v8806
        %v8808 = vand.u32 %v8807, 4294901760
        %8809 = vmatpush1.msra.mxu0 %v8808
        %v8810 = vand.u32 %v6386, 4294901760
        %8811 = vmatprep.mubr.f32.mxu0 %v8810
        %v8812 = vand.u32 %v1432, 4294901760
        %8813 = vmatmul.mubr.f32.gmra.mrb[0].mxu0 %v8812
        %v8814 = vpop.f32.mrb[0].mxu0
        %v8815 = vadd.f32 %v8550, %v8814
        %v8816 = vpop.f32.mrb[0].mxu0
        %v8817 = vadd.f32 %v8552, %v8816
        %8818 = vdwg.mxu0
        %v8819 = vand.u32 %v5918, 4294901760
        %8820 = vmatprep.subr.mxu0 %v8819
        %v8821 = vand.u32 %v5916, 4294901760
        %8822 = vmatpush1.msra.mxu0 %v8821
        %v8823 = vand.u32 %v5926, 4294901760
        %8824 = vmatprep.subr.mxu0 %v8823
        %v8825 = vand.u32 %v5924, 4294901760
        %8826 = vmatpush1.msra.mxu0 %v8825
        %v8827 = vand.u32 %v5934, 4294901760
        %8828 = vmatprep.subr.mxu0 %v8827
        %v8829 = vand.u32 %v5932, 4294901760
        %8830 = vmatpush1.msra.mxu0 %v8829
        %v8831 = vand.u32 %v5942, 4294901760
        %8832 = vmatprep.subr.mxu0 %v8831
        %v8833 = vand.u32 %v5940, 4294901760
        %8834 = vmatpush1.msra.mxu0 %v8833
        %v8835 = vand.u32 %v5950, 4294901760
        %8836 = vmatprep.subr.mxu0 %v8835
        %v8837 = vand.u32 %v5948, 4294901760
        %8838 = vmatpush1.msra.mxu0 %v8837
        %v8839 = vand.u32 %v5958, 4294901760
        %8840 = vmatprep.subr.mxu0 %v8839
        %v8841 = vand.u32 %v5956, 4294901760
        %8842 = vmatpush1.msra.mxu0 %v8841
        %v8843 = vand.u32 %v5966, 4294901760
        %8844 = vmatprep.subr.mxu0 %v8843
        %v8845 = vand.u32 %v5964, 4294901760
        %8846 = vmatpush1.msra.mxu0 %v8845
        %v8847 = vand.u32 %v5974, 4294901760
        %8848 = vmatprep.subr.mxu0 %v8847
        %v8849 = vand.u32 %v5972, 4294901760
        %8850 = vmatpush1.msra.mxu0 %v8849
        %v8851 = vand.u32 %v5982, 4294901760
        %8852 = vmatprep.subr.mxu0 %v8851
        %v8853 = vand.u32 %v5980, 4294901760
        %8854 = vmatpush1.msra.mxu0 %v8853
        %v8855 = vand.u32 %v5990, 4294901760
        %8856 = vmatprep.subr.mxu0 %v8855
        %v8857 = vand.u32 %v5988, 4294901760
        %8858 = vmatpush1.msra.mxu0 %v8857
        %v8859 = vand.u32 %v5998, 4294901760
        %8860 = vmatprep.subr.mxu0 %v8859
        %v8861 = vand.u32 %v5996, 4294901760
        %8862 = vmatpush1.msra.mxu0 %v8861
        %v8863 = vand.u32 %v6006, 4294901760
        %8864 = vmatprep.subr.mxu0 %v8863
        %v8865 = vand.u32 %v6004, 4294901760
        %8866 = vmatpush1.msra.mxu0 %v8865
        %v8867 = vand.u32 %v6014, 4294901760
        %8868 = vmatprep.subr.mxu0 %v8867
        %v8869 = vand.u32 %v6012, 4294901760
        %8870 = vmatpush1.msra.mxu0 %v8869
        %v8871 = vand.u32 %v6022, 4294901760
        %8872 = vmatprep.subr.mxu0 %v8871
        %v8873 = vand.u32 %v6020, 4294901760
        %8874 = vmatpush1.msra.mxu0 %v8873
        %v8875 = vand.u32 %v6030, 4294901760
        %8876 = vmatprep.subr.mxu0 %v8875
        %v8877 = vand.u32 %v6028, 4294901760
        %8878 = vmatpush1.msra.mxu0 %v8877
        %v8879 = vand.u32 %v6038, 4294901760
        %8880 = vmatprep.subr.mxu0 %v8879
        %v8881 = vand.u32 %v6036, 4294901760
        %8882 = vmatpush1.msra.mxu0 %v8881
        %v8883 = vand.u32 %v6046, 4294901760
        %8884 = vmatprep.subr.mxu0 %v8883
        %v8885 = vand.u32 %v6044, 4294901760
        %8886 = vmatpush1.msra.mxu0 %v8885
        %v8887 = vand.u32 %v6054, 4294901760
        %8888 = vmatprep.subr.mxu0 %v8887
        %v8889 = vand.u32 %v6052, 4294901760
        %8890 = vmatpush1.msra.mxu0 %v8889
        %v8891 = vand.u32 %v6062, 4294901760
        %8892 = vmatprep.subr.mxu0 %v8891
        %v8893 = vand.u32 %v6060, 4294901760
        %8894 = vmatpush1.msra.mxu0 %v8893
        %v8895 = vand.u32 %v6070, 4294901760
        %8896 = vmatprep.subr.mxu0 %v8895
        %v8897 = vand.u32 %v6068, 4294901760
        %8898 = vmatpush1.msra.mxu0 %v8897
        %v8899 = vand.u32 %v6078, 4294901760
        %8900 = vmatprep.subr.mxu0 %v8899
        %v8901 = vand.u32 %v6076, 4294901760
        %8902 = vmatpush1.msra.mxu0 %v8901
        %v8903 = vand.u32 %v6086, 4294901760
        %8904 = vmatprep.subr.mxu0 %v8903
        %v8905 = vand.u32 %v6084, 4294901760
        %8906 = vmatpush1.msra.mxu0 %v8905
        %v8907 = vand.u32 %v6094, 4294901760
        %8908 = vmatprep.subr.mxu0 %v8907
        %v8909 = vand.u32 %v6092, 4294901760
        %8910 = vmatpush1.msra.mxu0 %v8909
        %v8911 = vand.u32 %v6102, 4294901760
        %8912 = vmatprep.subr.mxu0 %v8911
        %v8913 = vand.u32 %v6100, 4294901760
        %8914 = vmatpush1.msra.mxu0 %v8913
        %v8915 = vand.u32 %v6110, 4294901760
        %8916 = vmatprep.subr.mxu0 %v8915
        %v8917 = vand.u32 %v6108, 4294901760
        %8918 = vmatpush1.msra.mxu0 %v8917
        %v8919 = vand.u32 %v6118, 4294901760
        %8920 = vmatprep.subr.mxu0 %v8919
        %v8921 = vand.u32 %v6116, 4294901760
        %8922 = vmatpush1.msra.mxu0 %v8921
        %v8923 = vand.u32 %v6126, 4294901760
        %8924 = vmatprep.subr.mxu0 %v8923
        %v8925 = vand.u32 %v6124, 4294901760
        %8926 = vmatpush1.msra.mxu0 %v8925
        %v8927 = vand.u32 %v6134, 4294901760
        %8928 = vmatprep.subr.mxu0 %v8927
        %v8929 = vand.u32 %v6132, 4294901760
        %8930 = vmatpush1.msra.mxu0 %v8929
        %v8931 = vand.u32 %v6142, 4294901760
        %8932 = vmatprep.subr.mxu0 %v8931
        %v8933 = vand.u32 %v6140, 4294901760
        %8934 = vmatpush1.msra.mxu0 %v8933
        %v8935 = vand.u32 %v6150, 4294901760
        %8936 = vmatprep.subr.mxu0 %v8935
        %v8937 = vand.u32 %v6148, 4294901760
        %8938 = vmatpush1.msra.mxu0 %v8937
        %v8939 = vand.u32 %v6158, 4294901760
        %8940 = vmatprep.subr.mxu0 %v8939
        %v8941 = vand.u32 %v6156, 4294901760
        %8942 = vmatpush1.msra.mxu0 %v8941
        %v8943 = vand.u32 %v6166, 4294901760
        %8944 = vmatprep.subr.mxu0 %v8943
        %v8945 = vand.u32 %v6164, 4294901760
        %8946 = vmatpush1.msra.mxu0 %v8945
        %v8947 = vand.u32 %v6386, 4294901760
        %8948 = vmatprep.mubr.f32.mxu0 %v8947
        %v8949 = vand.u32 %v1432, 4294901760
        %8950 = vmatmul.mubr.f32.gmra.mrb[0].mxu0 %v8949
        %v8951 = vpop.f32.mrb[0].mxu0
        %v8952 = vadd.f32 %v8815, %v8951
        %v8953 = vpop.f32.mrb[0].mxu0
        %v8954 = vadd.f32 %v8817, %v8953
        %8955 = vdwg.mxu0
        %v8956 = vadd.f32 %v6381, %v7668
        %v8957 = vadd.f32 %v6382, %v7670
        %v8958 = vadd.f32 %v6383, %v8952
        %v8959 = vadd.f32 %v6384, %v8954
        %v8964 = vcombine.low %v8956, %v8957
        %v8965 = vcombine.low %v8958, %v8959
        %8968 = vst [vmem:[#allocation5] sm:$0xff] %v8964
        %8969 = vst [vmem:[#allocation5 + $0x8] sm:$0xff] %v8965
        %8970 = vst.msk [vmem:[#allocation3] sm:$0xf] %vm6350, %v5758
        // Predicated region
        $region65: #{tpu_custom_call.1} parent=51 // pred_check
          %p8971 = pneg %p464
        $region66: #{tpu_custom_call.1} parent=51 // pred_check_branch
          %8973 = sbr.rel (%p8971) target = $region68
        $region67: #{tpu_custom_call.1} parent=51 // pred_region
          %v8974 = vld [vmem:[#allocation5] sm:$0xff]
          %v8975 = vld [vmem:[#allocation5 + $0x8] sm:$0xff]
          %v8976 = vld [vmem:[#allocation4] sm:$0xf]
          %v8978 = vlaneseq
          %v8979 = vshrl.u32 %v8978, 7
          %v8980 = vsub.s32 0, %v8979
          %v8981 = vrot.slane %v8976, %v8980
          %v8982 = vlaneseq
          %v8983 = vshrl.u32 %v8982, 7
          %v8984 = vsub.s32 1, %v8983
          %v8985 = vrot.slane %v8976, %v8984
          %v8986 = vlaneseq
          %v8987 = vshrl.u32 %v8986, 7
          %v8988 = vsub.s32 2, %v8987
          %v8989 = vrot.slane %v8976, %v8988
          %v8990 = vlaneseq
          %v8991 = vshrl.u32 %v8990, 7
          %v8992 = vsub.s32 3, %v8991
          %v8993 = vrot.slane %v8976, %v8992
          %v8994 = vcombine.low %v8981, %v8985
          %v8995 = vcombine.low %v8989, %v8993
          %v8998 = vrcp.pop %v8994
          %v8999 = vmul.f32 %v8974, %v8998
          %v9000 = vrcp.pop %v8995
          %v9001 = vmul.f32 %v8975, %v9000
          %v9002 = vld [vmem:[%s6] sm:$0xff]
          %v9003 = vld [vmem:[%s7] sm:$0xff]
          %9005 = vset.pattern.permute.xlu0 0
          %9006 = vperm.xlu0 %9005, %v9003
          %v9007 = vpop.permute.xlu0 %9006
          %v9011 = vcombine.high %v8999, %v8999
          %v9012 = vcombine.high %v9001, %v9001
          %v9014 = vsel %vm1506, %v9002, 0
          %v9016 = vsel %vm1603, %v8999, 0
          %v9018 = vsel %vm1603, %v9011, 0
          %v9020 = vsel %vm1603, %v9001, 0
          %v9022 = vsel %vm1603, %v9012, 0
          %v9024 = vand.u32 %v9018, 4294901760
          %9025 = vmatprep.subr.mxu0 %v9024
          %v9026 = vand.u32 %v9016, 4294901760
          %9027 = vmatpush1.msra.mxu0 %v9026
          %9028 = vmatprep.subr.mxu0 0.0
          %9029 = vmatpush1.msra.mxu0 0.0
          %9030 = vmatprep.subr.mxu0 0.0
          %9031 = vmatpush1.msra.mxu0 0.0
          %9032 = vmatprep.subr.mxu0 0.0
          %9033 = vmatpush1.msra.mxu0 0.0
          %9034 = vmatprep.subr.mxu0 0.0
          %9035 = vmatpush1.msra.mxu0 0.0
          %9036 = vmatprep.subr.mxu0 0.0
          %9037 = vmatpush1.msra.mxu0 0.0
          %9038 = vmatprep.subr.mxu0 0.0
          %9039 = vmatpush1.msra.mxu0 0.0
          %9040 = vmatprep.subr.mxu0 0.0
          %9041 = vmatpush1.msra.mxu0 0.0
          %9042 = vmatprep.subr.mxu0 0.0
          %9043 = vmatpush1.msra.mxu0 0.0
          %9044 = vmatprep.subr.mxu0 0.0
          %9045 = vmatpush1.msra.mxu0 0.0
          %9046 = vmatprep.subr.mxu0 0.0
          %9047 = vmatpush1.msra.mxu0 0.0
          %9048 = vmatprep.subr.mxu0 0.0
          %9049 = vmatpush1.msra.mxu0 0.0
          %9050 = vmatprep.subr.mxu0 0.0
          %9051 = vmatpush1.msra.mxu0 0.0
          %9052 = vmatprep.subr.mxu0 0.0
          %9053 = vmatpush1.msra.mxu0 0.0
          %9054 = vmatprep.subr.mxu0 0.0
          %9055 = vmatpush1.msra.mxu0 0.0
          %9056 = vmatprep.subr.mxu0 0.0
          %9057 = vmatpush1.msra.mxu0 0.0
          %9058 = vmatprep.subr.mxu0 0.0
          %9059 = vmatpush1.msra.mxu0 0.0
          %9060 = vmatprep.subr.mxu0 0.0
          %9061 = vmatpush1.msra.mxu0 0.0
          %9062 = vmatprep.subr.mxu0 0.0
          %9063 = vmatpush1.msra.mxu0 0.0
          %9064 = vmatprep.subr.mxu0 0.0
          %9065 = vmatpush1.msra.mxu0 0.0
          %9066 = vmatprep.subr.mxu0 0.0
          %9067 = vmatpush1.msra.mxu0 0.0
          %9068 = vmatprep.subr.mxu0 0.0
          %9069 = vmatpush1.msra.mxu0 0.0
          %9070 = vmatprep.subr.mxu0 0.0
          %9071 = vmatpush1.msra.mxu0 0.0
          %9072 = vmatprep.subr.mxu0 0.0
          %9073 = vmatpush1.msra.mxu0 0.0
          %9074 = vmatprep.subr.mxu0 0.0
          %9075 = vmatpush1.msra.mxu0 0.0
          %9076 = vmatprep.subr.mxu0 0.0
          %9077 = vmatpush1.msra.mxu0 0.0
          %9078 = vmatprep.subr.mxu0 0.0
          %9079 = vmatpush1.msra.mxu0 0.0
          %9080 = vmatprep.subr.mxu0 0.0
          %9081 = vmatpush1.msra.mxu0 0.0
          %9082 = vmatprep.subr.mxu0 0.0
          %9083 = vmatpush1.msra.mxu0 0.0
          %9084 = vmatprep.subr.mxu0 0.0
          %9085 = vmatpush1.msra.mxu0 0.0
          %9086 = vmatprep.subr.mxu0 0.0
          %9087 = vmatpush1.msra.mxu0 0.0
          %9088 = vmatprep.subr.mxu0 0.0
          %9089 = vmatpush1.msra.mxu0 0.0
          %9090 = vmatprep.mubr.f32.mxu0 0.0
          %v9091 = vand.u32 %v9014, 4294901760
          %v9092 = vsub.f32 %v9014, %v9091
          %v9093 = vand.u32 %v9092, 4294901760
          %v9094 = vsub.f32 %v9092, %v9093
          %v9095 = vand.u32 %v9094, 4294901760
          %9096 = vmatmul.mubr.f32.gmra.mrb[0].mxu0 %v9095
          %v9097 = vpop.f32.mrb[0].mxu0
          %v9098 = vadd.f32 %v9007, %v9097
          %v9099 = vpop.f32.mrb[0].mxu0
          %v9100 = vadd.f32 %v9007, %v9099
          %9101 = vdwg.mxu0
          %v9102 = vand.u32 %v9018, 4294901760
          %v9103 = vsub.f32 %v9018, %v9102
          %v9104 = vand.u32 %v9103, 4294901760
          %v9105 = vsub.f32 %v9103, %v9104
          %v9106 = vand.u32 %v9105, 4294901760
          %9107 = vmatprep.subr.mxu0 %v9106
          %v9108 = vand.u32 %v9016, 4294901760
          %v9109 = vsub.f32 %v9016, %v9108
          %v9110 = vand.u32 %v9109, 4294901760
          %v9111 = vsub.f32 %v9109, %v9110
          %v9112 = vand.u32 %v9111, 4294901760
          %9113 = vmatpush1.msra.mxu0 %v9112
          %9114 = vmatprep.subr.mxu0 0.0
          %9115 = vmatpush1.msra.mxu0 0.0
          %9116 = vmatprep.subr.mxu0 0.0
          %9117 = vmatpush1.msra.mxu0 0.0
          %9118 = vmatprep.subr.mxu0 0.0
          %9119 = vmatpush1.msra.mxu0 0.0
          %9120 = vmatprep.subr.mxu0 0.0
          %9121 = vmatpush1.msra.mxu0 0.0
          %9122 = vmatprep.subr.mxu0 0.0
          %9123 = vmatpush1.msra.mxu0 0.0
          %9124 = vmatprep.subr.mxu0 0.0
          %9125 = vmatpush1.msra.mxu0 0.0
          %9126 = vmatprep.subr.mxu0 0.0
          %9127 = vmatpush1.msra.mxu0 0.0
          %9128 = vmatprep.subr.mxu0 0.0
          %9129 = vmatpush1.msra.mxu0 0.0
          %9130 = vmatprep.subr.mxu0 0.0
          %9131 = vmatpush1.msra.mxu0 0.0
          %9132 = vmatprep.subr.mxu0 0.0
          %9133 = vmatpush1.msra.mxu0 0.0
          %9134 = vmatprep.subr.mxu0 0.0
          %9135 = vmatpush1.msra.mxu0 0.0
          %9136 = vmatprep.subr.mxu0 0.0
          %9137 = vmatpush1.msra.mxu0 0.0
          %9138 = vmatprep.subr.mxu0 0.0
          %9139 = vmatpush1.msra.mxu0 0.0
          %9140 = vmatprep.subr.mxu0 0.0
          %9141 = vmatpush1.msra.mxu0 0.0
          %9142 = vmatprep.subr.mxu0 0.0
          %9143 = vmatpush1.msra.mxu0 0.0
          %9144 = vmatprep.subr.mxu0 0.0
          %9145 = vmatpush1.msra.mxu0 0.0
          %9146 = vmatprep.subr.mxu0 0.0
          %9147 = vmatpush1.msra.mxu0 0.0
          %9148 = vmatprep.subr.mxu0 0.0
          %9149 = vmatpush1.msra.mxu0 0.0
          %9150 = vmatprep.subr.mxu0 0.0
          %9151 = vmatpush1.msra.mxu0 0.0
          %9152 = vmatprep.subr.mxu0 0.0
          %9153 = vmatpush1.msra.mxu0 0.0
          %9154 = vmatprep.subr.mxu0 0.0
          %9155 = vmatpush1.msra.mxu0 0.0
          %9156 = vmatprep.subr.mxu0 0.0
          %9157 = vmatpush1.msra.mxu0 0.0
          %9158 = vmatprep.subr.mxu0 0.0
          %9159 = vmatpush1.msra.mxu0 0.0
          %9160 = vmatprep.subr.mxu0 0.0
          %9161 = vmatpush1.msra.mxu0 0.0
          %9162 = vmatprep.subr.mxu0 0.0
          %9163 = vmatpush1.msra.mxu0 0.0
          %9164 = vmatprep.subr.mxu0 0.0
          %9165 = vmatpush1.msra.mxu0 0.0
          %9166 = vmatprep.subr.mxu0 0.0
          %9167 = vmatpush1.msra.mxu0 0.0
          %9168 = vmatprep.subr.mxu0 0.0
          %9169 = vmatpush1.msra.mxu0 0.0
          %9170 = vmatprep.subr.mxu0 0.0
          %9171 = vmatpush1.msra.mxu0 0.0
          %9172 = vmatprep.subr.mxu0 0.0
          %9173 = vmatpush1.msra.mxu0 0.0
          %9174 = vmatprep.subr.mxu0 0.0
          %9175 = vmatpush1.msra.mxu0 0.0
          %9176 = vmatprep.mubr.f32.mxu0 0.0
          %v9177 = vand.u32 %v9014, 4294901760
          %9178 = vmatmul.mubr.f32.gmra.mrb[0].mxu0 %v9177
          %v9179 = vpop.f32.mrb[0].mxu0
          %v9180 = vadd.f32 %v9098, %v9179
          %v9181 = vpop.f32.mrb[0].mxu0
          %v9182 = vadd.f32 %v9100, %v9181
          %9183 = vdwg.mxu0
          %v9184 = vand.u32 %v9018, 4294901760
          %v9185 = vsub.f32 %v9018, %v9184
          %9186 = vmatprep.subr.mxu0 %v9185
          %v9187 = vand.u32 %v9016, 4294901760
          %v9188 = vsub.f32 %v9016, %v9187
          %9189 = vmatpush1.msra.mxu0 %v9188
          %9190 = vmatprep.subr.mxu0 0.0
          %9191 = vmatpush1.msra.mxu0 0.0
          %9192 = vmatprep.subr.mxu0 0.0
          %9193 = vmatpush1.msra.mxu0 0.0
          %9194 = vmatprep.subr.mxu0 0.0
          %9195 = vmatpush1.msra.mxu0 0.0
          %9196 = vmatprep.subr.mxu0 0.0
          %9197 = vmatpush1.msra.mxu0 0.0
          %9198 = vmatprep.subr.mxu0 0.0
          %9199 = vmatpush1.msra.mxu0 0.0
          %9200 = vmatprep.subr.mxu0 0.0
          %9201 = vmatpush1.msra.mxu0 0.0
          %9202 = vmatprep.subr.mxu0 0.0
          %9203 = vmatpush1.msra.mxu0 0.0
          %9204 = vmatprep.subr.mxu0 0.0
          %9205 = vmatpush1.msra.mxu0 0.0
          %9206 = vmatprep.subr.mxu0 0.0
          %9207 = vmatpush1.msra.mxu0 0.0
          %9208 = vmatprep.subr.mxu0 0.0
          %9209 = vmatpush1.msra.mxu0 0.0
          %9210 = vmatprep.subr.mxu0 0.0
          %9211 = vmatpush1.msra.mxu0 0.0
          %9212 = vmatprep.subr.mxu0 0.0
          %9213 = vmatpush1.msra.mxu0 0.0
          %9214 = vmatprep.subr.mxu0 0.0
          %9215 = vmatpush1.msra.mxu0 0.0
          %9216 = vmatprep.subr.mxu0 0.0
          %9217 = vmatpush1.msra.mxu0 0.0
          %9218 = vmatprep.subr.mxu0 0.0
          %9219 = vmatpush1.msra.mxu0 0.0
          %9220 = vmatprep.subr.mxu0 0.0
          %9221 = vmatpush1.msra.mxu0 0.0
          %9222 = vmatprep.subr.mxu0 0.0
          %9223 = vmatpush1.msra.mxu0 0.0
          %9224 = vmatprep.subr.mxu0 0.0
          %9225 = vmatpush1.msra.mxu0 0.0
          %9226 = vmatprep.subr.mxu0 0.0
          %9227 = vmatpush1.msra.mxu0 0.0
          %9228 = vmatprep.subr.mxu0 0.0
          %9229 = vmatpush1.msra.mxu0 0.0
          %9230 = vmatprep.subr.mxu0 0.0
          %9231 = vmatpush1.msra.mxu0 0.0
          %9232 = vmatprep.subr.mxu0 0.0
          %9233 = vmatpush1.msra.mxu0 0.0
          %9234 = vmatprep.subr.mxu0 0.0
          %9235 = vmatpush1.msra.mxu0 0.0
          %9236 = vmatprep.subr.mxu0 0.0
          %9237 = vmatpush1.msra.mxu0 0.0
          %9238 = vmatprep.subr.mxu0 0.0
          %9239 = vmatpush1.msra.mxu0 0.0
          %9240 = vmatprep.subr.mxu0 0.0
          %9241 = vmatpush1.msra.mxu0 0.0
          %9242 = vmatprep.subr.mxu0 0.0
          %9243 = vmatpush1.msra.mxu0 0.0
          %9244 = vmatprep.subr.mxu0 0.0
          %9245 = vmatpush1.msra.mxu0 0.0
          %9246 = vmatprep.subr.mxu0 0.0
          %9247 = vmatpush1.msra.mxu0 0.0
          %9248 = vmatprep.subr.mxu0 0.0
          %9249 = vmatpush1.msra.mxu0 0.0
          %9250 = vmatprep.subr.mxu0 0.0
          %9251 = vmatpush1.msra.mxu0 0.0
          %9252 = vmatprep.mubr.f32.mxu0 0.0
          %v9253 = vand.u32 %v9014, 4294901760
          %v9254 = vsub.f32 %v9014, %v9253
          %9255 = vmatmul.mubr.f32.gmra.mrb[0].mxu0 %v9254
          %v9256 = vpop.f32.mrb[0].mxu0
          %v9257 = vadd.f32 %v9180, %v9256
          %v9258 = vpop.f32.mrb[0].mxu0
          %v9259 = vadd.f32 %v9182, %v9258
          %9260 = vdwg.mxu0
          %v9261 = vand.u32 %v9018, 4294901760
          %9262 = vmatprep.subr.mxu0 %v9261
          %v9263 = vand.u32 %v9016, 4294901760
          %9264 = vmatpush1.msra.mxu0 %v9263
          %9265 = vmatprep.subr.mxu0 0.0
          %9266 = vmatpush1.msra.mxu0 0.0
          %9267 = vmatprep.subr.mxu0 0.0
          %9268 = vmatpush1.msra.mxu0 0.0
          %9269 = vmatprep.subr.mxu0 0.0
          %9270 = vmatpush1.msra.mxu0 0.0
          %9271 = vmatprep.subr.mxu0 0.0
          %9272 = vmatpush1.msra.mxu0 0.0
          %9273 = vmatprep.subr.mxu0 0.0
          %9274 = vmatpush1.msra.mxu0 0.0
          %9275 = vmatprep.subr.mxu0 0.0
          %9276 = vmatpush1.msra.mxu0 0.0
          %9277 = vmatprep.subr.mxu0 0.0
          %9278 = vmatpush1.msra.mxu0 0.0
          %9279 = vmatprep.subr.mxu0 0.0
          %9280 = vmatpush1.msra.mxu0 0.0
          %9281 = vmatprep.subr.mxu0 0.0
          %9282 = vmatpush1.msra.mxu0 0.0
          %9283 = vmatprep.subr.mxu0 0.0
          %9284 = vmatpush1.msra.mxu0 0.0
          %9285 = vmatprep.subr.mxu0 0.0
          %9286 = vmatpush1.msra.mxu0 0.0
          %9287 = vmatprep.subr.mxu0 0.0
          %9288 = vmatpush1.msra.mxu0 0.0
          %9289 = vmatprep.subr.mxu0 0.0
          %9290 = vmatpush1.msra.mxu0 0.0
          %9291 = vmatprep.subr.mxu0 0.0
          %9292 = vmatpush1.msra.mxu0 0.0
          %9293 = vmatprep.subr.mxu0 0.0
          %9294 = vmatpush1.msra.mxu0 0.0
          %9295 = vmatprep.subr.mxu0 0.0
          %9296 = vmatpush1.msra.mxu0 0.0
          %9297 = vmatprep.subr.mxu0 0.0
          %9298 = vmatpush1.msra.mxu0 0.0
          %9299 = vmatprep.subr.mxu0 0.0
          %9300 = vmatpush1.msra.mxu0 0.0
          %9301 = vmatprep.subr.mxu0 0.0
          %9302 = vmatpush1.msra.mxu0 0.0
          %9303 = vmatprep.subr.mxu0 0.0
          %9304 = vmatpush1.msra.mxu0 0.0
          %9305 = vmatprep.subr.mxu0 0.0
          %9306 = vmatpush1.msra.mxu0 0.0
          %9307 = vmatprep.subr.mxu0 0.0
          %9308 = vmatpush1.msra.mxu0 0.0
          %9309 = vmatprep.subr.mxu0 0.0
          %9310 = vmatpush1.msra.mxu0 0.0
          %9311 = vmatprep.subr.mxu0 0.0
          %9312 = vmatpush1.msra.mxu0 0.0
          %9313 = vmatprep.subr.mxu0 0.0
          %9314 = vmatpush1.msra.mxu0 0.0
          %9315 = vmatprep.subr.mxu0 0.0
          %9316 = vmatpush1.msra.mxu0 0.0
          %9317 = vmatprep.subr.mxu0 0.0
          %9318 = vmatpush1.msra.mxu0 0.0
          %9319 = vmatprep.subr.mxu0 0.0
          %9320 = vmatpush1.msra.mxu0 0.0
          %9321 = vmatprep.subr.mxu0 0.0
          %9322 = vmatpush1.msra.mxu0 0.0
          %9323 = vmatprep.subr.mxu0 0.0
          %9324 = vmatpush1.msra.mxu0 0.0
          %9325 = vmatprep.subr.mxu0 0.0
          %9326 = vmatpush1.msra.mxu0 0.0
          %9327 = vmatprep.mubr.f32.mxu0 0.0
          %v9328 = vand.u32 %v9014, 4294901760
          %v9329 = vsub.f32 %v9014, %v9328
          %v9330 = vand.u32 %v9329, 4294901760
          %9331 = vmatmul.mubr.f32.gmra.mrb[0].mxu0 %v9330
          %v9332 = vpop.f32.mrb[0].mxu0
          %v9333 = vadd.f32 %v9257, %v9332
          %v9334 = vpop.f32.mrb[0].mxu0
          %v9335 = vadd.f32 %v9259, %v9334
          %9336 = vdwg.mxu0
          %v9337 = vand.u32 %v9018, 4294901760
          %v9338 = vsub.f32 %v9018, %v9337
          %v9339 = vand.u32 %v9338, 4294901760
          %9340 = vmatprep.subr.mxu0 %v9339
          %v9341 = vand.u32 %v9016, 4294901760
          %v9342 = vsub.f32 %v9016, %v9341
          %v9343 = vand.u32 %v9342, 4294901760
          %9344 = vmatpush1.msra.mxu0 %v9343
          %9345 = vmatprep.subr.mxu0 0.0
          %9346 = vmatpush1.msra.mxu0 0.0
          %9347 = vmatprep.subr.mxu0 0.0
          %9348 = vmatpush1.msra.mxu0 0.0
          %9349 = vmatprep.subr.mxu0 0.0
          %9350 = vmatpush1.msra.mxu0 0.0
          %9351 = vmatprep.subr.mxu0 0.0
          %9352 = vmatpush1.msra.mxu0 0.0
          %9353 = vmatprep.subr.mxu0 0.0
          %9354 = vmatpush1.msra.mxu0 0.0
          %9355 = vmatprep.subr.mxu0 0.0
          %9356 = vmatpush1.msra.mxu0 0.0
          %9357 = vmatprep.subr.mxu0 0.0
          %9358 = vmatpush1.msra.mxu0 0.0
          %9359 = vmatprep.subr.mxu0 0.0
          %9360 = vmatpush1.msra.mxu0 0.0
          %9361 = vmatprep.subr.mxu0 0.0
          %9362 = vmatpush1.msra.mxu0 0.0
          %9363 = vmatprep.subr.mxu0 0.0
          %9364 = vmatpush1.msra.mxu0 0.0
          %9365 = vmatprep.subr.mxu0 0.0
          %9366 = vmatpush1.msra.mxu0 0.0
          %9367 = vmatprep.subr.mxu0 0.0
          %9368 = vmatpush1.msra.mxu0 0.0
          %9369 = vmatprep.subr.mxu0 0.0
          %9370 = vmatpush1.msra.mxu0 0.0
          %9371 = vmatprep.subr.mxu0 0.0
          %9372 = vmatpush1.msra.mxu0 0.0
          %9373 = vmatprep.subr.mxu0 0.0
          %9374 = vmatpush1.msra.mxu0 0.0
          %9375 = vmatprep.subr.mxu0 0.0
          %9376 = vmatpush1.msra.mxu0 0.0
          %9377 = vmatprep.subr.mxu0 0.0
          %9378 = vmatpush1.msra.mxu0 0.0
          %9379 = vmatprep.subr.mxu0 0.0
          %9380 = vmatpush1.msra.mxu0 0.0
          %9381 = vmatprep.subr.mxu0 0.0
          %9382 = vmatpush1.msra.mxu0 0.0
          %9383 = vmatprep.subr.mxu0 0.0
          %9384 = vmatpush1.msra.mxu0 0.0
          %9385 = vmatprep.subr.mxu0 0.0
          %9386 = vmatpush1.msra.mxu0 0.0
          %9387 = vmatprep.subr.mxu0 0.0
          %9388 = vmatpush1.msra.mxu0 0.0
          %9389 = vmatprep.subr.mxu0 0.0
          %9390 = vmatpush1.msra.mxu0 0.0
          %9391 = vmatprep.subr.mxu0 0.0
          %9392 = vmatpush1.msra.mxu0 0.0
          %9393 = vmatprep.subr.mxu0 0.0
          %9394 = vmatpush1.msra.mxu0 0.0
          %9395 = vmatprep.subr.mxu0 0.0
          %9396 = vmatpush1.msra.mxu0 0.0
          %9397 = vmatprep.subr.mxu0 0.0
          %9398 = vmatpush1.msra.mxu0 0.0
          %9399 = vmatprep.subr.mxu0 0.0
          %9400 = vmatpush1.msra.mxu0 0.0
          %9401 = vmatprep.subr.mxu0 0.0
          %9402 = vmatpush1.msra.mxu0 0.0
          %9403 = vmatprep.subr.mxu0 0.0
          %9404 = vmatpush1.msra.mxu0 0.0
          %9405 = vmatprep.subr.mxu0 0.0
          %9406 = vmatpush1.msra.mxu0 0.0
          %9407 = vmatprep.mubr.f32.mxu0 0.0
          %v9408 = vand.u32 %v9014, 4294901760
          %9409 = vmatmul.mubr.f32.gmra.mrb[0].mxu0 %v9408
          %v9410 = vpop.f32.mrb[0].mxu0
          %v9411 = vadd.f32 %v9333, %v9410
          %v9412 = vpop.f32.mrb[0].mxu0
          %v9413 = vadd.f32 %v9335, %v9412
          %9414 = vdwg.mxu0
          %v9415 = vand.u32 %v9018, 4294901760
          %9416 = vmatprep.subr.mxu0 %v9415
          %v9417 = vand.u32 %v9016, 4294901760
          %9418 = vmatpush1.msra.mxu0 %v9417
          %9419 = vmatprep.subr.mxu0 0.0
          %9420 = vmatpush1.msra.mxu0 0.0
          %9421 = vmatprep.subr.mxu0 0.0
          %9422 = vmatpush1.msra.mxu0 0.0
          %9423 = vmatprep.subr.mxu0 0.0
          %9424 = vmatpush1.msra.mxu0 0.0
          %9425 = vmatprep.subr.mxu0 0.0
          %9426 = vmatpush1.msra.mxu0 0.0
          %9427 = vmatprep.subr.mxu0 0.0
          %9428 = vmatpush1.msra.mxu0 0.0
          %9429 = vmatprep.subr.mxu0 0.0
          %9430 = vmatpush1.msra.mxu0 0.0
          %9431 = vmatprep.subr.mxu0 0.0
          %9432 = vmatpush1.msra.mxu0 0.0
          %9433 = vmatprep.subr.mxu0 0.0
          %9434 = vmatpush1.msra.mxu0 0.0
          %9435 = vmatprep.subr.mxu0 0.0
          %9436 = vmatpush1.msra.mxu0 0.0
          %9437 = vmatprep.subr.mxu0 0.0
          %9438 = vmatpush1.msra.mxu0 0.0
          %9439 = vmatprep.subr.mxu0 0.0
          %9440 = vmatpush1.msra.mxu0 0.0
          %9441 = vmatprep.subr.mxu0 0.0
          %9442 = vmatpush1.msra.mxu0 0.0
          %9443 = vmatprep.subr.mxu0 0.0
          %9444 = vmatpush1.msra.mxu0 0.0
          %9445 = vmatprep.subr.mxu0 0.0
          %9446 = vmatpush1.msra.mxu0 0.0
          %9447 = vmatprep.subr.mxu0 0.0
          %9448 = vmatpush1.msra.mxu0 0.0
          %9449 = vmatprep.subr.mxu0 0.0
          %9450 = vmatpush1.msra.mxu0 0.0
          %9451 = vmatprep.subr.mxu0 0.0
          %9452 = vmatpush1.msra.mxu0 0.0
          %9453 = vmatprep.subr.mxu0 0.0
          %9454 = vmatpush1.msra.mxu0 0.0
          %9455 = vmatprep.subr.mxu0 0.0
          %9456 = vmatpush1.msra.mxu0 0.0
          %9457 = vmatprep.subr.mxu0 0.0
          %9458 = vmatpush1.msra.mxu0 0.0
          %9459 = vmatprep.subr.mxu0 0.0
          %9460 = vmatpush1.msra.mxu0 0.0
          %9461 = vmatprep.subr.mxu0 0.0
          %9462 = vmatpush1.msra.mxu0 0.0
          %9463 = vmatprep.subr.mxu0 0.0
          %9464 = vmatpush1.msra.mxu0 0.0
          %9465 = vmatprep.subr.mxu0 0.0
          %9466 = vmatpush1.msra.mxu0 0.0
          %9467 = vmatprep.subr.mxu0 0.0
          %9468 = vmatpush1.msra.mxu0 0.0
          %9469 = vmatprep.subr.mxu0 0.0
          %9470 = vmatpush1.msra.mxu0 0.0
          %9471 = vmatprep.subr.mxu0 0.0
          %9472 = vmatpush1.msra.mxu0 0.0
          %9473 = vmatprep.subr.mxu0 0.0
          %9474 = vmatpush1.msra.mxu0 0.0
          %9475 = vmatprep.subr.mxu0 0.0
          %9476 = vmatpush1.msra.mxu0 0.0
          %9477 = vmatprep.subr.mxu0 0.0
          %9478 = vmatpush1.msra.mxu0 0.0
          %9479 = vmatprep.subr.mxu0 0.0
          %9480 = vmatpush1.msra.mxu0 0.0
          %9481 = vmatprep.mubr.f32.mxu0 0.0
          %v9482 = vand.u32 %v9014, 4294901760
          %9483 = vmatmul.mubr.f32.gmra.mrb[0].mxu0 %v9482
          %v9484 = vpop.f32.mrb[0].mxu0
          %v9485 = vadd.f32 %v9411, %v9484
          %v9486 = vpop.f32.mrb[0].mxu0
          %v9487 = vadd.f32 %v9413, %v9486
          %9488 = vdwg.mxu0
          %v9489 = vand.u32 %v9022, 4294901760
          %9490 = vmatprep.subr.mxu0 %v9489
          %v9491 = vand.u32 %v9020, 4294901760
          %9492 = vmatpush1.msra.mxu0 %v9491
          %9493 = vmatprep.subr.mxu0 0.0
          %9494 = vmatpush1.msra.mxu0 0.0
          %9495 = vmatprep.subr.mxu0 0.0
          %9496 = vmatpush1.msra.mxu0 0.0
          %9497 = vmatprep.subr.mxu0 0.0
          %9498 = vmatpush1.msra.mxu0 0.0
          %9499 = vmatprep.subr.mxu0 0.0
          %9500 = vmatpush1.msra.mxu0 0.0
          %9501 = vmatprep.subr.mxu0 0.0
          %9502 = vmatpush1.msra.mxu0 0.0
          %9503 = vmatprep.subr.mxu0 0.0
          %9504 = vmatpush1.msra.mxu0 0.0
          %9505 = vmatprep.subr.mxu0 0.0
          %9506 = vmatpush1.msra.mxu0 0.0
          %9507 = vmatprep.subr.mxu0 0.0
          %9508 = vmatpush1.msra.mxu0 0.0
          %9509 = vmatprep.subr.mxu0 0.0
          %9510 = vmatpush1.msra.mxu0 0.0
          %9511 = vmatprep.subr.mxu0 0.0
          %9512 = vmatpush1.msra.mxu0 0.0
          %9513 = vmatprep.subr.mxu0 0.0
          %9514 = vmatpush1.msra.mxu0 0.0
          %9515 = vmatprep.subr.mxu0 0.0
          %9516 = vmatpush1.msra.mxu0 0.0
          %9517 = vmatprep.subr.mxu0 0.0
          %9518 = vmatpush1.msra.mxu0 0.0
          %9519 = vmatprep.subr.mxu0 0.0
          %9520 = vmatpush1.msra.mxu0 0.0
          %9521 = vmatprep.subr.mxu0 0.0
          %9522 = vmatpush1.msra.mxu0 0.0
          %9523 = vmatprep.subr.mxu0 0.0
          %9524 = vmatpush1.msra.mxu0 0.0
          %9525 = vmatprep.subr.mxu0 0.0
          %9526 = vmatpush1.msra.mxu0 0.0
          %9527 = vmatprep.subr.mxu0 0.0
          %9528 = vmatpush1.msra.mxu0 0.0
          %9529 = vmatprep.subr.mxu0 0.0
          %9530 = vmatpush1.msra.mxu0 0.0
          %9531 = vmatprep.subr.mxu0 0.0
          %9532 = vmatpush1.msra.mxu0 0.0
          %9533 = vmatprep.subr.mxu0 0.0
          %9534 = vmatpush1.msra.mxu0 0.0
          %9535 = vmatprep.subr.mxu0 0.0
          %9536 = vmatpush1.msra.mxu0 0.0
          %9537 = vmatprep.subr.mxu0 0.0
          %9538 = vmatpush1.msra.mxu0 0.0
          %9539 = vmatprep.subr.mxu0 0.0
          %9540 = vmatpush1.msra.mxu0 0.0
          %9541 = vmatprep.subr.mxu0 0.0
          %9542 = vmatpush1.msra.mxu0 0.0
          %9543 = vmatprep.subr.mxu0 0.0
          %9544 = vmatpush1.msra.mxu0 0.0
          %9545 = vmatprep.subr.mxu0 0.0
          %9546 = vmatpush1.msra.mxu0 0.0
          %9547 = vmatprep.subr.mxu0 0.0
          %9548 = vmatpush1.msra.mxu0 0.0
          %9549 = vmatprep.subr.mxu0 0.0
          %9550 = vmatpush1.msra.mxu0 0.0
          %9551 = vmatprep.subr.mxu0 0.0
          %9552 = vmatpush1.msra.mxu0 0.0
          %9553 = vmatprep.subr.mxu0 0.0
          %9554 = vmatpush1.msra.mxu0 0.0
          %9555 = vmatprep.mubr.f32.mxu0 0.0
          %v9556 = vand.u32 %v9014, 4294901760
          %v9557 = vsub.f32 %v9014, %v9556
          %v9558 = vand.u32 %v9557, 4294901760
          %v9559 = vsub.f32 %v9557, %v9558
          %v9560 = vand.u32 %v9559, 4294901760
          %9561 = vmatmul.mubr.f32.gmra.mrb[0].mxu0 %v9560
          %v9562 = vpop.f32.mrb[0].mxu0
          %v9563 = vadd.f32 %v9007, %v9562
          %v9564 = vpop.f32.mrb[0].mxu0
          %v9565 = vadd.f32 %v9007, %v9564
          %9566 = vdwg.mxu0
          %v9567 = vand.u32 %v9022, 4294901760
          %v9568 = vsub.f32 %v9022, %v9567
          %v9569 = vand.u32 %v9568, 4294901760
          %v9570 = vsub.f32 %v9568, %v9569
          %v9571 = vand.u32 %v9570, 4294901760
          %9572 = vmatprep.subr.mxu0 %v9571
          %v9573 = vand.u32 %v9020, 4294901760
          %v9574 = vsub.f32 %v9020, %v9573
          %v9575 = vand.u32 %v9574, 4294901760
          %v9576 = vsub.f32 %v9574, %v9575
          %v9577 = vand.u32 %v9576, 4294901760
          %9578 = vmatpush1.msra.mxu0 %v9577
          %9579 = vmatprep.subr.mxu0 0.0
          %9580 = vmatpush1.msra.mxu0 0.0
          %9581 = vmatprep.subr.mxu0 0.0
          %9582 = vmatpush1.msra.mxu0 0.0
          %9583 = vmatprep.subr.mxu0 0.0
          %9584 = vmatpush1.msra.mxu0 0.0
          %9585 = vmatprep.subr.mxu0 0.0
          %9586 = vmatpush1.msra.mxu0 0.0
          %9587 = vmatprep.subr.mxu0 0.0
          %9588 = vmatpush1.msra.mxu0 0.0
          %9589 = vmatprep.subr.mxu0 0.0
          %9590 = vmatpush1.msra.mxu0 0.0
          %9591 = vmatprep.subr.mxu0 0.0
          %9592 = vmatpush1.msra.mxu0 0.0
          %9593 = vmatprep.subr.mxu0 0.0
          %9594 = vmatpush1.msra.mxu0 0.0
          %9595 = vmatprep.subr.mxu0 0.0
          %9596 = vmatpush1.msra.mxu0 0.0
          %9597 = vmatprep.subr.mxu0 0.0
          %9598 = vmatpush1.msra.mxu0 0.0
          %9599 = vmatprep.subr.mxu0 0.0
          %9600 = vmatpush1.msra.mxu0 0.0
          %9601 = vmatprep.subr.mxu0 0.0
          %9602 = vmatpush1.msra.mxu0 0.0
          %9603 = vmatprep.subr.mxu0 0.0
          %9604 = vmatpush1.msra.mxu0 0.0
          %9605 = vmatprep.subr.mxu0 0.0
          %9606 = vmatpush1.msra.mxu0 0.0
          %9607 = vmatprep.subr.mxu0 0.0
          %9608 = vmatpush1.msra.mxu0 0.0
          %9609 = vmatprep.subr.mxu0 0.0
          %9610 = vmatpush1.msra.mxu0 0.0
          %9611 = vmatprep.subr.mxu0 0.0
          %9612 = vmatpush1.msra.mxu0 0.0
          %9613 = vmatprep.subr.mxu0 0.0
          %9614 = vmatpush1.msra.mxu0 0.0
          %9615 = vmatprep.subr.mxu0 0.0
          %9616 = vmatpush1.msra.mxu0 0.0
          %9617 = vmatprep.subr.mxu0 0.0
          %9618 = vmatpush1.msra.mxu0 0.0
          %9619 = vmatprep.subr.mxu0 0.0
          %9620 = vmatpush1.msra.mxu0 0.0
          %9621 = vmatprep.subr.mxu0 0.0
          %9622 = vmatpush1.msra.mxu0 0.0
          %9623 = vmatprep.subr.mxu0 0.0
          %9624 = vmatpush1.msra.mxu0 0.0
          %9625 = vmatprep.subr.mxu0 0.0
          %9626 = vmatpush1.msra.mxu0 0.0
          %9627 = vmatprep.subr.mxu0 0.0
          %9628 = vmatpush1.msra.mxu0 0.0
          %9629 = vmatprep.subr.mxu0 0.0
          %9630 = vmatpush1.msra.mxu0 0.0
          %9631 = vmatprep.subr.mxu0 0.0
          %9632 = vmatpush1.msra.mxu0 0.0
          %9633 = vmatprep.subr.mxu0 0.0
          %9634 = vmatpush1.msra.mxu0 0.0
          %9635 = vmatprep.subr.mxu0 0.0
          %9636 = vmatpush1.msra.mxu0 0.0
          %9637 = vmatprep.subr.mxu0 0.0
          %9638 = vmatpush1.msra.mxu0 0.0
          %9639 = vmatprep.subr.mxu0 0.0
          %9640 = vmatpush1.msra.mxu0 0.0
          %9641 = vmatprep.mubr.f32.mxu0 0.0
          %v9642 = vand.u32 %v9014, 4294901760
          %9643 = vmatmul.mubr.f32.gmra.mrb[0].mxu0 %v9642
          %v9644 = vpop.f32.mrb[0].mxu0
          %v9645 = vadd.f32 %v9563, %v9644
          %v9646 = vpop.f32.mrb[0].mxu0
          %v9647 = vadd.f32 %v9565, %v9646
          %9648 = vdwg.mxu0
          %v9649 = vand.u32 %v9022, 4294901760
          %v9650 = vsub.f32 %v9022, %v9649
          %9651 = vmatprep.subr.mxu0 %v9650
          %v9652 = vand.u32 %v9020, 4294901760
          %v9653 = vsub.f32 %v9020, %v9652
          %9654 = vmatpush1.msra.mxu0 %v9653
          %9655 = vmatprep.subr.mxu0 0.0
          %9656 = vmatpush1.msra.mxu0 0.0
          %9657 = vmatprep.subr.mxu0 0.0
          %9658 = vmatpush1.msra.mxu0 0.0
          %9659 = vmatprep.subr.mxu0 0.0
          %9660 = vmatpush1.msra.mxu0 0.0
          %9661 = vmatprep.subr.mxu0 0.0
          %9662 = vmatpush1.msra.mxu0 0.0
          %9663 = vmatprep.subr.mxu0 0.0
          %9664 = vmatpush1.msra.mxu0 0.0
          %9665 = vmatprep.subr.mxu0 0.0
          %9666 = vmatpush1.msra.mxu0 0.0
          %9667 = vmatprep.subr.mxu0 0.0
          %9668 = vmatpush1.msra.mxu0 0.0
          %9669 = vmatprep.subr.mxu0 0.0
          %9670 = vmatpush1.msra.mxu0 0.0
          %9671 = vmatprep.subr.mxu0 0.0
          %9672 = vmatpush1.msra.mxu0 0.0
          %9673 = vmatprep.subr.mxu0 0.0
          %9674 = vmatpush1.msra.mxu0 0.0
          %9675 = vmatprep.subr.mxu0 0.0
          %9676 = vmatpush1.msra.mxu0 0.0
          %9677 = vmatprep.subr.mxu0 0.0
          %9678 = vmatpush1.msra.mxu0 0.0
          %9679 = vmatprep.subr.mxu0 0.0
          %9680 = vmatpush1.msra.mxu0 0.0
          %9681 = vmatprep.subr.mxu0 0.0
          %9682 = vmatpush1.msra.mxu0 0.0
          %9683 = vmatprep.subr.mxu0 0.0
          %9684 = vmatpush1.msra.mxu0 0.0
          %9685 = vmatprep.subr.mxu0 0.0
          %9686 = vmatpush1.msra.mxu0 0.0
          %9687 = vmatprep.subr.mxu0 0.0
          %9688 = vmatpush1.msra.mxu0 0.0
          %9689 = vmatprep.subr.mxu0 0.0
          %9690 = vmatpush1.msra.mxu0 0.0
          %9691 = vmatprep.subr.mxu0 0.0
          %9692 = vmatpush1.msra.mxu0 0.0
          %9693 = vmatprep.subr.mxu0 0.0
          %9694 = vmatpush1.msra.mxu0 0.0
          %9695 = vmatprep.subr.mxu0 0.0
          %9696 = vmatpush1.msra.mxu0 0.0
          %9697 = vmatprep.subr.mxu0 0.0
          %9698 = vmatpush1.msra.mxu0 0.0
          %9699 = vmatprep.subr.mxu0 0.0
          %9700 = vmatpush1.msra.mxu0 0.0
          %9701 = vmatprep.subr.mxu0 0.0
          %9702 = vmatpush1.msra.mxu0 0.0
          %9703 = vmatprep.subr.mxu0 0.0
          %9704 = vmatpush1.msra.mxu0 0.0
          %9705 = vmatprep.subr.mxu0 0.0
          %9706 = vmatpush1.msra.mxu0 0.0
          %9707 = vmatprep.subr.mxu0 0.0
          %9708 = vmatpush1.msra.mxu0 0.0
          %9709 = vmatprep.subr.mxu0 0.0
          %9710 = vmatpush1.msra.mxu0 0.0
          %9711 = vmatprep.subr.mxu0 0.0
          %9712 = vmatpush1.msra.mxu0 0.0
          %9713 = vmatprep.subr.mxu0 0.0
          %9714 = vmatpush1.msra.mxu0 0.0
          %9715 = vmatprep.subr.mxu0 0.0
          %9716 = vmatpush1.msra.mxu0 0.0
          %9717 = vmatprep.mubr.f32.mxu0 0.0
          %v9718 = vand.u32 %v9014, 4294901760
          %v9719 = vsub.f32 %v9014, %v9718
          %9720 = vmatmul.mubr.f32.gmra.mrb[0].mxu0 %v9719
          %v9721 = vpop.f32.mrb[0].mxu0
          %v9722 = vadd.f32 %v9645, %v9721
          %v9723 = vpop.f32.mrb[0].mxu0
          %v9724 = vadd.f32 %v9647, %v9723
          %9725 = vdwg.mxu0
          %v9726 = vand.u32 %v9022, 4294901760
          %9727 = vmatprep.subr.mxu0 %v9726
          %v9728 = vand.u32 %v9020, 4294901760
          %9729 = vmatpush1.msra.mxu0 %v9728
          %9730 = vmatprep.subr.mxu0 0.0
          %9731 = vmatpush1.msra.mxu0 0.0
          %9732 = vmatprep.subr.mxu0 0.0
          %9733 = vmatpush1.msra.mxu0 0.0
          %9734 = vmatprep.subr.mxu0 0.0
          %9735 = vmatpush1.msra.mxu0 0.0
          %9736 = vmatprep.subr.mxu0 0.0
          %9737 = vmatpush1.msra.mxu0 0.0
          %9738 = vmatprep.subr.mxu0 0.0
          %9739 = vmatpush1.msra.mxu0 0.0
          %9740 = vmatprep.subr.mxu0 0.0
          %9741 = vmatpush1.msra.mxu0 0.0
          %9742 = vmatprep.subr.mxu0 0.0
          %9743 = vmatpush1.msra.mxu0 0.0
          %9744 = vmatprep.subr.mxu0 0.0
          %9745 = vmatpush1.msra.mxu0 0.0
          %9746 = vmatprep.subr.mxu0 0.0
          %9747 = vmatpush1.msra.mxu0 0.0
          %9748 = vmatprep.subr.mxu0 0.0
          %9749 = vmatpush1.msra.mxu0 0.0
          %9750 = vmatprep.subr.mxu0 0.0
          %9751 = vmatpush1.msra.mxu0 0.0
          %9752 = vmatprep.subr.mxu0 0.0
          %9753 = vmatpush1.msra.mxu0 0.0
          %9754 = vmatprep.subr.mxu0 0.0
          %9755 = vmatpush1.msra.mxu0 0.0
          %9756 = vmatprep.subr.mxu0 0.0
          %9757 = vmatpush1.msra.mxu0 0.0
          %9758 = vmatprep.subr.mxu0 0.0
          %9759 = vmatpush1.msra.mxu0 0.0
          %9760 = vmatprep.subr.mxu0 0.0
          %9761 = vmatpush1.msra.mxu0 0.0
          %9762 = vmatprep.subr.mxu0 0.0
          %9763 = vmatpush1.msra.mxu0 0.0
          %9764 = vmatprep.subr.mxu0 0.0
          %9765 = vmatpush1.msra.mxu0 0.0
          %9766 = vmatprep.subr.mxu0 0.0
          %9767 = vmatpush1.msra.mxu0 0.0
          %9768 = vmatprep.subr.mxu0 0.0
          %9769 = vmatpush1.msra.mxu0 0.0
          %9770 = vmatprep.subr.mxu0 0.0
          %9771 = vmatpush1.msra.mxu0 0.0
          %9772 = vmatprep.subr.mxu0 0.0
          %9773 = vmatpush1.msra.mxu0 0.0
          %9774 = vmatprep.subr.mxu0 0.0
          %9775 = vmatpush1.msra.mxu0 0.0
          %9776 = vmatprep.subr.mxu0 0.0
          %9777 = vmatpush1.msra.mxu0 0.0
          %9778 = vmatprep.subr.mxu0 0.0
          %9779 = vmatpush1.msra.mxu0 0.0
          %9780 = vmatprep.subr.mxu0 0.0
          %9781 = vmatpush1.msra.mxu0 0.0
          %9782 = vmatprep.subr.mxu0 0.0
          %9783 = vmatpush1.msra.mxu0 0.0
          %9784 = vmatprep.subr.mxu0 0.0
          %9785 = vmatpush1.msra.mxu0 0.0
          %9786 = vmatprep.subr.mxu0 0.0
          %9787 = vmatpush1.msra.mxu0 0.0
          %9788 = vmatprep.subr.mxu0 0.0
          %9789 = vmatpush1.msra.mxu0 0.0
          %9790 = vmatprep.subr.mxu0 0.0
          %9791 = vmatpush1.msra.mxu0 0.0
          %9792 = vmatprep.mubr.f32.mxu0 0.0
          %v9793 = vand.u32 %v9014, 4294901760
          %v9794 = vsub.f32 %v9014, %v9793
          %v9795 = vand.u32 %v9794, 4294901760
          %9796 = vmatmul.mubr.f32.gmra.mrb[0].mxu0 %v9795
          %v9797 = vpop.f32.mrb[0].mxu0
          %v9798 = vadd.f32 %v9722, %v9797
          %v9799 = vpop.f32.mrb[0].mxu0
          %v9800 = vadd.f32 %v9724, %v9799
          %9801 = vdwg.mxu0
          %v9802 = vand.u32 %v9022, 4294901760
          %v9803 = vsub.f32 %v9022, %v9802
          %v9804 = vand.u32 %v9803, 4294901760
          %9805 = vmatprep.subr.mxu0 %v9804
          %v9806 = vand.u32 %v9020, 4294901760
          %v9807 = vsub.f32 %v9020, %v9806
          %v9808 = vand.u32 %v9807, 4294901760
          %9809 = vmatpush1.msra.mxu0 %v9808
          %9810 = vmatprep.subr.mxu0 0.0
          %9811 = vmatpush1.msra.mxu0 0.0
          %9812 = vmatprep.subr.mxu0 0.0
          %9813 = vmatpush1.msra.mxu0 0.0
          %9814 = vmatprep.subr.mxu0 0.0
          %9815 = vmatpush1.msra.mxu0 0.0
          %9816 = vmatprep.subr.mxu0 0.0
          %9817 = vmatpush1.msra.mxu0 0.0
          %9818 = vmatprep.subr.mxu0 0.0
          %9819 = vmatpush1.msra.mxu0 0.0
          %9820 = vmatprep.subr.mxu0 0.0
          %9821 = vmatpush1.msra.mxu0 0.0
          %9822 = vmatprep.subr.mxu0 0.0
          %9823 = vmatpush1.msra.mxu0 0.0
          %9824 = vmatprep.subr.mxu0 0.0
          %9825 = vmatpush1.msra.mxu0 0.0
          %9826 = vmatprep.subr.mxu0 0.0
          %9827 = vmatpush1.msra.mxu0 0.0
          %9828 = vmatprep.subr.mxu0 0.0
          %9829 = vmatpush1.msra.mxu0 0.0
          %9830 = vmatprep.subr.mxu0 0.0
          %9831 = vmatpush1.msra.mxu0 0.0
          %9832 = vmatprep.subr.mxu0 0.0
          %9833 = vmatpush1.msra.mxu0 0.0
          %9834 = vmatprep.subr.mxu0 0.0
          %9835 = vmatpush1.msra.mxu0 0.0
          %9836 = vmatprep.subr.mxu0 0.0
          %9837 = vmatpush1.msra.mxu0 0.0
          %9838 = vmatprep.subr.mxu0 0.0
          %9839 = vmatpush1.msra.mxu0 0.0
          %9840 = vmatprep.subr.mxu0 0.0
          %9841 = vmatpush1.msra.mxu0 0.0
          %9842 = vmatprep.subr.mxu0 0.0
          %9843 = vmatpush1.msra.mxu0 0.0
          %9844 = vmatprep.subr.mxu0 0.0
          %9845 = vmatpush1.msra.mxu0 0.0
          %9846 = vmatprep.subr.mxu0 0.0
          %9847 = vmatpush1.msra.mxu0 0.0
          %9848 = vmatprep.subr.mxu0 0.0
          %9849 = vmatpush1.msra.mxu0 0.0
          %9850 = vmatprep.subr.mxu0 0.0
          %9851 = vmatpush1.msra.mxu0 0.0
          %9852 = vmatprep.subr.mxu0 0.0
          %9853 = vmatpush1.msra.mxu0 0.0
          %9854 = vmatprep.subr.mxu0 0.0
          %9855 = vmatpush1.msra.mxu0 0.0
          %9856 = vmatprep.subr.mxu0 0.0
          %9857 = vmatpush1.msra.mxu0 0.0
          %9858 = vmatprep.subr.mxu0 0.0
          %9859 = vmatpush1.msra.mxu0 0.0
          %9860 = vmatprep.subr.mxu0 0.0
          %9861 = vmatpush1.msra.mxu0 0.0
          %9862 = vmatprep.subr.mxu0 0.0
          %9863 = vmatpush1.msra.mxu0 0.0
          %9864 = vmatprep.subr.mxu0 0.0
          %9865 = vmatpush1.msra.mxu0 0.0
          %9866 = vmatprep.subr.mxu0 0.0
          %9867 = vmatpush1.msra.mxu0 0.0
          %9868 = vmatprep.subr.mxu0 0.0
          %9869 = vmatpush1.msra.mxu0 0.0
          %9870 = vmatprep.subr.mxu0 0.0
          %9871 = vmatpush1.msra.mxu0 0.0
          %9872 = vmatprep.mubr.f32.mxu0 0.0
          %v9873 = vand.u32 %v9014, 4294901760
          %9874 = vmatmul.mubr.f32.gmra.mrb[0].mxu0 %v9873
          %v9875 = vpop.f32.mrb[0].mxu0
          %v9876 = vadd.f32 %v9798, %v9875
          %v9877 = vpop.f32.mrb[0].mxu0
          %v9878 = vadd.f32 %v9800, %v9877
          %9879 = vdwg.mxu0
          %v9880 = vand.u32 %v9022, 4294901760
          %9881 = vmatprep.subr.mxu0 %v9880
          %v9882 = vand.u32 %v9020, 4294901760
          %9883 = vmatpush1.msra.mxu0 %v9882
          %9884 = vmatprep.subr.mxu0 0.0
          %9885 = vmatpush1.msra.mxu0 0.0
          %9886 = vmatprep.subr.mxu0 0.0
          %9887 = vmatpush1.msra.mxu0 0.0
          %9888 = vmatprep.subr.mxu0 0.0
          %9889 = vmatpush1.msra.mxu0 0.0
          %9890 = vmatprep.subr.mxu0 0.0
          %9891 = vmatpush1.msra.mxu0 0.0
          %9892 = vmatprep.subr.mxu0 0.0
          %9893 = vmatpush1.msra.mxu0 0.0
          %9894 = vmatprep.subr.mxu0 0.0
          %9895 = vmatpush1.msra.mxu0 0.0
          %9896 = vmatprep.subr.mxu0 0.0
          %9897 = vmatpush1.msra.mxu0 0.0
          %9898 = vmatprep.subr.mxu0 0.0
          %9899 = vmatpush1.msra.mxu0 0.0
          %9900 = vmatprep.subr.mxu0 0.0
          %9901 = vmatpush1.msra.mxu0 0.0
          %9902 = vmatprep.subr.mxu0 0.0
          %9903 = vmatpush1.msra.mxu0 0.0
          %9904 = vmatprep.subr.mxu0 0.0
          %9905 = vmatpush1.msra.mxu0 0.0
          %9906 = vmatprep.subr.mxu0 0.0
          %9907 = vmatpush1.msra.mxu0 0.0
          %9908 = vmatprep.subr.mxu0 0.0
          %9909 = vmatpush1.msra.mxu0 0.0
          %9910 = vmatprep.subr.mxu0 0.0
          %9911 = vmatpush1.msra.mxu0 0.0
          %9912 = vmatprep.subr.mxu0 0.0
          %9913 = vmatpush1.msra.mxu0 0.0
          %9914 = vmatprep.subr.mxu0 0.0
          %9915 = vmatpush1.msra.mxu0 0.0
          %9916 = vmatprep.subr.mxu0 0.0
          %9917 = vmatpush1.msra.mxu0 0.0
          %9918 = vmatprep.subr.mxu0 0.0
          %9919 = vmatpush1.msra.mxu0 0.0
          %9920 = vmatprep.subr.mxu0 0.0
          %9921 = vmatpush1.msra.mxu0 0.0
          %9922 = vmatprep.subr.mxu0 0.0
          %9923 = vmatpush1.msra.mxu0 0.0
          %9924 = vmatprep.subr.mxu0 0.0
          %9925 = vmatpush1.msra.mxu0 0.0
          %9926 = vmatprep.subr.mxu0 0.0
          %9927 = vmatpush1.msra.mxu0 0.0
          %9928 = vmatprep.subr.mxu0 0.0
          %9929 = vmatpush1.msra.mxu0 0.0
          %9930 = vmatprep.subr.mxu0 0.0
          %9931 = vmatpush1.msra.mxu0 0.0
          %9932 = vmatprep.subr.mxu0 0.0
          %9933 = vmatpush1.msra.mxu0 0.0
          %9934 = vmatprep.subr.mxu0 0.0
          %9935 = vmatpush1.msra.mxu0 0.0
          %9936 = vmatprep.subr.mxu0 0.0
          %9937 = vmatpush1.msra.mxu0 0.0
          %9938 = vmatprep.subr.mxu0 0.0
          %9939 = vmatpush1.msra.mxu0 0.0
          %9940 = vmatprep.subr.mxu0 0.0
          %9941 = vmatpush1.msra.mxu0 0.0
          %9942 = vmatprep.subr.mxu0 0.0
          %9943 = vmatpush1.msra.mxu0 0.0
          %9944 = vmatprep.subr.mxu0 0.0
          %9945 = vmatpush1.msra.mxu0 0.0
          %9946 = vmatprep.mubr.f32.mxu0 0.0
          %v9947 = vand.u32 %v9014, 4294901760
          %9948 = vmatmul.mubr.f32.gmra.mrb[0].mxu0 %v9947
          %v9949 = vpop.f32.mrb[0].mxu0
          %v9950 = vadd.f32 %v9876, %v9949
          %v9951 = vpop.f32.mrb[0].mxu0
          %v9952 = vadd.f32 %v9878, %v9951
          %9953 = vdwg.mxu0
          %v9954 = vld [vmem:[%s385] sm:$0xff]
          %v9955 = vld [vmem:[%s385 + $0x8] sm:$0xff]
          %v9956 = vld [vmem:[%s385 + $0x10] sm:$0xff]
          %v9957 = vld [vmem:[%s385 + $0x18] sm:$0xff]
          %v9958 = vadd.f32 %v9485, %v9954
          %v9959 = vadd.f32 %v9487, %v9955
          %v9960 = vadd.f32 %v9950, %v9956
          %v9961 = vadd.f32 %v9952, %v9957
          %9962 = vst [vmem:[%s440] sm:$0xff] %v9958
          %9963 = vst [vmem:[%s440 + $0x8] sm:$0xff] %v9959
          %9964 = vst [vmem:[%s440 + $0x10] sm:$0xff] %v9960
          %9965 = vst [vmem:[%s440 + $0x18] sm:$0xff] %v9961
        $region68: #{tpu_custom_call.1} parent=51 // pred_fallthru
          _
        %s9966 = sand.u32 %s253, 1
        %s9967 = scalar_lea.sflag [#allocation8], %s9966
        %s9968 = sand.u32 %s253, 1
        %s9969 = smul.addr %s9968, 32
        %s9970 = scalar_lea.vmem [#allocation11], %s9969
        // Predicated region
        $region69: #{tpu_custom_call.1} parent=51 // pred_check
          %p9971 = pneg %p263
        $region70: #{tpu_custom_call.1} parent=51 // pred_check_branch
          %9973 = sbr.rel (%p9971) target = $region72
        $region71: #{tpu_custom_call.1} parent=51 // pred_region
          %s9974 = smul.u32 4, %s34
          %s9976 = ssub.s32 512, 512
          %9977 = vsyncadd %s9967, %s9976
          %s9978 = smul.addr %s33, 8
          %s9979 = sadd.s32 %s9974, %s9978
          %s9980 = smul.addr %s9979, 128
          %s9981 = scalar_lea.hbm %s8, %s9980
          %s9983 = sshll.u32 %s9970, 4
          %s9984 = int_to_ptr.vmem [resolvable:$true] %s9983
          %9986 = dma.vmem_to_hbm [thread:$0]  %s9984, 512, %s9981, %s9967
        $region72: #{tpu_custom_call.1} parent=51 // pred_fallthru
          _
      $region52: #{tpu_custom_call.1} parent=5 // pred_fallthru
        _
      %p9987 = scmp.le.s32.totalorder 2, %s23
      // Predicated region
      $region73: #{tpu_custom_call.1} parent=5 // pred_check
        %p9988 = pneg %p9987
      $region74: #{tpu_custom_call.1} parent=5 // pred_check_branch
        %9990 = sbr.rel (%p9988) target = $region76
      $region75: #{tpu_custom_call.1} parent=5 // pred_region
        %s9991 = ssub.s32 %s23, 2
        // Predicated region
        $region77: #{tpu_custom_call.1} parent=75 // pred_check
          %p9992 = pneg %p269
        $region78: #{tpu_custom_call.1} parent=75 // pred_check_branch
          %9994 = sbr.rel (%p9992) target = $region80
        $region79: #{tpu_custom_call.1} parent=75 // pred_region
          %s9995 = sand.u32 %s254, 1
          %s9996 = scalar_lea.sflag [#allocation8], %s9995
          %s9997 = sand.u32 %s254, 1
          %s9998 = smul.addr %s9997, 32
          %s9999 = scalar_lea.vmem [#allocation11], %s9998
          %10000 = dma.done %s9996, 512
        $region80: #{tpu_custom_call.1} parent=75 // pred_fallthru
          _
      $region76: #{tpu_custom_call.1} parent=5 // pred_fallthru
        _
    $region6: #{tpu_custom_call.1} parent=1 // loop_footer
      %s27 = sadd.s32 1, %s23
    $region7: #{tpu_custom_call.1} parent=1 // loop_footer_branch
      %22 = sbr.rel target = $region3
    $region8: #{tpu_custom_call.1} parent=1 // loop_exit
      _
    %10001 = vsyncpa [#allocation7], 1
    %s10002 = scalar_lea.sflag [#allocation7], 1
    %10003 = vsyncpa %s10002, 1
    %10004 = vsyncpa [#allocation10], 1
    %s10005 = scalar_lea.sflag [#allocation10], 1
    %10006 = vsyncpa %s10005, 1
    %10007 = vsyncpa [#allocation8], 1
    %s10008 = scalar_lea.sflag [#allocation8], 1
    %10009 = vsyncpa %s10008, 1

</llo_original>
